<compile_context>
chip_gen: v7x
topology: tpu7x:2x2x1
jax: 0.10.0
libtpu: 0.0.40
codegen_flags: <defaults>
</compile_context>

<pallas_src>
import jax
import jax.numpy as jnp
from jax.experimental import pallas as pl
from jax.experimental.pallas import tpu as pltpu

CNN_FEATURES = 256          # out_features of the replaced _fc
BACKBONE_FEATURES = 1280    # EfficientNet-b0 _fc.in_features
MAX_BATCH_TILE = 128        # batch rows per grid step when N is large


# ---------------------------------------------------------------------------
# Fused kernel (one batch tile per grid step):
#   1x1 conv (4->3) + bias + ReLU + global avg pool (scale folded into proj_w)
#   + backbone stand-in (3->1280, swish) + _fc (1280->256) on the MXU.
# ---------------------------------------------------------------------------
def cnn_fused_kernel(x_ref, cw_ref, cb_ref, pw_ref, pb_ref, fw_ref, fb_ref,
                     out_ref):
    # x_ref:   (TB, Cin, HW)  batch tile; channels on sublanes, pixels on lanes
    # cw_ref:  (Cout, Cin)    1x1 conv weight (PyTorch (Cout,Cin,1,1) squeezed)
    # cb_ref:  (Cout, 1)      conv bias
    # pw_ref:  (Cout, 1280)   backbone stand-in projection weight * (1/HW)
    # pb_ref:  (1, 1280)      projection bias
    # fw_ref:  (1280, 256)    replaced _fc weight, stored bf16
    # fb_ref:  (1, 256)       fc bias
    # out_ref: (TB, 256)
    x = x_ref[...]                                   # (TB, Cin, HW) f32
    cw = cw_ref[...]                                 # (Cout, Cin)   f32
    cin = x.shape[1]
    cout = cw.shape[0]

    # --- F.relu(self.map(x)): 1x1 conv == Cin lane-dense VPU broadcast-FMAs.
    y = cw[None, :, 0:1] * x[:, 0:1, :]              # (TB, Cout, HW)
    for c in range(1, cin):                          # static unroll, Cin=4
        y = y + cw[None, :, c:c + 1] * x[:, c:c + 1, :]
    y = jnp.maximum(y + cb_ref[...][None], 0.0)      # bias + ReLU (f32 VPU)

    # --- global average pool over the HW pixels (lane reduce).  The 1/HW
    #     scale is folded into pw_ref by the wrapper, so this is a plain sum.
    pooled = jnp.sum(y, axis=2)                      # (TB, Cout)

    # --- backbone stand-in: 3 -> 1280 as Cout sublane-broadcast FMAs
    #     (K=3 is far too small for the MXU), then swish activation.
    h = pooled[:, 0:1] * pw_ref[0:1, :]              # (TB, 1280)
    for c in range(1, cout):                         # static unroll, Cout=3
        h = h + pooled[:, c:c + 1] * pw_ref[c:c + 1, :]
    h = h + pb_ref[...]
    h = h * (1.0 / (1.0 + jnp.exp(-h)))              # swish, f32 on VPU/EUP

    # --- replaced _fc: Linear(1280 -> 256) on the MXU, bf16 in / f32 acc,
    #     now batched: M = TB instead of M = 1.
    out = jnp.dot(h.astype(jnp.bfloat16), fw_ref[...],
                  preferred_element_type=jnp.float32) + fb_ref[...]
    out_ref[...] = out


def cnn_forward_pallas(params, x_nchw):
    N, Cin, H, W = x_nchw.shape
    HW = H * W
    Cout = params["map_w"].shape[0]

    # Batch tiling: whole batch in one step when small (removes all grid-step
    # overhead); 128-row tiles (8-sublane / MXU-friendly M) when large.
    TB = N if N <= MAX_BATCH_TILE else MAX_BATCH_TILE
    n_tiles = pl.cdiv(N, TB)
    Np = n_tiles * TB

    # Keep NCHW: pure reshape (no transpose), pixels land on the lane axis.
    x_rows = x_nchw.reshape(N, Cin, HW)
    if Np != N:
        x_rows = jnp.pad(x_rows, ((0, Np - N), (0, 0), (0, 0)))

    # Fold the GAP 1/HW scale into the tiny (Cout, 1280) projection weight.
    pw_scaled = params["proj_w"] * (1.0 / HW)

    out = pl.pallas_call(
        cnn_fused_kernel,
        out_shape=jax.ShapeDtypeStruct((Np, CNN_FEATURES), jnp.float32),
        grid=(n_tiles,),
        in_specs=[
            pl.BlockSpec((TB, Cin, HW), lambda i: (i, 0, 0)),
            # Weights/biases: constant index_maps -> DMA'd once, resident.
            pl.BlockSpec((Cout, Cin), lambda i: (0, 0)),
            pl.BlockSpec((Cout, 1), lambda i: (0, 0)),
            pl.BlockSpec((Cout, BACKBONE_FEATURES), lambda i: (0, 0)),
            pl.BlockSpec((1, BACKBONE_FEATURES), lambda i: (0, 0)),
            pl.BlockSpec((BACKBONE_FEATURES, CNN_FEATURES), lambda i: (0, 0)),
            pl.BlockSpec((1, CNN_FEATURES), lambda i: (0, 0)),
        ],
        out_specs=pl.BlockSpec((TB, CNN_FEATURES), lambda i: (i, 0)),
        compiler_params=pltpu.CompilerParams(
            # Only shard the batch across TensorCores when there are >=2 full
            # tiles; for a single tiny tile, sharding would just duplicate the
            # resident-weight DMA on v7x.
            dimension_semantics=("parallel",) if n_tiles > 1
            else ("arbitrary",)),
    )(x_rows,
      params["map_w"], params["map_b"].reshape(Cout, 1),
      pw_scaled, params["proj_b"].reshape(1, BACKBONE_FEATURES),
      params["fc_w"], params["fc_b"].reshape(1, CNN_FEATURES))
    return out[:N]


# ---------------------------------------------------------------------------
# Parameter init (deterministic, synthetic) and a pure-JAX reference.
# ---------------------------------------------------------------------------
def init_params(key):
    k0, k1, k2, k3, k4, k5 = jax.random.split(key, 6)
    return {
        # nn.Conv2d(4, 3, kernel_size=1): PyTorch weight is (Cout, Cin, 1, 1);
        # stored here squeezed as (Cout=3, Cin=4).  A real checkpoint import
        # must keep this (Cout, Cin) layout (no transpose needed).
        "map_w": 0.1 * jax.random.normal(k0, (3, 4), jnp.float32),
        "map_b": 0.05 * jax.random.normal(k1, (3,), jnp.float32),
        # backbone stand-in projection 3 -> 1280 (tiny, kept f32)
        "proj_w": 0.1 * jax.random.normal(k2, (3, BACKBONE_FEATURES), jnp.float32),
        "proj_b": 0.01 * jax.random.normal(k3, (BACKBONE_FEATURES,), jnp.float32),
        # replaced _fc: Linear(1280 -> 256), stored (in, out) and in bf16 to
        # halve the dominant weight-DMA bytes (PyTorch layout is (out, in)).
        # TODO(synk): re-validate parity vs. an f32 checkpoint with the chosen
        # tolerance; on v5e/v6e int8 (+per-column scale) would halve it again.
        "fc_w": (0.02 * jax.random.normal(k4, (BACKBONE_FEATURES, CNN_FEATURES),
                                          jnp.float32)).astype(jnp.bfloat16),
        "fc_b": 0.01 * jax.random.normal(k5, (CNN_FEATURES,), jnp.float32),
    }


def cnn_forward_ref(params, x_nchw):
    N, Cin, H, W = x_nchw.shape
    x = x_nchw.reshape(N, Cin, H * W)
    y = jnp.einsum("oc,ncp->nop", params["map_w"], x) \
        + params["map_b"][None, :, None]
    y = jnp.maximum(y, 0.0)                              # relu(conv1x1)
    pooled = jnp.mean(y, axis=2)                         # (N, 3) GAP
    h = pooled @ params["proj_w"] + params["proj_b"]
    h = h * jax.nn.sigmoid(h)                            # swish
    out = jnp.dot(h.astype(jnp.bfloat16), params["fc_w"],
                  preferred_element_type=jnp.float32) + params["fc_b"]
    return out


@jax.jit
def cnn_forward(params, x_nchw):
    # x = F.relu(self.map(x)); out = self.net(x)  -- single fused Pallas kernel
    return cnn_forward_pallas(params, x_nchw)


if __name__ == "__main__":
    key = jax.random.PRNGKey(0)
    kx, kp = jax.random.split(key)
    # Small NCHW input consistent with Conv2d(in_channels=4, ...)
    x = jax.random.normal(kx, (2, 4, 16, 16), jnp.float32)
    params = init_params(kp)

    out = cnn_forward(params, x)
    out = jax.block_until_ready(out)

    assert out.shape == (2, CNN_FEATURES), out.shape
    assert bool(jnp.all(jnp.isfinite(out)))

    ref = jax.block_until_ready(cnn_forward_ref(params, x))
    assert jnp.allclose(out, ref, rtol=1e-2, atol=1e-3), \
        float(jnp.max(jnp.abs(out - ref)))

    print("KERNEL_OK")
</pallas_src>

<mosaic_0001>
module attributes {stable_mosaic.version = 11 : i64} {
  func.func @cnn_fused_kernel(%arg0: i32, %arg1: memref<2x4x256xf32, #tpu.memory_space<vmem>>, %arg2: memref<3x4xf32, #tpu.memory_space<vmem>>, %arg3: memref<3x1xf32, #tpu.memory_space<vmem>>, %arg4: memref<3x1280xf32, #tpu.memory_space<vmem>>, %arg5: memref<1x1280xf32, #tpu.memory_space<vmem>>, %arg6: memref<1280x256xbf16, #tpu.memory_space<vmem>>, %arg7: memref<1x256xf32, #tpu.memory_space<vmem>>, %arg8: memref<2x256xf32, #tpu.memory_space<vmem>>) attributes {dimension_semantics = [#tpu.dimension_semantics<arbitrary>], iteration_bounds = array<i64: 1>, scalar_prefetch = 0 : i64, scratch_operands = 0 : i64, tpu.core_type = #tpu.core_type<tc>, window_params = [{transform_indices = @transform_0, window_bounds = array<i64: 2, 4, 256>}, {pipeline_mode = #tpu.pipeline_mode<synchronous>, transform_indices = @transform_1, window_bounds = array<i64: 3, 4>}, {pipeline_mode = #tpu.pipeline_mode<synchronous>, transform_indices = @transform_2, window_bounds = array<i64: 3, 1>}, {pipeline_mode = #tpu.pipeline_mode<synchronous>, transform_indices = @transform_3, window_bounds = array<i64: 3, 1280>}, {pipeline_mode = #tpu.pipeline_mode<synchronous>, transform_indices = @transform_4, window_bounds = array<i64: 1, 1280>}, {pipeline_mode = #tpu.pipeline_mode<synchronous>, transform_indices = @transform_5, window_bounds = array<i64: 1280, 256>}, {pipeline_mode = #tpu.pipeline_mode<synchronous>, transform_indices = @transform_6, window_bounds = array<i64: 1, 256>}, {transform_indices = @transform_7, window_bounds = array<i64: 2, 256>}]} {
    %c0 = arith.constant 0 : index
    %c0_0 = arith.constant 0 : index
    %c0_1 = arith.constant 0 : index
    %0 = vector.load %arg1[%c0, %c0_0, %c0_1] : memref<2x4x256xf32, #tpu.memory_space<vmem>>, vector<2x4x256xf32>
    %c0_2 = arith.constant 0 : index
    %c0_3 = arith.constant 0 : index
    %1 = vector.load %arg2[%c0_2, %c0_3] : memref<3x4xf32, #tpu.memory_space<vmem>>, vector<3x4xf32>
    %2 = vector.extract_strided_slice %1 {offsets = [0, 0], sizes = [3, 1], strides = [1, 1]} : vector<3x4xf32> to vector<3x1xf32>
    %3 = vector.shape_cast %2 : vector<3x1xf32> to vector<1x3x1xf32>
    %4 = vector.extract_strided_slice %0 {offsets = [0, 0, 0], sizes = [2, 1, 256], strides = [1, 1, 1]} : vector<2x4x256xf32> to vector<2x1x256xf32>
    %5 = vector.broadcast %3 : vector<1x3x1xf32> to vector<2x3x256xf32>
    %6 = vector.broadcast %4 : vector<2x1x256xf32> to vector<2x3x256xf32>
    %7 = arith.mulf %5, %6 : vector<2x3x256xf32>
    %8 = vector.extract_strided_slice %1 {offsets = [0, 1], sizes = [3, 1], strides = [1, 1]} : vector<3x4xf32> to vector<3x1xf32>
    %9 = vector.shape_cast %8 : vector<3x1xf32> to vector<1x3x1xf32>
    %10 = vector.extract_strided_slice %0 {offsets = [0, 1, 0], sizes = [2, 1, 256], strides = [1, 1, 1]} : vector<2x4x256xf32> to vector<2x1x256xf32>
    %11 = vector.broadcast %9 : vector<1x3x1xf32> to vector<2x3x256xf32>
    %12 = vector.broadcast %10 : vector<2x1x256xf32> to vector<2x3x256xf32>
    %13 = arith.mulf %11, %12 : vector<2x3x256xf32>
    %14 = arith.addf %7, %13 : vector<2x3x256xf32>
    %15 = vector.extract_strided_slice %1 {offsets = [0, 2], sizes = [3, 1], strides = [1, 1]} : vector<3x4xf32> to vector<3x1xf32>
    %16 = vector.shape_cast %15 : vector<3x1xf32> to vector<1x3x1xf32>
    %17 = vector.extract_strided_slice %0 {offsets = [0, 2, 0], sizes = [2, 1, 256], strides = [1, 1, 1]} : vector<2x4x256xf32> to vector<2x1x256xf32>
    %18 = vector.broadcast %16 : vector<1x3x1xf32> to vector<2x3x256xf32>
    %19 = vector.broadcast %17 : vector<2x1x256xf32> to vector<2x3x256xf32>
    %20 = arith.mulf %18, %19 : vector<2x3x256xf32>
    %21 = arith.addf %14, %20 : vector<2x3x256xf32>
    %22 = vector.extract_strided_slice %1 {offsets = [0, 3], sizes = [3, 1], strides = [1, 1]} : vector<3x4xf32> to vector<3x1xf32>
    %23 = vector.shape_cast %22 : vector<3x1xf32> to vector<1x3x1xf32>
    %24 = vector.extract_strided_slice %0 {offsets = [0, 3, 0], sizes = [2, 1, 256], strides = [1, 1, 1]} : vector<2x4x256xf32> to vector<2x1x256xf32>
    %25 = vector.broadcast %23 : vector<1x3x1xf32> to vector<2x3x256xf32>
    %26 = vector.broadcast %24 : vector<2x1x256xf32> to vector<2x3x256xf32>
    %27 = arith.mulf %25, %26 : vector<2x3x256xf32>
    %28 = arith.addf %21, %27 : vector<2x3x256xf32>
    %c0_4 = arith.constant 0 : index
    %c0_5 = arith.constant 0 : index
    %29 = vector.load %arg3[%c0_4, %c0_5] : memref<3x1xf32, #tpu.memory_space<vmem>>, vector<3x1xf32>
    %30 = vector.shape_cast %29 : vector<3x1xf32> to vector<1x3x1xf32>
    %31 = vector.broadcast %30 : vector<1x3x1xf32> to vector<2x3x256xf32>
    %32 = arith.addf %28, %31 : vector<2x3x256xf32>
    %cst = arith.constant 0.000000e+00 : f32
    %33 = vector.broadcast %cst : f32 to vector<2x3x256xf32>
    %34 = arith.maximumf %32, %33 : vector<2x3x256xf32>
    %cst_6 = arith.constant dense<0.000000e+00> : vector<2x3xf32>
    %35 = vector.multi_reduction <add>, %34, %cst_6 [2] : vector<2x3x256xf32> to vector<2x3xf32>
    %36 = vector.extract_strided_slice %35 {offsets = [0, 0], sizes = [2, 1], strides = [1, 1]} : vector<2x3xf32> to vector<2x1xf32>
    %c0_7 = arith.constant 0 : index
    %c0_8 = arith.constant 0 : index
    %37 = vector.load %arg4[%c0_7, %c0_8] : memref<3x1280xf32, #tpu.memory_space<vmem>>, vector<1x1280xf32>
    %38 = vector.broadcast %36 : vector<2x1xf32> to vector<2x1280xf32>
    %39 = vector.broadcast %37 : vector<1x1280xf32> to vector<2x1280xf32>
    %40 = arith.mulf %38, %39 : vector<2x1280xf32>
    %41 = vector.extract_strided_slice %35 {offsets = [0, 1], sizes = [2, 1], strides = [1, 1]} : vector<2x3xf32> to vector<2x1xf32>
    %c1 = arith.constant 1 : index
    %c0_9 = arith.constant 0 : index
    %42 = vector.load %arg4[%c1, %c0_9] : memref<3x1280xf32, #tpu.memory_space<vmem>>, vector<1x1280xf32>
    %43 = vector.broadcast %41 : vector<2x1xf32> to vector<2x1280xf32>
    %44 = vector.broadcast %42 : vector<1x1280xf32> to vector<2x1280xf32>
    %45 = arith.mulf %43, %44 : vector<2x1280xf32>
    %46 = arith.addf %40, %45 : vector<2x1280xf32>
    %47 = vector.extract_strided_slice %35 {offsets = [0, 2], sizes = [2, 1], strides = [1, 1]} : vector<2x3xf32> to vector<2x1xf32>
    %c2 = arith.constant 2 : index
    %c0_10 = arith.constant 0 : index
    %48 = vector.load %arg4[%c2, %c0_10] : memref<3x1280xf32, #tpu.memory_space<vmem>>, vector<1x1280xf32>
    %49 = vector.broadcast %47 : vector<2x1xf32> to vector<2x1280xf32>
    %50 = vector.broadcast %48 : vector<1x1280xf32> to vector<2x1280xf32>
    %51 = arith.mulf %49, %50 : vector<2x1280xf32>
    %52 = arith.addf %46, %51 : vector<2x1280xf32>
    %c0_11 = arith.constant 0 : index
    %c0_12 = arith.constant 0 : index
    %53 = vector.load %arg5[%c0_11, %c0_12] : memref<1x1280xf32, #tpu.memory_space<vmem>>, vector<1x1280xf32>
    %54 = vector.broadcast %53 : vector<1x1280xf32> to vector<2x1280xf32>
    %55 = arith.addf %52, %54 : vector<2x1280xf32>
    %cst_13 = arith.constant 0.000000e+00 : f32
    %56 = vector.broadcast %cst_13 : f32 to vector<2x1280xf32>
    %57 = arith.subf %56, %55 : vector<2x1280xf32>
    %58 = math.exp %57 : vector<2x1280xf32>
    %cst_14 = arith.constant 1.000000e+00 : f32
    %59 = vector.broadcast %cst_14 : f32 to vector<2x1280xf32>
    %60 = arith.addf %59, %58 : vector<2x1280xf32>
    %cst_15 = arith.constant 1.000000e+00 : f32
    %61 = vector.broadcast %cst_15 : f32 to vector<2x1280xf32>
    %62 = arith.divf %61, %60 : vector<2x1280xf32>
    %63 = arith.mulf %55, %62 : vector<2x1280xf32>
    %64 = arith.truncf %63 : vector<2x1280xf32> to vector<2x1280xbf16>
    %c0_16 = arith.constant 0 : index
    %c0_17 = arith.constant 0 : index
    %65 = vector.load %arg6[%c0_16, %c0_17] : memref<1280x256xbf16, #tpu.memory_space<vmem>>, vector<1280x256xbf16>
    %cst_18 = arith.constant dense<0.000000e+00> : vector<2x256xf32>
    %66 = tpu.matmul %64, %65, %cst_18 {dimension_numbers = #tpu.dot_dimension_numbers<[1], [0], [0], [1], [0, 0, 1, 1], [], []>} : vector<2x1280xbf16>, vector<1280x256xbf16>, vector<2x256xf32> -> vector<2x256xf32>
    %c0_19 = arith.constant 0 : index
    %c0_20 = arith.constant 0 : index
    %67 = vector.load %arg7[%c0_19, %c0_20] : memref<1x256xf32, #tpu.memory_space<vmem>>, vector<1x256xf32>
    %68 = vector.broadcast %67 : vector<1x256xf32> to vector<2x256xf32>
    %69 = arith.addf %66, %68 : vector<2x256xf32>
    %c0_21 = arith.constant 0 : index
    %c0_22 = arith.constant 0 : index
    %70 = vector.load %arg8[%c0_21, %c0_22] : memref<2x256xf32, #tpu.memory_space<vmem>>, vector<2x256xf32>
    tpu.vector_store %arg8[%c0_21, %c0_22], %69 {strides = array<i32>} : memref<2x256xf32, #tpu.memory_space<vmem>>, vector<2x256xf32>,
    return
  }
  func.func @transform_0(%arg0: i32) -> (i32, i32, i32) {
    %c0_i32 = arith.constant 0 : i32
    %c0_i32_0 = arith.constant 0 : i32
    %c0_i32_1 = arith.constant 0 : i32
    return %arg0, %c0_i32, %c0_i32_0 : i32, i32, i32
  }
  func.func @transform_1(%arg0: i32) -> (i32, i32) {
    %c0_i32 = arith.constant 0 : i32
    %c0_i32_0 = arith.constant 0 : i32
    %c0_i32_1 = arith.constant 0 : i32
    return %c0_i32, %c0_i32_0 : i32, i32
  }
  func.func @transform_2(%arg0: i32) -> (i32, i32) {
    %c0_i32 = arith.constant 0 : i32
    %c0_i32_0 = arith.constant 0 : i32
    %c0_i32_1 = arith.constant 0 : i32
    return %c0_i32, %c0_i32_0 : i32, i32
  }
  func.func @transform_3(%arg0: i32) -> (i32, i32) {
    %c0_i32 = arith.constant 0 : i32
    %c0_i32_0 = arith.constant 0 : i32
    %c0_i32_1 = arith.constant 0 : i32
    return %c0_i32, %c0_i32_0 : i32, i32
  }
  func.func @transform_4(%arg0: i32) -> (i32, i32) {
    %c0_i32 = arith.constant 0 : i32
    %c0_i32_0 = arith.constant 0 : i32
    %c0_i32_1 = arith.constant 0 : i32
    return %c0_i32, %c0_i32_0 : i32, i32
  }
  func.func @transform_5(%arg0: i32) -> (i32, i32) {
    %c0_i32 = arith.constant 0 : i32
    %c0_i32_0 = arith.constant 0 : i32
    %c0_i32_1 = arith.constant 0 : i32
    return %c0_i32, %c0_i32_0 : i32, i32
  }
  func.func @transform_6(%arg0: i32) -> (i32, i32) {
    %c0_i32 = arith.constant 0 : i32
    %c0_i32_0 = arith.constant 0 : i32
    %c0_i32_1 = arith.constant 0 : i32
    return %c0_i32, %c0_i32_0 : i32, i32
  }
  func.func @transform_7(%arg0: i32) -> (i32, i32) {
    %c0_i32 = arith.constant 0 : i32
    %c0_i32_0 = arith.constant 0 : i32
    return %arg0, %c0_i32 : i32, i32
  }
}

</mosaic_0001>

<llo_original>
// kernel: cnn_forward.1
$region0: #{cnn_forward.1}
  #allocation0 [shape = 'u32[]', space=smem, size = 0x4, offset = 0x4, fixed_abs, tag = 'smem constant byte address 0x4 - core index']
  #allocation1 [shape = 'u32[144,128]{1,0:T(1,128)}', space=vmem, size = 0x12000, scoped, tag = 'internal scratch']
  %s0 = inlined_call_operand.vmem [shape: f32[2,4,256], index: 0, kind: input, shape index: {}]
  %s1 = inlined_call_operand.vmem [shape: f32[3,4], index: 1, kind: input, shape index: {}]
  %s2 = inlined_call_operand.vmem [shape: f32[3,1], index: 2, kind: input, shape index: {}]
  %s3 = inlined_call_operand.vmem [shape: f32[3,1280], index: 3, kind: input, shape index: {}]
  %s4 = inlined_call_operand.vmem [shape: f32[1,1280], index: 4, kind: input, shape index: {}]
  %s5 = inlined_call_operand.hbm [shape: bf16[1280,256], index: 5, kind: input, shape index: {}]
  %s6 = inlined_call_operand.vmem [shape: f32[1,256], index: 6, kind: input, shape index: {}]
  %s7 = inlined_call_operand.hbm [shape: f32[2,256], index: 7, kind: output, shape index: {}]
  %s8 = sld [smem:[#allocation0]]
  $region42: #{cnn_forward.1} parent=0
    _
  %s10 = ssub.s32 1, %s8
  %s11 = scalar_select 0, %s10, %s8
  $region1: #{cnn_forward.1} parent=0
    #allocation2 [shape = 'u8[655360]{0}', space=vmem, size = 0xa0000, scoped, tag = 'input window, operand 5, single buffered']
    #allocation3 [shape = 's32[1]{0}', space=sflag, size = 0x4, scoped, tag = 'scoped memory for cnn_forward.1']
    #allocation4 [shape = 's32[1]{0}', space=sflag, size = 0x4, scoped, tag = 'scoped memory for cnn_forward.1']
    #allocation5 [shape = 'u8[2048]{0}', space=vmem, size = 0x800, scoped, tag = 'output window, operand 0, single buffered']
    %12 = vsyncpa [#allocation3], 0
    %13 = vsyncpa [#allocation4], 0
    // Predicated region
    $region2: #{cnn_forward.1} parent=1 // pred_check
      _
    $region3: #{cnn_forward.1} parent=1 // pred_check_branch
      %15 = sbr.rel (0) target = $region5
    $region4: #{cnn_forward.1} parent=1 // pred_region
      _
    $region5: #{cnn_forward.1} parent=1 // pred_fallthru
      _
    // Predicated region
    $region6: #{cnn_forward.1} parent=1 // pred_check
      _
    $region7: #{cnn_forward.1} parent=1 // pred_check_branch
      %17 = sbr.rel (0) target = $region9
    $region8: #{cnn_forward.1} parent=1 // pred_region
      _
    $region9: #{cnn_forward.1} parent=1 // pred_fallthru
      _
    // Predicated region
    $region10: #{cnn_forward.1} parent=1 // pred_check
      _
    $region11: #{cnn_forward.1} parent=1 // pred_check_branch
      %19 = sbr.rel (0) target = $region13
    $region12: #{cnn_forward.1} parent=1 // pred_region
      _
    $region13: #{cnn_forward.1} parent=1 // pred_fallthru
      _
    // Predicated region
    $region14: #{cnn_forward.1} parent=1 // pred_check
      _
    $region15: #{cnn_forward.1} parent=1 // pred_check_branch
      %21 = sbr.rel (0) target = $region17
    $region16: #{cnn_forward.1} parent=1 // pred_region
      _
    $region17: #{cnn_forward.1} parent=1 // pred_fallthru
      _
    // Predicated region
    $region18: #{cnn_forward.1} parent=1 // pred_check
      _
    $region19: #{cnn_forward.1} parent=1 // pred_check_branch
      %23 = sbr.rel (0) target = $region21
    $region20: #{cnn_forward.1} parent=1 // pred_region
      _
    $region21: #{cnn_forward.1} parent=1 // pred_fallthru
      _
    // Predicated region
    $region22: #{cnn_forward.1} parent=1 // pred_check
      _
    $region23: #{cnn_forward.1} parent=1 // pred_check_branch
      %25 = sbr.rel (0) target = $region25
    $region24: #{cnn_forward.1} parent=1 // pred_region
      %s27 = ssub.s32 20480, 20480
      %28 = vsyncadd [#allocation3], %s27
      %s29 = sshll.u32 [#allocation2], 4
      %s30 = int_to_ptr.vmem [resolvable:$true] %s29
      %35 = dma.hbm_to_vmem [thread:$0]  %s5, 20480, %s30, [#allocation3], 128, 128, 8
    $region25: #{cnn_forward.1} parent=1 // pred_fallthru
      _
    // Predicated region
    $region26: #{cnn_forward.1} parent=1 // pred_check
      _
    $region27: #{cnn_forward.1} parent=1 // pred_check_branch
      %37 = sbr.rel (0) target = $region29
    $region28: #{cnn_forward.1} parent=1 // pred_region
      _
    $region29: #{cnn_forward.1} parent=1 // pred_fallthru
      _
    // Predicated region
    $region30: #{cnn_forward.1} parent=1 // pred_check
      _
    $region31: #{cnn_forward.1} parent=1 // pred_check_branch
      %39 = sbr.rel (0) target = $region33
    $region32: #{cnn_forward.1} parent=1 // pred_region
      %40 = dma.done [#allocation3], 20480
    $region33: #{cnn_forward.1} parent=1 // pred_fallthru
      _
    %v41 = vld [vmem:[%s0] sm:$0xff]
    %v42 = vld [vmem:[%s0 + $0x8] sm:$0xff]
    %v43 = vld [vmem:[%s1] sm:$0x7]
    %45 = vset.pattern.permute.xlu0 0
    %46 = vperm.xlu0 %45, %v43
    %v47 = vpop.permute.xlu0 %46
    %v51 = vlaneseq
    %v52 = vshrl.u32 %v51, 7
    %v53 = vsub.s32 0, %v52
    %v54 = vrot.slane %v41, %v53
    %v55 = vlaneseq
    %v56 = vshrl.u32 %v55, 7
    %v57 = vsub.s32 4, %v56
    %v58 = vrot.slane %v41, %v57
    %v59 = vlaneseq
    %v60 = vshrl.u32 %v59, 7
    %v61 = vsub.s32 0, %v60
    %v62 = vrot.slane %v42, %v61
    %v63 = vlaneseq
    %v64 = vshrl.u32 %v63, 7
    %v65 = vsub.s32 4, %v64
    %v66 = vrot.slane %v42, %v65
    %v71 = vlaneseq
    %v72 = vshrl.u32 %v71, 7
    %v73 = vsub.s32 0, %v72
    %v74 = vrot.slane %v54, %v73
    %v75 = vlaneseq
    %v76 = vshrl.u32 %v75, 7
    %v77 = vsub.s32 0, %v76
    %v78 = vrot.slane %v58, %v77
    %v79 = vlaneseq
    %v80 = vshrl.u32 %v79, 7
    %v81 = vsub.s32 0, %v80
    %v82 = vrot.slane %v62, %v81
    %v83 = vlaneseq
    %v84 = vshrl.u32 %v83, 7
    %v85 = vsub.s32 0, %v84
    %v86 = vrot.slane %v66, %v85
    %v87 = vmul.f32 %v47, %v74
    %v88 = vmul.f32 %v47, %v78
    %v89 = vmul.f32 %v47, %v82
    %v90 = vmul.f32 %v47, %v86
    %91 = vset.pattern.permute.xlu0 1
    %92 = vperm.xlu0 %91, %v43
    %v93 = vpop.permute.xlu0 %92
    %v95 = vlaneseq
    %v96 = vshrl.u32 %v95, 7
    %v97 = vsub.s32 1, %v96
    %v98 = vrot.slane %v41, %v97
    %v99 = vlaneseq
    %v100 = vshrl.u32 %v99, 7
    %v101 = vsub.s32 5, %v100
    %v102 = vrot.slane %v41, %v101
    %v103 = vlaneseq
    %v104 = vshrl.u32 %v103, 7
    %v105 = vsub.s32 1, %v104
    %v106 = vrot.slane %v42, %v105
    %v107 = vlaneseq
    %v108 = vshrl.u32 %v107, 7
    %v109 = vsub.s32 5, %v108
    %v110 = vrot.slane %v42, %v109
    %v115 = vlaneseq
    %v116 = vshrl.u32 %v115, 7
    %v117 = vsub.s32 1, %v116
    %v118 = vrot.slane %v98, %v117
    %v119 = vlaneseq
    %v120 = vshrl.u32 %v119, 7
    %v121 = vsub.s32 1, %v120
    %v122 = vrot.slane %v102, %v121
    %v123 = vlaneseq
    %v124 = vshrl.u32 %v123, 7
    %v125 = vsub.s32 1, %v124
    %v126 = vrot.slane %v106, %v125
    %v127 = vlaneseq
    %v128 = vshrl.u32 %v127, 7
    %v129 = vsub.s32 1, %v128
    %v130 = vrot.slane %v110, %v129
    %v131 = vmul.f32 %v93, %v118
    %v132 = vmul.f32 %v93, %v122
    %v133 = vmul.f32 %v93, %v126
    %v134 = vmul.f32 %v93, %v130
    %v135 = vadd.f32 %v87, %v131
    %v136 = vadd.f32 %v88, %v132
    %v137 = vadd.f32 %v89, %v133
    %v138 = vadd.f32 %v90, %v134
    %139 = vset.pattern.permute.xlu0 2
    %140 = vperm.xlu0 %139, %v43
    %v141 = vpop.permute.xlu0 %140
    %v143 = vlaneseq
    %v144 = vshrl.u32 %v143, 7
    %v145 = vsub.s32 2, %v144
    %v146 = vrot.slane %v41, %v145
    %v147 = vlaneseq
    %v148 = vshrl.u32 %v147, 7
    %v149 = vsub.s32 6, %v148
    %v150 = vrot.slane %v41, %v149
    %v151 = vlaneseq
    %v152 = vshrl.u32 %v151, 7
    %v153 = vsub.s32 2, %v152
    %v154 = vrot.slane %v42, %v153
    %v155 = vlaneseq
    %v156 = vshrl.u32 %v155, 7
    %v157 = vsub.s32 6, %v156
    %v158 = vrot.slane %v42, %v157
    %v163 = vlaneseq
    %v164 = vshrl.u32 %v163, 7
    %v165 = vsub.s32 2, %v164
    %v166 = vrot.slane %v146, %v165
    %v167 = vlaneseq
    %v168 = vshrl.u32 %v167, 7
    %v169 = vsub.s32 2, %v168
    %v170 = vrot.slane %v150, %v169
    %v171 = vlaneseq
    %v172 = vshrl.u32 %v171, 7
    %v173 = vsub.s32 2, %v172
    %v174 = vrot.slane %v154, %v173
    %v175 = vlaneseq
    %v176 = vshrl.u32 %v175, 7
    %v177 = vsub.s32 2, %v176
    %v178 = vrot.slane %v158, %v177
    %v179 = vmul.f32 %v141, %v166
    %v180 = vmul.f32 %v141, %v170
    %v181 = vmul.f32 %v141, %v174
    %v182 = vmul.f32 %v141, %v178
    %v183 = vadd.f32 %v135, %v179
    %v184 = vadd.f32 %v136, %v180
    %v185 = vadd.f32 %v137, %v181
    %v186 = vadd.f32 %v138, %v182
    %187 = vset.pattern.permute.xlu0 3
    %188 = vperm.xlu0 %187, %v43
    %v189 = vpop.permute.xlu0 %188
    %v191 = vlaneseq
    %v192 = vshrl.u32 %v191, 7
    %v193 = vsub.s32 3, %v192
    %v194 = vrot.slane %v41, %v193
    %v195 = vlaneseq
    %v196 = vshrl.u32 %v195, 7
    %v197 = vsub.s32 7, %v196
    %v198 = vrot.slane %v41, %v197
    %v199 = vlaneseq
    %v200 = vshrl.u32 %v199, 7
    %v201 = vsub.s32 3, %v200
    %v202 = vrot.slane %v42, %v201
    %v203 = vlaneseq
    %v204 = vshrl.u32 %v203, 7
    %v205 = vsub.s32 7, %v204
    %v206 = vrot.slane %v42, %v205
    %v211 = vlaneseq
    %v212 = vshrl.u32 %v211, 7
    %v213 = vsub.s32 3, %v212
    %v214 = vrot.slane %v194, %v213
    %v215 = vlaneseq
    %v216 = vshrl.u32 %v215, 7
    %v217 = vsub.s32 3, %v216
    %v218 = vrot.slane %v198, %v217
    %v219 = vlaneseq
    %v220 = vshrl.u32 %v219, 7
    %v221 = vsub.s32 3, %v220
    %v222 = vrot.slane %v202, %v221
    %v223 = vlaneseq
    %v224 = vshrl.u32 %v223, 7
    %v225 = vsub.s32 3, %v224
    %v226 = vrot.slane %v206, %v225
    %v227 = vmul.f32 %v189, %v214
    %v228 = vmul.f32 %v189, %v218
    %v229 = vmul.f32 %v189, %v222
    %v230 = vmul.f32 %v189, %v226
    %v231 = vadd.f32 %v183, %v227
    %v232 = vadd.f32 %v184, %v228
    %v233 = vadd.f32 %v185, %v229
    %v234 = vadd.f32 %v186, %v230
    %v235 = vld [vmem:[%s2] sm:$0x7]
    %237 = vset.pattern.permute.xlu0 0
    %238 = vperm.xlu0 %237, %v235
    %v239 = vpop.permute.xlu0 %238
    %v241 = vadd.f32 %v231, %v239
    %v242 = vadd.f32 %v232, %v239
    %v243 = vadd.f32 %v233, %v239
    %v244 = vadd.f32 %v234, %v239
    %v245 = vmax.f32 %v241, 0.0
    %v246 = vmax.f32 %v242, 0.0
    %v247 = vmax.f32 %v243, 0.0
    %v248 = vmax.f32 %v244, 0.0
    %vm249 = vcmask 1042432
    %v250 = vsel %vm249, %v245, 0.0
    %v251 = vsel %vm249, %v246, 0.0
    %v252 = vadd.f32 %v250, %v251
    %253 = vadd.xlane.f32.xlu0 %v252
    %v254 = vpop.xlane.xlu0 %253
    %v255 = vsel %vm249, %v247, 0.0
    %v256 = vsel %vm249, %v248, 0.0
    %v257 = vadd.f32 %v255, %v256
    %258 = vadd.xlane.f32.xlu0 %v257
    %v259 = vpop.xlane.xlu0 %258
    %v260 = vld [vmem:[%s3] ss:$4 sm:$0xff]
    %s261 = scalar_lea.vmem %s3, 32
    %v262 = vld [vmem:[%s261] ss:$4 sm:$0x3]
    %v263 = vlaneseq
    %v264 = vshrl.u32 %v263, 7
    %v265 = vsub.s32 0, %v264
    %v266 = vrot.slane %v254, %v265
    %v267 = vlaneseq
    %v268 = vshrl.u32 %v267, 7
    %v269 = vsub.s32 0, %v268
    %v270 = vrot.slane %v259, %v269
    %v273 = vlaneseq
    %v274 = vshrl.u32 %v273, 7
    %v275 = vsub.s32 0, %v274
    %v276 = vrot.slane %v260, %v275
    %v277 = vlaneseq
    %v278 = vshrl.u32 %v277, 7
    %v279 = vsub.s32 1, %v278
    %v280 = vrot.slane %v260, %v279
    %v281 = vlaneseq
    %v282 = vshrl.u32 %v281, 7
    %v283 = vsub.s32 2, %v282
    %v284 = vrot.slane %v260, %v283
    %v285 = vlaneseq
    %v286 = vshrl.u32 %v285, 7
    %v287 = vsub.s32 3, %v286
    %v288 = vrot.slane %v260, %v287
    %v289 = vlaneseq
    %v290 = vshrl.u32 %v289, 7
    %v291 = vsub.s32 4, %v290
    %v292 = vrot.slane %v260, %v291
    %v293 = vlaneseq
    %v294 = vshrl.u32 %v293, 7
    %v295 = vsub.s32 5, %v294
    %v296 = vrot.slane %v260, %v295
    %v297 = vlaneseq
    %v298 = vshrl.u32 %v297, 7
    %v299 = vsub.s32 6, %v298
    %v300 = vrot.slane %v260, %v299
    %v301 = vlaneseq
    %v302 = vshrl.u32 %v301, 7
    %v303 = vsub.s32 7, %v302
    %v304 = vrot.slane %v260, %v303
    %v305 = vlaneseq
    %v306 = vshrl.u32 %v305, 7
    %v307 = vsub.s32 0, %v306
    %v308 = vrot.slane %v262, %v307
    %v309 = vlaneseq
    %v310 = vshrl.u32 %v309, 7
    %v311 = vsub.s32 1, %v310
    %v312 = vrot.slane %v262, %v311
    %314 = vbcast.lane.b32.xlu0 %v276, 256
    %v315 = vpop.permute.xlu0 %314
    %s317 = sor.u32 256, 8
    %318 = vbcast.lane.b32.xlu0 %v276, %s317
    %v319 = vpop.permute.xlu0 %318
    %s321 = sor.u32 256, 16
    %322 = vbcast.lane.b32.xlu0 %v276, %s321
    %v323 = vpop.permute.xlu0 %322
    %s325 = sor.u32 256, 24
    %326 = vbcast.lane.b32.xlu0 %v276, %s325
    %v327 = vpop.permute.xlu0 %326
    %s329 = sor.u32 256, 32
    %330 = vbcast.lane.b32.xlu0 %v276, %s329
    %v331 = vpop.permute.xlu0 %330
    %s333 = sor.u32 256, 40
    %334 = vbcast.lane.b32.xlu0 %v276, %s333
    %v335 = vpop.permute.xlu0 %334
    %s337 = sor.u32 256, 48
    %338 = vbcast.lane.b32.xlu0 %v276, %s337
    %v339 = vpop.permute.xlu0 %338
    %s341 = sor.u32 256, 56
    %342 = vbcast.lane.b32.xlu0 %v276, %s341
    %v343 = vpop.permute.xlu0 %342
    %s345 = sor.u32 256, 64
    %346 = vbcast.lane.b32.xlu0 %v276, %s345
    %v347 = vpop.permute.xlu0 %346
    %s349 = sor.u32 256, 72
    %350 = vbcast.lane.b32.xlu0 %v276, %s349
    %v351 = vpop.permute.xlu0 %350
    %s353 = sor.u32 256, 80
    %354 = vbcast.lane.b32.xlu0 %v276, %s353
    %v355 = vpop.permute.xlu0 %354
    %s357 = sor.u32 256, 88
    %358 = vbcast.lane.b32.xlu0 %v276, %s357
    %v359 = vpop.permute.xlu0 %358
    %s361 = sor.u32 256, 96
    %362 = vbcast.lane.b32.xlu0 %v276, %s361
    %v363 = vpop.permute.xlu0 %362
    %s365 = sor.u32 256, 104
    %366 = vbcast.lane.b32.xlu0 %v276, %s365
    %v367 = vpop.permute.xlu0 %366
    %s369 = sor.u32 256, 112
    %370 = vbcast.lane.b32.xlu0 %v276, %s369
    %v371 = vpop.permute.xlu0 %370
    %s373 = sor.u32 256, 120
    %374 = vbcast.lane.b32.xlu0 %v276, %s373
    %v375 = vpop.permute.xlu0 %374
    %377 = vbcast.lane.b32.xlu0 %v280, 256
    %v378 = vpop.permute.xlu0 %377
    %s380 = sor.u32 256, 8
    %381 = vbcast.lane.b32.xlu0 %v280, %s380
    %v382 = vpop.permute.xlu0 %381
    %s384 = sor.u32 256, 16
    %385 = vbcast.lane.b32.xlu0 %v280, %s384
    %v386 = vpop.permute.xlu0 %385
    %s388 = sor.u32 256, 24
    %389 = vbcast.lane.b32.xlu0 %v280, %s388
    %v390 = vpop.permute.xlu0 %389
    %s392 = sor.u32 256, 32
    %393 = vbcast.lane.b32.xlu0 %v280, %s392
    %v394 = vpop.permute.xlu0 %393
    %s396 = sor.u32 256, 40
    %397 = vbcast.lane.b32.xlu0 %v280, %s396
    %v398 = vpop.permute.xlu0 %397
    %s400 = sor.u32 256, 48
    %401 = vbcast.lane.b32.xlu0 %v280, %s400
    %v402 = vpop.permute.xlu0 %401
    %s404 = sor.u32 256, 56
    %405 = vbcast.lane.b32.xlu0 %v280, %s404
    %v406 = vpop.permute.xlu0 %405
    %s408 = sor.u32 256, 64
    %409 = vbcast.lane.b32.xlu0 %v280, %s408
    %v410 = vpop.permute.xlu0 %409
    %s412 = sor.u32 256, 72
    %413 = vbcast.lane.b32.xlu0 %v280, %s412
    %v414 = vpop.permute.xlu0 %413
    %s416 = sor.u32 256, 80
    %417 = vbcast.lane.b32.xlu0 %v280, %s416
    %v418 = vpop.permute.xlu0 %417
    %s420 = sor.u32 256, 88
    %421 = vbcast.lane.b32.xlu0 %v280, %s420
    %v422 = vpop.permute.xlu0 %421
    %s424 = sor.u32 256, 96
    %425 = vbcast.lane.b32.xlu0 %v280, %s424
    %v426 = vpop.permute.xlu0 %425
    %s428 = sor.u32 256, 104
    %429 = vbcast.lane.b32.xlu0 %v280, %s428
    %v430 = vpop.permute.xlu0 %429
    %s432 = sor.u32 256, 112
    %433 = vbcast.lane.b32.xlu0 %v280, %s432
    %v434 = vpop.permute.xlu0 %433
    %s436 = sor.u32 256, 120
    %437 = vbcast.lane.b32.xlu0 %v280, %s436
    %v438 = vpop.permute.xlu0 %437
    %440 = vbcast.lane.b32.xlu0 %v284, 256
    %v441 = vpop.permute.xlu0 %440
    %s443 = sor.u32 256, 8
    %444 = vbcast.lane.b32.xlu0 %v284, %s443
    %v445 = vpop.permute.xlu0 %444
    %s447 = sor.u32 256, 16
    %448 = vbcast.lane.b32.xlu0 %v284, %s447
    %v449 = vpop.permute.xlu0 %448
    %s451 = sor.u32 256, 24
    %452 = vbcast.lane.b32.xlu0 %v284, %s451
    %v453 = vpop.permute.xlu0 %452
    %s455 = sor.u32 256, 32
    %456 = vbcast.lane.b32.xlu0 %v284, %s455
    %v457 = vpop.permute.xlu0 %456
    %s459 = sor.u32 256, 40
    %460 = vbcast.lane.b32.xlu0 %v284, %s459
    %v461 = vpop.permute.xlu0 %460
    %s463 = sor.u32 256, 48
    %464 = vbcast.lane.b32.xlu0 %v284, %s463
    %v465 = vpop.permute.xlu0 %464
    %s467 = sor.u32 256, 56
    %468 = vbcast.lane.b32.xlu0 %v284, %s467
    %v469 = vpop.permute.xlu0 %468
    %s471 = sor.u32 256, 64
    %472 = vbcast.lane.b32.xlu0 %v284, %s471
    %v473 = vpop.permute.xlu0 %472
    %s475 = sor.u32 256, 72
    %476 = vbcast.lane.b32.xlu0 %v284, %s475
    %v477 = vpop.permute.xlu0 %476
    %s479 = sor.u32 256, 80
    %480 = vbcast.lane.b32.xlu0 %v284, %s479
    %v481 = vpop.permute.xlu0 %480
    %s483 = sor.u32 256, 88
    %484 = vbcast.lane.b32.xlu0 %v284, %s483
    %v485 = vpop.permute.xlu0 %484
    %s487 = sor.u32 256, 96
    %488 = vbcast.lane.b32.xlu0 %v284, %s487
    %v489 = vpop.permute.xlu0 %488
    %s491 = sor.u32 256, 104
    %492 = vbcast.lane.b32.xlu0 %v284, %s491
    %v493 = vpop.permute.xlu0 %492
    %s495 = sor.u32 256, 112
    %496 = vbcast.lane.b32.xlu0 %v284, %s495
    %v497 = vpop.permute.xlu0 %496
    %s499 = sor.u32 256, 120
    %500 = vbcast.lane.b32.xlu0 %v284, %s499
    %v501 = vpop.permute.xlu0 %500
    %503 = vbcast.lane.b32.xlu0 %v288, 256
    %v504 = vpop.permute.xlu0 %503
    %s506 = sor.u32 256, 8
    %507 = vbcast.lane.b32.xlu0 %v288, %s506
    %v508 = vpop.permute.xlu0 %507
    %s510 = sor.u32 256, 16
    %511 = vbcast.lane.b32.xlu0 %v288, %s510
    %v512 = vpop.permute.xlu0 %511
    %s514 = sor.u32 256, 24
    %515 = vbcast.lane.b32.xlu0 %v288, %s514
    %v516 = vpop.permute.xlu0 %515
    %s518 = sor.u32 256, 32
    %519 = vbcast.lane.b32.xlu0 %v288, %s518
    %v520 = vpop.permute.xlu0 %519
    %s522 = sor.u32 256, 40
    %523 = vbcast.lane.b32.xlu0 %v288, %s522
    %v524 = vpop.permute.xlu0 %523
    %s526 = sor.u32 256, 48
    %527 = vbcast.lane.b32.xlu0 %v288, %s526
    %v528 = vpop.permute.xlu0 %527
    %s530 = sor.u32 256, 56
    %531 = vbcast.lane.b32.xlu0 %v288, %s530
    %v532 = vpop.permute.xlu0 %531
    %s534 = sor.u32 256, 64
    %535 = vbcast.lane.b32.xlu0 %v288, %s534
    %v536 = vpop.permute.xlu0 %535
    %s538 = sor.u32 256, 72
    %539 = vbcast.lane.b32.xlu0 %v288, %s538
    %v540 = vpop.permute.xlu0 %539
    %s542 = sor.u32 256, 80
    %543 = vbcast.lane.b32.xlu0 %v288, %s542
    %v544 = vpop.permute.xlu0 %543
    %s546 = sor.u32 256, 88
    %547 = vbcast.lane.b32.xlu0 %v288, %s546
    %v548 = vpop.permute.xlu0 %547
    %s550 = sor.u32 256, 96
    %551 = vbcast.lane.b32.xlu0 %v288, %s550
    %v552 = vpop.permute.xlu0 %551
    %s554 = sor.u32 256, 104
    %555 = vbcast.lane.b32.xlu0 %v288, %s554
    %v556 = vpop.permute.xlu0 %555
    %s558 = sor.u32 256, 112
    %559 = vbcast.lane.b32.xlu0 %v288, %s558
    %v560 = vpop.permute.xlu0 %559
    %s562 = sor.u32 256, 120
    %563 = vbcast.lane.b32.xlu0 %v288, %s562
    %v564 = vpop.permute.xlu0 %563
    %566 = vbcast.lane.b32.xlu0 %v292, 256
    %v567 = vpop.permute.xlu0 %566
    %s569 = sor.u32 256, 8
    %570 = vbcast.lane.b32.xlu0 %v292, %s569
    %v571 = vpop.permute.xlu0 %570
    %s573 = sor.u32 256, 16
    %574 = vbcast.lane.b32.xlu0 %v292, %s573
    %v575 = vpop.permute.xlu0 %574
    %s577 = sor.u32 256, 24
    %578 = vbcast.lane.b32.xlu0 %v292, %s577
    %v579 = vpop.permute.xlu0 %578
    %s581 = sor.u32 256, 32
    %582 = vbcast.lane.b32.xlu0 %v292, %s581
    %v583 = vpop.permute.xlu0 %582
    %s585 = sor.u32 256, 40
    %586 = vbcast.lane.b32.xlu0 %v292, %s585
    %v587 = vpop.permute.xlu0 %586
    %s589 = sor.u32 256, 48
    %590 = vbcast.lane.b32.xlu0 %v292, %s589
    %v591 = vpop.permute.xlu0 %590
    %s593 = sor.u32 256, 56
    %594 = vbcast.lane.b32.xlu0 %v292, %s593
    %v595 = vpop.permute.xlu0 %594
    %s597 = sor.u32 256, 64
    %598 = vbcast.lane.b32.xlu0 %v292, %s597
    %v599 = vpop.permute.xlu0 %598
    %s601 = sor.u32 256, 72
    %602 = vbcast.lane.b32.xlu0 %v292, %s601
    %v603 = vpop.permute.xlu0 %602
    %s605 = sor.u32 256, 80
    %606 = vbcast.lane.b32.xlu0 %v292, %s605
    %v607 = vpop.permute.xlu0 %606
    %s609 = sor.u32 256, 88
    %610 = vbcast.lane.b32.xlu0 %v292, %s609
    %v611 = vpop.permute.xlu0 %610
    %s613 = sor.u32 256, 96
    %614 = vbcast.lane.b32.xlu0 %v292, %s613
    %v615 = vpop.permute.xlu0 %614
    %s617 = sor.u32 256, 104
    %618 = vbcast.lane.b32.xlu0 %v292, %s617
    %v619 = vpop.permute.xlu0 %618
    %s621 = sor.u32 256, 112
    %622 = vbcast.lane.b32.xlu0 %v292, %s621
    %v623 = vpop.permute.xlu0 %622
    %s625 = sor.u32 256, 120
    %626 = vbcast.lane.b32.xlu0 %v292, %s625
    %v627 = vpop.permute.xlu0 %626
    %629 = vbcast.lane.b32.xlu0 %v296, 256
    %v630 = vpop.permute.xlu0 %629
    %s632 = sor.u32 256, 8
    %633 = vbcast.lane.b32.xlu0 %v296, %s632
    %v634 = vpop.permute.xlu0 %633
    %s636 = sor.u32 256, 16
    %637 = vbcast.lane.b32.xlu0 %v296, %s636
    %v638 = vpop.permute.xlu0 %637
    %s640 = sor.u32 256, 24
    %641 = vbcast.lane.b32.xlu0 %v296, %s640
    %v642 = vpop.permute.xlu0 %641
    %s644 = sor.u32 256, 32
    %645 = vbcast.lane.b32.xlu0 %v296, %s644
    %v646 = vpop.permute.xlu0 %645
    %s648 = sor.u32 256, 40
    %649 = vbcast.lane.b32.xlu0 %v296, %s648
    %v650 = vpop.permute.xlu0 %649
    %s652 = sor.u32 256, 48
    %653 = vbcast.lane.b32.xlu0 %v296, %s652
    %v654 = vpop.permute.xlu0 %653
    %s656 = sor.u32 256, 56
    %657 = vbcast.lane.b32.xlu0 %v296, %s656
    %v658 = vpop.permute.xlu0 %657
    %s660 = sor.u32 256, 64
    %661 = vbcast.lane.b32.xlu0 %v296, %s660
    %v662 = vpop.permute.xlu0 %661
    %s664 = sor.u32 256, 72
    %665 = vbcast.lane.b32.xlu0 %v296, %s664
    %v666 = vpop.permute.xlu0 %665
    %s668 = sor.u32 256, 80
    %669 = vbcast.lane.b32.xlu0 %v296, %s668
    %v670 = vpop.permute.xlu0 %669
    %s672 = sor.u32 256, 88
    %673 = vbcast.lane.b32.xlu0 %v296, %s672
    %v674 = vpop.permute.xlu0 %673
    %s676 = sor.u32 256, 96
    %677 = vbcast.lane.b32.xlu0 %v296, %s676
    %v678 = vpop.permute.xlu0 %677
    %s680 = sor.u32 256, 104
    %681 = vbcast.lane.b32.xlu0 %v296, %s680
    %v682 = vpop.permute.xlu0 %681
    %s684 = sor.u32 256, 112
    %685 = vbcast.lane.b32.xlu0 %v296, %s684
    %v686 = vpop.permute.xlu0 %685
    %s688 = sor.u32 256, 120
    %689 = vbcast.lane.b32.xlu0 %v296, %s688
    %v690 = vpop.permute.xlu0 %689
    %692 = vbcast.lane.b32.xlu0 %v300, 256
    %v693 = vpop.permute.xlu0 %692
    %s695 = sor.u32 256, 8
    %696 = vbcast.lane.b32.xlu0 %v300, %s695
    %v697 = vpop.permute.xlu0 %696
    %s699 = sor.u32 256, 16
    %700 = vbcast.lane.b32.xlu0 %v300, %s699
    %v701 = vpop.permute.xlu0 %700
    %s703 = sor.u32 256, 24
    %704 = vbcast.lane.b32.xlu0 %v300, %s703
    %v705 = vpop.permute.xlu0 %704
    %s707 = sor.u32 256, 32
    %708 = vbcast.lane.b32.xlu0 %v300, %s707
    %v709 = vpop.permute.xlu0 %708
    %s711 = sor.u32 256, 40
    %712 = vbcast.lane.b32.xlu0 %v300, %s711
    %v713 = vpop.permute.xlu0 %712
    %s715 = sor.u32 256, 48
    %716 = vbcast.lane.b32.xlu0 %v300, %s715
    %v717 = vpop.permute.xlu0 %716
    %s719 = sor.u32 256, 56
    %720 = vbcast.lane.b32.xlu0 %v300, %s719
    %v721 = vpop.permute.xlu0 %720
    %s723 = sor.u32 256, 64
    %724 = vbcast.lane.b32.xlu0 %v300, %s723
    %v725 = vpop.permute.xlu0 %724
    %s727 = sor.u32 256, 72
    %728 = vbcast.lane.b32.xlu0 %v300, %s727
    %v729 = vpop.permute.xlu0 %728
    %s731 = sor.u32 256, 80
    %732 = vbcast.lane.b32.xlu0 %v300, %s731
    %v733 = vpop.permute.xlu0 %732
    %s735 = sor.u32 256, 88
    %736 = vbcast.lane.b32.xlu0 %v300, %s735
    %v737 = vpop.permute.xlu0 %736
    %s739 = sor.u32 256, 96
    %740 = vbcast.lane.b32.xlu0 %v300, %s739
    %v741 = vpop.permute.xlu0 %740
    %s743 = sor.u32 256, 104
    %744 = vbcast.lane.b32.xlu0 %v300, %s743
    %v745 = vpop.permute.xlu0 %744
    %s747 = sor.u32 256, 112
    %748 = vbcast.lane.b32.xlu0 %v300, %s747
    %v749 = vpop.permute.xlu0 %748
    %s751 = sor.u32 256, 120
    %752 = vbcast.lane.b32.xlu0 %v300, %s751
    %v753 = vpop.permute.xlu0 %752
    %755 = vbcast.lane.b32.xlu0 %v304, 256
    %v756 = vpop.permute.xlu0 %755
    %s758 = sor.u32 256, 8
    %759 = vbcast.lane.b32.xlu0 %v304, %s758
    %v760 = vpop.permute.xlu0 %759
    %s762 = sor.u32 256, 16
    %763 = vbcast.lane.b32.xlu0 %v304, %s762
    %v764 = vpop.permute.xlu0 %763
    %s766 = sor.u32 256, 24
    %767 = vbcast.lane.b32.xlu0 %v304, %s766
    %v768 = vpop.permute.xlu0 %767
    %s770 = sor.u32 256, 32
    %771 = vbcast.lane.b32.xlu0 %v304, %s770
    %v772 = vpop.permute.xlu0 %771
    %s774 = sor.u32 256, 40
    %775 = vbcast.lane.b32.xlu0 %v304, %s774
    %v776 = vpop.permute.xlu0 %775
    %s778 = sor.u32 256, 48
    %779 = vbcast.lane.b32.xlu0 %v304, %s778
    %v780 = vpop.permute.xlu0 %779
    %s782 = sor.u32 256, 56
    %783 = vbcast.lane.b32.xlu0 %v304, %s782
    %v784 = vpop.permute.xlu0 %783
    %s786 = sor.u32 256, 64
    %787 = vbcast.lane.b32.xlu0 %v304, %s786
    %v788 = vpop.permute.xlu0 %787
    %s790 = sor.u32 256, 72
    %791 = vbcast.lane.b32.xlu0 %v304, %s790
    %v792 = vpop.permute.xlu0 %791
    %s794 = sor.u32 256, 80
    %795 = vbcast.lane.b32.xlu0 %v304, %s794
    %v796 = vpop.permute.xlu0 %795
    %s798 = sor.u32 256, 88
    %799 = vbcast.lane.b32.xlu0 %v304, %s798
    %v800 = vpop.permute.xlu0 %799
    %s802 = sor.u32 256, 96
    %803 = vbcast.lane.b32.xlu0 %v304, %s802
    %v804 = vpop.permute.xlu0 %803
    %s806 = sor.u32 256, 104
    %807 = vbcast.lane.b32.xlu0 %v304, %s806
    %v808 = vpop.permute.xlu0 %807
    %s810 = sor.u32 256, 112
    %811 = vbcast.lane.b32.xlu0 %v304, %s810
    %v812 = vpop.permute.xlu0 %811
    %s814 = sor.u32 256, 120
    %815 = vbcast.lane.b32.xlu0 %v304, %s814
    %v816 = vpop.permute.xlu0 %815
    %818 = vbcast.lane.b32.xlu0 %v308, 256
    %v819 = vpop.permute.xlu0 %818
    %s821 = sor.u32 256, 8
    %822 = vbcast.lane.b32.xlu0 %v308, %s821
    %v823 = vpop.permute.xlu0 %822
    %s825 = sor.u32 256, 16
    %826 = vbcast.lane.b32.xlu0 %v308, %s825
    %v827 = vpop.permute.xlu0 %826
    %s829 = sor.u32 256, 24
    %830 = vbcast.lane.b32.xlu0 %v308, %s829
    %v831 = vpop.permute.xlu0 %830
    %s833 = sor.u32 256, 32
    %834 = vbcast.lane.b32.xlu0 %v308, %s833
    %v835 = vpop.permute.xlu0 %834
    %s837 = sor.u32 256, 40
    %838 = vbcast.lane.b32.xlu0 %v308, %s837
    %v839 = vpop.permute.xlu0 %838
    %s841 = sor.u32 256, 48
    %842 = vbcast.lane.b32.xlu0 %v308, %s841
    %v843 = vpop.permute.xlu0 %842
    %s845 = sor.u32 256, 56
    %846 = vbcast.lane.b32.xlu0 %v308, %s845
    %v847 = vpop.permute.xlu0 %846
    %s849 = sor.u32 256, 64
    %850 = vbcast.lane.b32.xlu0 %v308, %s849
    %v851 = vpop.permute.xlu0 %850
    %s853 = sor.u32 256, 72
    %854 = vbcast.lane.b32.xlu0 %v308, %s853
    %v855 = vpop.permute.xlu0 %854
    %s857 = sor.u32 256, 80
    %858 = vbcast.lane.b32.xlu0 %v308, %s857
    %v859 = vpop.permute.xlu0 %858
    %s861 = sor.u32 256, 88
    %862 = vbcast.lane.b32.xlu0 %v308, %s861
    %v863 = vpop.permute.xlu0 %862
    %s865 = sor.u32 256, 96
    %866 = vbcast.lane.b32.xlu0 %v308, %s865
    %v867 = vpop.permute.xlu0 %866
    %s869 = sor.u32 256, 104
    %870 = vbcast.lane.b32.xlu0 %v308, %s869
    %v871 = vpop.permute.xlu0 %870
    %s873 = sor.u32 256, 112
    %874 = vbcast.lane.b32.xlu0 %v308, %s873
    %v875 = vpop.permute.xlu0 %874
    %s877 = sor.u32 256, 120
    %878 = vbcast.lane.b32.xlu0 %v308, %s877
    %v879 = vpop.permute.xlu0 %878
    %881 = vbcast.lane.b32.xlu0 %v312, 256
    %v882 = vpop.permute.xlu0 %881
    %s884 = sor.u32 256, 8
    %885 = vbcast.lane.b32.xlu0 %v312, %s884
    %v886 = vpop.permute.xlu0 %885
    %s888 = sor.u32 256, 16
    %889 = vbcast.lane.b32.xlu0 %v312, %s888
    %v890 = vpop.permute.xlu0 %889
    %s892 = sor.u32 256, 24
    %893 = vbcast.lane.b32.xlu0 %v312, %s892
    %v894 = vpop.permute.xlu0 %893
    %s896 = sor.u32 256, 32
    %897 = vbcast.lane.b32.xlu0 %v312, %s896
    %v898 = vpop.permute.xlu0 %897
    %s900 = sor.u32 256, 40
    %901 = vbcast.lane.b32.xlu0 %v312, %s900
    %v902 = vpop.permute.xlu0 %901
    %s904 = sor.u32 256, 48
    %905 = vbcast.lane.b32.xlu0 %v312, %s904
    %v906 = vpop.permute.xlu0 %905
    %s908 = sor.u32 256, 56
    %909 = vbcast.lane.b32.xlu0 %v312, %s908
    %v910 = vpop.permute.xlu0 %909
    %s912 = sor.u32 256, 64
    %913 = vbcast.lane.b32.xlu0 %v312, %s912
    %v914 = vpop.permute.xlu0 %913
    %s916 = sor.u32 256, 72
    %917 = vbcast.lane.b32.xlu0 %v312, %s916
    %v918 = vpop.permute.xlu0 %917
    %s920 = sor.u32 256, 80
    %921 = vbcast.lane.b32.xlu0 %v312, %s920
    %v922 = vpop.permute.xlu0 %921
    %s924 = sor.u32 256, 88
    %925 = vbcast.lane.b32.xlu0 %v312, %s924
    %v926 = vpop.permute.xlu0 %925
    %s928 = sor.u32 256, 96
    %929 = vbcast.lane.b32.xlu0 %v312, %s928
    %v930 = vpop.permute.xlu0 %929
    %s932 = sor.u32 256, 104
    %933 = vbcast.lane.b32.xlu0 %v312, %s932
    %v934 = vpop.permute.xlu0 %933
    %s936 = sor.u32 256, 112
    %937 = vbcast.lane.b32.xlu0 %v312, %s936
    %v938 = vpop.permute.xlu0 %937
    %s940 = sor.u32 256, 120
    %941 = vbcast.lane.b32.xlu0 %v312, %s940
    %v942 = vpop.permute.xlu0 %941
    %v1103 = vmul.f32 %v266, %v315
    %v1104 = vmul.f32 %v266, %v319
    %v1105 = vmul.f32 %v266, %v323
    %v1106 = vmul.f32 %v266, %v327
    %v1107 = vmul.f32 %v266, %v331
    %v1108 = vmul.f32 %v266, %v335
    %v1109 = vmul.f32 %v266, %v339
    %v1110 = vmul.f32 %v266, %v343
    %v1111 = vmul.f32 %v266, %v347
    %v1112 = vmul.f32 %v266, %v351
    %v1113 = vmul.f32 %v266, %v355
    %v1114 = vmul.f32 %v266, %v359
    %v1115 = vmul.f32 %v266, %v363
    %v1116 = vmul.f32 %v266, %v367
    %v1117 = vmul.f32 %v266, %v371
    %v1118 = vmul.f32 %v266, %v375
    %v1119 = vmul.f32 %v266, %v378
    %v1120 = vmul.f32 %v266, %v382
    %v1121 = vmul.f32 %v266, %v386
    %v1122 = vmul.f32 %v266, %v390
    %v1123 = vmul.f32 %v266, %v394
    %v1124 = vmul.f32 %v266, %v398
    %v1125 = vmul.f32 %v266, %v402
    %v1126 = vmul.f32 %v266, %v406
    %v1127 = vmul.f32 %v266, %v410
    %v1128 = vmul.f32 %v266, %v414
    %v1129 = vmul.f32 %v266, %v418
    %v1130 = vmul.f32 %v266, %v422
    %v1131 = vmul.f32 %v266, %v426
    %v1132 = vmul.f32 %v266, %v430
    %v1133 = vmul.f32 %v266, %v434
    %v1134 = vmul.f32 %v266, %v438
    %v1135 = vmul.f32 %v266, %v441
    %v1136 = vmul.f32 %v266, %v445
    %v1137 = vmul.f32 %v266, %v449
    %v1138 = vmul.f32 %v266, %v453
    %v1139 = vmul.f32 %v266, %v457
    %v1140 = vmul.f32 %v266, %v461
    %v1141 = vmul.f32 %v266, %v465
    %v1142 = vmul.f32 %v266, %v469
    %v1143 = vmul.f32 %v266, %v473
    %v1144 = vmul.f32 %v266, %v477
    %v1145 = vmul.f32 %v266, %v481
    %v1146 = vmul.f32 %v266, %v485
    %v1147 = vmul.f32 %v266, %v489
    %v1148 = vmul.f32 %v266, %v493
    %v1149 = vmul.f32 %v266, %v497
    %v1150 = vmul.f32 %v266, %v501
    %v1151 = vmul.f32 %v266, %v504
    %v1152 = vmul.f32 %v266, %v508
    %v1153 = vmul.f32 %v266, %v512
    %v1154 = vmul.f32 %v266, %v516
    %v1155 = vmul.f32 %v266, %v520
    %v1156 = vmul.f32 %v266, %v524
    %v1157 = vmul.f32 %v266, %v528
    %v1158 = vmul.f32 %v266, %v532
    %v1159 = vmul.f32 %v266, %v536
    %v1160 = vmul.f32 %v266, %v540
    %v1161 = vmul.f32 %v266, %v544
    %v1162 = vmul.f32 %v266, %v548
    %v1163 = vmul.f32 %v266, %v552
    %v1164 = vmul.f32 %v266, %v556
    %v1165 = vmul.f32 %v266, %v560
    %v1166 = vmul.f32 %v266, %v564
    %v1167 = vmul.f32 %v266, %v567
    %v1168 = vmul.f32 %v266, %v571
    %v1169 = vmul.f32 %v266, %v575
    %v1170 = vmul.f32 %v266, %v579
    %v1171 = vmul.f32 %v266, %v583
    %v1172 = vmul.f32 %v266, %v587
    %v1173 = vmul.f32 %v266, %v591
    %v1174 = vmul.f32 %v266, %v595
    %v1175 = vmul.f32 %v266, %v599
    %v1176 = vmul.f32 %v266, %v603
    %v1177 = vmul.f32 %v266, %v607
    %v1178 = vmul.f32 %v266, %v611
    %v1179 = vmul.f32 %v266, %v615
    %v1180 = vmul.f32 %v266, %v619
    %v1181 = vmul.f32 %v266, %v623
    %v1182 = vmul.f32 %v266, %v627
    %v1183 = vmul.f32 %v266, %v630
    %v1184 = vmul.f32 %v266, %v634
    %v1185 = vmul.f32 %v266, %v638
    %v1186 = vmul.f32 %v266, %v642
    %v1187 = vmul.f32 %v266, %v646
    %v1188 = vmul.f32 %v266, %v650
    %v1189 = vmul.f32 %v266, %v654
    %v1190 = vmul.f32 %v266, %v658
    %v1191 = vmul.f32 %v266, %v662
    %v1192 = vmul.f32 %v266, %v666
    %v1193 = vmul.f32 %v266, %v670
    %v1194 = vmul.f32 %v266, %v674
    %v1195 = vmul.f32 %v266, %v678
    %v1196 = vmul.f32 %v266, %v682
    %v1197 = vmul.f32 %v266, %v686
    %v1198 = vmul.f32 %v266, %v690
    %v1199 = vmul.f32 %v266, %v693
    %v1200 = vmul.f32 %v266, %v697
    %v1201 = vmul.f32 %v266, %v701
    %v1202 = vmul.f32 %v266, %v705
    %v1203 = vmul.f32 %v266, %v709
    %v1204 = vmul.f32 %v266, %v713
    %v1205 = vmul.f32 %v266, %v717
    %v1206 = vmul.f32 %v266, %v721
    %v1207 = vmul.f32 %v266, %v725
    %v1208 = vmul.f32 %v266, %v729
    %v1209 = vmul.f32 %v266, %v733
    %v1210 = vmul.f32 %v266, %v737
    %v1211 = vmul.f32 %v266, %v741
    %v1212 = vmul.f32 %v266, %v745
    %v1213 = vmul.f32 %v266, %v749
    %v1214 = vmul.f32 %v266, %v753
    %v1215 = vmul.f32 %v266, %v756
    %v1216 = vmul.f32 %v266, %v760
    %v1217 = vmul.f32 %v266, %v764
    %v1218 = vmul.f32 %v266, %v768
    %v1219 = vmul.f32 %v266, %v772
    %v1220 = vmul.f32 %v266, %v776
    %v1221 = vmul.f32 %v266, %v780
    %v1222 = vmul.f32 %v266, %v784
    %v1223 = vmul.f32 %v266, %v788
    %v1224 = vmul.f32 %v266, %v792
    %v1225 = vmul.f32 %v266, %v796
    %v1226 = vmul.f32 %v266, %v800
    %v1227 = vmul.f32 %v266, %v804
    %v1228 = vmul.f32 %v266, %v808
    %v1229 = vmul.f32 %v266, %v812
    %v1230 = vmul.f32 %v266, %v816
    %v1231 = vmul.f32 %v266, %v819
    %v1232 = vmul.f32 %v266, %v823
    %v1233 = vmul.f32 %v266, %v827
    %v1234 = vmul.f32 %v266, %v831
    %v1235 = vmul.f32 %v266, %v835
    %v1236 = vmul.f32 %v266, %v839
    %v1237 = vmul.f32 %v266, %v843
    %v1238 = vmul.f32 %v266, %v847
    %v1239 = vmul.f32 %v266, %v851
    %v1240 = vmul.f32 %v266, %v855
    %v1241 = vmul.f32 %v266, %v859
    %v1242 = vmul.f32 %v266, %v863
    %v1243 = vmul.f32 %v266, %v867
    %v1244 = vmul.f32 %v266, %v871
    %v1245 = vmul.f32 %v266, %v875
    %v1246 = vmul.f32 %v266, %v879
    %v1247 = vmul.f32 %v266, %v882
    %v1248 = vmul.f32 %v266, %v886
    %v1249 = vmul.f32 %v266, %v890
    %v1250 = vmul.f32 %v266, %v894
    %v1251 = vmul.f32 %v266, %v898
    %v1252 = vmul.f32 %v266, %v902
    %v1253 = vmul.f32 %v266, %v906
    %v1254 = vmul.f32 %v266, %v910
    %v1255 = vmul.f32 %v266, %v914
    %v1256 = vmul.f32 %v266, %v918
    %v1257 = vmul.f32 %v266, %v922
    %v1258 = vmul.f32 %v266, %v926
    %v1259 = vmul.f32 %v266, %v930
    %v1260 = vmul.f32 %v266, %v934
    %v1261 = vmul.f32 %v266, %v938
    %v1262 = vmul.f32 %v266, %v942
    %v1263 = vmul.f32 %v270, %v315
    %v1264 = vmul.f32 %v270, %v319
    %v1265 = vmul.f32 %v270, %v323
    %v1266 = vmul.f32 %v270, %v327
    %v1267 = vmul.f32 %v270, %v331
    %v1268 = vmul.f32 %v270, %v335
    %v1269 = vmul.f32 %v270, %v339
    %v1270 = vmul.f32 %v270, %v343
    %v1271 = vmul.f32 %v270, %v347
    %v1272 = vmul.f32 %v270, %v351
    %v1273 = vmul.f32 %v270, %v355
    %v1274 = vmul.f32 %v270, %v359
    %v1275 = vmul.f32 %v270, %v363
    %v1276 = vmul.f32 %v270, %v367
    %v1277 = vmul.f32 %v270, %v371
    %v1278 = vmul.f32 %v270, %v375
    %v1279 = vmul.f32 %v270, %v378
    %v1280 = vmul.f32 %v270, %v382
    %v1281 = vmul.f32 %v270, %v386
    %v1282 = vmul.f32 %v270, %v390
    %v1283 = vmul.f32 %v270, %v394
    %v1284 = vmul.f32 %v270, %v398
    %v1285 = vmul.f32 %v270, %v402
    %v1286 = vmul.f32 %v270, %v406
    %v1287 = vmul.f32 %v270, %v410
    %v1288 = vmul.f32 %v270, %v414
    %v1289 = vmul.f32 %v270, %v418
    %v1290 = vmul.f32 %v270, %v422
    %v1291 = vmul.f32 %v270, %v426
    %v1292 = vmul.f32 %v270, %v430
    %v1293 = vmul.f32 %v270, %v434
    %v1294 = vmul.f32 %v270, %v438
    %v1295 = vmul.f32 %v270, %v441
    %v1296 = vmul.f32 %v270, %v445
    %v1297 = vmul.f32 %v270, %v449
    %v1298 = vmul.f32 %v270, %v453
    %v1299 = vmul.f32 %v270, %v457
    %v1300 = vmul.f32 %v270, %v461
    %v1301 = vmul.f32 %v270, %v465
    %v1302 = vmul.f32 %v270, %v469
    %v1303 = vmul.f32 %v270, %v473
    %v1304 = vmul.f32 %v270, %v477
    %v1305 = vmul.f32 %v270, %v481
    %v1306 = vmul.f32 %v270, %v485
    %v1307 = vmul.f32 %v270, %v489
    %v1308 = vmul.f32 %v270, %v493
    %v1309 = vmul.f32 %v270, %v497
    %v1310 = vmul.f32 %v270, %v501
    %v1311 = vmul.f32 %v270, %v504
    %v1312 = vmul.f32 %v270, %v508
    %v1313 = vmul.f32 %v270, %v512
    %v1314 = vmul.f32 %v270, %v516
    %v1315 = vmul.f32 %v270, %v520
    %v1316 = vmul.f32 %v270, %v524
    %v1317 = vmul.f32 %v270, %v528
    %v1318 = vmul.f32 %v270, %v532
    %v1319 = vmul.f32 %v270, %v536
    %v1320 = vmul.f32 %v270, %v540
    %v1321 = vmul.f32 %v270, %v544
    %v1322 = vmul.f32 %v270, %v548
    %v1323 = vmul.f32 %v270, %v552
    %v1324 = vmul.f32 %v270, %v556
    %v1325 = vmul.f32 %v270, %v560
    %v1326 = vmul.f32 %v270, %v564
    %v1327 = vmul.f32 %v270, %v567
    %v1328 = vmul.f32 %v270, %v571
    %v1329 = vmul.f32 %v270, %v575
    %v1330 = vmul.f32 %v270, %v579
    %v1331 = vmul.f32 %v270, %v583
    %v1332 = vmul.f32 %v270, %v587
    %v1333 = vmul.f32 %v270, %v591
    %v1334 = vmul.f32 %v270, %v595
    %v1335 = vmul.f32 %v270, %v599
    %v1336 = vmul.f32 %v270, %v603
    %v1337 = vmul.f32 %v270, %v607
    %v1338 = vmul.f32 %v270, %v611
    %v1339 = vmul.f32 %v270, %v615
    %v1340 = vmul.f32 %v270, %v619
    %v1341 = vmul.f32 %v270, %v623
    %v1342 = vmul.f32 %v270, %v627
    %v1343 = vmul.f32 %v270, %v630
    %v1344 = vmul.f32 %v270, %v634
    %v1345 = vmul.f32 %v270, %v638
    %v1346 = vmul.f32 %v270, %v642
    %v1347 = vmul.f32 %v270, %v646
    %v1348 = vmul.f32 %v270, %v650
    %v1349 = vmul.f32 %v270, %v654
    %v1350 = vmul.f32 %v270, %v658
    %v1351 = vmul.f32 %v270, %v662
    %v1352 = vmul.f32 %v270, %v666
    %v1353 = vmul.f32 %v270, %v670
    %v1354 = vmul.f32 %v270, %v674
    %v1355 = vmul.f32 %v270, %v678
    %v1356 = vmul.f32 %v270, %v682
    %v1357 = vmul.f32 %v270, %v686
    %v1358 = vmul.f32 %v270, %v690
    %v1359 = vmul.f32 %v270, %v693
    %v1360 = vmul.f32 %v270, %v697
    %v1361 = vmul.f32 %v270, %v701
    %v1362 = vmul.f32 %v270, %v705
    %v1363 = vmul.f32 %v270, %v709
    %v1364 = vmul.f32 %v270, %v713
    %v1365 = vmul.f32 %v270, %v717
    %v1366 = vmul.f32 %v270, %v721
    %v1367 = vmul.f32 %v270, %v725
    %v1368 = vmul.f32 %v270, %v729
    %v1369 = vmul.f32 %v270, %v733
    %v1370 = vmul.f32 %v270, %v737
    %v1371 = vmul.f32 %v270, %v741
    %v1372 = vmul.f32 %v270, %v745
    %v1373 = vmul.f32 %v270, %v749
    %v1374 = vmul.f32 %v270, %v753
    %v1375 = vmul.f32 %v270, %v756
    %v1376 = vmul.f32 %v270, %v760
    %v1377 = vmul.f32 %v270, %v764
    %v1378 = vmul.f32 %v270, %v768
    %v1379 = vmul.f32 %v270, %v772
    %v1380 = vmul.f32 %v270, %v776
    %v1381 = vmul.f32 %v270, %v780
    %v1382 = vmul.f32 %v270, %v784
    %v1383 = vmul.f32 %v270, %v788
    %v1384 = vmul.f32 %v270, %v792
    %v1385 = vmul.f32 %v270, %v796
    %v1386 = vmul.f32 %v270, %v800
    %v1387 = vmul.f32 %v270, %v804
    %v1388 = vmul.f32 %v270, %v808
    %v1389 = vmul.f32 %v270, %v812
    %v1390 = vmul.f32 %v270, %v816
    %v1391 = vmul.f32 %v270, %v819
    %v1392 = vmul.f32 %v270, %v823
    %v1393 = vmul.f32 %v270, %v827
    %v1394 = vmul.f32 %v270, %v831
    %v1395 = vmul.f32 %v270, %v835
    %v1396 = vmul.f32 %v270, %v839
    %v1397 = vmul.f32 %v270, %v843
    %v1398 = vmul.f32 %v270, %v847
    %v1399 = vmul.f32 %v270, %v851
    %v1400 = vmul.f32 %v270, %v855
    %v1401 = vmul.f32 %v270, %v859
    %v1402 = vmul.f32 %v270, %v863
    %v1403 = vmul.f32 %v270, %v867
    %v1404 = vmul.f32 %v270, %v871
    %v1405 = vmul.f32 %v270, %v875
    %v1406 = vmul.f32 %v270, %v879
    %v1407 = vmul.f32 %v270, %v882
    %v1408 = vmul.f32 %v270, %v886
    %v1409 = vmul.f32 %v270, %v890
    %v1410 = vmul.f32 %v270, %v894
    %v1411 = vmul.f32 %v270, %v898
    %v1412 = vmul.f32 %v270, %v902
    %v1413 = vmul.f32 %v270, %v906
    %v1414 = vmul.f32 %v270, %v910
    %v1415 = vmul.f32 %v270, %v914
    %v1416 = vmul.f32 %v270, %v918
    %v1417 = vmul.f32 %v270, %v922
    %v1418 = vmul.f32 %v270, %v926
    %v1419 = vmul.f32 %v270, %v930
    %v1420 = vmul.f32 %v270, %v934
    %v1421 = vmul.f32 %v270, %v938
    %v1422 = vmul.f32 %v270, %v942
    %s1423 = scalar_lea.vmem %s3, 1
    %v1424 = vld [vmem:[%s1423] ss:$4 sm:$0xff]
    %s1425 = scalar_lea.vmem %s3, 33
    %v1426 = vld [vmem:[%s1425] ss:$4 sm:$0x3]
    %v1427 = vlaneseq
    %v1428 = vshrl.u32 %v1427, 7
    %v1429 = vsub.s32 1, %v1428
    %v1430 = vrot.slane %v254, %v1429
    %v1431 = vlaneseq
    %v1432 = vshrl.u32 %v1431, 7
    %v1433 = vsub.s32 1, %v1432
    %v1434 = vrot.slane %v259, %v1433
    %v1437 = vlaneseq
    %v1438 = vshrl.u32 %v1437, 7
    %v1439 = vsub.s32 0, %v1438
    %v1440 = vrot.slane %v1424, %v1439
    %v1441 = vlaneseq
    %v1442 = vshrl.u32 %v1441, 7
    %v1443 = vsub.s32 1, %v1442
    %v1444 = vrot.slane %v1424, %v1443
    %v1445 = vlaneseq
    %v1446 = vshrl.u32 %v1445, 7
    %v1447 = vsub.s32 2, %v1446
    %v1448 = vrot.slane %v1424, %v1447
    %v1449 = vlaneseq
    %v1450 = vshrl.u32 %v1449, 7
    %v1451 = vsub.s32 3, %v1450
    %v1452 = vrot.slane %v1424, %v1451
    %v1453 = vlaneseq
    %v1454 = vshrl.u32 %v1453, 7
    %v1455 = vsub.s32 4, %v1454
    %v1456 = vrot.slane %v1424, %v1455
    %v1457 = vlaneseq
    %v1458 = vshrl.u32 %v1457, 7
    %v1459 = vsub.s32 5, %v1458
    %v1460 = vrot.slane %v1424, %v1459
    %v1461 = vlaneseq
    %v1462 = vshrl.u32 %v1461, 7
    %v1463 = vsub.s32 6, %v1462
    %v1464 = vrot.slane %v1424, %v1463
    %v1465 = vlaneseq
    %v1466 = vshrl.u32 %v1465, 7
    %v1467 = vsub.s32 7, %v1466
    %v1468 = vrot.slane %v1424, %v1467
    %v1469 = vlaneseq
    %v1470 = vshrl.u32 %v1469, 7
    %v1471 = vsub.s32 0, %v1470
    %v1472 = vrot.slane %v1426, %v1471
    %v1473 = vlaneseq
    %v1474 = vshrl.u32 %v1473, 7
    %v1475 = vsub.s32 1, %v1474
    %v1476 = vrot.slane %v1426, %v1475
    %1478 = vbcast.lane.b32.xlu0 %v1440, 256
    %v1479 = vpop.permute.xlu0 %1478
    %s1481 = sor.u32 256, 8
    %1482 = vbcast.lane.b32.xlu0 %v1440, %s1481
    %v1483 = vpop.permute.xlu0 %1482
    %s1485 = sor.u32 256, 16
    %1486 = vbcast.lane.b32.xlu0 %v1440, %s1485
    %v1487 = vpop.permute.xlu0 %1486
    %s1489 = sor.u32 256, 24
    %1490 = vbcast.lane.b32.xlu0 %v1440, %s1489
    %v1491 = vpop.permute.xlu0 %1490
    %s1493 = sor.u32 256, 32
    %1494 = vbcast.lane.b32.xlu0 %v1440, %s1493
    %v1495 = vpop.permute.xlu0 %1494
    %s1497 = sor.u32 256, 40
    %1498 = vbcast.lane.b32.xlu0 %v1440, %s1497
    %v1499 = vpop.permute.xlu0 %1498
    %s1501 = sor.u32 256, 48
    %1502 = vbcast.lane.b32.xlu0 %v1440, %s1501
    %v1503 = vpop.permute.xlu0 %1502
    %s1505 = sor.u32 256, 56
    %1506 = vbcast.lane.b32.xlu0 %v1440, %s1505
    %v1507 = vpop.permute.xlu0 %1506
    %s1509 = sor.u32 256, 64
    %1510 = vbcast.lane.b32.xlu0 %v1440, %s1509
    %v1511 = vpop.permute.xlu0 %1510
    %s1513 = sor.u32 256, 72
    %1514 = vbcast.lane.b32.xlu0 %v1440, %s1513
    %v1515 = vpop.permute.xlu0 %1514
    %s1517 = sor.u32 256, 80
    %1518 = vbcast.lane.b32.xlu0 %v1440, %s1517
    %v1519 = vpop.permute.xlu0 %1518
    %s1521 = sor.u32 256, 88
    %1522 = vbcast.lane.b32.xlu0 %v1440, %s1521
    %v1523 = vpop.permute.xlu0 %1522
    %s1525 = sor.u32 256, 96
    %1526 = vbcast.lane.b32.xlu0 %v1440, %s1525
    %v1527 = vpop.permute.xlu0 %1526
    %s1529 = sor.u32 256, 104
    %1530 = vbcast.lane.b32.xlu0 %v1440, %s1529
    %v1531 = vpop.permute.xlu0 %1530
    %s1533 = sor.u32 256, 112
    %1534 = vbcast.lane.b32.xlu0 %v1440, %s1533
    %v1535 = vpop.permute.xlu0 %1534
    %s1537 = sor.u32 256, 120
    %1538 = vbcast.lane.b32.xlu0 %v1440, %s1537
    %v1539 = vpop.permute.xlu0 %1538
    %1541 = vbcast.lane.b32.xlu0 %v1444, 256
    %v1542 = vpop.permute.xlu0 %1541
    %s1544 = sor.u32 256, 8
    %1545 = vbcast.lane.b32.xlu0 %v1444, %s1544
    %v1546 = vpop.permute.xlu0 %1545
    %s1548 = sor.u32 256, 16
    %1549 = vbcast.lane.b32.xlu0 %v1444, %s1548
    %v1550 = vpop.permute.xlu0 %1549
    %s1552 = sor.u32 256, 24
    %1553 = vbcast.lane.b32.xlu0 %v1444, %s1552
    %v1554 = vpop.permute.xlu0 %1553
    %s1556 = sor.u32 256, 32
    %1557 = vbcast.lane.b32.xlu0 %v1444, %s1556
    %v1558 = vpop.permute.xlu0 %1557
    %s1560 = sor.u32 256, 40
    %1561 = vbcast.lane.b32.xlu0 %v1444, %s1560
    %v1562 = vpop.permute.xlu0 %1561
    %s1564 = sor.u32 256, 48
    %1565 = vbcast.lane.b32.xlu0 %v1444, %s1564
    %v1566 = vpop.permute.xlu0 %1565
    %s1568 = sor.u32 256, 56
    %1569 = vbcast.lane.b32.xlu0 %v1444, %s1568
    %v1570 = vpop.permute.xlu0 %1569
    %s1572 = sor.u32 256, 64
    %1573 = vbcast.lane.b32.xlu0 %v1444, %s1572
    %v1574 = vpop.permute.xlu0 %1573
    %s1576 = sor.u32 256, 72
    %1577 = vbcast.lane.b32.xlu0 %v1444, %s1576
    %v1578 = vpop.permute.xlu0 %1577
    %s1580 = sor.u32 256, 80
    %1581 = vbcast.lane.b32.xlu0 %v1444, %s1580
    %v1582 = vpop.permute.xlu0 %1581
    %s1584 = sor.u32 256, 88
    %1585 = vbcast.lane.b32.xlu0 %v1444, %s1584
    %v1586 = vpop.permute.xlu0 %1585
    %s1588 = sor.u32 256, 96
    %1589 = vbcast.lane.b32.xlu0 %v1444, %s1588
    %v1590 = vpop.permute.xlu0 %1589
    %s1592 = sor.u32 256, 104
    %1593 = vbcast.lane.b32.xlu0 %v1444, %s1592
    %v1594 = vpop.permute.xlu0 %1593
    %s1596 = sor.u32 256, 112
    %1597 = vbcast.lane.b32.xlu0 %v1444, %s1596
    %v1598 = vpop.permute.xlu0 %1597
    %s1600 = sor.u32 256, 120
    %1601 = vbcast.lane.b32.xlu0 %v1444, %s1600
    %v1602 = vpop.permute.xlu0 %1601
    %1604 = vbcast.lane.b32.xlu0 %v1448, 256
    %v1605 = vpop.permute.xlu0 %1604
    %s1607 = sor.u32 256, 8
    %1608 = vbcast.lane.b32.xlu0 %v1448, %s1607
    %v1609 = vpop.permute.xlu0 %1608
    %s1611 = sor.u32 256, 16
    %1612 = vbcast.lane.b32.xlu0 %v1448, %s1611
    %v1613 = vpop.permute.xlu0 %1612
    %s1615 = sor.u32 256, 24
    %1616 = vbcast.lane.b32.xlu0 %v1448, %s1615
    %v1617 = vpop.permute.xlu0 %1616
    %s1619 = sor.u32 256, 32
    %1620 = vbcast.lane.b32.xlu0 %v1448, %s1619
    %v1621 = vpop.permute.xlu0 %1620
    %s1623 = sor.u32 256, 40
    %1624 = vbcast.lane.b32.xlu0 %v1448, %s1623
    %v1625 = vpop.permute.xlu0 %1624
    %s1627 = sor.u32 256, 48
    %1628 = vbcast.lane.b32.xlu0 %v1448, %s1627
    %v1629 = vpop.permute.xlu0 %1628
    %s1631 = sor.u32 256, 56
    %1632 = vbcast.lane.b32.xlu0 %v1448, %s1631
    %v1633 = vpop.permute.xlu0 %1632
    %s1635 = sor.u32 256, 64
    %1636 = vbcast.lane.b32.xlu0 %v1448, %s1635
    %v1637 = vpop.permute.xlu0 %1636
    %s1639 = sor.u32 256, 72
    %1640 = vbcast.lane.b32.xlu0 %v1448, %s1639
    %v1641 = vpop.permute.xlu0 %1640
    %s1643 = sor.u32 256, 80
    %1644 = vbcast.lane.b32.xlu0 %v1448, %s1643
    %v1645 = vpop.permute.xlu0 %1644
    %s1647 = sor.u32 256, 88
    %1648 = vbcast.lane.b32.xlu0 %v1448, %s1647
    %v1649 = vpop.permute.xlu0 %1648
    %s1651 = sor.u32 256, 96
    %1652 = vbcast.lane.b32.xlu0 %v1448, %s1651
    %v1653 = vpop.permute.xlu0 %1652
    %s1655 = sor.u32 256, 104
    %1656 = vbcast.lane.b32.xlu0 %v1448, %s1655
    %v1657 = vpop.permute.xlu0 %1656
    %s1659 = sor.u32 256, 112
    %1660 = vbcast.lane.b32.xlu0 %v1448, %s1659
    %v1661 = vpop.permute.xlu0 %1660
    %s1663 = sor.u32 256, 120
    %1664 = vbcast.lane.b32.xlu0 %v1448, %s1663
    %v1665 = vpop.permute.xlu0 %1664
    %1667 = vbcast.lane.b32.xlu0 %v1452, 256
    %v1668 = vpop.permute.xlu0 %1667
    %s1670 = sor.u32 256, 8
    %1671 = vbcast.lane.b32.xlu0 %v1452, %s1670
    %v1672 = vpop.permute.xlu0 %1671
    %s1674 = sor.u32 256, 16
    %1675 = vbcast.lane.b32.xlu0 %v1452, %s1674
    %v1676 = vpop.permute.xlu0 %1675
    %s1678 = sor.u32 256, 24
    %1679 = vbcast.lane.b32.xlu0 %v1452, %s1678
    %v1680 = vpop.permute.xlu0 %1679
    %s1682 = sor.u32 256, 32
    %1683 = vbcast.lane.b32.xlu0 %v1452, %s1682
    %v1684 = vpop.permute.xlu0 %1683
    %s1686 = sor.u32 256, 40
    %1687 = vbcast.lane.b32.xlu0 %v1452, %s1686
    %v1688 = vpop.permute.xlu0 %1687
    %s1690 = sor.u32 256, 48
    %1691 = vbcast.lane.b32.xlu0 %v1452, %s1690
    %v1692 = vpop.permute.xlu0 %1691
    %s1694 = sor.u32 256, 56
    %1695 = vbcast.lane.b32.xlu0 %v1452, %s1694
    %v1696 = vpop.permute.xlu0 %1695
    %s1698 = sor.u32 256, 64
    %1699 = vbcast.lane.b32.xlu0 %v1452, %s1698
    %v1700 = vpop.permute.xlu0 %1699
    %s1702 = sor.u32 256, 72
    %1703 = vbcast.lane.b32.xlu0 %v1452, %s1702
    %v1704 = vpop.permute.xlu0 %1703
    %s1706 = sor.u32 256, 80
    %1707 = vbcast.lane.b32.xlu0 %v1452, %s1706
    %v1708 = vpop.permute.xlu0 %1707
    %s1710 = sor.u32 256, 88
    %1711 = vbcast.lane.b32.xlu0 %v1452, %s1710
    %v1712 = vpop.permute.xlu0 %1711
    %s1714 = sor.u32 256, 96
    %1715 = vbcast.lane.b32.xlu0 %v1452, %s1714
    %v1716 = vpop.permute.xlu0 %1715
    %s1718 = sor.u32 256, 104
    %1719 = vbcast.lane.b32.xlu0 %v1452, %s1718
    %v1720 = vpop.permute.xlu0 %1719
    %s1722 = sor.u32 256, 112
    %1723 = vbcast.lane.b32.xlu0 %v1452, %s1722
    %v1724 = vpop.permute.xlu0 %1723
    %s1726 = sor.u32 256, 120
    %1727 = vbcast.lane.b32.xlu0 %v1452, %s1726
    %v1728 = vpop.permute.xlu0 %1727
    %1730 = vbcast.lane.b32.xlu0 %v1456, 256
    %v1731 = vpop.permute.xlu0 %1730
    %s1733 = sor.u32 256, 8
    %1734 = vbcast.lane.b32.xlu0 %v1456, %s1733
    %v1735 = vpop.permute.xlu0 %1734
    %s1737 = sor.u32 256, 16
    %1738 = vbcast.lane.b32.xlu0 %v1456, %s1737
    %v1739 = vpop.permute.xlu0 %1738
    %s1741 = sor.u32 256, 24
    %1742 = vbcast.lane.b32.xlu0 %v1456, %s1741
    %v1743 = vpop.permute.xlu0 %1742
    %s1745 = sor.u32 256, 32
    %1746 = vbcast.lane.b32.xlu0 %v1456, %s1745
    %v1747 = vpop.permute.xlu0 %1746
    %s1749 = sor.u32 256, 40
    %1750 = vbcast.lane.b32.xlu0 %v1456, %s1749
    %v1751 = vpop.permute.xlu0 %1750
    %s1753 = sor.u32 256, 48
    %1754 = vbcast.lane.b32.xlu0 %v1456, %s1753
    %v1755 = vpop.permute.xlu0 %1754
    %s1757 = sor.u32 256, 56
    %1758 = vbcast.lane.b32.xlu0 %v1456, %s1757
    %v1759 = vpop.permute.xlu0 %1758
    %s1761 = sor.u32 256, 64
    %1762 = vbcast.lane.b32.xlu0 %v1456, %s1761
    %v1763 = vpop.permute.xlu0 %1762
    %s1765 = sor.u32 256, 72
    %1766 = vbcast.lane.b32.xlu0 %v1456, %s1765
    %v1767 = vpop.permute.xlu0 %1766
    %s1769 = sor.u32 256, 80
    %1770 = vbcast.lane.b32.xlu0 %v1456, %s1769
    %v1771 = vpop.permute.xlu0 %1770
    %s1773 = sor.u32 256, 88
    %1774 = vbcast.lane.b32.xlu0 %v1456, %s1773
    %v1775 = vpop.permute.xlu0 %1774
    %s1777 = sor.u32 256, 96
    %1778 = vbcast.lane.b32.xlu0 %v1456, %s1777
    %v1779 = vpop.permute.xlu0 %1778
    %s1781 = sor.u32 256, 104
    %1782 = vbcast.lane.b32.xlu0 %v1456, %s1781
    %v1783 = vpop.permute.xlu0 %1782
    %s1785 = sor.u32 256, 112
    %1786 = vbcast.lane.b32.xlu0 %v1456, %s1785
    %v1787 = vpop.permute.xlu0 %1786
    %s1789 = sor.u32 256, 120
    %1790 = vbcast.lane.b32.xlu0 %v1456, %s1789
    %v1791 = vpop.permute.xlu0 %1790
    %1793 = vbcast.lane.b32.xlu0 %v1460, 256
    %v1794 = vpop.permute.xlu0 %1793
    %s1796 = sor.u32 256, 8
    %1797 = vbcast.lane.b32.xlu0 %v1460, %s1796
    %v1798 = vpop.permute.xlu0 %1797
    %s1800 = sor.u32 256, 16
    %1801 = vbcast.lane.b32.xlu0 %v1460, %s1800
    %v1802 = vpop.permute.xlu0 %1801
    %s1804 = sor.u32 256, 24
    %1805 = vbcast.lane.b32.xlu0 %v1460, %s1804
    %v1806 = vpop.permute.xlu0 %1805
    %s1808 = sor.u32 256, 32
    %1809 = vbcast.lane.b32.xlu0 %v1460, %s1808
    %v1810 = vpop.permute.xlu0 %1809
    %s1812 = sor.u32 256, 40
    %1813 = vbcast.lane.b32.xlu0 %v1460, %s1812
    %v1814 = vpop.permute.xlu0 %1813
    %s1816 = sor.u32 256, 48
    %1817 = vbcast.lane.b32.xlu0 %v1460, %s1816
    %v1818 = vpop.permute.xlu0 %1817
    %s1820 = sor.u32 256, 56
    %1821 = vbcast.lane.b32.xlu0 %v1460, %s1820
    %v1822 = vpop.permute.xlu0 %1821
    %s1824 = sor.u32 256, 64
    %1825 = vbcast.lane.b32.xlu0 %v1460, %s1824
    %v1826 = vpop.permute.xlu0 %1825
    %s1828 = sor.u32 256, 72
    %1829 = vbcast.lane.b32.xlu0 %v1460, %s1828
    %v1830 = vpop.permute.xlu0 %1829
    %s1832 = sor.u32 256, 80
    %1833 = vbcast.lane.b32.xlu0 %v1460, %s1832
    %v1834 = vpop.permute.xlu0 %1833
    %s1836 = sor.u32 256, 88
    %1837 = vbcast.lane.b32.xlu0 %v1460, %s1836
    %v1838 = vpop.permute.xlu0 %1837
    %s1840 = sor.u32 256, 96
    %1841 = vbcast.lane.b32.xlu0 %v1460, %s1840
    %v1842 = vpop.permute.xlu0 %1841
    %s1844 = sor.u32 256, 104
    %1845 = vbcast.lane.b32.xlu0 %v1460, %s1844
    %v1846 = vpop.permute.xlu0 %1845
    %s1848 = sor.u32 256, 112
    %1849 = vbcast.lane.b32.xlu0 %v1460, %s1848
    %v1850 = vpop.permute.xlu0 %1849
    %s1852 = sor.u32 256, 120
    %1853 = vbcast.lane.b32.xlu0 %v1460, %s1852
    %v1854 = vpop.permute.xlu0 %1853
    %1856 = vbcast.lane.b32.xlu0 %v1464, 256
    %v1857 = vpop.permute.xlu0 %1856
    %s1859 = sor.u32 256, 8
    %1860 = vbcast.lane.b32.xlu0 %v1464, %s1859
    %v1861 = vpop.permute.xlu0 %1860
    %s1863 = sor.u32 256, 16
    %1864 = vbcast.lane.b32.xlu0 %v1464, %s1863
    %v1865 = vpop.permute.xlu0 %1864
    %s1867 = sor.u32 256, 24
    %1868 = vbcast.lane.b32.xlu0 %v1464, %s1867
    %v1869 = vpop.permute.xlu0 %1868
    %s1871 = sor.u32 256, 32
    %1872 = vbcast.lane.b32.xlu0 %v1464, %s1871
    %v1873 = vpop.permute.xlu0 %1872
    %s1875 = sor.u32 256, 40
    %1876 = vbcast.lane.b32.xlu0 %v1464, %s1875
    %v1877 = vpop.permute.xlu0 %1876
    %s1879 = sor.u32 256, 48
    %1880 = vbcast.lane.b32.xlu0 %v1464, %s1879
    %v1881 = vpop.permute.xlu0 %1880
    %s1883 = sor.u32 256, 56
    %1884 = vbcast.lane.b32.xlu0 %v1464, %s1883
    %v1885 = vpop.permute.xlu0 %1884
    %s1887 = sor.u32 256, 64
    %1888 = vbcast.lane.b32.xlu0 %v1464, %s1887
    %v1889 = vpop.permute.xlu0 %1888
    %s1891 = sor.u32 256, 72
    %1892 = vbcast.lane.b32.xlu0 %v1464, %s1891
    %v1893 = vpop.permute.xlu0 %1892
    %s1895 = sor.u32 256, 80
    %1896 = vbcast.lane.b32.xlu0 %v1464, %s1895
    %v1897 = vpop.permute.xlu0 %1896
    %s1899 = sor.u32 256, 88
    %1900 = vbcast.lane.b32.xlu0 %v1464, %s1899
    %v1901 = vpop.permute.xlu0 %1900
    %s1903 = sor.u32 256, 96
    %1904 = vbcast.lane.b32.xlu0 %v1464, %s1903
    %v1905 = vpop.permute.xlu0 %1904
    %s1907 = sor.u32 256, 104
    %1908 = vbcast.lane.b32.xlu0 %v1464, %s1907
    %v1909 = vpop.permute.xlu0 %1908
    %s1911 = sor.u32 256, 112
    %1912 = vbcast.lane.b32.xlu0 %v1464, %s1911
    %v1913 = vpop.permute.xlu0 %1912
    %s1915 = sor.u32 256, 120
    %1916 = vbcast.lane.b32.xlu0 %v1464, %s1915
    %v1917 = vpop.permute.xlu0 %1916
    %1919 = vbcast.lane.b32.xlu0 %v1468, 256
    %v1920 = vpop.permute.xlu0 %1919
    %s1922 = sor.u32 256, 8
    %1923 = vbcast.lane.b32.xlu0 %v1468, %s1922
    %v1924 = vpop.permute.xlu0 %1923
    %s1926 = sor.u32 256, 16
    %1927 = vbcast.lane.b32.xlu0 %v1468, %s1926
    %v1928 = vpop.permute.xlu0 %1927
    %s1930 = sor.u32 256, 24
    %1931 = vbcast.lane.b32.xlu0 %v1468, %s1930
    %v1932 = vpop.permute.xlu0 %1931
    %s1934 = sor.u32 256, 32
    %1935 = vbcast.lane.b32.xlu0 %v1468, %s1934
    %v1936 = vpop.permute.xlu0 %1935
    %s1938 = sor.u32 256, 40
    %1939 = vbcast.lane.b32.xlu0 %v1468, %s1938
    %v1940 = vpop.permute.xlu0 %1939
    %s1942 = sor.u32 256, 48
    %1943 = vbcast.lane.b32.xlu0 %v1468, %s1942
    %v1944 = vpop.permute.xlu0 %1943
    %s1946 = sor.u32 256, 56
    %1947 = vbcast.lane.b32.xlu0 %v1468, %s1946
    %v1948 = vpop.permute.xlu0 %1947
    %s1950 = sor.u32 256, 64
    %1951 = vbcast.lane.b32.xlu0 %v1468, %s1950
    %v1952 = vpop.permute.xlu0 %1951
    %s1954 = sor.u32 256, 72
    %1955 = vbcast.lane.b32.xlu0 %v1468, %s1954
    %v1956 = vpop.permute.xlu0 %1955
    %s1958 = sor.u32 256, 80
    %1959 = vbcast.lane.b32.xlu0 %v1468, %s1958
    %v1960 = vpop.permute.xlu0 %1959
    %s1962 = sor.u32 256, 88
    %1963 = vbcast.lane.b32.xlu0 %v1468, %s1962
    %v1964 = vpop.permute.xlu0 %1963
    %s1966 = sor.u32 256, 96
    %1967 = vbcast.lane.b32.xlu0 %v1468, %s1966
    %v1968 = vpop.permute.xlu0 %1967
    %s1970 = sor.u32 256, 104
    %1971 = vbcast.lane.b32.xlu0 %v1468, %s1970
    %v1972 = vpop.permute.xlu0 %1971
    %s1974 = sor.u32 256, 112
    %1975 = vbcast.lane.b32.xlu0 %v1468, %s1974
    %v1976 = vpop.permute.xlu0 %1975
    %s1978 = sor.u32 256, 120
    %1979 = vbcast.lane.b32.xlu0 %v1468, %s1978
    %v1980 = vpop.permute.xlu0 %1979
    %1982 = vbcast.lane.b32.xlu0 %v1472, 256
    %v1983 = vpop.permute.xlu0 %1982
    %s1985 = sor.u32 256, 8
    %1986 = vbcast.lane.b32.xlu0 %v1472, %s1985
    %v1987 = vpop.permute.xlu0 %1986
    %s1989 = sor.u32 256, 16
    %1990 = vbcast.lane.b32.xlu0 %v1472, %s1989
    %v1991 = vpop.permute.xlu0 %1990
    %s1993 = sor.u32 256, 24
    %1994 = vbcast.lane.b32.xlu0 %v1472, %s1993
    %v1995 = vpop.permute.xlu0 %1994
    %s1997 = sor.u32 256, 32
    %1998 = vbcast.lane.b32.xlu0 %v1472, %s1997
    %v1999 = vpop.permute.xlu0 %1998
    %s2001 = sor.u32 256, 40
    %2002 = vbcast.lane.b32.xlu0 %v1472, %s2001
    %v2003 = vpop.permute.xlu0 %2002
    %s2005 = sor.u32 256, 48
    %2006 = vbcast.lane.b32.xlu0 %v1472, %s2005
    %v2007 = vpop.permute.xlu0 %2006
    %s2009 = sor.u32 256, 56
    %2010 = vbcast.lane.b32.xlu0 %v1472, %s2009
    %v2011 = vpop.permute.xlu0 %2010
    %s2013 = sor.u32 256, 64
    %2014 = vbcast.lane.b32.xlu0 %v1472, %s2013
    %v2015 = vpop.permute.xlu0 %2014
    %s2017 = sor.u32 256, 72
    %2018 = vbcast.lane.b32.xlu0 %v1472, %s2017
    %v2019 = vpop.permute.xlu0 %2018
    %s2021 = sor.u32 256, 80
    %2022 = vbcast.lane.b32.xlu0 %v1472, %s2021
    %v2023 = vpop.permute.xlu0 %2022
    %s2025 = sor.u32 256, 88
    %2026 = vbcast.lane.b32.xlu0 %v1472, %s2025
    %v2027 = vpop.permute.xlu0 %2026
    %s2029 = sor.u32 256, 96
    %2030 = vbcast.lane.b32.xlu0 %v1472, %s2029
    %v2031 = vpop.permute.xlu0 %2030
    %s2033 = sor.u32 256, 104
    %2034 = vbcast.lane.b32.xlu0 %v1472, %s2033
    %v2035 = vpop.permute.xlu0 %2034
    %s2037 = sor.u32 256, 112
    %2038 = vbcast.lane.b32.xlu0 %v1472, %s2037
    %v2039 = vpop.permute.xlu0 %2038
    %s2041 = sor.u32 256, 120
    %2042 = vbcast.lane.b32.xlu0 %v1472, %s2041
    %v2043 = vpop.permute.xlu0 %2042
    %2045 = vbcast.lane.b32.xlu0 %v1476, 256
    %v2046 = vpop.permute.xlu0 %2045
    %s2048 = sor.u32 256, 8
    %2049 = vbcast.lane.b32.xlu0 %v1476, %s2048
    %v2050 = vpop.permute.xlu0 %2049
    %s2052 = sor.u32 256, 16
    %2053 = vbcast.lane.b32.xlu0 %v1476, %s2052
    %v2054 = vpop.permute.xlu0 %2053
    %s2056 = sor.u32 256, 24
    %2057 = vbcast.lane.b32.xlu0 %v1476, %s2056
    %v2058 = vpop.permute.xlu0 %2057
    %s2060 = sor.u32 256, 32
    %2061 = vbcast.lane.b32.xlu0 %v1476, %s2060
    %v2062 = vpop.permute.xlu0 %2061
    %s2064 = sor.u32 256, 40
    %2065 = vbcast.lane.b32.xlu0 %v1476, %s2064
    %v2066 = vpop.permute.xlu0 %2065
    %s2068 = sor.u32 256, 48
    %2069 = vbcast.lane.b32.xlu0 %v1476, %s2068
    %v2070 = vpop.permute.xlu0 %2069
    %s2072 = sor.u32 256, 56
    %2073 = vbcast.lane.b32.xlu0 %v1476, %s2072
    %v2074 = vpop.permute.xlu0 %2073
    %s2076 = sor.u32 256, 64
    %2077 = vbcast.lane.b32.xlu0 %v1476, %s2076
    %v2078 = vpop.permute.xlu0 %2077
    %s2080 = sor.u32 256, 72
    %2081 = vbcast.lane.b32.xlu0 %v1476, %s2080
    %v2082 = vpop.permute.xlu0 %2081
    %s2084 = sor.u32 256, 80
    %2085 = vbcast.lane.b32.xlu0 %v1476, %s2084
    %v2086 = vpop.permute.xlu0 %2085
    %s2088 = sor.u32 256, 88
    %2089 = vbcast.lane.b32.xlu0 %v1476, %s2088
    %v2090 = vpop.permute.xlu0 %2089
    %s2092 = sor.u32 256, 96
    %2093 = vbcast.lane.b32.xlu0 %v1476, %s2092
    %v2094 = vpop.permute.xlu0 %2093
    %s2096 = sor.u32 256, 104
    %2097 = vbcast.lane.b32.xlu0 %v1476, %s2096
    %v2098 = vpop.permute.xlu0 %2097
    %s2100 = sor.u32 256, 112
    %2101 = vbcast.lane.b32.xlu0 %v1476, %s2100
    %v2102 = vpop.permute.xlu0 %2101
    %s2104 = sor.u32 256, 120
    %2105 = vbcast.lane.b32.xlu0 %v1476, %s2104
    %v2106 = vpop.permute.xlu0 %2105
    %v2267 = vmul.f32 %v1430, %v1479
    %v2268 = vmul.f32 %v1430, %v1483
    %v2269 = vmul.f32 %v1430, %v1487
    %v2270 = vmul.f32 %v1430, %v1491
    %v2271 = vmul.f32 %v1430, %v1495
    %v2272 = vmul.f32 %v1430, %v1499
    %v2273 = vmul.f32 %v1430, %v1503
    %v2274 = vmul.f32 %v1430, %v1507
    %v2275 = vmul.f32 %v1430, %v1511
    %v2276 = vmul.f32 %v1430, %v1515
    %v2277 = vmul.f32 %v1430, %v1519
    %v2278 = vmul.f32 %v1430, %v1523
    %v2279 = vmul.f32 %v1430, %v1527
    %v2280 = vmul.f32 %v1430, %v1531
    %v2281 = vmul.f32 %v1430, %v1535
    %v2282 = vmul.f32 %v1430, %v1539
    %v2283 = vmul.f32 %v1430, %v1542
    %v2284 = vmul.f32 %v1430, %v1546
    %v2285 = vmul.f32 %v1430, %v1550
    %v2286 = vmul.f32 %v1430, %v1554
    %v2287 = vmul.f32 %v1430, %v1558
    %v2288 = vmul.f32 %v1430, %v1562
    %v2289 = vmul.f32 %v1430, %v1566
    %v2290 = vmul.f32 %v1430, %v1570
    %v2291 = vmul.f32 %v1430, %v1574
    %v2292 = vmul.f32 %v1430, %v1578
    %v2293 = vmul.f32 %v1430, %v1582
    %v2294 = vmul.f32 %v1430, %v1586
    %v2295 = vmul.f32 %v1430, %v1590
    %v2296 = vmul.f32 %v1430, %v1594
    %v2297 = vmul.f32 %v1430, %v1598
    %v2298 = vmul.f32 %v1430, %v1602
    %v2299 = vmul.f32 %v1430, %v1605
    %v2300 = vmul.f32 %v1430, %v1609
    %v2301 = vmul.f32 %v1430, %v1613
    %v2302 = vmul.f32 %v1430, %v1617
    %v2303 = vmul.f32 %v1430, %v1621
    %v2304 = vmul.f32 %v1430, %v1625
    %v2305 = vmul.f32 %v1430, %v1629
    %v2306 = vmul.f32 %v1430, %v1633
    %v2307 = vmul.f32 %v1430, %v1637
    %v2308 = vmul.f32 %v1430, %v1641
    %v2309 = vmul.f32 %v1430, %v1645
    %v2310 = vmul.f32 %v1430, %v1649
    %v2311 = vmul.f32 %v1430, %v1653
    %v2312 = vmul.f32 %v1430, %v1657
    %v2313 = vmul.f32 %v1430, %v1661
    %v2314 = vmul.f32 %v1430, %v1665
    %v2315 = vmul.f32 %v1430, %v1668
    %v2316 = vmul.f32 %v1430, %v1672
    %v2317 = vmul.f32 %v1430, %v1676
    %v2318 = vmul.f32 %v1430, %v1680
    %v2319 = vmul.f32 %v1430, %v1684
    %v2320 = vmul.f32 %v1430, %v1688
    %v2321 = vmul.f32 %v1430, %v1692
    %v2322 = vmul.f32 %v1430, %v1696
    %v2323 = vmul.f32 %v1430, %v1700
    %v2324 = vmul.f32 %v1430, %v1704
    %v2325 = vmul.f32 %v1430, %v1708
    %v2326 = vmul.f32 %v1430, %v1712
    %v2327 = vmul.f32 %v1430, %v1716
    %v2328 = vmul.f32 %v1430, %v1720
    %v2329 = vmul.f32 %v1430, %v1724
    %v2330 = vmul.f32 %v1430, %v1728
    %v2331 = vmul.f32 %v1430, %v1731
    %v2332 = vmul.f32 %v1430, %v1735
    %v2333 = vmul.f32 %v1430, %v1739
    %v2334 = vmul.f32 %v1430, %v1743
    %v2335 = vmul.f32 %v1430, %v1747
    %v2336 = vmul.f32 %v1430, %v1751
    %v2337 = vmul.f32 %v1430, %v1755
    %v2338 = vmul.f32 %v1430, %v1759
    %v2339 = vmul.f32 %v1430, %v1763
    %v2340 = vmul.f32 %v1430, %v1767
    %v2341 = vmul.f32 %v1430, %v1771
    %v2342 = vmul.f32 %v1430, %v1775
    %v2343 = vmul.f32 %v1430, %v1779
    %v2344 = vmul.f32 %v1430, %v1783
    %v2345 = vmul.f32 %v1430, %v1787
    %v2346 = vmul.f32 %v1430, %v1791
    %v2347 = vmul.f32 %v1430, %v1794
    %v2348 = vmul.f32 %v1430, %v1798
    %v2349 = vmul.f32 %v1430, %v1802
    %v2350 = vmul.f32 %v1430, %v1806
    %v2351 = vmul.f32 %v1430, %v1810
    %v2352 = vmul.f32 %v1430, %v1814
    %v2353 = vmul.f32 %v1430, %v1818
    %v2354 = vmul.f32 %v1430, %v1822
    %v2355 = vmul.f32 %v1430, %v1826
    %v2356 = vmul.f32 %v1430, %v1830
    %v2357 = vmul.f32 %v1430, %v1834
    %v2358 = vmul.f32 %v1430, %v1838
    %v2359 = vmul.f32 %v1430, %v1842
    %v2360 = vmul.f32 %v1430, %v1846
    %v2361 = vmul.f32 %v1430, %v1850
    %v2362 = vmul.f32 %v1430, %v1854
    %v2363 = vmul.f32 %v1430, %v1857
    %v2364 = vmul.f32 %v1430, %v1861
    %v2365 = vmul.f32 %v1430, %v1865
    %v2366 = vmul.f32 %v1430, %v1869
    %v2367 = vmul.f32 %v1430, %v1873
    %v2368 = vmul.f32 %v1430, %v1877
    %v2369 = vmul.f32 %v1430, %v1881
    %v2370 = vmul.f32 %v1430, %v1885
    %v2371 = vmul.f32 %v1430, %v1889
    %v2372 = vmul.f32 %v1430, %v1893
    %v2373 = vmul.f32 %v1430, %v1897
    %v2374 = vmul.f32 %v1430, %v1901
    %v2375 = vmul.f32 %v1430, %v1905
    %v2376 = vmul.f32 %v1430, %v1909
    %v2377 = vmul.f32 %v1430, %v1913
    %v2378 = vmul.f32 %v1430, %v1917
    %v2379 = vmul.f32 %v1430, %v1920
    %v2380 = vmul.f32 %v1430, %v1924
    %v2381 = vmul.f32 %v1430, %v1928
    %v2382 = vmul.f32 %v1430, %v1932
    %v2383 = vmul.f32 %v1430, %v1936
    %v2384 = vmul.f32 %v1430, %v1940
    %v2385 = vmul.f32 %v1430, %v1944
    %v2386 = vmul.f32 %v1430, %v1948
    %v2387 = vmul.f32 %v1430, %v1952
    %v2388 = vmul.f32 %v1430, %v1956
    %v2389 = vmul.f32 %v1430, %v1960
    %v2390 = vmul.f32 %v1430, %v1964
    %v2391 = vmul.f32 %v1430, %v1968
    %v2392 = vmul.f32 %v1430, %v1972
    %v2393 = vmul.f32 %v1430, %v1976
    %v2394 = vmul.f32 %v1430, %v1980
    %v2395 = vmul.f32 %v1430, %v1983
    %v2396 = vmul.f32 %v1430, %v1987
    %v2397 = vmul.f32 %v1430, %v1991
    %v2398 = vmul.f32 %v1430, %v1995
    %v2399 = vmul.f32 %v1430, %v1999
    %v2400 = vmul.f32 %v1430, %v2003
    %v2401 = vmul.f32 %v1430, %v2007
    %v2402 = vmul.f32 %v1430, %v2011
    %v2403 = vmul.f32 %v1430, %v2015
    %v2404 = vmul.f32 %v1430, %v2019
    %v2405 = vmul.f32 %v1430, %v2023
    %v2406 = vmul.f32 %v1430, %v2027
    %v2407 = vmul.f32 %v1430, %v2031
    %v2408 = vmul.f32 %v1430, %v2035
    %v2409 = vmul.f32 %v1430, %v2039
    %v2410 = vmul.f32 %v1430, %v2043
    %v2411 = vmul.f32 %v1430, %v2046
    %v2412 = vmul.f32 %v1430, %v2050
    %v2413 = vmul.f32 %v1430, %v2054
    %v2414 = vmul.f32 %v1430, %v2058
    %v2415 = vmul.f32 %v1430, %v2062
    %v2416 = vmul.f32 %v1430, %v2066
    %v2417 = vmul.f32 %v1430, %v2070
    %v2418 = vmul.f32 %v1430, %v2074
    %v2419 = vmul.f32 %v1430, %v2078
    %v2420 = vmul.f32 %v1430, %v2082
    %v2421 = vmul.f32 %v1430, %v2086
    %v2422 = vmul.f32 %v1430, %v2090
    %v2423 = vmul.f32 %v1430, %v2094
    %v2424 = vmul.f32 %v1430, %v2098
    %v2425 = vmul.f32 %v1430, %v2102
    %v2426 = vmul.f32 %v1430, %v2106
    %v2427 = vmul.f32 %v1434, %v1479
    %v2428 = vmul.f32 %v1434, %v1483
    %v2429 = vmul.f32 %v1434, %v1487
    %v2430 = vmul.f32 %v1434, %v1491
    %v2431 = vmul.f32 %v1434, %v1495
    %v2432 = vmul.f32 %v1434, %v1499
    %v2433 = vmul.f32 %v1434, %v1503
    %v2434 = vmul.f32 %v1434, %v1507
    %v2435 = vmul.f32 %v1434, %v1511
    %v2436 = vmul.f32 %v1434, %v1515
    %v2437 = vmul.f32 %v1434, %v1519
    %v2438 = vmul.f32 %v1434, %v1523
    %v2439 = vmul.f32 %v1434, %v1527
    %v2440 = vmul.f32 %v1434, %v1531
    %v2441 = vmul.f32 %v1434, %v1535
    %v2442 = vmul.f32 %v1434, %v1539
    %v2443 = vmul.f32 %v1434, %v1542
    %v2444 = vmul.f32 %v1434, %v1546
    %v2445 = vmul.f32 %v1434, %v1550
    %v2446 = vmul.f32 %v1434, %v1554
    %v2447 = vmul.f32 %v1434, %v1558
    %v2448 = vmul.f32 %v1434, %v1562
    %v2449 = vmul.f32 %v1434, %v1566
    %v2450 = vmul.f32 %v1434, %v1570
    %v2451 = vmul.f32 %v1434, %v1574
    %v2452 = vmul.f32 %v1434, %v1578
    %v2453 = vmul.f32 %v1434, %v1582
    %v2454 = vmul.f32 %v1434, %v1586
    %v2455 = vmul.f32 %v1434, %v1590
    %v2456 = vmul.f32 %v1434, %v1594
    %v2457 = vmul.f32 %v1434, %v1598
    %v2458 = vmul.f32 %v1434, %v1602
    %v2459 = vmul.f32 %v1434, %v1605
    %v2460 = vmul.f32 %v1434, %v1609
    %v2461 = vmul.f32 %v1434, %v1613
    %v2462 = vmul.f32 %v1434, %v1617
    %v2463 = vmul.f32 %v1434, %v1621
    %v2464 = vmul.f32 %v1434, %v1625
    %v2465 = vmul.f32 %v1434, %v1629
    %v2466 = vmul.f32 %v1434, %v1633
    %v2467 = vmul.f32 %v1434, %v1637
    %v2468 = vmul.f32 %v1434, %v1641
    %v2469 = vmul.f32 %v1434, %v1645
    %v2470 = vmul.f32 %v1434, %v1649
    %v2471 = vmul.f32 %v1434, %v1653
    %v2472 = vmul.f32 %v1434, %v1657
    %v2473 = vmul.f32 %v1434, %v1661
    %v2474 = vmul.f32 %v1434, %v1665
    %v2475 = vmul.f32 %v1434, %v1668
    %v2476 = vmul.f32 %v1434, %v1672
    %v2477 = vmul.f32 %v1434, %v1676
    %v2478 = vmul.f32 %v1434, %v1680
    %v2479 = vmul.f32 %v1434, %v1684
    %v2480 = vmul.f32 %v1434, %v1688
    %v2481 = vmul.f32 %v1434, %v1692
    %v2482 = vmul.f32 %v1434, %v1696
    %v2483 = vmul.f32 %v1434, %v1700
    %v2484 = vmul.f32 %v1434, %v1704
    %v2485 = vmul.f32 %v1434, %v1708
    %v2486 = vmul.f32 %v1434, %v1712
    %v2487 = vmul.f32 %v1434, %v1716
    %v2488 = vmul.f32 %v1434, %v1720
    %v2489 = vmul.f32 %v1434, %v1724
    %v2490 = vmul.f32 %v1434, %v1728
    %v2491 = vmul.f32 %v1434, %v1731
    %v2492 = vmul.f32 %v1434, %v1735
    %v2493 = vmul.f32 %v1434, %v1739
    %v2494 = vmul.f32 %v1434, %v1743
    %v2495 = vmul.f32 %v1434, %v1747
    %v2496 = vmul.f32 %v1434, %v1751
    %v2497 = vmul.f32 %v1434, %v1755
    %v2498 = vmul.f32 %v1434, %v1759
    %v2499 = vmul.f32 %v1434, %v1763
    %v2500 = vmul.f32 %v1434, %v1767
    %v2501 = vmul.f32 %v1434, %v1771
    %v2502 = vmul.f32 %v1434, %v1775
    %v2503 = vmul.f32 %v1434, %v1779
    %v2504 = vmul.f32 %v1434, %v1783
    %v2505 = vmul.f32 %v1434, %v1787
    %v2506 = vmul.f32 %v1434, %v1791
    %v2507 = vmul.f32 %v1434, %v1794
    %v2508 = vmul.f32 %v1434, %v1798
    %v2509 = vmul.f32 %v1434, %v1802
    %v2510 = vmul.f32 %v1434, %v1806
    %v2511 = vmul.f32 %v1434, %v1810
    %v2512 = vmul.f32 %v1434, %v1814
    %v2513 = vmul.f32 %v1434, %v1818
    %v2514 = vmul.f32 %v1434, %v1822
    %v2515 = vmul.f32 %v1434, %v1826
    %v2516 = vmul.f32 %v1434, %v1830
    %v2517 = vmul.f32 %v1434, %v1834
    %v2518 = vmul.f32 %v1434, %v1838
    %v2519 = vmul.f32 %v1434, %v1842
    %v2520 = vmul.f32 %v1434, %v1846
    %v2521 = vmul.f32 %v1434, %v1850
    %v2522 = vmul.f32 %v1434, %v1854
    %v2523 = vmul.f32 %v1434, %v1857
    %v2524 = vmul.f32 %v1434, %v1861
    %v2525 = vmul.f32 %v1434, %v1865
    %v2526 = vmul.f32 %v1434, %v1869
    %v2527 = vmul.f32 %v1434, %v1873
    %v2528 = vmul.f32 %v1434, %v1877
    %v2529 = vmul.f32 %v1434, %v1881
    %v2530 = vmul.f32 %v1434, %v1885
    %v2531 = vmul.f32 %v1434, %v1889
    %v2532 = vmul.f32 %v1434, %v1893
    %v2533 = vmul.f32 %v1434, %v1897
    %v2534 = vmul.f32 %v1434, %v1901
    %v2535 = vmul.f32 %v1434, %v1905
    %v2536 = vmul.f32 %v1434, %v1909
    %v2537 = vmul.f32 %v1434, %v1913
    %v2538 = vmul.f32 %v1434, %v1917
    %v2539 = vmul.f32 %v1434, %v1920
    %v2540 = vmul.f32 %v1434, %v1924
    %v2541 = vmul.f32 %v1434, %v1928
    %v2542 = vmul.f32 %v1434, %v1932
    %v2543 = vmul.f32 %v1434, %v1936
    %v2544 = vmul.f32 %v1434, %v1940
    %v2545 = vmul.f32 %v1434, %v1944
    %v2546 = vmul.f32 %v1434, %v1948
    %v2547 = vmul.f32 %v1434, %v1952
    %v2548 = vmul.f32 %v1434, %v1956
    %v2549 = vmul.f32 %v1434, %v1960
    %v2550 = vmul.f32 %v1434, %v1964
    %v2551 = vmul.f32 %v1434, %v1968
    %v2552 = vmul.f32 %v1434, %v1972
    %v2553 = vmul.f32 %v1434, %v1976
    %v2554 = vmul.f32 %v1434, %v1980
    %v2555 = vmul.f32 %v1434, %v1983
    %v2556 = vmul.f32 %v1434, %v1987
    %v2557 = vmul.f32 %v1434, %v1991
    %v2558 = vmul.f32 %v1434, %v1995
    %v2559 = vmul.f32 %v1434, %v1999
    %v2560 = vmul.f32 %v1434, %v2003
    %v2561 = vmul.f32 %v1434, %v2007
    %v2562 = vmul.f32 %v1434, %v2011
    %v2563 = vmul.f32 %v1434, %v2015
    %v2564 = vmul.f32 %v1434, %v2019
    %v2565 = vmul.f32 %v1434, %v2023
    %v2566 = vmul.f32 %v1434, %v2027
    %v2567 = vmul.f32 %v1434, %v2031
    %v2568 = vmul.f32 %v1434, %v2035
    %v2569 = vmul.f32 %v1434, %v2039
    %v2570 = vmul.f32 %v1434, %v2043
    %v2571 = vmul.f32 %v1434, %v2046
    %v2572 = vmul.f32 %v1434, %v2050
    %v2573 = vmul.f32 %v1434, %v2054
    %v2574 = vmul.f32 %v1434, %v2058
    %v2575 = vmul.f32 %v1434, %v2062
    %v2576 = vmul.f32 %v1434, %v2066
    %v2577 = vmul.f32 %v1434, %v2070
    %v2578 = vmul.f32 %v1434, %v2074
    %v2579 = vmul.f32 %v1434, %v2078
    %v2580 = vmul.f32 %v1434, %v2082
    %v2581 = vmul.f32 %v1434, %v2086
    %v2582 = vmul.f32 %v1434, %v2090
    %v2583 = vmul.f32 %v1434, %v2094
    %v2584 = vmul.f32 %v1434, %v2098
    %v2585 = vmul.f32 %v1434, %v2102
    %v2586 = vmul.f32 %v1434, %v2106
    %v2587 = vadd.f32 %v1103, %v2267
    %v2588 = vadd.f32 %v1104, %v2268
    %v2589 = vadd.f32 %v1105, %v2269
    %v2590 = vadd.f32 %v1106, %v2270
    %v2591 = vadd.f32 %v1107, %v2271
    %v2592 = vadd.f32 %v1108, %v2272
    %v2593 = vadd.f32 %v1109, %v2273
    %v2594 = vadd.f32 %v1110, %v2274
    %v2595 = vadd.f32 %v1111, %v2275
    %v2596 = vadd.f32 %v1112, %v2276
    %v2597 = vadd.f32 %v1113, %v2277
    %v2598 = vadd.f32 %v1114, %v2278
    %v2599 = vadd.f32 %v1115, %v2279
    %v2600 = vadd.f32 %v1116, %v2280
    %v2601 = vadd.f32 %v1117, %v2281
    %v2602 = vadd.f32 %v1118, %v2282
    %v2603 = vadd.f32 %v1119, %v2283
    %v2604 = vadd.f32 %v1120, %v2284
    %v2605 = vadd.f32 %v1121, %v2285
    %v2606 = vadd.f32 %v1122, %v2286
    %v2607 = vadd.f32 %v1123, %v2287
    %v2608 = vadd.f32 %v1124, %v2288
    %v2609 = vadd.f32 %v1125, %v2289
    %v2610 = vadd.f32 %v1126, %v2290
    %v2611 = vadd.f32 %v1127, %v2291
    %v2612 = vadd.f32 %v1128, %v2292
    %v2613 = vadd.f32 %v1129, %v2293
    %v2614 = vadd.f32 %v1130, %v2294
    %v2615 = vadd.f32 %v1131, %v2295
    %v2616 = vadd.f32 %v1132, %v2296
    %v2617 = vadd.f32 %v1133, %v2297
    %v2618 = vadd.f32 %v1134, %v2298
    %v2619 = vadd.f32 %v1135, %v2299
    %v2620 = vadd.f32 %v1136, %v2300
    %v2621 = vadd.f32 %v1137, %v2301
    %v2622 = vadd.f32 %v1138, %v2302
    %v2623 = vadd.f32 %v1139, %v2303
    %v2624 = vadd.f32 %v1140, %v2304
    %v2625 = vadd.f32 %v1141, %v2305
    %v2626 = vadd.f32 %v1142, %v2306
    %v2627 = vadd.f32 %v1143, %v2307
    %v2628 = vadd.f32 %v1144, %v2308
    %v2629 = vadd.f32 %v1145, %v2309
    %v2630 = vadd.f32 %v1146, %v2310
    %v2631 = vadd.f32 %v1147, %v2311
    %v2632 = vadd.f32 %v1148, %v2312
    %v2633 = vadd.f32 %v1149, %v2313
    %v2634 = vadd.f32 %v1150, %v2314
    %v2635 = vadd.f32 %v1151, %v2315
    %v2636 = vadd.f32 %v1152, %v2316
    %v2637 = vadd.f32 %v1153, %v2317
    %v2638 = vadd.f32 %v1154, %v2318
    %v2639 = vadd.f32 %v1155, %v2319
    %v2640 = vadd.f32 %v1156, %v2320
    %v2641 = vadd.f32 %v1157, %v2321
    %v2642 = vadd.f32 %v1158, %v2322
    %v2643 = vadd.f32 %v1159, %v2323
    %v2644 = vadd.f32 %v1160, %v2324
    %v2645 = vadd.f32 %v1161, %v2325
    %v2646 = vadd.f32 %v1162, %v2326
    %v2647 = vadd.f32 %v1163, %v2327
    %v2648 = vadd.f32 %v1164, %v2328
    %v2649 = vadd.f32 %v1165, %v2329
    %v2650 = vadd.f32 %v1166, %v2330
    %v2651 = vadd.f32 %v1167, %v2331
    %v2652 = vadd.f32 %v1168, %v2332
    %v2653 = vadd.f32 %v1169, %v2333
    %v2654 = vadd.f32 %v1170, %v2334
    %v2655 = vadd.f32 %v1171, %v2335
    %v2656 = vadd.f32 %v1172, %v2336
    %v2657 = vadd.f32 %v1173, %v2337
    %v2658 = vadd.f32 %v1174, %v2338
    %v2659 = vadd.f32 %v1175, %v2339
    %v2660 = vadd.f32 %v1176, %v2340
    %v2661 = vadd.f32 %v1177, %v2341
    %v2662 = vadd.f32 %v1178, %v2342
    %v2663 = vadd.f32 %v1179, %v2343
    %v2664 = vadd.f32 %v1180, %v2344
    %v2665 = vadd.f32 %v1181, %v2345
    %v2666 = vadd.f32 %v1182, %v2346
    %v2667 = vadd.f32 %v1183, %v2347
    %v2668 = vadd.f32 %v1184, %v2348
    %v2669 = vadd.f32 %v1185, %v2349
    %v2670 = vadd.f32 %v1186, %v2350
    %v2671 = vadd.f32 %v1187, %v2351
    %v2672 = vadd.f32 %v1188, %v2352
    %v2673 = vadd.f32 %v1189, %v2353
    %v2674 = vadd.f32 %v1190, %v2354
    %v2675 = vadd.f32 %v1191, %v2355
    %v2676 = vadd.f32 %v1192, %v2356
    %v2677 = vadd.f32 %v1193, %v2357
    %v2678 = vadd.f32 %v1194, %v2358
    %v2679 = vadd.f32 %v1195, %v2359
    %v2680 = vadd.f32 %v1196, %v2360
    %v2681 = vadd.f32 %v1197, %v2361
    %v2682 = vadd.f32 %v1198, %v2362
    %v2683 = vadd.f32 %v1199, %v2363
    %v2684 = vadd.f32 %v1200, %v2364
    %v2685 = vadd.f32 %v1201, %v2365
    %v2686 = vadd.f32 %v1202, %v2366
    %v2687 = vadd.f32 %v1203, %v2367
    %v2688 = vadd.f32 %v1204, %v2368
    %v2689 = vadd.f32 %v1205, %v2369
    %v2690 = vadd.f32 %v1206, %v2370
    %v2691 = vadd.f32 %v1207, %v2371
    %v2692 = vadd.f32 %v1208, %v2372
    %v2693 = vadd.f32 %v1209, %v2373
    %v2694 = vadd.f32 %v1210, %v2374
    %v2695 = vadd.f32 %v1211, %v2375
    %v2696 = vadd.f32 %v1212, %v2376
    %v2697 = vadd.f32 %v1213, %v2377
    %v2698 = vadd.f32 %v1214, %v2378
    %v2699 = vadd.f32 %v1215, %v2379
    %v2700 = vadd.f32 %v1216, %v2380
    %v2701 = vadd.f32 %v1217, %v2381
    %v2702 = vadd.f32 %v1218, %v2382
    %v2703 = vadd.f32 %v1219, %v2383
    %v2704 = vadd.f32 %v1220, %v2384
    %v2705 = vadd.f32 %v1221, %v2385
    %v2706 = vadd.f32 %v1222, %v2386
    %v2707 = vadd.f32 %v1223, %v2387
    %v2708 = vadd.f32 %v1224, %v2388
    %v2709 = vadd.f32 %v1225, %v2389
    %v2710 = vadd.f32 %v1226, %v2390
    %v2711 = vadd.f32 %v1227, %v2391
    %v2712 = vadd.f32 %v1228, %v2392
    %v2713 = vadd.f32 %v1229, %v2393
    %v2714 = vadd.f32 %v1230, %v2394
    %v2715 = vadd.f32 %v1231, %v2395
    %v2716 = vadd.f32 %v1232, %v2396
    %v2717 = vadd.f32 %v1233, %v2397
    %v2718 = vadd.f32 %v1234, %v2398
    %v2719 = vadd.f32 %v1235, %v2399
    %v2720 = vadd.f32 %v1236, %v2400
    %v2721 = vadd.f32 %v1237, %v2401
    %v2722 = vadd.f32 %v1238, %v2402
    %v2723 = vadd.f32 %v1239, %v2403
    %v2724 = vadd.f32 %v1240, %v2404
    %v2725 = vadd.f32 %v1241, %v2405
    %v2726 = vadd.f32 %v1242, %v2406
    %v2727 = vadd.f32 %v1243, %v2407
    %v2728 = vadd.f32 %v1244, %v2408
    %v2729 = vadd.f32 %v1245, %v2409
    %v2730 = vadd.f32 %v1246, %v2410
    %v2731 = vadd.f32 %v1247, %v2411
    %v2732 = vadd.f32 %v1248, %v2412
    %v2733 = vadd.f32 %v1249, %v2413
    %v2734 = vadd.f32 %v1250, %v2414
    %v2735 = vadd.f32 %v1251, %v2415
    %v2736 = vadd.f32 %v1252, %v2416
    %v2737 = vadd.f32 %v1253, %v2417
    %v2738 = vadd.f32 %v1254, %v2418
    %v2739 = vadd.f32 %v1255, %v2419
    %v2740 = vadd.f32 %v1256, %v2420
    %v2741 = vadd.f32 %v1257, %v2421
    %v2742 = vadd.f32 %v1258, %v2422
    %v2743 = vadd.f32 %v1259, %v2423
    %v2744 = vadd.f32 %v1260, %v2424
    %v2745 = vadd.f32 %v1261, %v2425
    %v2746 = vadd.f32 %v1262, %v2426
    %v2747 = vadd.f32 %v1263, %v2427
    %v2748 = vadd.f32 %v1264, %v2428
    %v2749 = vadd.f32 %v1265, %v2429
    %v2750 = vadd.f32 %v1266, %v2430
    %v2751 = vadd.f32 %v1267, %v2431
    %v2752 = vadd.f32 %v1268, %v2432
    %v2753 = vadd.f32 %v1269, %v2433
    %v2754 = vadd.f32 %v1270, %v2434
    %v2755 = vadd.f32 %v1271, %v2435
    %v2756 = vadd.f32 %v1272, %v2436
    %v2757 = vadd.f32 %v1273, %v2437
    %v2758 = vadd.f32 %v1274, %v2438
    %v2759 = vadd.f32 %v1275, %v2439
    %v2760 = vadd.f32 %v1276, %v2440
    %v2761 = vadd.f32 %v1277, %v2441
    %v2762 = vadd.f32 %v1278, %v2442
    %v2763 = vadd.f32 %v1279, %v2443
    %v2764 = vadd.f32 %v1280, %v2444
    %v2765 = vadd.f32 %v1281, %v2445
    %v2766 = vadd.f32 %v1282, %v2446
    %v2767 = vadd.f32 %v1283, %v2447
    %v2768 = vadd.f32 %v1284, %v2448
    %v2769 = vadd.f32 %v1285, %v2449
    %v2770 = vadd.f32 %v1286, %v2450
    %v2771 = vadd.f32 %v1287, %v2451
    %v2772 = vadd.f32 %v1288, %v2452
    %v2773 = vadd.f32 %v1289, %v2453
    %v2774 = vadd.f32 %v1290, %v2454
    %v2775 = vadd.f32 %v1291, %v2455
    %v2776 = vadd.f32 %v1292, %v2456
    %v2777 = vadd.f32 %v1293, %v2457
    %v2778 = vadd.f32 %v1294, %v2458
    %v2779 = vadd.f32 %v1295, %v2459
    %v2780 = vadd.f32 %v1296, %v2460
    %v2781 = vadd.f32 %v1297, %v2461
    %v2782 = vadd.f32 %v1298, %v2462
    %v2783 = vadd.f32 %v1299, %v2463
    %v2784 = vadd.f32 %v1300, %v2464
    %v2785 = vadd.f32 %v1301, %v2465
    %v2786 = vadd.f32 %v1302, %v2466
    %v2787 = vadd.f32 %v1303, %v2467
    %v2788 = vadd.f32 %v1304, %v2468
    %v2789 = vadd.f32 %v1305, %v2469
    %v2790 = vadd.f32 %v1306, %v2470
    %v2791 = vadd.f32 %v1307, %v2471
    %v2792 = vadd.f32 %v1308, %v2472
    %v2793 = vadd.f32 %v1309, %v2473
    %v2794 = vadd.f32 %v1310, %v2474
    %v2795 = vadd.f32 %v1311, %v2475
    %v2796 = vadd.f32 %v1312, %v2476
    %v2797 = vadd.f32 %v1313, %v2477
    %v2798 = vadd.f32 %v1314, %v2478
    %v2799 = vadd.f32 %v1315, %v2479
    %v2800 = vadd.f32 %v1316, %v2480
    %v2801 = vadd.f32 %v1317, %v2481
    %v2802 = vadd.f32 %v1318, %v2482
    %v2803 = vadd.f32 %v1319, %v2483
    %v2804 = vadd.f32 %v1320, %v2484
    %v2805 = vadd.f32 %v1321, %v2485
    %v2806 = vadd.f32 %v1322, %v2486
    %v2807 = vadd.f32 %v1323, %v2487
    %v2808 = vadd.f32 %v1324, %v2488
    %v2809 = vadd.f32 %v1325, %v2489
    %v2810 = vadd.f32 %v1326, %v2490
    %v2811 = vadd.f32 %v1327, %v2491
    %v2812 = vadd.f32 %v1328, %v2492
    %v2813 = vadd.f32 %v1329, %v2493
    %v2814 = vadd.f32 %v1330, %v2494
    %v2815 = vadd.f32 %v1331, %v2495
    %v2816 = vadd.f32 %v1332, %v2496
    %v2817 = vadd.f32 %v1333, %v2497
    %v2818 = vadd.f32 %v1334, %v2498
    %v2819 = vadd.f32 %v1335, %v2499
    %v2820 = vadd.f32 %v1336, %v2500
    %v2821 = vadd.f32 %v1337, %v2501
    %v2822 = vadd.f32 %v1338, %v2502
    %v2823 = vadd.f32 %v1339, %v2503
    %v2824 = vadd.f32 %v1340, %v2504
    %v2825 = vadd.f32 %v1341, %v2505
    %v2826 = vadd.f32 %v1342, %v2506
    %v2827 = vadd.f32 %v1343, %v2507
    %v2828 = vadd.f32 %v1344, %v2508
    %v2829 = vadd.f32 %v1345, %v2509
    %v2830 = vadd.f32 %v1346, %v2510
    %v2831 = vadd.f32 %v1347, %v2511
    %v2832 = vadd.f32 %v1348, %v2512
    %v2833 = vadd.f32 %v1349, %v2513
    %v2834 = vadd.f32 %v1350, %v2514
    %v2835 = vadd.f32 %v1351, %v2515
    %v2836 = vadd.f32 %v1352, %v2516
    %v2837 = vadd.f32 %v1353, %v2517
    %v2838 = vadd.f32 %v1354, %v2518
    %v2839 = vadd.f32 %v1355, %v2519
    %v2840 = vadd.f32 %v1356, %v2520
    %v2841 = vadd.f32 %v1357, %v2521
    %v2842 = vadd.f32 %v1358, %v2522
    %v2843 = vadd.f32 %v1359, %v2523
    %v2844 = vadd.f32 %v1360, %v2524
    %v2845 = vadd.f32 %v1361, %v2525
    %v2846 = vadd.f32 %v1362, %v2526
    %v2847 = vadd.f32 %v1363, %v2527
    %v2848 = vadd.f32 %v1364, %v2528
    %v2849 = vadd.f32 %v1365, %v2529
    %v2850 = vadd.f32 %v1366, %v2530
    %v2851 = vadd.f32 %v1367, %v2531
    %v2852 = vadd.f32 %v1368, %v2532
    %v2853 = vadd.f32 %v1369, %v2533
    %v2854 = vadd.f32 %v1370, %v2534
    %v2855 = vadd.f32 %v1371, %v2535
    %v2856 = vadd.f32 %v1372, %v2536
    %v2857 = vadd.f32 %v1373, %v2537
    %v2858 = vadd.f32 %v1374, %v2538
    %v2859 = vadd.f32 %v1375, %v2539
    %v2860 = vadd.f32 %v1376, %v2540
    %v2861 = vadd.f32 %v1377, %v2541
    %v2862 = vadd.f32 %v1378, %v2542
    %v2863 = vadd.f32 %v1379, %v2543
    %v2864 = vadd.f32 %v1380, %v2544
    %v2865 = vadd.f32 %v1381, %v2545
    %v2866 = vadd.f32 %v1382, %v2546
    %v2867 = vadd.f32 %v1383, %v2547
    %v2868 = vadd.f32 %v1384, %v2548
    %v2869 = vadd.f32 %v1385, %v2549
    %v2870 = vadd.f32 %v1386, %v2550
    %v2871 = vadd.f32 %v1387, %v2551
    %v2872 = vadd.f32 %v1388, %v2552
    %v2873 = vadd.f32 %v1389, %v2553
    %v2874 = vadd.f32 %v1390, %v2554
    %v2875 = vadd.f32 %v1391, %v2555
    %v2876 = vadd.f32 %v1392, %v2556
    %v2877 = vadd.f32 %v1393, %v2557
    %v2878 = vadd.f32 %v1394, %v2558
    %v2879 = vadd.f32 %v1395, %v2559
    %v2880 = vadd.f32 %v1396, %v2560
    %v2881 = vadd.f32 %v1397, %v2561
    %v2882 = vadd.f32 %v1398, %v2562
    %v2883 = vadd.f32 %v1399, %v2563
    %v2884 = vadd.f32 %v1400, %v2564
    %v2885 = vadd.f32 %v1401, %v2565
    %v2886 = vadd.f32 %v1402, %v2566
    %v2887 = vadd.f32 %v1403, %v2567
    %v2888 = vadd.f32 %v1404, %v2568
    %v2889 = vadd.f32 %v1405, %v2569
    %v2890 = vadd.f32 %v1406, %v2570
    %v2891 = vadd.f32 %v1407, %v2571
    %v2892 = vadd.f32 %v1408, %v2572
    %v2893 = vadd.f32 %v1409, %v2573
    %v2894 = vadd.f32 %v1410, %v2574
    %v2895 = vadd.f32 %v1411, %v2575
    %v2896 = vadd.f32 %v1412, %v2576
    %v2897 = vadd.f32 %v1413, %v2577
    %v2898 = vadd.f32 %v1414, %v2578
    %v2899 = vadd.f32 %v1415, %v2579
    %v2900 = vadd.f32 %v1416, %v2580
    %v2901 = vadd.f32 %v1417, %v2581
    %v2902 = vadd.f32 %v1418, %v2582
    %v2903 = vadd.f32 %v1419, %v2583
    %v2904 = vadd.f32 %v1420, %v2584
    %v2905 = vadd.f32 %v1421, %v2585
    %v2906 = vadd.f32 %v1422, %v2586
    %s2907 = scalar_lea.vmem %s3, 2
    %v2908 = vld [vmem:[%s2907] ss:$4 sm:$0xff]
    %s2909 = scalar_lea.vmem %s3, 34
    %v2910 = vld [vmem:[%s2909] ss:$4 sm:$0x3]
    %v2911 = vlaneseq
    %v2912 = vshrl.u32 %v2911, 7
    %v2913 = vsub.s32 2, %v2912
    %v2914 = vrot.slane %v254, %v2913
    %v2915 = vlaneseq
    %v2916 = vshrl.u32 %v2915, 7
    %v2917 = vsub.s32 2, %v2916
    %v2918 = vrot.slane %v259, %v2917
    %v2921 = vlaneseq
    %v2922 = vshrl.u32 %v2921, 7
    %v2923 = vsub.s32 0, %v2922
    %v2924 = vrot.slane %v2908, %v2923
    %v2925 = vlaneseq
    %v2926 = vshrl.u32 %v2925, 7
    %v2927 = vsub.s32 1, %v2926
    %v2928 = vrot.slane %v2908, %v2927
    %v2929 = vlaneseq
    %v2930 = vshrl.u32 %v2929, 7
    %v2931 = vsub.s32 2, %v2930
    %v2932 = vrot.slane %v2908, %v2931
    %v2933 = vlaneseq
    %v2934 = vshrl.u32 %v2933, 7
    %v2935 = vsub.s32 3, %v2934
    %v2936 = vrot.slane %v2908, %v2935
    %v2937 = vlaneseq
    %v2938 = vshrl.u32 %v2937, 7
    %v2939 = vsub.s32 4, %v2938
    %v2940 = vrot.slane %v2908, %v2939
    %v2941 = vlaneseq
    %v2942 = vshrl.u32 %v2941, 7
    %v2943 = vsub.s32 5, %v2942
    %v2944 = vrot.slane %v2908, %v2943
    %v2945 = vlaneseq
    %v2946 = vshrl.u32 %v2945, 7
    %v2947 = vsub.s32 6, %v2946
    %v2948 = vrot.slane %v2908, %v2947
    %v2949 = vlaneseq
    %v2950 = vshrl.u32 %v2949, 7
    %v2951 = vsub.s32 7, %v2950
    %v2952 = vrot.slane %v2908, %v2951
    %v2953 = vlaneseq
    %v2954 = vshrl.u32 %v2953, 7
    %v2955 = vsub.s32 0, %v2954
    %v2956 = vrot.slane %v2910, %v2955
    %v2957 = vlaneseq
    %v2958 = vshrl.u32 %v2957, 7
    %v2959 = vsub.s32 1, %v2958
    %v2960 = vrot.slane %v2910, %v2959
    %2962 = vbcast.lane.b32.xlu0 %v2924, 256
    %v2963 = vpop.permute.xlu0 %2962
    %s2965 = sor.u32 256, 8
    %2966 = vbcast.lane.b32.xlu0 %v2924, %s2965
    %v2967 = vpop.permute.xlu0 %2966
    %s2969 = sor.u32 256, 16
    %2970 = vbcast.lane.b32.xlu0 %v2924, %s2969
    %v2971 = vpop.permute.xlu0 %2970
    %s2973 = sor.u32 256, 24
    %2974 = vbcast.lane.b32.xlu0 %v2924, %s2973
    %v2975 = vpop.permute.xlu0 %2974
    %s2977 = sor.u32 256, 32
    %2978 = vbcast.lane.b32.xlu0 %v2924, %s2977
    %v2979 = vpop.permute.xlu0 %2978
    %s2981 = sor.u32 256, 40
    %2982 = vbcast.lane.b32.xlu0 %v2924, %s2981
    %v2983 = vpop.permute.xlu0 %2982
    %s2985 = sor.u32 256, 48
    %2986 = vbcast.lane.b32.xlu0 %v2924, %s2985
    %v2987 = vpop.permute.xlu0 %2986
    %s2989 = sor.u32 256, 56
    %2990 = vbcast.lane.b32.xlu0 %v2924, %s2989
    %v2991 = vpop.permute.xlu0 %2990
    %s2993 = sor.u32 256, 64
    %2994 = vbcast.lane.b32.xlu0 %v2924, %s2993
    %v2995 = vpop.permute.xlu0 %2994
    %s2997 = sor.u32 256, 72
    %2998 = vbcast.lane.b32.xlu0 %v2924, %s2997
    %v2999 = vpop.permute.xlu0 %2998
    %s3001 = sor.u32 256, 80
    %3002 = vbcast.lane.b32.xlu0 %v2924, %s3001
    %v3003 = vpop.permute.xlu0 %3002
    %s3005 = sor.u32 256, 88
    %3006 = vbcast.lane.b32.xlu0 %v2924, %s3005
    %v3007 = vpop.permute.xlu0 %3006
    %s3009 = sor.u32 256, 96
    %3010 = vbcast.lane.b32.xlu0 %v2924, %s3009
    %v3011 = vpop.permute.xlu0 %3010
    %s3013 = sor.u32 256, 104
    %3014 = vbcast.lane.b32.xlu0 %v2924, %s3013
    %v3015 = vpop.permute.xlu0 %3014
    %s3017 = sor.u32 256, 112
    %3018 = vbcast.lane.b32.xlu0 %v2924, %s3017
    %v3019 = vpop.permute.xlu0 %3018
    %s3021 = sor.u32 256, 120
    %3022 = vbcast.lane.b32.xlu0 %v2924, %s3021
    %v3023 = vpop.permute.xlu0 %3022
    %3025 = vbcast.lane.b32.xlu0 %v2928, 256
    %v3026 = vpop.permute.xlu0 %3025
    %s3028 = sor.u32 256, 8
    %3029 = vbcast.lane.b32.xlu0 %v2928, %s3028
    %v3030 = vpop.permute.xlu0 %3029
    %s3032 = sor.u32 256, 16
    %3033 = vbcast.lane.b32.xlu0 %v2928, %s3032
    %v3034 = vpop.permute.xlu0 %3033
    %s3036 = sor.u32 256, 24
    %3037 = vbcast.lane.b32.xlu0 %v2928, %s3036
    %v3038 = vpop.permute.xlu0 %3037
    %s3040 = sor.u32 256, 32
    %3041 = vbcast.lane.b32.xlu0 %v2928, %s3040
    %v3042 = vpop.permute.xlu0 %3041
    %s3044 = sor.u32 256, 40
    %3045 = vbcast.lane.b32.xlu0 %v2928, %s3044
    %v3046 = vpop.permute.xlu0 %3045
    %s3048 = sor.u32 256, 48
    %3049 = vbcast.lane.b32.xlu0 %v2928, %s3048
    %v3050 = vpop.permute.xlu0 %3049
    %s3052 = sor.u32 256, 56
    %3053 = vbcast.lane.b32.xlu0 %v2928, %s3052
    %v3054 = vpop.permute.xlu0 %3053
    %s3056 = sor.u32 256, 64
    %3057 = vbcast.lane.b32.xlu0 %v2928, %s3056
    %v3058 = vpop.permute.xlu0 %3057
    %s3060 = sor.u32 256, 72
    %3061 = vbcast.lane.b32.xlu0 %v2928, %s3060
    %v3062 = vpop.permute.xlu0 %3061
    %s3064 = sor.u32 256, 80
    %3065 = vbcast.lane.b32.xlu0 %v2928, %s3064
    %v3066 = vpop.permute.xlu0 %3065
    %s3068 = sor.u32 256, 88
    %3069 = vbcast.lane.b32.xlu0 %v2928, %s3068
    %v3070 = vpop.permute.xlu0 %3069
    %s3072 = sor.u32 256, 96
    %3073 = vbcast.lane.b32.xlu0 %v2928, %s3072
    %v3074 = vpop.permute.xlu0 %3073
    %s3076 = sor.u32 256, 104
    %3077 = vbcast.lane.b32.xlu0 %v2928, %s3076
    %v3078 = vpop.permute.xlu0 %3077
    %s3080 = sor.u32 256, 112
    %3081 = vbcast.lane.b32.xlu0 %v2928, %s3080
    %v3082 = vpop.permute.xlu0 %3081
    %s3084 = sor.u32 256, 120
    %3085 = vbcast.lane.b32.xlu0 %v2928, %s3084
    %v3086 = vpop.permute.xlu0 %3085
    %3088 = vbcast.lane.b32.xlu0 %v2932, 256
    %v3089 = vpop.permute.xlu0 %3088
    %s3091 = sor.u32 256, 8
    %3092 = vbcast.lane.b32.xlu0 %v2932, %s3091
    %v3093 = vpop.permute.xlu0 %3092
    %s3095 = sor.u32 256, 16
    %3096 = vbcast.lane.b32.xlu0 %v2932, %s3095
    %v3097 = vpop.permute.xlu0 %3096
    %s3099 = sor.u32 256, 24
    %3100 = vbcast.lane.b32.xlu0 %v2932, %s3099
    %v3101 = vpop.permute.xlu0 %3100
    %s3103 = sor.u32 256, 32
    %3104 = vbcast.lane.b32.xlu0 %v2932, %s3103
    %v3105 = vpop.permute.xlu0 %3104
    %s3107 = sor.u32 256, 40
    %3108 = vbcast.lane.b32.xlu0 %v2932, %s3107
    %v3109 = vpop.permute.xlu0 %3108
    %s3111 = sor.u32 256, 48
    %3112 = vbcast.lane.b32.xlu0 %v2932, %s3111
    %v3113 = vpop.permute.xlu0 %3112
    %s3115 = sor.u32 256, 56
    %3116 = vbcast.lane.b32.xlu0 %v2932, %s3115
    %v3117 = vpop.permute.xlu0 %3116
    %s3119 = sor.u32 256, 64
    %3120 = vbcast.lane.b32.xlu0 %v2932, %s3119
    %v3121 = vpop.permute.xlu0 %3120
    %s3123 = sor.u32 256, 72
    %3124 = vbcast.lane.b32.xlu0 %v2932, %s3123
    %v3125 = vpop.permute.xlu0 %3124
    %s3127 = sor.u32 256, 80
    %3128 = vbcast.lane.b32.xlu0 %v2932, %s3127
    %v3129 = vpop.permute.xlu0 %3128
    %s3131 = sor.u32 256, 88
    %3132 = vbcast.lane.b32.xlu0 %v2932, %s3131
    %v3133 = vpop.permute.xlu0 %3132
    %s3135 = sor.u32 256, 96
    %3136 = vbcast.lane.b32.xlu0 %v2932, %s3135
    %v3137 = vpop.permute.xlu0 %3136
    %s3139 = sor.u32 256, 104
    %3140 = vbcast.lane.b32.xlu0 %v2932, %s3139
    %v3141 = vpop.permute.xlu0 %3140
    %s3143 = sor.u32 256, 112
    %3144 = vbcast.lane.b32.xlu0 %v2932, %s3143
    %v3145 = vpop.permute.xlu0 %3144
    %s3147 = sor.u32 256, 120
    %3148 = vbcast.lane.b32.xlu0 %v2932, %s3147
    %v3149 = vpop.permute.xlu0 %3148
    %3151 = vbcast.lane.b32.xlu0 %v2936, 256
    %v3152 = vpop.permute.xlu0 %3151
    %s3154 = sor.u32 256, 8
    %3155 = vbcast.lane.b32.xlu0 %v2936, %s3154
    %v3156 = vpop.permute.xlu0 %3155
    %s3158 = sor.u32 256, 16
    %3159 = vbcast.lane.b32.xlu0 %v2936, %s3158
    %v3160 = vpop.permute.xlu0 %3159
    %s3162 = sor.u32 256, 24
    %3163 = vbcast.lane.b32.xlu0 %v2936, %s3162
    %v3164 = vpop.permute.xlu0 %3163
    %s3166 = sor.u32 256, 32
    %3167 = vbcast.lane.b32.xlu0 %v2936, %s3166
    %v3168 = vpop.permute.xlu0 %3167
    %s3170 = sor.u32 256, 40
    %3171 = vbcast.lane.b32.xlu0 %v2936, %s3170
    %v3172 = vpop.permute.xlu0 %3171
    %s3174 = sor.u32 256, 48
    %3175 = vbcast.lane.b32.xlu0 %v2936, %s3174
    %v3176 = vpop.permute.xlu0 %3175
    %s3178 = sor.u32 256, 56
    %3179 = vbcast.lane.b32.xlu0 %v2936, %s3178
    %v3180 = vpop.permute.xlu0 %3179
    %s3182 = sor.u32 256, 64
    %3183 = vbcast.lane.b32.xlu0 %v2936, %s3182
    %v3184 = vpop.permute.xlu0 %3183
    %s3186 = sor.u32 256, 72
    %3187 = vbcast.lane.b32.xlu0 %v2936, %s3186
    %v3188 = vpop.permute.xlu0 %3187
    %s3190 = sor.u32 256, 80
    %3191 = vbcast.lane.b32.xlu0 %v2936, %s3190
    %v3192 = vpop.permute.xlu0 %3191
    %s3194 = sor.u32 256, 88
    %3195 = vbcast.lane.b32.xlu0 %v2936, %s3194
    %v3196 = vpop.permute.xlu0 %3195
    %s3198 = sor.u32 256, 96
    %3199 = vbcast.lane.b32.xlu0 %v2936, %s3198
    %v3200 = vpop.permute.xlu0 %3199
    %s3202 = sor.u32 256, 104
    %3203 = vbcast.lane.b32.xlu0 %v2936, %s3202
    %v3204 = vpop.permute.xlu0 %3203
    %s3206 = sor.u32 256, 112
    %3207 = vbcast.lane.b32.xlu0 %v2936, %s3206
    %v3208 = vpop.permute.xlu0 %3207
    %s3210 = sor.u32 256, 120
    %3211 = vbcast.lane.b32.xlu0 %v2936, %s3210
    %v3212 = vpop.permute.xlu0 %3211
    %3214 = vbcast.lane.b32.xlu0 %v2940, 256
    %v3215 = vpop.permute.xlu0 %3214
    %s3217 = sor.u32 256, 8
    %3218 = vbcast.lane.b32.xlu0 %v2940, %s3217
    %v3219 = vpop.permute.xlu0 %3218
    %s3221 = sor.u32 256, 16
    %3222 = vbcast.lane.b32.xlu0 %v2940, %s3221
    %v3223 = vpop.permute.xlu0 %3222
    %s3225 = sor.u32 256, 24
    %3226 = vbcast.lane.b32.xlu0 %v2940, %s3225
    %v3227 = vpop.permute.xlu0 %3226
    %s3229 = sor.u32 256, 32
    %3230 = vbcast.lane.b32.xlu0 %v2940, %s3229
    %v3231 = vpop.permute.xlu0 %3230
    %s3233 = sor.u32 256, 40
    %3234 = vbcast.lane.b32.xlu0 %v2940, %s3233
    %v3235 = vpop.permute.xlu0 %3234
    %s3237 = sor.u32 256, 48
    %3238 = vbcast.lane.b32.xlu0 %v2940, %s3237
    %v3239 = vpop.permute.xlu0 %3238
    %s3241 = sor.u32 256, 56
    %3242 = vbcast.lane.b32.xlu0 %v2940, %s3241
    %v3243 = vpop.permute.xlu0 %3242
    %s3245 = sor.u32 256, 64
    %3246 = vbcast.lane.b32.xlu0 %v2940, %s3245
    %v3247 = vpop.permute.xlu0 %3246
    %s3249 = sor.u32 256, 72
    %3250 = vbcast.lane.b32.xlu0 %v2940, %s3249
    %v3251 = vpop.permute.xlu0 %3250
    %s3253 = sor.u32 256, 80
    %3254 = vbcast.lane.b32.xlu0 %v2940, %s3253
    %v3255 = vpop.permute.xlu0 %3254
    %s3257 = sor.u32 256, 88
    %3258 = vbcast.lane.b32.xlu0 %v2940, %s3257
    %v3259 = vpop.permute.xlu0 %3258
    %s3261 = sor.u32 256, 96
    %3262 = vbcast.lane.b32.xlu0 %v2940, %s3261
    %v3263 = vpop.permute.xlu0 %3262
    %s3265 = sor.u32 256, 104
    %3266 = vbcast.lane.b32.xlu0 %v2940, %s3265
    %v3267 = vpop.permute.xlu0 %3266
    %s3269 = sor.u32 256, 112
    %3270 = vbcast.lane.b32.xlu0 %v2940, %s3269
    %v3271 = vpop.permute.xlu0 %3270
    %s3273 = sor.u32 256, 120
    %3274 = vbcast.lane.b32.xlu0 %v2940, %s3273
    %v3275 = vpop.permute.xlu0 %3274
    %3277 = vbcast.lane.b32.xlu0 %v2944, 256
    %v3278 = vpop.permute.xlu0 %3277
    %s3280 = sor.u32 256, 8
    %3281 = vbcast.lane.b32.xlu0 %v2944, %s3280
    %v3282 = vpop.permute.xlu0 %3281
    %s3284 = sor.u32 256, 16
    %3285 = vbcast.lane.b32.xlu0 %v2944, %s3284
    %v3286 = vpop.permute.xlu0 %3285
    %s3288 = sor.u32 256, 24
    %3289 = vbcast.lane.b32.xlu0 %v2944, %s3288
    %v3290 = vpop.permute.xlu0 %3289
    %s3292 = sor.u32 256, 32
    %3293 = vbcast.lane.b32.xlu0 %v2944, %s3292
    %v3294 = vpop.permute.xlu0 %3293
    %s3296 = sor.u32 256, 40
    %3297 = vbcast.lane.b32.xlu0 %v2944, %s3296
    %v3298 = vpop.permute.xlu0 %3297
    %s3300 = sor.u32 256, 48
    %3301 = vbcast.lane.b32.xlu0 %v2944, %s3300
    %v3302 = vpop.permute.xlu0 %3301
    %s3304 = sor.u32 256, 56
    %3305 = vbcast.lane.b32.xlu0 %v2944, %s3304
    %v3306 = vpop.permute.xlu0 %3305
    %s3308 = sor.u32 256, 64
    %3309 = vbcast.lane.b32.xlu0 %v2944, %s3308
    %v3310 = vpop.permute.xlu0 %3309
    %s3312 = sor.u32 256, 72
    %3313 = vbcast.lane.b32.xlu0 %v2944, %s3312
    %v3314 = vpop.permute.xlu0 %3313
    %s3316 = sor.u32 256, 80
    %3317 = vbcast.lane.b32.xlu0 %v2944, %s3316
    %v3318 = vpop.permute.xlu0 %3317
    %s3320 = sor.u32 256, 88
    %3321 = vbcast.lane.b32.xlu0 %v2944, %s3320
    %v3322 = vpop.permute.xlu0 %3321
    %s3324 = sor.u32 256, 96
    %3325 = vbcast.lane.b32.xlu0 %v2944, %s3324
    %v3326 = vpop.permute.xlu0 %3325
    %s3328 = sor.u32 256, 104
    %3329 = vbcast.lane.b32.xlu0 %v2944, %s3328
    %v3330 = vpop.permute.xlu0 %3329
    %s3332 = sor.u32 256, 112
    %3333 = vbcast.lane.b32.xlu0 %v2944, %s3332
    %v3334 = vpop.permute.xlu0 %3333
    %s3336 = sor.u32 256, 120
    %3337 = vbcast.lane.b32.xlu0 %v2944, %s3336
    %v3338 = vpop.permute.xlu0 %3337
    %3340 = vbcast.lane.b32.xlu0 %v2948, 256
    %v3341 = vpop.permute.xlu0 %3340
    %s3343 = sor.u32 256, 8
    %3344 = vbcast.lane.b32.xlu0 %v2948, %s3343
    %v3345 = vpop.permute.xlu0 %3344
    %s3347 = sor.u32 256, 16
    %3348 = vbcast.lane.b32.xlu0 %v2948, %s3347
    %v3349 = vpop.permute.xlu0 %3348
    %s3351 = sor.u32 256, 24
    %3352 = vbcast.lane.b32.xlu0 %v2948, %s3351
    %v3353 = vpop.permute.xlu0 %3352
    %s3355 = sor.u32 256, 32
    %3356 = vbcast.lane.b32.xlu0 %v2948, %s3355
    %v3357 = vpop.permute.xlu0 %3356
    %s3359 = sor.u32 256, 40
    %3360 = vbcast.lane.b32.xlu0 %v2948, %s3359
    %v3361 = vpop.permute.xlu0 %3360
    %s3363 = sor.u32 256, 48
    %3364 = vbcast.lane.b32.xlu0 %v2948, %s3363
    %v3365 = vpop.permute.xlu0 %3364
    %s3367 = sor.u32 256, 56
    %3368 = vbcast.lane.b32.xlu0 %v2948, %s3367
    %v3369 = vpop.permute.xlu0 %3368
    %s3371 = sor.u32 256, 64
    %3372 = vbcast.lane.b32.xlu0 %v2948, %s3371
    %v3373 = vpop.permute.xlu0 %3372
    %s3375 = sor.u32 256, 72
    %3376 = vbcast.lane.b32.xlu0 %v2948, %s3375
    %v3377 = vpop.permute.xlu0 %3376
    %s3379 = sor.u32 256, 80
    %3380 = vbcast.lane.b32.xlu0 %v2948, %s3379
    %v3381 = vpop.permute.xlu0 %3380
    %s3383 = sor.u32 256, 88
    %3384 = vbcast.lane.b32.xlu0 %v2948, %s3383
    %v3385 = vpop.permute.xlu0 %3384
    %s3387 = sor.u32 256, 96
    %3388 = vbcast.lane.b32.xlu0 %v2948, %s3387
    %v3389 = vpop.permute.xlu0 %3388
    %s3391 = sor.u32 256, 104
    %3392 = vbcast.lane.b32.xlu0 %v2948, %s3391
    %v3393 = vpop.permute.xlu0 %3392
    %s3395 = sor.u32 256, 112
    %3396 = vbcast.lane.b32.xlu0 %v2948, %s3395
    %v3397 = vpop.permute.xlu0 %3396
    %s3399 = sor.u32 256, 120
    %3400 = vbcast.lane.b32.xlu0 %v2948, %s3399
    %v3401 = vpop.permute.xlu0 %3400
    %3403 = vbcast.lane.b32.xlu0 %v2952, 256
    %v3404 = vpop.permute.xlu0 %3403
    %s3406 = sor.u32 256, 8
    %3407 = vbcast.lane.b32.xlu0 %v2952, %s3406
    %v3408 = vpop.permute.xlu0 %3407
    %s3410 = sor.u32 256, 16
    %3411 = vbcast.lane.b32.xlu0 %v2952, %s3410
    %v3412 = vpop.permute.xlu0 %3411
    %s3414 = sor.u32 256, 24
    %3415 = vbcast.lane.b32.xlu0 %v2952, %s3414
    %v3416 = vpop.permute.xlu0 %3415
    %s3418 = sor.u32 256, 32
    %3419 = vbcast.lane.b32.xlu0 %v2952, %s3418
    %v3420 = vpop.permute.xlu0 %3419
    %s3422 = sor.u32 256, 40
    %3423 = vbcast.lane.b32.xlu0 %v2952, %s3422
    %v3424 = vpop.permute.xlu0 %3423
    %s3426 = sor.u32 256, 48
    %3427 = vbcast.lane.b32.xlu0 %v2952, %s3426
    %v3428 = vpop.permute.xlu0 %3427
    %s3430 = sor.u32 256, 56
    %3431 = vbcast.lane.b32.xlu0 %v2952, %s3430
    %v3432 = vpop.permute.xlu0 %3431
    %s3434 = sor.u32 256, 64
    %3435 = vbcast.lane.b32.xlu0 %v2952, %s3434
    %v3436 = vpop.permute.xlu0 %3435
    %s3438 = sor.u32 256, 72
    %3439 = vbcast.lane.b32.xlu0 %v2952, %s3438
    %v3440 = vpop.permute.xlu0 %3439
    %s3442 = sor.u32 256, 80
    %3443 = vbcast.lane.b32.xlu0 %v2952, %s3442
    %v3444 = vpop.permute.xlu0 %3443
    %s3446 = sor.u32 256, 88
    %3447 = vbcast.lane.b32.xlu0 %v2952, %s3446
    %v3448 = vpop.permute.xlu0 %3447
    %s3450 = sor.u32 256, 96
    %3451 = vbcast.lane.b32.xlu0 %v2952, %s3450
    %v3452 = vpop.permute.xlu0 %3451
    %s3454 = sor.u32 256, 104
    %3455 = vbcast.lane.b32.xlu0 %v2952, %s3454
    %v3456 = vpop.permute.xlu0 %3455
    %s3458 = sor.u32 256, 112
    %3459 = vbcast.lane.b32.xlu0 %v2952, %s3458
    %v3460 = vpop.permute.xlu0 %3459
    %s3462 = sor.u32 256, 120
    %3463 = vbcast.lane.b32.xlu0 %v2952, %s3462
    %v3464 = vpop.permute.xlu0 %3463
    %3466 = vbcast.lane.b32.xlu0 %v2956, 256
    %v3467 = vpop.permute.xlu0 %3466
    %s3469 = sor.u32 256, 8
    %3470 = vbcast.lane.b32.xlu0 %v2956, %s3469
    %v3471 = vpop.permute.xlu0 %3470
    %s3473 = sor.u32 256, 16
    %3474 = vbcast.lane.b32.xlu0 %v2956, %s3473
    %v3475 = vpop.permute.xlu0 %3474
    %s3477 = sor.u32 256, 24
    %3478 = vbcast.lane.b32.xlu0 %v2956, %s3477
    %v3479 = vpop.permute.xlu0 %3478
    %s3481 = sor.u32 256, 32
    %3482 = vbcast.lane.b32.xlu0 %v2956, %s3481
    %v3483 = vpop.permute.xlu0 %3482
    %s3485 = sor.u32 256, 40
    %3486 = vbcast.lane.b32.xlu0 %v2956, %s3485
    %v3487 = vpop.permute.xlu0 %3486
    %s3489 = sor.u32 256, 48
    %3490 = vbcast.lane.b32.xlu0 %v2956, %s3489
    %v3491 = vpop.permute.xlu0 %3490
    %s3493 = sor.u32 256, 56
    %3494 = vbcast.lane.b32.xlu0 %v2956, %s3493
    %v3495 = vpop.permute.xlu0 %3494
    %s3497 = sor.u32 256, 64
    %3498 = vbcast.lane.b32.xlu0 %v2956, %s3497
    %v3499 = vpop.permute.xlu0 %3498
    %s3501 = sor.u32 256, 72
    %3502 = vbcast.lane.b32.xlu0 %v2956, %s3501
    %v3503 = vpop.permute.xlu0 %3502
    %s3505 = sor.u32 256, 80
    %3506 = vbcast.lane.b32.xlu0 %v2956, %s3505
    %v3507 = vpop.permute.xlu0 %3506
    %s3509 = sor.u32 256, 88
    %3510 = vbcast.lane.b32.xlu0 %v2956, %s3509
    %v3511 = vpop.permute.xlu0 %3510
    %s3513 = sor.u32 256, 96
    %3514 = vbcast.lane.b32.xlu0 %v2956, %s3513
    %v3515 = vpop.permute.xlu0 %3514
    %s3517 = sor.u32 256, 104
    %3518 = vbcast.lane.b32.xlu0 %v2956, %s3517
    %v3519 = vpop.permute.xlu0 %3518
    %s3521 = sor.u32 256, 112
    %3522 = vbcast.lane.b32.xlu0 %v2956, %s3521
    %v3523 = vpop.permute.xlu0 %3522
    %s3525 = sor.u32 256, 120
    %3526 = vbcast.lane.b32.xlu0 %v2956, %s3525
    %v3527 = vpop.permute.xlu0 %3526
    %3529 = vbcast.lane.b32.xlu0 %v2960, 256
    %v3530 = vpop.permute.xlu0 %3529
    %s3532 = sor.u32 256, 8
    %3533 = vbcast.lane.b32.xlu0 %v2960, %s3532
    %v3534 = vpop.permute.xlu0 %3533
    %s3536 = sor.u32 256, 16
    %3537 = vbcast.lane.b32.xlu0 %v2960, %s3536
    %v3538 = vpop.permute.xlu0 %3537
    %s3540 = sor.u32 256, 24
    %3541 = vbcast.lane.b32.xlu0 %v2960, %s3540
    %v3542 = vpop.permute.xlu0 %3541
    %s3544 = sor.u32 256, 32
    %3545 = vbcast.lane.b32.xlu0 %v2960, %s3544
    %v3546 = vpop.permute.xlu0 %3545
    %s3548 = sor.u32 256, 40
    %3549 = vbcast.lane.b32.xlu0 %v2960, %s3548
    %v3550 = vpop.permute.xlu0 %3549
    %s3552 = sor.u32 256, 48
    %3553 = vbcast.lane.b32.xlu0 %v2960, %s3552
    %v3554 = vpop.permute.xlu0 %3553
    %s3556 = sor.u32 256, 56
    %3557 = vbcast.lane.b32.xlu0 %v2960, %s3556
    %v3558 = vpop.permute.xlu0 %3557
    %s3560 = sor.u32 256, 64
    %3561 = vbcast.lane.b32.xlu0 %v2960, %s3560
    %v3562 = vpop.permute.xlu0 %3561
    %s3564 = sor.u32 256, 72
    %3565 = vbcast.lane.b32.xlu0 %v2960, %s3564
    %v3566 = vpop.permute.xlu0 %3565
    %s3568 = sor.u32 256, 80
    %3569 = vbcast.lane.b32.xlu0 %v2960, %s3568
    %v3570 = vpop.permute.xlu0 %3569
    %s3572 = sor.u32 256, 88
    %3573 = vbcast.lane.b32.xlu0 %v2960, %s3572
    %v3574 = vpop.permute.xlu0 %3573
    %s3576 = sor.u32 256, 96
    %3577 = vbcast.lane.b32.xlu0 %v2960, %s3576
    %v3578 = vpop.permute.xlu0 %3577
    %s3580 = sor.u32 256, 104
    %3581 = vbcast.lane.b32.xlu0 %v2960, %s3580
    %v3582 = vpop.permute.xlu0 %3581
    %s3584 = sor.u32 256, 112
    %3585 = vbcast.lane.b32.xlu0 %v2960, %s3584
    %v3586 = vpop.permute.xlu0 %3585
    %s3588 = sor.u32 256, 120
    %3589 = vbcast.lane.b32.xlu0 %v2960, %s3588
    %v3590 = vpop.permute.xlu0 %3589
    %v3751 = vmul.f32 %v2914, %v2963
    %v3752 = vmul.f32 %v2914, %v2967
    %v3753 = vmul.f32 %v2914, %v2971
    %v3754 = vmul.f32 %v2914, %v2975
    %v3755 = vmul.f32 %v2914, %v2979
    %v3756 = vmul.f32 %v2914, %v2983
    %v3757 = vmul.f32 %v2914, %v2987
    %v3758 = vmul.f32 %v2914, %v2991
    %v3759 = vmul.f32 %v2914, %v2995
    %v3760 = vmul.f32 %v2914, %v2999
    %v3761 = vmul.f32 %v2914, %v3003
    %v3762 = vmul.f32 %v2914, %v3007
    %v3763 = vmul.f32 %v2914, %v3011
    %v3764 = vmul.f32 %v2914, %v3015
    %v3765 = vmul.f32 %v2914, %v3019
    %v3766 = vmul.f32 %v2914, %v3023
    %v3767 = vmul.f32 %v2914, %v3026
    %v3768 = vmul.f32 %v2914, %v3030
    %v3769 = vmul.f32 %v2914, %v3034
    %v3770 = vmul.f32 %v2914, %v3038
    %v3771 = vmul.f32 %v2914, %v3042
    %v3772 = vmul.f32 %v2914, %v3046
    %v3773 = vmul.f32 %v2914, %v3050
    %v3774 = vmul.f32 %v2914, %v3054
    %v3775 = vmul.f32 %v2914, %v3058
    %v3776 = vmul.f32 %v2914, %v3062
    %v3777 = vmul.f32 %v2914, %v3066
    %v3778 = vmul.f32 %v2914, %v3070
    %v3779 = vmul.f32 %v2914, %v3074
    %v3780 = vmul.f32 %v2914, %v3078
    %v3781 = vmul.f32 %v2914, %v3082
    %v3782 = vmul.f32 %v2914, %v3086
    %v3783 = vmul.f32 %v2914, %v3089
    %v3784 = vmul.f32 %v2914, %v3093
    %v3785 = vmul.f32 %v2914, %v3097
    %v3786 = vmul.f32 %v2914, %v3101
    %v3787 = vmul.f32 %v2914, %v3105
    %v3788 = vmul.f32 %v2914, %v3109
    %v3789 = vmul.f32 %v2914, %v3113
    %v3790 = vmul.f32 %v2914, %v3117
    %v3791 = vmul.f32 %v2914, %v3121
    %v3792 = vmul.f32 %v2914, %v3125
    %v3793 = vmul.f32 %v2914, %v3129
    %v3794 = vmul.f32 %v2914, %v3133
    %v3795 = vmul.f32 %v2914, %v3137
    %v3796 = vmul.f32 %v2914, %v3141
    %v3797 = vmul.f32 %v2914, %v3145
    %v3798 = vmul.f32 %v2914, %v3149
    %v3799 = vmul.f32 %v2914, %v3152
    %v3800 = vmul.f32 %v2914, %v3156
    %v3801 = vmul.f32 %v2914, %v3160
    %v3802 = vmul.f32 %v2914, %v3164
    %v3803 = vmul.f32 %v2914, %v3168
    %v3804 = vmul.f32 %v2914, %v3172
    %v3805 = vmul.f32 %v2914, %v3176
    %v3806 = vmul.f32 %v2914, %v3180
    %v3807 = vmul.f32 %v2914, %v3184
    %v3808 = vmul.f32 %v2914, %v3188
    %v3809 = vmul.f32 %v2914, %v3192
    %v3810 = vmul.f32 %v2914, %v3196
    %v3811 = vmul.f32 %v2914, %v3200
    %v3812 = vmul.f32 %v2914, %v3204
    %v3813 = vmul.f32 %v2914, %v3208
    %v3814 = vmul.f32 %v2914, %v3212
    %v3815 = vmul.f32 %v2914, %v3215
    %v3816 = vmul.f32 %v2914, %v3219
    %v3817 = vmul.f32 %v2914, %v3223
    %v3818 = vmul.f32 %v2914, %v3227
    %v3819 = vmul.f32 %v2914, %v3231
    %v3820 = vmul.f32 %v2914, %v3235
    %v3821 = vmul.f32 %v2914, %v3239
    %v3822 = vmul.f32 %v2914, %v3243
    %v3823 = vmul.f32 %v2914, %v3247
    %v3824 = vmul.f32 %v2914, %v3251
    %v3825 = vmul.f32 %v2914, %v3255
    %v3826 = vmul.f32 %v2914, %v3259
    %v3827 = vmul.f32 %v2914, %v3263
    %v3828 = vmul.f32 %v2914, %v3267
    %v3829 = vmul.f32 %v2914, %v3271
    %v3830 = vmul.f32 %v2914, %v3275
    %v3831 = vmul.f32 %v2914, %v3278
    %v3832 = vmul.f32 %v2914, %v3282
    %v3833 = vmul.f32 %v2914, %v3286
    %v3834 = vmul.f32 %v2914, %v3290
    %v3835 = vmul.f32 %v2914, %v3294
    %v3836 = vmul.f32 %v2914, %v3298
    %v3837 = vmul.f32 %v2914, %v3302
    %v3838 = vmul.f32 %v2914, %v3306
    %v3839 = vmul.f32 %v2914, %v3310
    %v3840 = vmul.f32 %v2914, %v3314
    %v3841 = vmul.f32 %v2914, %v3318
    %v3842 = vmul.f32 %v2914, %v3322
    %v3843 = vmul.f32 %v2914, %v3326
    %v3844 = vmul.f32 %v2914, %v3330
    %v3845 = vmul.f32 %v2914, %v3334
    %v3846 = vmul.f32 %v2914, %v3338
    %v3847 = vmul.f32 %v2914, %v3341
    %v3848 = vmul.f32 %v2914, %v3345
    %v3849 = vmul.f32 %v2914, %v3349
    %v3850 = vmul.f32 %v2914, %v3353
    %v3851 = vmul.f32 %v2914, %v3357
    %v3852 = vmul.f32 %v2914, %v3361
    %v3853 = vmul.f32 %v2914, %v3365
    %v3854 = vmul.f32 %v2914, %v3369
    %v3855 = vmul.f32 %v2914, %v3373
    %v3856 = vmul.f32 %v2914, %v3377
    %v3857 = vmul.f32 %v2914, %v3381
    %v3858 = vmul.f32 %v2914, %v3385
    %v3859 = vmul.f32 %v2914, %v3389
    %v3860 = vmul.f32 %v2914, %v3393
    %v3861 = vmul.f32 %v2914, %v3397
    %v3862 = vmul.f32 %v2914, %v3401
    %v3863 = vmul.f32 %v2914, %v3404
    %v3864 = vmul.f32 %v2914, %v3408
    %v3865 = vmul.f32 %v2914, %v3412
    %v3866 = vmul.f32 %v2914, %v3416
    %v3867 = vmul.f32 %v2914, %v3420
    %v3868 = vmul.f32 %v2914, %v3424
    %v3869 = vmul.f32 %v2914, %v3428
    %v3870 = vmul.f32 %v2914, %v3432
    %v3871 = vmul.f32 %v2914, %v3436
    %v3872 = vmul.f32 %v2914, %v3440
    %v3873 = vmul.f32 %v2914, %v3444
    %v3874 = vmul.f32 %v2914, %v3448
    %v3875 = vmul.f32 %v2914, %v3452
    %v3876 = vmul.f32 %v2914, %v3456
    %v3877 = vmul.f32 %v2914, %v3460
    %v3878 = vmul.f32 %v2914, %v3464
    %v3879 = vmul.f32 %v2914, %v3467
    %v3880 = vmul.f32 %v2914, %v3471
    %v3881 = vmul.f32 %v2914, %v3475
    %v3882 = vmul.f32 %v2914, %v3479
    %v3883 = vmul.f32 %v2914, %v3483
    %v3884 = vmul.f32 %v2914, %v3487
    %v3885 = vmul.f32 %v2914, %v3491
    %v3886 = vmul.f32 %v2914, %v3495
    %v3887 = vmul.f32 %v2914, %v3499
    %v3888 = vmul.f32 %v2914, %v3503
    %v3889 = vmul.f32 %v2914, %v3507
    %v3890 = vmul.f32 %v2914, %v3511
    %v3891 = vmul.f32 %v2914, %v3515
    %v3892 = vmul.f32 %v2914, %v3519
    %v3893 = vmul.f32 %v2914, %v3523
    %v3894 = vmul.f32 %v2914, %v3527
    %v3895 = vmul.f32 %v2914, %v3530
    %v3896 = vmul.f32 %v2914, %v3534
    %v3897 = vmul.f32 %v2914, %v3538
    %v3898 = vmul.f32 %v2914, %v3542
    %v3899 = vmul.f32 %v2914, %v3546
    %v3900 = vmul.f32 %v2914, %v3550
    %v3901 = vmul.f32 %v2914, %v3554
    %v3902 = vmul.f32 %v2914, %v3558
    %v3903 = vmul.f32 %v2914, %v3562
    %v3904 = vmul.f32 %v2914, %v3566
    %v3905 = vmul.f32 %v2914, %v3570
    %v3906 = vmul.f32 %v2914, %v3574
    %v3907 = vmul.f32 %v2914, %v3578
    %v3908 = vmul.f32 %v2914, %v3582
    %v3909 = vmul.f32 %v2914, %v3586
    %v3910 = vmul.f32 %v2914, %v3590
    %v3911 = vmul.f32 %v2918, %v2963
    %v3912 = vmul.f32 %v2918, %v2967
    %v3913 = vmul.f32 %v2918, %v2971
    %v3914 = vmul.f32 %v2918, %v2975
    %v3915 = vmul.f32 %v2918, %v2979
    %v3916 = vmul.f32 %v2918, %v2983
    %v3917 = vmul.f32 %v2918, %v2987
    %v3918 = vmul.f32 %v2918, %v2991
    %v3919 = vmul.f32 %v2918, %v2995
    %v3920 = vmul.f32 %v2918, %v2999
    %v3921 = vmul.f32 %v2918, %v3003
    %v3922 = vmul.f32 %v2918, %v3007
    %v3923 = vmul.f32 %v2918, %v3011
    %v3924 = vmul.f32 %v2918, %v3015
    %v3925 = vmul.f32 %v2918, %v3019
    %v3926 = vmul.f32 %v2918, %v3023
    %v3927 = vmul.f32 %v2918, %v3026
    %v3928 = vmul.f32 %v2918, %v3030
    %v3929 = vmul.f32 %v2918, %v3034
    %v3930 = vmul.f32 %v2918, %v3038
    %v3931 = vmul.f32 %v2918, %v3042
    %v3932 = vmul.f32 %v2918, %v3046
    %v3933 = vmul.f32 %v2918, %v3050
    %v3934 = vmul.f32 %v2918, %v3054
    %v3935 = vmul.f32 %v2918, %v3058
    %v3936 = vmul.f32 %v2918, %v3062
    %v3937 = vmul.f32 %v2918, %v3066
    %v3938 = vmul.f32 %v2918, %v3070
    %v3939 = vmul.f32 %v2918, %v3074
    %v3940 = vmul.f32 %v2918, %v3078
    %v3941 = vmul.f32 %v2918, %v3082
    %v3942 = vmul.f32 %v2918, %v3086
    %v3943 = vmul.f32 %v2918, %v3089
    %v3944 = vmul.f32 %v2918, %v3093
    %v3945 = vmul.f32 %v2918, %v3097
    %v3946 = vmul.f32 %v2918, %v3101
    %v3947 = vmul.f32 %v2918, %v3105
    %v3948 = vmul.f32 %v2918, %v3109
    %v3949 = vmul.f32 %v2918, %v3113
    %v3950 = vmul.f32 %v2918, %v3117
    %v3951 = vmul.f32 %v2918, %v3121
    %v3952 = vmul.f32 %v2918, %v3125
    %v3953 = vmul.f32 %v2918, %v3129
    %v3954 = vmul.f32 %v2918, %v3133
    %v3955 = vmul.f32 %v2918, %v3137
    %v3956 = vmul.f32 %v2918, %v3141
    %v3957 = vmul.f32 %v2918, %v3145
    %v3958 = vmul.f32 %v2918, %v3149
    %v3959 = vmul.f32 %v2918, %v3152
    %v3960 = vmul.f32 %v2918, %v3156
    %v3961 = vmul.f32 %v2918, %v3160
    %v3962 = vmul.f32 %v2918, %v3164
    %v3963 = vmul.f32 %v2918, %v3168
    %v3964 = vmul.f32 %v2918, %v3172
    %v3965 = vmul.f32 %v2918, %v3176
    %v3966 = vmul.f32 %v2918, %v3180
    %v3967 = vmul.f32 %v2918, %v3184
    %v3968 = vmul.f32 %v2918, %v3188
    %v3969 = vmul.f32 %v2918, %v3192
    %v3970 = vmul.f32 %v2918, %v3196
    %v3971 = vmul.f32 %v2918, %v3200
    %v3972 = vmul.f32 %v2918, %v3204
    %v3973 = vmul.f32 %v2918, %v3208
    %v3974 = vmul.f32 %v2918, %v3212
    %v3975 = vmul.f32 %v2918, %v3215
    %v3976 = vmul.f32 %v2918, %v3219
    %v3977 = vmul.f32 %v2918, %v3223
    %v3978 = vmul.f32 %v2918, %v3227
    %v3979 = vmul.f32 %v2918, %v3231
    %v3980 = vmul.f32 %v2918, %v3235
    %v3981 = vmul.f32 %v2918, %v3239
    %v3982 = vmul.f32 %v2918, %v3243
    %v3983 = vmul.f32 %v2918, %v3247
    %v3984 = vmul.f32 %v2918, %v3251
    %v3985 = vmul.f32 %v2918, %v3255
    %v3986 = vmul.f32 %v2918, %v3259
    %v3987 = vmul.f32 %v2918, %v3263
    %v3988 = vmul.f32 %v2918, %v3267
    %v3989 = vmul.f32 %v2918, %v3271
    %v3990 = vmul.f32 %v2918, %v3275
    %v3991 = vmul.f32 %v2918, %v3278
    %v3992 = vmul.f32 %v2918, %v3282
    %v3993 = vmul.f32 %v2918, %v3286
    %v3994 = vmul.f32 %v2918, %v3290
    %v3995 = vmul.f32 %v2918, %v3294
    %v3996 = vmul.f32 %v2918, %v3298
    %v3997 = vmul.f32 %v2918, %v3302
    %v3998 = vmul.f32 %v2918, %v3306
    %v3999 = vmul.f32 %v2918, %v3310
    %v4000 = vmul.f32 %v2918, %v3314
    %v4001 = vmul.f32 %v2918, %v3318
    %v4002 = vmul.f32 %v2918, %v3322
    %v4003 = vmul.f32 %v2918, %v3326
    %v4004 = vmul.f32 %v2918, %v3330
    %v4005 = vmul.f32 %v2918, %v3334
    %v4006 = vmul.f32 %v2918, %v3338
    %v4007 = vmul.f32 %v2918, %v3341
    %v4008 = vmul.f32 %v2918, %v3345
    %v4009 = vmul.f32 %v2918, %v3349
    %v4010 = vmul.f32 %v2918, %v3353
    %v4011 = vmul.f32 %v2918, %v3357
    %v4012 = vmul.f32 %v2918, %v3361
    %v4013 = vmul.f32 %v2918, %v3365
    %v4014 = vmul.f32 %v2918, %v3369
    %v4015 = vmul.f32 %v2918, %v3373
    %v4016 = vmul.f32 %v2918, %v3377
    %v4017 = vmul.f32 %v2918, %v3381
    %v4018 = vmul.f32 %v2918, %v3385
    %v4019 = vmul.f32 %v2918, %v3389
    %v4020 = vmul.f32 %v2918, %v3393
    %v4021 = vmul.f32 %v2918, %v3397
    %v4022 = vmul.f32 %v2918, %v3401
    %v4023 = vmul.f32 %v2918, %v3404
    %v4024 = vmul.f32 %v2918, %v3408
    %v4025 = vmul.f32 %v2918, %v3412
    %v4026 = vmul.f32 %v2918, %v3416
    %v4027 = vmul.f32 %v2918, %v3420
    %v4028 = vmul.f32 %v2918, %v3424
    %v4029 = vmul.f32 %v2918, %v3428
    %v4030 = vmul.f32 %v2918, %v3432
    %v4031 = vmul.f32 %v2918, %v3436
    %v4032 = vmul.f32 %v2918, %v3440
    %v4033 = vmul.f32 %v2918, %v3444
    %v4034 = vmul.f32 %v2918, %v3448
    %v4035 = vmul.f32 %v2918, %v3452
    %v4036 = vmul.f32 %v2918, %v3456
    %v4037 = vmul.f32 %v2918, %v3460
    %v4038 = vmul.f32 %v2918, %v3464
    %v4039 = vmul.f32 %v2918, %v3467
    %v4040 = vmul.f32 %v2918, %v3471
    %v4041 = vmul.f32 %v2918, %v3475
    %v4042 = vmul.f32 %v2918, %v3479
    %v4043 = vmul.f32 %v2918, %v3483
    %v4044 = vmul.f32 %v2918, %v3487
    %v4045 = vmul.f32 %v2918, %v3491
    %v4046 = vmul.f32 %v2918, %v3495
    %v4047 = vmul.f32 %v2918, %v3499
    %v4048 = vmul.f32 %v2918, %v3503
    %v4049 = vmul.f32 %v2918, %v3507
    %v4050 = vmul.f32 %v2918, %v3511
    %v4051 = vmul.f32 %v2918, %v3515
    %v4052 = vmul.f32 %v2918, %v3519
    %v4053 = vmul.f32 %v2918, %v3523
    %v4054 = vmul.f32 %v2918, %v3527
    %v4055 = vmul.f32 %v2918, %v3530
    %v4056 = vmul.f32 %v2918, %v3534
    %v4057 = vmul.f32 %v2918, %v3538
    %v4058 = vmul.f32 %v2918, %v3542
    %v4059 = vmul.f32 %v2918, %v3546
    %v4060 = vmul.f32 %v2918, %v3550
    %v4061 = vmul.f32 %v2918, %v3554
    %v4062 = vmul.f32 %v2918, %v3558
    %v4063 = vmul.f32 %v2918, %v3562
    %v4064 = vmul.f32 %v2918, %v3566
    %v4065 = vmul.f32 %v2918, %v3570
    %v4066 = vmul.f32 %v2918, %v3574
    %v4067 = vmul.f32 %v2918, %v3578
    %v4068 = vmul.f32 %v2918, %v3582
    %v4069 = vmul.f32 %v2918, %v3586
    %v4070 = vmul.f32 %v2918, %v3590
    %v4071 = vadd.f32 %v2587, %v3751
    %v4072 = vadd.f32 %v2588, %v3752
    %v4073 = vadd.f32 %v2589, %v3753
    %v4074 = vadd.f32 %v2590, %v3754
    %v4075 = vadd.f32 %v2591, %v3755
    %v4076 = vadd.f32 %v2592, %v3756
    %v4077 = vadd.f32 %v2593, %v3757
    %v4078 = vadd.f32 %v2594, %v3758
    %v4079 = vadd.f32 %v2595, %v3759
    %v4080 = vadd.f32 %v2596, %v3760
    %v4081 = vadd.f32 %v2597, %v3761
    %v4082 = vadd.f32 %v2598, %v3762
    %v4083 = vadd.f32 %v2599, %v3763
    %v4084 = vadd.f32 %v2600, %v3764
    %v4085 = vadd.f32 %v2601, %v3765
    %v4086 = vadd.f32 %v2602, %v3766
    %v4087 = vadd.f32 %v2603, %v3767
    %v4088 = vadd.f32 %v2604, %v3768
    %v4089 = vadd.f32 %v2605, %v3769
    %v4090 = vadd.f32 %v2606, %v3770
    %v4091 = vadd.f32 %v2607, %v3771
    %v4092 = vadd.f32 %v2608, %v3772
    %v4093 = vadd.f32 %v2609, %v3773
    %v4094 = vadd.f32 %v2610, %v3774
    %v4095 = vadd.f32 %v2611, %v3775
    %v4096 = vadd.f32 %v2612, %v3776
    %v4097 = vadd.f32 %v2613, %v3777
    %v4098 = vadd.f32 %v2614, %v3778
    %v4099 = vadd.f32 %v2615, %v3779
    %v4100 = vadd.f32 %v2616, %v3780
    %v4101 = vadd.f32 %v2617, %v3781
    %v4102 = vadd.f32 %v2618, %v3782
    %v4103 = vadd.f32 %v2619, %v3783
    %v4104 = vadd.f32 %v2620, %v3784
    %v4105 = vadd.f32 %v2621, %v3785
    %v4106 = vadd.f32 %v2622, %v3786
    %v4107 = vadd.f32 %v2623, %v3787
    %v4108 = vadd.f32 %v2624, %v3788
    %v4109 = vadd.f32 %v2625, %v3789
    %v4110 = vadd.f32 %v2626, %v3790
    %v4111 = vadd.f32 %v2627, %v3791
    %v4112 = vadd.f32 %v2628, %v3792
    %v4113 = vadd.f32 %v2629, %v3793
    %v4114 = vadd.f32 %v2630, %v3794
    %v4115 = vadd.f32 %v2631, %v3795
    %v4116 = vadd.f32 %v2632, %v3796
    %v4117 = vadd.f32 %v2633, %v3797
    %v4118 = vadd.f32 %v2634, %v3798
    %v4119 = vadd.f32 %v2635, %v3799
    %v4120 = vadd.f32 %v2636, %v3800
    %v4121 = vadd.f32 %v2637, %v3801
    %v4122 = vadd.f32 %v2638, %v3802
    %v4123 = vadd.f32 %v2639, %v3803
    %v4124 = vadd.f32 %v2640, %v3804
    %v4125 = vadd.f32 %v2641, %v3805
    %v4126 = vadd.f32 %v2642, %v3806
    %v4127 = vadd.f32 %v2643, %v3807
    %v4128 = vadd.f32 %v2644, %v3808
    %v4129 = vadd.f32 %v2645, %v3809
    %v4130 = vadd.f32 %v2646, %v3810
    %v4131 = vadd.f32 %v2647, %v3811
    %v4132 = vadd.f32 %v2648, %v3812
    %v4133 = vadd.f32 %v2649, %v3813
    %v4134 = vadd.f32 %v2650, %v3814
    %v4135 = vadd.f32 %v2651, %v3815
    %v4136 = vadd.f32 %v2652, %v3816
    %v4137 = vadd.f32 %v2653, %v3817
    %v4138 = vadd.f32 %v2654, %v3818
    %v4139 = vadd.f32 %v2655, %v3819
    %v4140 = vadd.f32 %v2656, %v3820
    %v4141 = vadd.f32 %v2657, %v3821
    %v4142 = vadd.f32 %v2658, %v3822
    %v4143 = vadd.f32 %v2659, %v3823
    %v4144 = vadd.f32 %v2660, %v3824
    %v4145 = vadd.f32 %v2661, %v3825
    %v4146 = vadd.f32 %v2662, %v3826
    %v4147 = vadd.f32 %v2663, %v3827
    %v4148 = vadd.f32 %v2664, %v3828
    %v4149 = vadd.f32 %v2665, %v3829
    %v4150 = vadd.f32 %v2666, %v3830
    %v4151 = vadd.f32 %v2667, %v3831
    %v4152 = vadd.f32 %v2668, %v3832
    %v4153 = vadd.f32 %v2669, %v3833
    %v4154 = vadd.f32 %v2670, %v3834
    %v4155 = vadd.f32 %v2671, %v3835
    %v4156 = vadd.f32 %v2672, %v3836
    %v4157 = vadd.f32 %v2673, %v3837
    %v4158 = vadd.f32 %v2674, %v3838
    %v4159 = vadd.f32 %v2675, %v3839
    %v4160 = vadd.f32 %v2676, %v3840
    %v4161 = vadd.f32 %v2677, %v3841
    %v4162 = vadd.f32 %v2678, %v3842
    %v4163 = vadd.f32 %v2679, %v3843
    %v4164 = vadd.f32 %v2680, %v3844
    %v4165 = vadd.f32 %v2681, %v3845
    %v4166 = vadd.f32 %v2682, %v3846
    %v4167 = vadd.f32 %v2683, %v3847
    %v4168 = vadd.f32 %v2684, %v3848
    %v4169 = vadd.f32 %v2685, %v3849
    %v4170 = vadd.f32 %v2686, %v3850
    %v4171 = vadd.f32 %v2687, %v3851
    %v4172 = vadd.f32 %v2688, %v3852
    %v4173 = vadd.f32 %v2689, %v3853
    %v4174 = vadd.f32 %v2690, %v3854
    %v4175 = vadd.f32 %v2691, %v3855
    %v4176 = vadd.f32 %v2692, %v3856
    %v4177 = vadd.f32 %v2693, %v3857
    %v4178 = vadd.f32 %v2694, %v3858
    %v4179 = vadd.f32 %v2695, %v3859
    %v4180 = vadd.f32 %v2696, %v3860
    %v4181 = vadd.f32 %v2697, %v3861
    %v4182 = vadd.f32 %v2698, %v3862
    %v4183 = vadd.f32 %v2699, %v3863
    %v4184 = vadd.f32 %v2700, %v3864
    %v4185 = vadd.f32 %v2701, %v3865
    %v4186 = vadd.f32 %v2702, %v3866
    %v4187 = vadd.f32 %v2703, %v3867
    %v4188 = vadd.f32 %v2704, %v3868
    %v4189 = vadd.f32 %v2705, %v3869
    %v4190 = vadd.f32 %v2706, %v3870
    %v4191 = vadd.f32 %v2707, %v3871
    %v4192 = vadd.f32 %v2708, %v3872
    %v4193 = vadd.f32 %v2709, %v3873
    %v4194 = vadd.f32 %v2710, %v3874
    %v4195 = vadd.f32 %v2711, %v3875
    %v4196 = vadd.f32 %v2712, %v3876
    %v4197 = vadd.f32 %v2713, %v3877
    %v4198 = vadd.f32 %v2714, %v3878
    %v4199 = vadd.f32 %v2715, %v3879
    %v4200 = vadd.f32 %v2716, %v3880
    %v4201 = vadd.f32 %v2717, %v3881
    %v4202 = vadd.f32 %v2718, %v3882
    %v4203 = vadd.f32 %v2719, %v3883
    %v4204 = vadd.f32 %v2720, %v3884
    %v4205 = vadd.f32 %v2721, %v3885
    %v4206 = vadd.f32 %v2722, %v3886
    %v4207 = vadd.f32 %v2723, %v3887
    %v4208 = vadd.f32 %v2724, %v3888
    %v4209 = vadd.f32 %v2725, %v3889
    %v4210 = vadd.f32 %v2726, %v3890
    %v4211 = vadd.f32 %v2727, %v3891
    %v4212 = vadd.f32 %v2728, %v3892
    %v4213 = vadd.f32 %v2729, %v3893
    %v4214 = vadd.f32 %v2730, %v3894
    %v4215 = vadd.f32 %v2731, %v3895
    %v4216 = vadd.f32 %v2732, %v3896
    %v4217 = vadd.f32 %v2733, %v3897
    %v4218 = vadd.f32 %v2734, %v3898
    %v4219 = vadd.f32 %v2735, %v3899
    %v4220 = vadd.f32 %v2736, %v3900
    %v4221 = vadd.f32 %v2737, %v3901
    %v4222 = vadd.f32 %v2738, %v3902
    %v4223 = vadd.f32 %v2739, %v3903
    %v4224 = vadd.f32 %v2740, %v3904
    %v4225 = vadd.f32 %v2741, %v3905
    %v4226 = vadd.f32 %v2742, %v3906
    %v4227 = vadd.f32 %v2743, %v3907
    %v4228 = vadd.f32 %v2744, %v3908
    %v4229 = vadd.f32 %v2745, %v3909
    %v4230 = vadd.f32 %v2746, %v3910
    %v4231 = vadd.f32 %v2747, %v3911
    %v4232 = vadd.f32 %v2748, %v3912
    %v4233 = vadd.f32 %v2749, %v3913
    %v4234 = vadd.f32 %v2750, %v3914
    %v4235 = vadd.f32 %v2751, %v3915
    %v4236 = vadd.f32 %v2752, %v3916
    %v4237 = vadd.f32 %v2753, %v3917
    %v4238 = vadd.f32 %v2754, %v3918
    %v4239 = vadd.f32 %v2755, %v3919
    %v4240 = vadd.f32 %v2756, %v3920
    %v4241 = vadd.f32 %v2757, %v3921
    %v4242 = vadd.f32 %v2758, %v3922
    %v4243 = vadd.f32 %v2759, %v3923
    %v4244 = vadd.f32 %v2760, %v3924
    %v4245 = vadd.f32 %v2761, %v3925
    %v4246 = vadd.f32 %v2762, %v3926
    %v4247 = vadd.f32 %v2763, %v3927
    %v4248 = vadd.f32 %v2764, %v3928
    %v4249 = vadd.f32 %v2765, %v3929
    %v4250 = vadd.f32 %v2766, %v3930
    %v4251 = vadd.f32 %v2767, %v3931
    %v4252 = vadd.f32 %v2768, %v3932
    %v4253 = vadd.f32 %v2769, %v3933
    %v4254 = vadd.f32 %v2770, %v3934
    %v4255 = vadd.f32 %v2771, %v3935
    %v4256 = vadd.f32 %v2772, %v3936
    %v4257 = vadd.f32 %v2773, %v3937
    %v4258 = vadd.f32 %v2774, %v3938
    %v4259 = vadd.f32 %v2775, %v3939
    %v4260 = vadd.f32 %v2776, %v3940
    %v4261 = vadd.f32 %v2777, %v3941
    %v4262 = vadd.f32 %v2778, %v3942
    %v4263 = vadd.f32 %v2779, %v3943
    %v4264 = vadd.f32 %v2780, %v3944
    %v4265 = vadd.f32 %v2781, %v3945
    %v4266 = vadd.f32 %v2782, %v3946
    %v4267 = vadd.f32 %v2783, %v3947
    %v4268 = vadd.f32 %v2784, %v3948
    %v4269 = vadd.f32 %v2785, %v3949
    %v4270 = vadd.f32 %v2786, %v3950
    %v4271 = vadd.f32 %v2787, %v3951
    %v4272 = vadd.f32 %v2788, %v3952
    %v4273 = vadd.f32 %v2789, %v3953
    %v4274 = vadd.f32 %v2790, %v3954
    %v4275 = vadd.f32 %v2791, %v3955
    %v4276 = vadd.f32 %v2792, %v3956
    %v4277 = vadd.f32 %v2793, %v3957
    %v4278 = vadd.f32 %v2794, %v3958
    %v4279 = vadd.f32 %v2795, %v3959
    %v4280 = vadd.f32 %v2796, %v3960
    %v4281 = vadd.f32 %v2797, %v3961
    %v4282 = vadd.f32 %v2798, %v3962
    %v4283 = vadd.f32 %v2799, %v3963
    %v4284 = vadd.f32 %v2800, %v3964
    %v4285 = vadd.f32 %v2801, %v3965
    %v4286 = vadd.f32 %v2802, %v3966
    %v4287 = vadd.f32 %v2803, %v3967
    %v4288 = vadd.f32 %v2804, %v3968
    %v4289 = vadd.f32 %v2805, %v3969
    %v4290 = vadd.f32 %v2806, %v3970
    %v4291 = vadd.f32 %v2807, %v3971
    %v4292 = vadd.f32 %v2808, %v3972
    %v4293 = vadd.f32 %v2809, %v3973
    %v4294 = vadd.f32 %v2810, %v3974
    %v4295 = vadd.f32 %v2811, %v3975
    %v4296 = vadd.f32 %v2812, %v3976
    %v4297 = vadd.f32 %v2813, %v3977
    %v4298 = vadd.f32 %v2814, %v3978
    %v4299 = vadd.f32 %v2815, %v3979
    %v4300 = vadd.f32 %v2816, %v3980
    %v4301 = vadd.f32 %v2817, %v3981
    %v4302 = vadd.f32 %v2818, %v3982
    %v4303 = vadd.f32 %v2819, %v3983
    %v4304 = vadd.f32 %v2820, %v3984
    %v4305 = vadd.f32 %v2821, %v3985
    %v4306 = vadd.f32 %v2822, %v3986
    %v4307 = vadd.f32 %v2823, %v3987
    %v4308 = vadd.f32 %v2824, %v3988
    %v4309 = vadd.f32 %v2825, %v3989
    %v4310 = vadd.f32 %v2826, %v3990
    %v4311 = vadd.f32 %v2827, %v3991
    %v4312 = vadd.f32 %v2828, %v3992
    %v4313 = vadd.f32 %v2829, %v3993
    %v4314 = vadd.f32 %v2830, %v3994
    %v4315 = vadd.f32 %v2831, %v3995
    %v4316 = vadd.f32 %v2832, %v3996
    %v4317 = vadd.f32 %v2833, %v3997
    %v4318 = vadd.f32 %v2834, %v3998
    %v4319 = vadd.f32 %v2835, %v3999
    %v4320 = vadd.f32 %v2836, %v4000
    %v4321 = vadd.f32 %v2837, %v4001
    %v4322 = vadd.f32 %v2838, %v4002
    %v4323 = vadd.f32 %v2839, %v4003
    %v4324 = vadd.f32 %v2840, %v4004
    %v4325 = vadd.f32 %v2841, %v4005
    %v4326 = vadd.f32 %v2842, %v4006
    %v4327 = vadd.f32 %v2843, %v4007
    %v4328 = vadd.f32 %v2844, %v4008
    %v4329 = vadd.f32 %v2845, %v4009
    %v4330 = vadd.f32 %v2846, %v4010
    %v4331 = vadd.f32 %v2847, %v4011
    %v4332 = vadd.f32 %v2848, %v4012
    %v4333 = vadd.f32 %v2849, %v4013
    %v4334 = vadd.f32 %v2850, %v4014
    %v4335 = vadd.f32 %v2851, %v4015
    %v4336 = vadd.f32 %v2852, %v4016
    %v4337 = vadd.f32 %v2853, %v4017
    %v4338 = vadd.f32 %v2854, %v4018
    %v4339 = vadd.f32 %v2855, %v4019
    %v4340 = vadd.f32 %v2856, %v4020
    %v4341 = vadd.f32 %v2857, %v4021
    %v4342 = vadd.f32 %v2858, %v4022
    %v4343 = vadd.f32 %v2859, %v4023
    %v4344 = vadd.f32 %v2860, %v4024
    %v4345 = vadd.f32 %v2861, %v4025
    %v4346 = vadd.f32 %v2862, %v4026
    %v4347 = vadd.f32 %v2863, %v4027
    %v4348 = vadd.f32 %v2864, %v4028
    %v4349 = vadd.f32 %v2865, %v4029
    %v4350 = vadd.f32 %v2866, %v4030
    %v4351 = vadd.f32 %v2867, %v4031
    %v4352 = vadd.f32 %v2868, %v4032
    %v4353 = vadd.f32 %v2869, %v4033
    %v4354 = vadd.f32 %v2870, %v4034
    %v4355 = vadd.f32 %v2871, %v4035
    %v4356 = vadd.f32 %v2872, %v4036
    %v4357 = vadd.f32 %v2873, %v4037
    %v4358 = vadd.f32 %v2874, %v4038
    %v4359 = vadd.f32 %v2875, %v4039
    %v4360 = vadd.f32 %v2876, %v4040
    %v4361 = vadd.f32 %v2877, %v4041
    %v4362 = vadd.f32 %v2878, %v4042
    %v4363 = vadd.f32 %v2879, %v4043
    %v4364 = vadd.f32 %v2880, %v4044
    %v4365 = vadd.f32 %v2881, %v4045
    %v4366 = vadd.f32 %v2882, %v4046
    %v4367 = vadd.f32 %v2883, %v4047
    %v4368 = vadd.f32 %v2884, %v4048
    %v4369 = vadd.f32 %v2885, %v4049
    %v4370 = vadd.f32 %v2886, %v4050
    %v4371 = vadd.f32 %v2887, %v4051
    %v4372 = vadd.f32 %v2888, %v4052
    %v4373 = vadd.f32 %v2889, %v4053
    %v4374 = vadd.f32 %v2890, %v4054
    %v4375 = vadd.f32 %v2891, %v4055
    %v4376 = vadd.f32 %v2892, %v4056
    %v4377 = vadd.f32 %v2893, %v4057
    %v4378 = vadd.f32 %v2894, %v4058
    %v4379 = vadd.f32 %v2895, %v4059
    %v4380 = vadd.f32 %v2896, %v4060
    %v4381 = vadd.f32 %v2897, %v4061
    %v4382 = vadd.f32 %v2898, %v4062
    %v4383 = vadd.f32 %v2899, %v4063
    %v4384 = vadd.f32 %v2900, %v4064
    %v4385 = vadd.f32 %v2901, %v4065
    %v4386 = vadd.f32 %v2902, %v4066
    %v4387 = vadd.f32 %v2903, %v4067
    %v4388 = vadd.f32 %v2904, %v4068
    %v4389 = vadd.f32 %v2905, %v4069
    %v4390 = vadd.f32 %v2906, %v4070
    %v4391 = vld [vmem:[%s4] sm:$0xff]
    %v4392 = vld [vmem:[%s4 + $0x8] sm:$0x3]
    %v4395 = vlaneseq
    %v4396 = vshrl.u32 %v4395, 7
    %v4397 = vsub.s32 0, %v4396
    %v4398 = vrot.slane %v4391, %v4397
    %v4399 = vlaneseq
    %v4400 = vshrl.u32 %v4399, 7
    %v4401 = vsub.s32 1, %v4400
    %v4402 = vrot.slane %v4391, %v4401
    %v4403 = vlaneseq
    %v4404 = vshrl.u32 %v4403, 7
    %v4405 = vsub.s32 2, %v4404
    %v4406 = vrot.slane %v4391, %v4405
    %v4407 = vlaneseq
    %v4408 = vshrl.u32 %v4407, 7
    %v4409 = vsub.s32 3, %v4408
    %v4410 = vrot.slane %v4391, %v4409
    %v4411 = vlaneseq
    %v4412 = vshrl.u32 %v4411, 7
    %v4413 = vsub.s32 4, %v4412
    %v4414 = vrot.slane %v4391, %v4413
    %v4415 = vlaneseq
    %v4416 = vshrl.u32 %v4415, 7
    %v4417 = vsub.s32 5, %v4416
    %v4418 = vrot.slane %v4391, %v4417
    %v4419 = vlaneseq
    %v4420 = vshrl.u32 %v4419, 7
    %v4421 = vsub.s32 6, %v4420
    %v4422 = vrot.slane %v4391, %v4421
    %v4423 = vlaneseq
    %v4424 = vshrl.u32 %v4423, 7
    %v4425 = vsub.s32 7, %v4424
    %v4426 = vrot.slane %v4391, %v4425
    %v4427 = vlaneseq
    %v4428 = vshrl.u32 %v4427, 7
    %v4429 = vsub.s32 0, %v4428
    %v4430 = vrot.slane %v4392, %v4429
    %v4431 = vlaneseq
    %v4432 = vshrl.u32 %v4431, 7
    %v4433 = vsub.s32 1, %v4432
    %v4434 = vrot.slane %v4392, %v4433
    %4436 = vbcast.lane.b32.xlu0 %v4398, 256
    %v4437 = vpop.permute.xlu0 %4436
    %s4439 = sor.u32 256, 8
    %4440 = vbcast.lane.b32.xlu0 %v4398, %s4439
    %v4441 = vpop.permute.xlu0 %4440
    %s4443 = sor.u32 256, 16
    %4444 = vbcast.lane.b32.xlu0 %v4398, %s4443
    %v4445 = vpop.permute.xlu0 %4444
    %s4447 = sor.u32 256, 24
    %4448 = vbcast.lane.b32.xlu0 %v4398, %s4447
    %v4449 = vpop.permute.xlu0 %4448
    %s4451 = sor.u32 256, 32
    %4452 = vbcast.lane.b32.xlu0 %v4398, %s4451
    %v4453 = vpop.permute.xlu0 %4452
    %s4455 = sor.u32 256, 40
    %4456 = vbcast.lane.b32.xlu0 %v4398, %s4455
    %v4457 = vpop.permute.xlu0 %4456
    %s4459 = sor.u32 256, 48
    %4460 = vbcast.lane.b32.xlu0 %v4398, %s4459
    %v4461 = vpop.permute.xlu0 %4460
    %s4463 = sor.u32 256, 56
    %4464 = vbcast.lane.b32.xlu0 %v4398, %s4463
    %v4465 = vpop.permute.xlu0 %4464
    %s4467 = sor.u32 256, 64
    %4468 = vbcast.lane.b32.xlu0 %v4398, %s4467
    %v4469 = vpop.permute.xlu0 %4468
    %s4471 = sor.u32 256, 72
    %4472 = vbcast.lane.b32.xlu0 %v4398, %s4471
    %v4473 = vpop.permute.xlu0 %4472
    %s4475 = sor.u32 256, 80
    %4476 = vbcast.lane.b32.xlu0 %v4398, %s4475
    %v4477 = vpop.permute.xlu0 %4476
    %s4479 = sor.u32 256, 88
    %4480 = vbcast.lane.b32.xlu0 %v4398, %s4479
    %v4481 = vpop.permute.xlu0 %4480
    %s4483 = sor.u32 256, 96
    %4484 = vbcast.lane.b32.xlu0 %v4398, %s4483
    %v4485 = vpop.permute.xlu0 %4484
    %s4487 = sor.u32 256, 104
    %4488 = vbcast.lane.b32.xlu0 %v4398, %s4487
    %v4489 = vpop.permute.xlu0 %4488
    %s4491 = sor.u32 256, 112
    %4492 = vbcast.lane.b32.xlu0 %v4398, %s4491
    %v4493 = vpop.permute.xlu0 %4492
    %s4495 = sor.u32 256, 120
    %4496 = vbcast.lane.b32.xlu0 %v4398, %s4495
    %v4497 = vpop.permute.xlu0 %4496
    %4499 = vbcast.lane.b32.xlu0 %v4402, 256
    %v4500 = vpop.permute.xlu0 %4499
    %s4502 = sor.u32 256, 8
    %4503 = vbcast.lane.b32.xlu0 %v4402, %s4502
    %v4504 = vpop.permute.xlu0 %4503
    %s4506 = sor.u32 256, 16
    %4507 = vbcast.lane.b32.xlu0 %v4402, %s4506
    %v4508 = vpop.permute.xlu0 %4507
    %s4510 = sor.u32 256, 24
    %4511 = vbcast.lane.b32.xlu0 %v4402, %s4510
    %v4512 = vpop.permute.xlu0 %4511
    %s4514 = sor.u32 256, 32
    %4515 = vbcast.lane.b32.xlu0 %v4402, %s4514
    %v4516 = vpop.permute.xlu0 %4515
    %s4518 = sor.u32 256, 40
    %4519 = vbcast.lane.b32.xlu0 %v4402, %s4518
    %v4520 = vpop.permute.xlu0 %4519
    %s4522 = sor.u32 256, 48
    %4523 = vbcast.lane.b32.xlu0 %v4402, %s4522
    %v4524 = vpop.permute.xlu0 %4523
    %s4526 = sor.u32 256, 56
    %4527 = vbcast.lane.b32.xlu0 %v4402, %s4526
    %v4528 = vpop.permute.xlu0 %4527
    %s4530 = sor.u32 256, 64
    %4531 = vbcast.lane.b32.xlu0 %v4402, %s4530
    %v4532 = vpop.permute.xlu0 %4531
    %s4534 = sor.u32 256, 72
    %4535 = vbcast.lane.b32.xlu0 %v4402, %s4534
    %v4536 = vpop.permute.xlu0 %4535
    %s4538 = sor.u32 256, 80
    %4539 = vbcast.lane.b32.xlu0 %v4402, %s4538
    %v4540 = vpop.permute.xlu0 %4539
    %s4542 = sor.u32 256, 88
    %4543 = vbcast.lane.b32.xlu0 %v4402, %s4542
    %v4544 = vpop.permute.xlu0 %4543
    %s4546 = sor.u32 256, 96
    %4547 = vbcast.lane.b32.xlu0 %v4402, %s4546
    %v4548 = vpop.permute.xlu0 %4547
    %s4550 = sor.u32 256, 104
    %4551 = vbcast.lane.b32.xlu0 %v4402, %s4550
    %v4552 = vpop.permute.xlu0 %4551
    %s4554 = sor.u32 256, 112
    %4555 = vbcast.lane.b32.xlu0 %v4402, %s4554
    %v4556 = vpop.permute.xlu0 %4555
    %s4558 = sor.u32 256, 120
    %4559 = vbcast.lane.b32.xlu0 %v4402, %s4558
    %v4560 = vpop.permute.xlu0 %4559
    %4562 = vbcast.lane.b32.xlu0 %v4406, 256
    %v4563 = vpop.permute.xlu0 %4562
    %s4565 = sor.u32 256, 8
    %4566 = vbcast.lane.b32.xlu0 %v4406, %s4565
    %v4567 = vpop.permute.xlu0 %4566
    %s4569 = sor.u32 256, 16
    %4570 = vbcast.lane.b32.xlu0 %v4406, %s4569
    %v4571 = vpop.permute.xlu0 %4570
    %s4573 = sor.u32 256, 24
    %4574 = vbcast.lane.b32.xlu0 %v4406, %s4573
    %v4575 = vpop.permute.xlu0 %4574
    %s4577 = sor.u32 256, 32
    %4578 = vbcast.lane.b32.xlu0 %v4406, %s4577
    %v4579 = vpop.permute.xlu0 %4578
    %s4581 = sor.u32 256, 40
    %4582 = vbcast.lane.b32.xlu0 %v4406, %s4581
    %v4583 = vpop.permute.xlu0 %4582
    %s4585 = sor.u32 256, 48
    %4586 = vbcast.lane.b32.xlu0 %v4406, %s4585
    %v4587 = vpop.permute.xlu0 %4586
    %s4589 = sor.u32 256, 56
    %4590 = vbcast.lane.b32.xlu0 %v4406, %s4589
    %v4591 = vpop.permute.xlu0 %4590
    %s4593 = sor.u32 256, 64
    %4594 = vbcast.lane.b32.xlu0 %v4406, %s4593
    %v4595 = vpop.permute.xlu0 %4594
    %s4597 = sor.u32 256, 72
    %4598 = vbcast.lane.b32.xlu0 %v4406, %s4597
    %v4599 = vpop.permute.xlu0 %4598
    %s4601 = sor.u32 256, 80
    %4602 = vbcast.lane.b32.xlu0 %v4406, %s4601
    %v4603 = vpop.permute.xlu0 %4602
    %s4605 = sor.u32 256, 88
    %4606 = vbcast.lane.b32.xlu0 %v4406, %s4605
    %v4607 = vpop.permute.xlu0 %4606
    %s4609 = sor.u32 256, 96
    %4610 = vbcast.lane.b32.xlu0 %v4406, %s4609
    %v4611 = vpop.permute.xlu0 %4610
    %s4613 = sor.u32 256, 104
    %4614 = vbcast.lane.b32.xlu0 %v4406, %s4613
    %v4615 = vpop.permute.xlu0 %4614
    %s4617 = sor.u32 256, 112
    %4618 = vbcast.lane.b32.xlu0 %v4406, %s4617
    %v4619 = vpop.permute.xlu0 %4618
    %s4621 = sor.u32 256, 120
    %4622 = vbcast.lane.b32.xlu0 %v4406, %s4621
    %v4623 = vpop.permute.xlu0 %4622
    %4625 = vbcast.lane.b32.xlu0 %v4410, 256
    %v4626 = vpop.permute.xlu0 %4625
    %s4628 = sor.u32 256, 8
    %4629 = vbcast.lane.b32.xlu0 %v4410, %s4628
    %v4630 = vpop.permute.xlu0 %4629
    %s4632 = sor.u32 256, 16
    %4633 = vbcast.lane.b32.xlu0 %v4410, %s4632
    %v4634 = vpop.permute.xlu0 %4633
    %s4636 = sor.u32 256, 24
    %4637 = vbcast.lane.b32.xlu0 %v4410, %s4636
    %v4638 = vpop.permute.xlu0 %4637
    %s4640 = sor.u32 256, 32
    %4641 = vbcast.lane.b32.xlu0 %v4410, %s4640
    %v4642 = vpop.permute.xlu0 %4641
    %s4644 = sor.u32 256, 40
    %4645 = vbcast.lane.b32.xlu0 %v4410, %s4644
    %v4646 = vpop.permute.xlu0 %4645
    %s4648 = sor.u32 256, 48
    %4649 = vbcast.lane.b32.xlu0 %v4410, %s4648
    %v4650 = vpop.permute.xlu0 %4649
    %s4652 = sor.u32 256, 56
    %4653 = vbcast.lane.b32.xlu0 %v4410, %s4652
    %v4654 = vpop.permute.xlu0 %4653
    %s4656 = sor.u32 256, 64
    %4657 = vbcast.lane.b32.xlu0 %v4410, %s4656
    %v4658 = vpop.permute.xlu0 %4657
    %s4660 = sor.u32 256, 72
    %4661 = vbcast.lane.b32.xlu0 %v4410, %s4660
    %v4662 = vpop.permute.xlu0 %4661
    %s4664 = sor.u32 256, 80
    %4665 = vbcast.lane.b32.xlu0 %v4410, %s4664
    %v4666 = vpop.permute.xlu0 %4665
    %s4668 = sor.u32 256, 88
    %4669 = vbcast.lane.b32.xlu0 %v4410, %s4668
    %v4670 = vpop.permute.xlu0 %4669
    %s4672 = sor.u32 256, 96
    %4673 = vbcast.lane.b32.xlu0 %v4410, %s4672
    %v4674 = vpop.permute.xlu0 %4673
    %s4676 = sor.u32 256, 104
    %4677 = vbcast.lane.b32.xlu0 %v4410, %s4676
    %v4678 = vpop.permute.xlu0 %4677
    %s4680 = sor.u32 256, 112
    %4681 = vbcast.lane.b32.xlu0 %v4410, %s4680
    %v4682 = vpop.permute.xlu0 %4681
    %s4684 = sor.u32 256, 120
    %4685 = vbcast.lane.b32.xlu0 %v4410, %s4684
    %v4686 = vpop.permute.xlu0 %4685
    %4688 = vbcast.lane.b32.xlu0 %v4414, 256
    %v4689 = vpop.permute.xlu0 %4688
    %s4691 = sor.u32 256, 8
    %4692 = vbcast.lane.b32.xlu0 %v4414, %s4691
    %v4693 = vpop.permute.xlu0 %4692
    %s4695 = sor.u32 256, 16
    %4696 = vbcast.lane.b32.xlu0 %v4414, %s4695
    %v4697 = vpop.permute.xlu0 %4696
    %s4699 = sor.u32 256, 24
    %4700 = vbcast.lane.b32.xlu0 %v4414, %s4699
    %v4701 = vpop.permute.xlu0 %4700
    %s4703 = sor.u32 256, 32
    %4704 = vbcast.lane.b32.xlu0 %v4414, %s4703
    %v4705 = vpop.permute.xlu0 %4704
    %s4707 = sor.u32 256, 40
    %4708 = vbcast.lane.b32.xlu0 %v4414, %s4707
    %v4709 = vpop.permute.xlu0 %4708
    %s4711 = sor.u32 256, 48
    %4712 = vbcast.lane.b32.xlu0 %v4414, %s4711
    %v4713 = vpop.permute.xlu0 %4712
    %s4715 = sor.u32 256, 56
    %4716 = vbcast.lane.b32.xlu0 %v4414, %s4715
    %v4717 = vpop.permute.xlu0 %4716
    %s4719 = sor.u32 256, 64
    %4720 = vbcast.lane.b32.xlu0 %v4414, %s4719
    %v4721 = vpop.permute.xlu0 %4720
    %s4723 = sor.u32 256, 72
    %4724 = vbcast.lane.b32.xlu0 %v4414, %s4723
    %v4725 = vpop.permute.xlu0 %4724
    %s4727 = sor.u32 256, 80
    %4728 = vbcast.lane.b32.xlu0 %v4414, %s4727
    %v4729 = vpop.permute.xlu0 %4728
    %s4731 = sor.u32 256, 88
    %4732 = vbcast.lane.b32.xlu0 %v4414, %s4731
    %v4733 = vpop.permute.xlu0 %4732
    %s4735 = sor.u32 256, 96
    %4736 = vbcast.lane.b32.xlu0 %v4414, %s4735
    %v4737 = vpop.permute.xlu0 %4736
    %s4739 = sor.u32 256, 104
    %4740 = vbcast.lane.b32.xlu0 %v4414, %s4739
    %v4741 = vpop.permute.xlu0 %4740
    %s4743 = sor.u32 256, 112
    %4744 = vbcast.lane.b32.xlu0 %v4414, %s4743
    %v4745 = vpop.permute.xlu0 %4744
    %s4747 = sor.u32 256, 120
    %4748 = vbcast.lane.b32.xlu0 %v4414, %s4747
    %v4749 = vpop.permute.xlu0 %4748
    %4751 = vbcast.lane.b32.xlu0 %v4418, 256
    %v4752 = vpop.permute.xlu0 %4751
    %s4754 = sor.u32 256, 8
    %4755 = vbcast.lane.b32.xlu0 %v4418, %s4754
    %v4756 = vpop.permute.xlu0 %4755
    %s4758 = sor.u32 256, 16
    %4759 = vbcast.lane.b32.xlu0 %v4418, %s4758
    %v4760 = vpop.permute.xlu0 %4759
    %s4762 = sor.u32 256, 24
    %4763 = vbcast.lane.b32.xlu0 %v4418, %s4762
    %v4764 = vpop.permute.xlu0 %4763
    %s4766 = sor.u32 256, 32
    %4767 = vbcast.lane.b32.xlu0 %v4418, %s4766
    %v4768 = vpop.permute.xlu0 %4767
    %s4770 = sor.u32 256, 40
    %4771 = vbcast.lane.b32.xlu0 %v4418, %s4770
    %v4772 = vpop.permute.xlu0 %4771
    %s4774 = sor.u32 256, 48
    %4775 = vbcast.lane.b32.xlu0 %v4418, %s4774
    %v4776 = vpop.permute.xlu0 %4775
    %s4778 = sor.u32 256, 56
    %4779 = vbcast.lane.b32.xlu0 %v4418, %s4778
    %v4780 = vpop.permute.xlu0 %4779
    %s4782 = sor.u32 256, 64
    %4783 = vbcast.lane.b32.xlu0 %v4418, %s4782
    %v4784 = vpop.permute.xlu0 %4783
    %s4786 = sor.u32 256, 72
    %4787 = vbcast.lane.b32.xlu0 %v4418, %s4786
    %v4788 = vpop.permute.xlu0 %4787
    %s4790 = sor.u32 256, 80
    %4791 = vbcast.lane.b32.xlu0 %v4418, %s4790
    %v4792 = vpop.permute.xlu0 %4791
    %s4794 = sor.u32 256, 88
    %4795 = vbcast.lane.b32.xlu0 %v4418, %s4794
    %v4796 = vpop.permute.xlu0 %4795
    %s4798 = sor.u32 256, 96
    %4799 = vbcast.lane.b32.xlu0 %v4418, %s4798
    %v4800 = vpop.permute.xlu0 %4799
    %s4802 = sor.u32 256, 104
    %4803 = vbcast.lane.b32.xlu0 %v4418, %s4802
    %v4804 = vpop.permute.xlu0 %4803
    %s4806 = sor.u32 256, 112
    %4807 = vbcast.lane.b32.xlu0 %v4418, %s4806
    %v4808 = vpop.permute.xlu0 %4807
    %s4810 = sor.u32 256, 120
    %4811 = vbcast.lane.b32.xlu0 %v4418, %s4810
    %v4812 = vpop.permute.xlu0 %4811
    %4814 = vbcast.lane.b32.xlu0 %v4422, 256
    %v4815 = vpop.permute.xlu0 %4814
    %s4817 = sor.u32 256, 8
    %4818 = vbcast.lane.b32.xlu0 %v4422, %s4817
    %v4819 = vpop.permute.xlu0 %4818
    %s4821 = sor.u32 256, 16
    %4822 = vbcast.lane.b32.xlu0 %v4422, %s4821
    %v4823 = vpop.permute.xlu0 %4822
    %s4825 = sor.u32 256, 24
    %4826 = vbcast.lane.b32.xlu0 %v4422, %s4825
    %v4827 = vpop.permute.xlu0 %4826
    %s4829 = sor.u32 256, 32
    %4830 = vbcast.lane.b32.xlu0 %v4422, %s4829
    %v4831 = vpop.permute.xlu0 %4830
    %s4833 = sor.u32 256, 40
    %4834 = vbcast.lane.b32.xlu0 %v4422, %s4833
    %v4835 = vpop.permute.xlu0 %4834
    %s4837 = sor.u32 256, 48
    %4838 = vbcast.lane.b32.xlu0 %v4422, %s4837
    %v4839 = vpop.permute.xlu0 %4838
    %s4841 = sor.u32 256, 56
    %4842 = vbcast.lane.b32.xlu0 %v4422, %s4841
    %v4843 = vpop.permute.xlu0 %4842
    %s4845 = sor.u32 256, 64
    %4846 = vbcast.lane.b32.xlu0 %v4422, %s4845
    %v4847 = vpop.permute.xlu0 %4846
    %s4849 = sor.u32 256, 72
    %4850 = vbcast.lane.b32.xlu0 %v4422, %s4849
    %v4851 = vpop.permute.xlu0 %4850
    %s4853 = sor.u32 256, 80
    %4854 = vbcast.lane.b32.xlu0 %v4422, %s4853
    %v4855 = vpop.permute.xlu0 %4854
    %s4857 = sor.u32 256, 88
    %4858 = vbcast.lane.b32.xlu0 %v4422, %s4857
    %v4859 = vpop.permute.xlu0 %4858
    %s4861 = sor.u32 256, 96
    %4862 = vbcast.lane.b32.xlu0 %v4422, %s4861
    %v4863 = vpop.permute.xlu0 %4862
    %s4865 = sor.u32 256, 104
    %4866 = vbcast.lane.b32.xlu0 %v4422, %s4865
    %v4867 = vpop.permute.xlu0 %4866
    %s4869 = sor.u32 256, 112
    %4870 = vbcast.lane.b32.xlu0 %v4422, %s4869
    %v4871 = vpop.permute.xlu0 %4870
    %s4873 = sor.u32 256, 120
    %4874 = vbcast.lane.b32.xlu0 %v4422, %s4873
    %v4875 = vpop.permute.xlu0 %4874
    %4877 = vbcast.lane.b32.xlu0 %v4426, 256
    %v4878 = vpop.permute.xlu0 %4877
    %s4880 = sor.u32 256, 8
    %4881 = vbcast.lane.b32.xlu0 %v4426, %s4880
    %v4882 = vpop.permute.xlu0 %4881
    %s4884 = sor.u32 256, 16
    %4885 = vbcast.lane.b32.xlu0 %v4426, %s4884
    %v4886 = vpop.permute.xlu0 %4885
    %s4888 = sor.u32 256, 24
    %4889 = vbcast.lane.b32.xlu0 %v4426, %s4888
    %v4890 = vpop.permute.xlu0 %4889
    %s4892 = sor.u32 256, 32
    %4893 = vbcast.lane.b32.xlu0 %v4426, %s4892
    %v4894 = vpop.permute.xlu0 %4893
    %s4896 = sor.u32 256, 40
    %4897 = vbcast.lane.b32.xlu0 %v4426, %s4896
    %v4898 = vpop.permute.xlu0 %4897
    %s4900 = sor.u32 256, 48
    %4901 = vbcast.lane.b32.xlu0 %v4426, %s4900
    %v4902 = vpop.permute.xlu0 %4901
    %s4904 = sor.u32 256, 56
    %4905 = vbcast.lane.b32.xlu0 %v4426, %s4904
    %v4906 = vpop.permute.xlu0 %4905
    %s4908 = sor.u32 256, 64
    %4909 = vbcast.lane.b32.xlu0 %v4426, %s4908
    %v4910 = vpop.permute.xlu0 %4909
    %s4912 = sor.u32 256, 72
    %4913 = vbcast.lane.b32.xlu0 %v4426, %s4912
    %v4914 = vpop.permute.xlu0 %4913
    %s4916 = sor.u32 256, 80
    %4917 = vbcast.lane.b32.xlu0 %v4426, %s4916
    %v4918 = vpop.permute.xlu0 %4917
    %s4920 = sor.u32 256, 88
    %4921 = vbcast.lane.b32.xlu0 %v4426, %s4920
    %v4922 = vpop.permute.xlu0 %4921
    %s4924 = sor.u32 256, 96
    %4925 = vbcast.lane.b32.xlu0 %v4426, %s4924
    %v4926 = vpop.permute.xlu0 %4925
    %s4928 = sor.u32 256, 104
    %4929 = vbcast.lane.b32.xlu0 %v4426, %s4928
    %v4930 = vpop.permute.xlu0 %4929
    %s4932 = sor.u32 256, 112
    %4933 = vbcast.lane.b32.xlu0 %v4426, %s4932
    %v4934 = vpop.permute.xlu0 %4933
    %s4936 = sor.u32 256, 120
    %4937 = vbcast.lane.b32.xlu0 %v4426, %s4936
    %v4938 = vpop.permute.xlu0 %4937
    %4940 = vbcast.lane.b32.xlu0 %v4430, 256
    %v4941 = vpop.permute.xlu0 %4940
    %s4943 = sor.u32 256, 8
    %4944 = vbcast.lane.b32.xlu0 %v4430, %s4943
    %v4945 = vpop.permute.xlu0 %4944
    %s4947 = sor.u32 256, 16
    %4948 = vbcast.lane.b32.xlu0 %v4430, %s4947
    %v4949 = vpop.permute.xlu0 %4948
    %s4951 = sor.u32 256, 24
    %4952 = vbcast.lane.b32.xlu0 %v4430, %s4951
    %v4953 = vpop.permute.xlu0 %4952
    %s4955 = sor.u32 256, 32
    %4956 = vbcast.lane.b32.xlu0 %v4430, %s4955
    %v4957 = vpop.permute.xlu0 %4956
    %s4959 = sor.u32 256, 40
    %4960 = vbcast.lane.b32.xlu0 %v4430, %s4959
    %v4961 = vpop.permute.xlu0 %4960
    %s4963 = sor.u32 256, 48
    %4964 = vbcast.lane.b32.xlu0 %v4430, %s4963
    %v4965 = vpop.permute.xlu0 %4964
    %s4967 = sor.u32 256, 56
    %4968 = vbcast.lane.b32.xlu0 %v4430, %s4967
    %v4969 = vpop.permute.xlu0 %4968
    %s4971 = sor.u32 256, 64
    %4972 = vbcast.lane.b32.xlu0 %v4430, %s4971
    %v4973 = vpop.permute.xlu0 %4972
    %s4975 = sor.u32 256, 72
    %4976 = vbcast.lane.b32.xlu0 %v4430, %s4975
    %v4977 = vpop.permute.xlu0 %4976
    %s4979 = sor.u32 256, 80
    %4980 = vbcast.lane.b32.xlu0 %v4430, %s4979
    %v4981 = vpop.permute.xlu0 %4980
    %s4983 = sor.u32 256, 88
    %4984 = vbcast.lane.b32.xlu0 %v4430, %s4983
    %v4985 = vpop.permute.xlu0 %4984
    %s4987 = sor.u32 256, 96
    %4988 = vbcast.lane.b32.xlu0 %v4430, %s4987
    %v4989 = vpop.permute.xlu0 %4988
    %s4991 = sor.u32 256, 104
    %4992 = vbcast.lane.b32.xlu0 %v4430, %s4991
    %v4993 = vpop.permute.xlu0 %4992
    %s4995 = sor.u32 256, 112
    %4996 = vbcast.lane.b32.xlu0 %v4430, %s4995
    %v4997 = vpop.permute.xlu0 %4996
    %s4999 = sor.u32 256, 120
    %5000 = vbcast.lane.b32.xlu0 %v4430, %s4999
    %v5001 = vpop.permute.xlu0 %5000
    %5003 = vbcast.lane.b32.xlu0 %v4434, 256
    %v5004 = vpop.permute.xlu0 %5003
    %s5006 = sor.u32 256, 8
    %5007 = vbcast.lane.b32.xlu0 %v4434, %s5006
    %v5008 = vpop.permute.xlu0 %5007
    %s5010 = sor.u32 256, 16
    %5011 = vbcast.lane.b32.xlu0 %v4434, %s5010
    %v5012 = vpop.permute.xlu0 %5011
    %s5014 = sor.u32 256, 24
    %5015 = vbcast.lane.b32.xlu0 %v4434, %s5014
    %v5016 = vpop.permute.xlu0 %5015
    %s5018 = sor.u32 256, 32
    %5019 = vbcast.lane.b32.xlu0 %v4434, %s5018
    %v5020 = vpop.permute.xlu0 %5019
    %s5022 = sor.u32 256, 40
    %5023 = vbcast.lane.b32.xlu0 %v4434, %s5022
    %v5024 = vpop.permute.xlu0 %5023
    %s5026 = sor.u32 256, 48
    %5027 = vbcast.lane.b32.xlu0 %v4434, %s5026
    %v5028 = vpop.permute.xlu0 %5027
    %s5030 = sor.u32 256, 56
    %5031 = vbcast.lane.b32.xlu0 %v4434, %s5030
    %v5032 = vpop.permute.xlu0 %5031
    %s5034 = sor.u32 256, 64
    %5035 = vbcast.lane.b32.xlu0 %v4434, %s5034
    %v5036 = vpop.permute.xlu0 %5035
    %s5038 = sor.u32 256, 72
    %5039 = vbcast.lane.b32.xlu0 %v4434, %s5038
    %v5040 = vpop.permute.xlu0 %5039
    %s5042 = sor.u32 256, 80
    %5043 = vbcast.lane.b32.xlu0 %v4434, %s5042
    %v5044 = vpop.permute.xlu0 %5043
    %s5046 = sor.u32 256, 88
    %5047 = vbcast.lane.b32.xlu0 %v4434, %s5046
    %v5048 = vpop.permute.xlu0 %5047
    %s5050 = sor.u32 256, 96
    %5051 = vbcast.lane.b32.xlu0 %v4434, %s5050
    %v5052 = vpop.permute.xlu0 %5051
    %s5054 = sor.u32 256, 104
    %5055 = vbcast.lane.b32.xlu0 %v4434, %s5054
    %v5056 = vpop.permute.xlu0 %5055
    %s5058 = sor.u32 256, 112
    %5059 = vbcast.lane.b32.xlu0 %v4434, %s5058
    %v5060 = vpop.permute.xlu0 %5059
    %s5062 = sor.u32 256, 120
    %5063 = vbcast.lane.b32.xlu0 %v4434, %s5062
    %v5064 = vpop.permute.xlu0 %5063
    %v5225 = vadd.f32 %v4071, %v4437
    %v5226 = vadd.f32 %v4072, %v4441
    %v5227 = vadd.f32 %v4073, %v4445
    %v5228 = vadd.f32 %v4074, %v4449
    %v5229 = vadd.f32 %v4075, %v4453
    %v5230 = vadd.f32 %v4076, %v4457
    %v5231 = vadd.f32 %v4077, %v4461
    %v5232 = vadd.f32 %v4078, %v4465
    %v5233 = vadd.f32 %v4079, %v4469
    %v5234 = vadd.f32 %v4080, %v4473
    %v5235 = vadd.f32 %v4081, %v4477
    %v5236 = vadd.f32 %v4082, %v4481
    %v5237 = vadd.f32 %v4083, %v4485
    %v5238 = vadd.f32 %v4084, %v4489
    %v5239 = vadd.f32 %v4085, %v4493
    %v5240 = vadd.f32 %v4086, %v4497
    %v5241 = vadd.f32 %v4087, %v4500
    %v5242 = vadd.f32 %v4088, %v4504
    %v5243 = vadd.f32 %v4089, %v4508
    %v5244 = vadd.f32 %v4090, %v4512
    %v5245 = vadd.f32 %v4091, %v4516
    %v5246 = vadd.f32 %v4092, %v4520
    %v5247 = vadd.f32 %v4093, %v4524
    %v5248 = vadd.f32 %v4094, %v4528
    %v5249 = vadd.f32 %v4095, %v4532
    %v5250 = vadd.f32 %v4096, %v4536
    %v5251 = vadd.f32 %v4097, %v4540
    %v5252 = vadd.f32 %v4098, %v4544
    %v5253 = vadd.f32 %v4099, %v4548
    %v5254 = vadd.f32 %v4100, %v4552
    %v5255 = vadd.f32 %v4101, %v4556
    %v5256 = vadd.f32 %v4102, %v4560
    %v5257 = vadd.f32 %v4103, %v4563
    %v5258 = vadd.f32 %v4104, %v4567
    %v5259 = vadd.f32 %v4105, %v4571
    %v5260 = vadd.f32 %v4106, %v4575
    %v5261 = vadd.f32 %v4107, %v4579
    %v5262 = vadd.f32 %v4108, %v4583
    %v5263 = vadd.f32 %v4109, %v4587
    %v5264 = vadd.f32 %v4110, %v4591
    %v5265 = vadd.f32 %v4111, %v4595
    %v5266 = vadd.f32 %v4112, %v4599
    %v5267 = vadd.f32 %v4113, %v4603
    %v5268 = vadd.f32 %v4114, %v4607
    %v5269 = vadd.f32 %v4115, %v4611
    %v5270 = vadd.f32 %v4116, %v4615
    %v5271 = vadd.f32 %v4117, %v4619
    %v5272 = vadd.f32 %v4118, %v4623
    %v5273 = vadd.f32 %v4119, %v4626
    %v5274 = vadd.f32 %v4120, %v4630
    %v5275 = vadd.f32 %v4121, %v4634
    %v5276 = vadd.f32 %v4122, %v4638
    %v5277 = vadd.f32 %v4123, %v4642
    %v5278 = vadd.f32 %v4124, %v4646
    %v5279 = vadd.f32 %v4125, %v4650
    %v5280 = vadd.f32 %v4126, %v4654
    %v5281 = vadd.f32 %v4127, %v4658
    %v5282 = vadd.f32 %v4128, %v4662
    %v5283 = vadd.f32 %v4129, %v4666
    %v5284 = vadd.f32 %v4130, %v4670
    %v5285 = vadd.f32 %v4131, %v4674
    %v5286 = vadd.f32 %v4132, %v4678
    %v5287 = vadd.f32 %v4133, %v4682
    %v5288 = vadd.f32 %v4134, %v4686
    %v5289 = vadd.f32 %v4135, %v4689
    %v5290 = vadd.f32 %v4136, %v4693
    %v5291 = vadd.f32 %v4137, %v4697
    %v5292 = vadd.f32 %v4138, %v4701
    %v5293 = vadd.f32 %v4139, %v4705
    %v5294 = vadd.f32 %v4140, %v4709
    %v5295 = vadd.f32 %v4141, %v4713
    %v5296 = vadd.f32 %v4142, %v4717
    %v5297 = vadd.f32 %v4143, %v4721
    %v5298 = vadd.f32 %v4144, %v4725
    %v5299 = vadd.f32 %v4145, %v4729
    %v5300 = vadd.f32 %v4146, %v4733
    %v5301 = vadd.f32 %v4147, %v4737
    %v5302 = vadd.f32 %v4148, %v4741
    %v5303 = vadd.f32 %v4149, %v4745
    %v5304 = vadd.f32 %v4150, %v4749
    %v5305 = vadd.f32 %v4151, %v4752
    %v5306 = vadd.f32 %v4152, %v4756
    %v5307 = vadd.f32 %v4153, %v4760
    %v5308 = vadd.f32 %v4154, %v4764
    %v5309 = vadd.f32 %v4155, %v4768
    %v5310 = vadd.f32 %v4156, %v4772
    %v5311 = vadd.f32 %v4157, %v4776
    %v5312 = vadd.f32 %v4158, %v4780
    %v5313 = vadd.f32 %v4159, %v4784
    %v5314 = vadd.f32 %v4160, %v4788
    %v5315 = vadd.f32 %v4161, %v4792
    %v5316 = vadd.f32 %v4162, %v4796
    %v5317 = vadd.f32 %v4163, %v4800
    %v5318 = vadd.f32 %v4164, %v4804
    %v5319 = vadd.f32 %v4165, %v4808
    %v5320 = vadd.f32 %v4166, %v4812
    %v5321 = vadd.f32 %v4167, %v4815
    %v5322 = vadd.f32 %v4168, %v4819
    %v5323 = vadd.f32 %v4169, %v4823
    %v5324 = vadd.f32 %v4170, %v4827
    %v5325 = vadd.f32 %v4171, %v4831
    %v5326 = vadd.f32 %v4172, %v4835
    %v5327 = vadd.f32 %v4173, %v4839
    %v5328 = vadd.f32 %v4174, %v4843
    %v5329 = vadd.f32 %v4175, %v4847
    %v5330 = vadd.f32 %v4176, %v4851
    %v5331 = vadd.f32 %v4177, %v4855
    %v5332 = vadd.f32 %v4178, %v4859
    %v5333 = vadd.f32 %v4179, %v4863
    %v5334 = vadd.f32 %v4180, %v4867
    %v5335 = vadd.f32 %v4181, %v4871
    %v5336 = vadd.f32 %v4182, %v4875
    %v5337 = vadd.f32 %v4183, %v4878
    %v5338 = vadd.f32 %v4184, %v4882
    %v5339 = vadd.f32 %v4185, %v4886
    %v5340 = vadd.f32 %v4186, %v4890
    %v5341 = vadd.f32 %v4187, %v4894
    %v5342 = vadd.f32 %v4188, %v4898
    %v5343 = vadd.f32 %v4189, %v4902
    %v5344 = vadd.f32 %v4190, %v4906
    %v5345 = vadd.f32 %v4191, %v4910
    %v5346 = vadd.f32 %v4192, %v4914
    %v5347 = vadd.f32 %v4193, %v4918
    %v5348 = vadd.f32 %v4194, %v4922
    %v5349 = vadd.f32 %v4195, %v4926
    %v5350 = vadd.f32 %v4196, %v4930
    %v5351 = vadd.f32 %v4197, %v4934
    %v5352 = vadd.f32 %v4198, %v4938
    %v5353 = vadd.f32 %v4199, %v4941
    %v5354 = vadd.f32 %v4200, %v4945
    %v5355 = vadd.f32 %v4201, %v4949
    %v5356 = vadd.f32 %v4202, %v4953
    %v5357 = vadd.f32 %v4203, %v4957
    %v5358 = vadd.f32 %v4204, %v4961
    %v5359 = vadd.f32 %v4205, %v4965
    %v5360 = vadd.f32 %v4206, %v4969
    %v5361 = vadd.f32 %v4207, %v4973
    %v5362 = vadd.f32 %v4208, %v4977
    %v5363 = vadd.f32 %v4209, %v4981
    %v5364 = vadd.f32 %v4210, %v4985
    %v5365 = vadd.f32 %v4211, %v4989
    %v5366 = vadd.f32 %v4212, %v4993
    %v5367 = vadd.f32 %v4213, %v4997
    %v5368 = vadd.f32 %v4214, %v5001
    %v5369 = vadd.f32 %v4215, %v5004
    %v5370 = vadd.f32 %v4216, %v5008
    %v5371 = vadd.f32 %v4217, %v5012
    %v5372 = vadd.f32 %v4218, %v5016
    %v5373 = vadd.f32 %v4219, %v5020
    %v5374 = vadd.f32 %v4220, %v5024
    %v5375 = vadd.f32 %v4221, %v5028
    %v5376 = vadd.f32 %v4222, %v5032
    %v5377 = vadd.f32 %v4223, %v5036
    %v5378 = vadd.f32 %v4224, %v5040
    %v5379 = vadd.f32 %v4225, %v5044
    %v5380 = vadd.f32 %v4226, %v5048
    %v5381 = vadd.f32 %v4227, %v5052
    %v5382 = vadd.f32 %v4228, %v5056
    %v5383 = vadd.f32 %v4229, %v5060
    %v5384 = vadd.f32 %v4230, %v5064
    %v5385 = vadd.f32 %v4231, %v4437
    %v5386 = vadd.f32 %v4232, %v4441
    %v5387 = vadd.f32 %v4233, %v4445
    %v5388 = vadd.f32 %v4234, %v4449
    %v5389 = vadd.f32 %v4235, %v4453
    %v5390 = vadd.f32 %v4236, %v4457
    %v5391 = vadd.f32 %v4237, %v4461
    %v5392 = vadd.f32 %v4238, %v4465
    %v5393 = vadd.f32 %v4239, %v4469
    %v5394 = vadd.f32 %v4240, %v4473
    %v5395 = vadd.f32 %v4241, %v4477
    %v5396 = vadd.f32 %v4242, %v4481
    %v5397 = vadd.f32 %v4243, %v4485
    %v5398 = vadd.f32 %v4244, %v4489
    %v5399 = vadd.f32 %v4245, %v4493
    %v5400 = vadd.f32 %v4246, %v4497
    %v5401 = vadd.f32 %v4247, %v4500
    %v5402 = vadd.f32 %v4248, %v4504
    %v5403 = vadd.f32 %v4249, %v4508
    %v5404 = vadd.f32 %v4250, %v4512
    %v5405 = vadd.f32 %v4251, %v4516
    %v5406 = vadd.f32 %v4252, %v4520
    %v5407 = vadd.f32 %v4253, %v4524
    %v5408 = vadd.f32 %v4254, %v4528
    %v5409 = vadd.f32 %v4255, %v4532
    %v5410 = vadd.f32 %v4256, %v4536
    %v5411 = vadd.f32 %v4257, %v4540
    %v5412 = vadd.f32 %v4258, %v4544
    %v5413 = vadd.f32 %v4259, %v4548
    %v5414 = vadd.f32 %v4260, %v4552
    %v5415 = vadd.f32 %v4261, %v4556
    %v5416 = vadd.f32 %v4262, %v4560
    %v5417 = vadd.f32 %v4263, %v4563
    %v5418 = vadd.f32 %v4264, %v4567
    %v5419 = vadd.f32 %v4265, %v4571
    %v5420 = vadd.f32 %v4266, %v4575
    %v5421 = vadd.f32 %v4267, %v4579
    %v5422 = vadd.f32 %v4268, %v4583
    %v5423 = vadd.f32 %v4269, %v4587
    %v5424 = vadd.f32 %v4270, %v4591
    %v5425 = vadd.f32 %v4271, %v4595
    %v5426 = vadd.f32 %v4272, %v4599
    %v5427 = vadd.f32 %v4273, %v4603
    %v5428 = vadd.f32 %v4274, %v4607
    %v5429 = vadd.f32 %v4275, %v4611
    %v5430 = vadd.f32 %v4276, %v4615
    %v5431 = vadd.f32 %v4277, %v4619
    %v5432 = vadd.f32 %v4278, %v4623
    %v5433 = vadd.f32 %v4279, %v4626
    %v5434 = vadd.f32 %v4280, %v4630
    %v5435 = vadd.f32 %v4281, %v4634
    %v5436 = vadd.f32 %v4282, %v4638
    %v5437 = vadd.f32 %v4283, %v4642
    %v5438 = vadd.f32 %v4284, %v4646
    %v5439 = vadd.f32 %v4285, %v4650
    %v5440 = vadd.f32 %v4286, %v4654
    %v5441 = vadd.f32 %v4287, %v4658
    %v5442 = vadd.f32 %v4288, %v4662
    %v5443 = vadd.f32 %v4289, %v4666
    %v5444 = vadd.f32 %v4290, %v4670
    %v5445 = vadd.f32 %v4291, %v4674
    %v5446 = vadd.f32 %v4292, %v4678
    %v5447 = vadd.f32 %v4293, %v4682
    %v5448 = vadd.f32 %v4294, %v4686
    %v5449 = vadd.f32 %v4295, %v4689
    %v5450 = vadd.f32 %v4296, %v4693
    %v5451 = vadd.f32 %v4297, %v4697
    %v5452 = vadd.f32 %v4298, %v4701
    %v5453 = vadd.f32 %v4299, %v4705
    %v5454 = vadd.f32 %v4300, %v4709
    %v5455 = vadd.f32 %v4301, %v4713
    %v5456 = vadd.f32 %v4302, %v4717
    %v5457 = vadd.f32 %v4303, %v4721
    %v5458 = vadd.f32 %v4304, %v4725
    %v5459 = vadd.f32 %v4305, %v4729
    %v5460 = vadd.f32 %v4306, %v4733
    %v5461 = vadd.f32 %v4307, %v4737
    %v5462 = vadd.f32 %v4308, %v4741
    %v5463 = vadd.f32 %v4309, %v4745
    %v5464 = vadd.f32 %v4310, %v4749
    %v5465 = vadd.f32 %v4311, %v4752
    %v5466 = vadd.f32 %v4312, %v4756
    %v5467 = vadd.f32 %v4313, %v4760
    %v5468 = vadd.f32 %v4314, %v4764
    %v5469 = vadd.f32 %v4315, %v4768
    %v5470 = vadd.f32 %v4316, %v4772
    %v5471 = vadd.f32 %v4317, %v4776
    %v5472 = vadd.f32 %v4318, %v4780
    %v5473 = vadd.f32 %v4319, %v4784
    %v5474 = vadd.f32 %v4320, %v4788
    %v5475 = vadd.f32 %v4321, %v4792
    %v5476 = vadd.f32 %v4322, %v4796
    %v5477 = vadd.f32 %v4323, %v4800
    %v5478 = vadd.f32 %v4324, %v4804
    %v5479 = vadd.f32 %v4325, %v4808
    %v5480 = vadd.f32 %v4326, %v4812
    %v5481 = vadd.f32 %v4327, %v4815
    %v5482 = vadd.f32 %v4328, %v4819
    %v5483 = vadd.f32 %v4329, %v4823
    %v5484 = vadd.f32 %v4330, %v4827
    %v5485 = vadd.f32 %v4331, %v4831
    %v5486 = vadd.f32 %v4332, %v4835
    %v5487 = vadd.f32 %v4333, %v4839
    %v5488 = vadd.f32 %v4334, %v4843
    %v5489 = vadd.f32 %v4335, %v4847
    %v5490 = vadd.f32 %v4336, %v4851
    %v5491 = vadd.f32 %v4337, %v4855
    %v5492 = vadd.f32 %v4338, %v4859
    %v5493 = vadd.f32 %v4339, %v4863
    %v5494 = vadd.f32 %v4340, %v4867
    %v5495 = vadd.f32 %v4341, %v4871
    %v5496 = vadd.f32 %v4342, %v4875
    %v5497 = vadd.f32 %v4343, %v4878
    %v5498 = vadd.f32 %v4344, %v4882
    %v5499 = vadd.f32 %v4345, %v4886
    %v5500 = vadd.f32 %v4346, %v4890
    %v5501 = vadd.f32 %v4347, %v4894
    %v5502 = vadd.f32 %v4348, %v4898
    %v5503 = vadd.f32 %v4349, %v4902
    %v5504 = vadd.f32 %v4350, %v4906
    %v5505 = vadd.f32 %v4351, %v4910
    %v5506 = vadd.f32 %v4352, %v4914
    %v5507 = vadd.f32 %v4353, %v4918
    %v5508 = vadd.f32 %v4354, %v4922
    %v5509 = vadd.f32 %v4355, %v4926
    %v5510 = vadd.f32 %v4356, %v4930
    %v5511 = vadd.f32 %v4357, %v4934
    %v5512 = vadd.f32 %v4358, %v4938
    %v5513 = vadd.f32 %v4359, %v4941
    %v5514 = vadd.f32 %v4360, %v4945
    %v5515 = vadd.f32 %v4361, %v4949
    %v5516 = vadd.f32 %v4362, %v4953
    %v5517 = vadd.f32 %v4363, %v4957
    %v5518 = vadd.f32 %v4364, %v4961
    %v5519 = vadd.f32 %v4365, %v4965
    %v5520 = vadd.f32 %v4366, %v4969
    %v5521 = vadd.f32 %v4367, %v4973
    %v5522 = vadd.f32 %v4368, %v4977
    %v5523 = vadd.f32 %v4369, %v4981
    %v5524 = vadd.f32 %v4370, %v4985
    %v5525 = vadd.f32 %v4371, %v4989
    %v5526 = vadd.f32 %v4372, %v4993
    %v5527 = vadd.f32 %v4373, %v4997
    %v5528 = vadd.f32 %v4374, %v5001
    %v5529 = vadd.f32 %v4375, %v5004
    %v5530 = vadd.f32 %v4376, %v5008
    %v5531 = vadd.f32 %v4377, %v5012
    %v5532 = vadd.f32 %v4378, %v5016
    %v5533 = vadd.f32 %v4379, %v5020
    %v5534 = vadd.f32 %v4380, %v5024
    %v5535 = vadd.f32 %v4381, %v5028
    %v5536 = vadd.f32 %v4382, %v5032
    %v5537 = vadd.f32 %v4383, %v5036
    %v5538 = vadd.f32 %v4384, %v5040
    %v5539 = vadd.f32 %v4385, %v5044
    %v5540 = vadd.f32 %v4386, %v5048
    %v5541 = vadd.f32 %v4387, %v5052
    %v5542 = vadd.f32 %v4388, %v5056
    %v5543 = vadd.f32 %v4389, %v5060
    %v5544 = vadd.f32 %v4390, %v5064
    %v5545 = vsub.f32 0.0, %v5225
    %v5546 = vsub.f32 0.0, %v5226
    %v5547 = vsub.f32 0.0, %v5227
    %v5548 = vsub.f32 0.0, %v5228
    %v5549 = vsub.f32 0.0, %v5229
    %v5550 = vsub.f32 0.0, %v5230
    %v5551 = vsub.f32 0.0, %v5231
    %v5552 = vsub.f32 0.0, %v5232
    %v5553 = vsub.f32 0.0, %v5233
    %v5554 = vsub.f32 0.0, %v5234
    %v5555 = vsub.f32 0.0, %v5235
    %v5556 = vsub.f32 0.0, %v5236
    %v5557 = vsub.f32 0.0, %v5237
    %v5558 = vsub.f32 0.0, %v5238
    %v5559 = vsub.f32 0.0, %v5239
    %v5560 = vsub.f32 0.0, %v5240
    %v5561 = vsub.f32 0.0, %v5241
    %v5562 = vsub.f32 0.0, %v5242
    %v5563 = vsub.f32 0.0, %v5243
    %v5564 = vsub.f32 0.0, %v5244
    %v5565 = vsub.f32 0.0, %v5245
    %v5566 = vsub.f32 0.0, %v5246
    %v5567 = vsub.f32 0.0, %v5247
    %v5568 = vsub.f32 0.0, %v5248
    %v5569 = vsub.f32 0.0, %v5249
    %v5570 = vsub.f32 0.0, %v5250
    %v5571 = vsub.f32 0.0, %v5251
    %v5572 = vsub.f32 0.0, %v5252
    %v5573 = vsub.f32 0.0, %v5253
    %v5574 = vsub.f32 0.0, %v5254
    %v5575 = vsub.f32 0.0, %v5255
    %v5576 = vsub.f32 0.0, %v5256
    %v5577 = vsub.f32 0.0, %v5257
    %v5578 = vsub.f32 0.0, %v5258
    %v5579 = vsub.f32 0.0, %v5259
    %v5580 = vsub.f32 0.0, %v5260
    %v5581 = vsub.f32 0.0, %v5261
    %v5582 = vsub.f32 0.0, %v5262
    %v5583 = vsub.f32 0.0, %v5263
    %v5584 = vsub.f32 0.0, %v5264
    %v5585 = vsub.f32 0.0, %v5265
    %v5586 = vsub.f32 0.0, %v5266
    %v5587 = vsub.f32 0.0, %v5267
    %v5588 = vsub.f32 0.0, %v5268
    %v5589 = vsub.f32 0.0, %v5269
    %v5590 = vsub.f32 0.0, %v5270
    %v5591 = vsub.f32 0.0, %v5271
    %v5592 = vsub.f32 0.0, %v5272
    %v5593 = vsub.f32 0.0, %v5273
    %v5594 = vsub.f32 0.0, %v5274
    %v5595 = vsub.f32 0.0, %v5275
    %v5596 = vsub.f32 0.0, %v5276
    %v5597 = vsub.f32 0.0, %v5277
    %v5598 = vsub.f32 0.0, %v5278
    %v5599 = vsub.f32 0.0, %v5279
    %v5600 = vsub.f32 0.0, %v5280
    %v5601 = vsub.f32 0.0, %v5281
    %v5602 = vsub.f32 0.0, %v5282
    %v5603 = vsub.f32 0.0, %v5283
    %v5604 = vsub.f32 0.0, %v5284
    %v5605 = vsub.f32 0.0, %v5285
    %v5606 = vsub.f32 0.0, %v5286
    %v5607 = vsub.f32 0.0, %v5287
    %v5608 = vsub.f32 0.0, %v5288
    %v5609 = vsub.f32 0.0, %v5289
    %v5610 = vsub.f32 0.0, %v5290
    %v5611 = vsub.f32 0.0, %v5291
    %v5612 = vsub.f32 0.0, %v5292
    %v5613 = vsub.f32 0.0, %v5293
    %v5614 = vsub.f32 0.0, %v5294
    %v5615 = vsub.f32 0.0, %v5295
    %v5616 = vsub.f32 0.0, %v5296
    %v5617 = vsub.f32 0.0, %v5297
    %v5618 = vsub.f32 0.0, %v5298
    %v5619 = vsub.f32 0.0, %v5299
    %v5620 = vsub.f32 0.0, %v5300
    %v5621 = vsub.f32 0.0, %v5301
    %v5622 = vsub.f32 0.0, %v5302
    %v5623 = vsub.f32 0.0, %v5303
    %v5624 = vsub.f32 0.0, %v5304
    %v5625 = vsub.f32 0.0, %v5305
    %v5626 = vsub.f32 0.0, %v5306
    %v5627 = vsub.f32 0.0, %v5307
    %v5628 = vsub.f32 0.0, %v5308
    %v5629 = vsub.f32 0.0, %v5309
    %v5630 = vsub.f32 0.0, %v5310
    %v5631 = vsub.f32 0.0, %v5311
    %v5632 = vsub.f32 0.0, %v5312
    %v5633 = vsub.f32 0.0, %v5313
    %v5634 = vsub.f32 0.0, %v5314
    %v5635 = vsub.f32 0.0, %v5315
    %v5636 = vsub.f32 0.0, %v5316
    %v5637 = vsub.f32 0.0, %v5317
    %v5638 = vsub.f32 0.0, %v5318
    %v5639 = vsub.f32 0.0, %v5319
    %v5640 = vsub.f32 0.0, %v5320
    %v5641 = vsub.f32 0.0, %v5321
    %v5642 = vsub.f32 0.0, %v5322
    %v5643 = vsub.f32 0.0, %v5323
    %v5644 = vsub.f32 0.0, %v5324
    %v5645 = vsub.f32 0.0, %v5325
    %v5646 = vsub.f32 0.0, %v5326
    %v5647 = vsub.f32 0.0, %v5327
    %v5648 = vsub.f32 0.0, %v5328
    %v5649 = vsub.f32 0.0, %v5329
    %v5650 = vsub.f32 0.0, %v5330
    %v5651 = vsub.f32 0.0, %v5331
    %v5652 = vsub.f32 0.0, %v5332
    %v5653 = vsub.f32 0.0, %v5333
    %v5654 = vsub.f32 0.0, %v5334
    %v5655 = vsub.f32 0.0, %v5335
    %v5656 = vsub.f32 0.0, %v5336
    %v5657 = vsub.f32 0.0, %v5337
    %v5658 = vsub.f32 0.0, %v5338
    %v5659 = vsub.f32 0.0, %v5339
    %v5660 = vsub.f32 0.0, %v5340
    %v5661 = vsub.f32 0.0, %v5341
    %v5662 = vsub.f32 0.0, %v5342
    %v5663 = vsub.f32 0.0, %v5343
    %v5664 = vsub.f32 0.0, %v5344
    %v5665 = vsub.f32 0.0, %v5345
    %v5666 = vsub.f32 0.0, %v5346
    %v5667 = vsub.f32 0.0, %v5347
    %v5668 = vsub.f32 0.0, %v5348
    %v5669 = vsub.f32 0.0, %v5349
    %v5670 = vsub.f32 0.0, %v5350
    %v5671 = vsub.f32 0.0, %v5351
    %v5672 = vsub.f32 0.0, %v5352
    %v5673 = vsub.f32 0.0, %v5353
    %v5674 = vsub.f32 0.0, %v5354
    %v5675 = vsub.f32 0.0, %v5355
    %v5676 = vsub.f32 0.0, %v5356
    %v5677 = vsub.f32 0.0, %v5357
    %v5678 = vsub.f32 0.0, %v5358
    %v5679 = vsub.f32 0.0, %v5359
    %v5680 = vsub.f32 0.0, %v5360
    %v5681 = vsub.f32 0.0, %v5361
    %v5682 = vsub.f32 0.0, %v5362
    %v5683 = vsub.f32 0.0, %v5363
    %v5684 = vsub.f32 0.0, %v5364
    %v5685 = vsub.f32 0.0, %v5365
    %v5686 = vsub.f32 0.0, %v5366
    %v5687 = vsub.f32 0.0, %v5367
    %v5688 = vsub.f32 0.0, %v5368
    %v5689 = vsub.f32 0.0, %v5369
    %v5690 = vsub.f32 0.0, %v5370
    %v5691 = vsub.f32 0.0, %v5371
    %v5692 = vsub.f32 0.0, %v5372
    %v5693 = vsub.f32 0.0, %v5373
    %v5694 = vsub.f32 0.0, %v5374
    %v5695 = vsub.f32 0.0, %v5375
    %v5696 = vsub.f32 0.0, %v5376
    %v5697 = vsub.f32 0.0, %v5377
    %v5698 = vsub.f32 0.0, %v5378
    %v5699 = vsub.f32 0.0, %v5379
    %v5700 = vsub.f32 0.0, %v5380
    %v5701 = vsub.f32 0.0, %v5381
    %v5702 = vsub.f32 0.0, %v5382
    %v5703 = vsub.f32 0.0, %v5383
    %v5704 = vsub.f32 0.0, %v5384
    %v5705 = vsub.f32 0.0, %v5385
    %v5706 = vsub.f32 0.0, %v5386
    %v5707 = vsub.f32 0.0, %v5387
    %v5708 = vsub.f32 0.0, %v5388
    %v5709 = vsub.f32 0.0, %v5389
    %v5710 = vsub.f32 0.0, %v5390
    %v5711 = vsub.f32 0.0, %v5391
    %v5712 = vsub.f32 0.0, %v5392
    %v5713 = vsub.f32 0.0, %v5393
    %v5714 = vsub.f32 0.0, %v5394
    %v5715 = vsub.f32 0.0, %v5395
    %v5716 = vsub.f32 0.0, %v5396
    %v5717 = vsub.f32 0.0, %v5397
    %v5718 = vsub.f32 0.0, %v5398
    %v5719 = vsub.f32 0.0, %v5399
    %v5720 = vsub.f32 0.0, %v5400
    %v5721 = vsub.f32 0.0, %v5401
    %v5722 = vsub.f32 0.0, %v5402
    %v5723 = vsub.f32 0.0, %v5403
    %v5724 = vsub.f32 0.0, %v5404
    %v5725 = vsub.f32 0.0, %v5405
    %v5726 = vsub.f32 0.0, %v5406
    %v5727 = vsub.f32 0.0, %v5407
    %v5728 = vsub.f32 0.0, %v5408
    %v5729 = vsub.f32 0.0, %v5409
    %v5730 = vsub.f32 0.0, %v5410
    %v5731 = vsub.f32 0.0, %v5411
    %v5732 = vsub.f32 0.0, %v5412
    %v5733 = vsub.f32 0.0, %v5413
    %v5734 = vsub.f32 0.0, %v5414
    %v5735 = vsub.f32 0.0, %v5415
    %v5736 = vsub.f32 0.0, %v5416
    %v5737 = vsub.f32 0.0, %v5417
    %v5738 = vsub.f32 0.0, %v5418
    %v5739 = vsub.f32 0.0, %v5419
    %v5740 = vsub.f32 0.0, %v5420
    %v5741 = vsub.f32 0.0, %v5421
    %v5742 = vsub.f32 0.0, %v5422
    %v5743 = vsub.f32 0.0, %v5423
    %v5744 = vsub.f32 0.0, %v5424
    %v5745 = vsub.f32 0.0, %v5425
    %v5746 = vsub.f32 0.0, %v5426
    %v5747 = vsub.f32 0.0, %v5427
    %v5748 = vsub.f32 0.0, %v5428
    %v5749 = vsub.f32 0.0, %v5429
    %v5750 = vsub.f32 0.0, %v5430
    %v5751 = vsub.f32 0.0, %v5431
    %v5752 = vsub.f32 0.0, %v5432
    %v5753 = vsub.f32 0.0, %v5433
    %v5754 = vsub.f32 0.0, %v5434
    %v5755 = vsub.f32 0.0, %v5435
    %v5756 = vsub.f32 0.0, %v5436
    %v5757 = vsub.f32 0.0, %v5437
    %v5758 = vsub.f32 0.0, %v5438
    %v5759 = vsub.f32 0.0, %v5439
    %v5760 = vsub.f32 0.0, %v5440
    %v5761 = vsub.f32 0.0, %v5441
    %v5762 = vsub.f32 0.0, %v5442
    %v5763 = vsub.f32 0.0, %v5443
    %v5764 = vsub.f32 0.0, %v5444
    %v5765 = vsub.f32 0.0, %v5445
    %v5766 = vsub.f32 0.0, %v5446
    %v5767 = vsub.f32 0.0, %v5447
    %v5768 = vsub.f32 0.0, %v5448
    %v5769 = vsub.f32 0.0, %v5449
    %v5770 = vsub.f32 0.0, %v5450
    %v5771 = vsub.f32 0.0, %v5451
    %v5772 = vsub.f32 0.0, %v5452
    %v5773 = vsub.f32 0.0, %v5453
    %v5774 = vsub.f32 0.0, %v5454
    %v5775 = vsub.f32 0.0, %v5455
    %v5776 = vsub.f32 0.0, %v5456
    %v5777 = vsub.f32 0.0, %v5457
    %v5778 = vsub.f32 0.0, %v5458
    %v5779 = vsub.f32 0.0, %v5459
    %v5780 = vsub.f32 0.0, %v5460
    %v5781 = vsub.f32 0.0, %v5461
    %v5782 = vsub.f32 0.0, %v5462
    %v5783 = vsub.f32 0.0, %v5463
    %v5784 = vsub.f32 0.0, %v5464
    %v5785 = vsub.f32 0.0, %v5465
    %v5786 = vsub.f32 0.0, %v5466
    %v5787 = vsub.f32 0.0, %v5467
    %v5788 = vsub.f32 0.0, %v5468
    %v5789 = vsub.f32 0.0, %v5469
    %v5790 = vsub.f32 0.0, %v5470
    %v5791 = vsub.f32 0.0, %v5471
    %v5792 = vsub.f32 0.0, %v5472
    %v5793 = vsub.f32 0.0, %v5473
    %v5794 = vsub.f32 0.0, %v5474
    %v5795 = vsub.f32 0.0, %v5475
    %v5796 = vsub.f32 0.0, %v5476
    %v5797 = vsub.f32 0.0, %v5477
    %v5798 = vsub.f32 0.0, %v5478
    %v5799 = vsub.f32 0.0, %v5479
    %v5800 = vsub.f32 0.0, %v5480
    %v5801 = vsub.f32 0.0, %v5481
    %v5802 = vsub.f32 0.0, %v5482
    %v5803 = vsub.f32 0.0, %v5483
    %v5804 = vsub.f32 0.0, %v5484
    %v5805 = vsub.f32 0.0, %v5485
    %v5806 = vsub.f32 0.0, %v5486
    %v5807 = vsub.f32 0.0, %v5487
    %v5808 = vsub.f32 0.0, %v5488
    %v5809 = vsub.f32 0.0, %v5489
    %v5810 = vsub.f32 0.0, %v5490
    %v5811 = vsub.f32 0.0, %v5491
    %v5812 = vsub.f32 0.0, %v5492
    %v5813 = vsub.f32 0.0, %v5493
    %v5814 = vsub.f32 0.0, %v5494
    %v5815 = vsub.f32 0.0, %v5495
    %v5816 = vsub.f32 0.0, %v5496
    %v5817 = vsub.f32 0.0, %v5497
    %v5818 = vsub.f32 0.0, %v5498
    %v5819 = vsub.f32 0.0, %v5499
    %v5820 = vsub.f32 0.0, %v5500
    %v5821 = vsub.f32 0.0, %v5501
    %v5822 = vsub.f32 0.0, %v5502
    %v5823 = vsub.f32 0.0, %v5503
    %v5824 = vsub.f32 0.0, %v5504
    %v5825 = vsub.f32 0.0, %v5505
    %v5826 = vsub.f32 0.0, %v5506
    %v5827 = vsub.f32 0.0, %v5507
    %v5828 = vsub.f32 0.0, %v5508
    %v5829 = vsub.f32 0.0, %v5509
    %v5830 = vsub.f32 0.0, %v5510
    %v5831 = vsub.f32 0.0, %v5511
    %v5832 = vsub.f32 0.0, %v5512
    %v5833 = vsub.f32 0.0, %v5513
    %v5834 = vsub.f32 0.0, %v5514
    %v5835 = vsub.f32 0.0, %v5515
    %v5836 = vsub.f32 0.0, %v5516
    %v5837 = vsub.f32 0.0, %v5517
    %v5838 = vsub.f32 0.0, %v5518
    %v5839 = vsub.f32 0.0, %v5519
    %v5840 = vsub.f32 0.0, %v5520
    %v5841 = vsub.f32 0.0, %v5521
    %v5842 = vsub.f32 0.0, %v5522
    %v5843 = vsub.f32 0.0, %v5523
    %v5844 = vsub.f32 0.0, %v5524
    %v5845 = vsub.f32 0.0, %v5525
    %v5846 = vsub.f32 0.0, %v5526
    %v5847 = vsub.f32 0.0, %v5527
    %v5848 = vsub.f32 0.0, %v5528
    %v5849 = vsub.f32 0.0, %v5529
    %v5850 = vsub.f32 0.0, %v5530
    %v5851 = vsub.f32 0.0, %v5531
    %v5852 = vsub.f32 0.0, %v5532
    %v5853 = vsub.f32 0.0, %v5533
    %v5854 = vsub.f32 0.0, %v5534
    %v5855 = vsub.f32 0.0, %v5535
    %v5856 = vsub.f32 0.0, %v5536
    %v5857 = vsub.f32 0.0, %v5537
    %v5858 = vsub.f32 0.0, %v5538
    %v5859 = vsub.f32 0.0, %v5539
    %v5860 = vsub.f32 0.0, %v5540
    %v5861 = vsub.f32 0.0, %v5541
    %v5862 = vsub.f32 0.0, %v5542
    %v5863 = vsub.f32 0.0, %v5543
    %v5864 = vsub.f32 0.0, %v5544
    %v5865 = vmul.f32 %v5545, 1.442695
    %v5866 = vpow.pop %v5865
    %v5867 = vmul.f32 %v5546, 1.442695
    %v5868 = vpow.pop %v5867
    %v5869 = vmul.f32 %v5547, 1.442695
    %v5870 = vpow.pop %v5869
    %v5871 = vmul.f32 %v5548, 1.442695
    %v5872 = vpow.pop %v5871
    %v5873 = vmul.f32 %v5549, 1.442695
    %v5874 = vpow.pop %v5873
    %v5875 = vmul.f32 %v5550, 1.442695
    %v5876 = vpow.pop %v5875
    %v5877 = vmul.f32 %v5551, 1.442695
    %v5878 = vpow.pop %v5877
    %v5879 = vmul.f32 %v5552, 1.442695
    %v5880 = vpow.pop %v5879
    %v5881 = vmul.f32 %v5553, 1.442695
    %v5882 = vpow.pop %v5881
    %v5883 = vmul.f32 %v5554, 1.442695
    %v5884 = vpow.pop %v5883
    %v5885 = vmul.f32 %v5555, 1.442695
    %v5886 = vpow.pop %v5885
    %v5887 = vmul.f32 %v5556, 1.442695
    %v5888 = vpow.pop %v5887
    %v5889 = vmul.f32 %v5557, 1.442695
    %v5890 = vpow.pop %v5889
    %v5891 = vmul.f32 %v5558, 1.442695
    %v5892 = vpow.pop %v5891
    %v5893 = vmul.f32 %v5559, 1.442695
    %v5894 = vpow.pop %v5893
    %v5895 = vmul.f32 %v5560, 1.442695
    %v5896 = vpow.pop %v5895
    %v5897 = vmul.f32 %v5561, 1.442695
    %v5898 = vpow.pop %v5897
    %v5899 = vmul.f32 %v5562, 1.442695
    %v5900 = vpow.pop %v5899
    %v5901 = vmul.f32 %v5563, 1.442695
    %v5902 = vpow.pop %v5901
    %v5903 = vmul.f32 %v5564, 1.442695
    %v5904 = vpow.pop %v5903
    %v5905 = vmul.f32 %v5565, 1.442695
    %v5906 = vpow.pop %v5905
    %v5907 = vmul.f32 %v5566, 1.442695
    %v5908 = vpow.pop %v5907
    %v5909 = vmul.f32 %v5567, 1.442695
    %v5910 = vpow.pop %v5909
    %v5911 = vmul.f32 %v5568, 1.442695
    %v5912 = vpow.pop %v5911
    %v5913 = vmul.f32 %v5569, 1.442695
    %v5914 = vpow.pop %v5913
    %v5915 = vmul.f32 %v5570, 1.442695
    %v5916 = vpow.pop %v5915
    %v5917 = vmul.f32 %v5571, 1.442695
    %v5918 = vpow.pop %v5917
    %v5919 = vmul.f32 %v5572, 1.442695
    %v5920 = vpow.pop %v5919
    %v5921 = vmul.f32 %v5573, 1.442695
    %v5922 = vpow.pop %v5921
    %v5923 = vmul.f32 %v5574, 1.442695
    %v5924 = vpow.pop %v5923
    %v5925 = vmul.f32 %v5575, 1.442695
    %v5926 = vpow.pop %v5925
    %v5927 = vmul.f32 %v5576, 1.442695
    %v5928 = vpow.pop %v5927
    %v5929 = vmul.f32 %v5577, 1.442695
    %v5930 = vpow.pop %v5929
    %v5931 = vmul.f32 %v5578, 1.442695
    %v5932 = vpow.pop %v5931
    %v5933 = vmul.f32 %v5579, 1.442695
    %v5934 = vpow.pop %v5933
    %v5935 = vmul.f32 %v5580, 1.442695
    %v5936 = vpow.pop %v5935
    %v5937 = vmul.f32 %v5581, 1.442695
    %v5938 = vpow.pop %v5937
    %v5939 = vmul.f32 %v5582, 1.442695
    %v5940 = vpow.pop %v5939
    %v5941 = vmul.f32 %v5583, 1.442695
    %v5942 = vpow.pop %v5941
    %v5943 = vmul.f32 %v5584, 1.442695
    %v5944 = vpow.pop %v5943
    %v5945 = vmul.f32 %v5585, 1.442695
    %v5946 = vpow.pop %v5945
    %v5947 = vmul.f32 %v5586, 1.442695
    %v5948 = vpow.pop %v5947
    %v5949 = vmul.f32 %v5587, 1.442695
    %v5950 = vpow.pop %v5949
    %v5951 = vmul.f32 %v5588, 1.442695
    %v5952 = vpow.pop %v5951
    %v5953 = vmul.f32 %v5589, 1.442695
    %v5954 = vpow.pop %v5953
    %v5955 = vmul.f32 %v5590, 1.442695
    %v5956 = vpow.pop %v5955
    %v5957 = vmul.f32 %v5591, 1.442695
    %v5958 = vpow.pop %v5957
    %v5959 = vmul.f32 %v5592, 1.442695
    %v5960 = vpow.pop %v5959
    %v5961 = vmul.f32 %v5593, 1.442695
    %v5962 = vpow.pop %v5961
    %v5963 = vmul.f32 %v5594, 1.442695
    %v5964 = vpow.pop %v5963
    %v5965 = vmul.f32 %v5595, 1.442695
    %v5966 = vpow.pop %v5965
    %v5967 = vmul.f32 %v5596, 1.442695
    %v5968 = vpow.pop %v5967
    %v5969 = vmul.f32 %v5597, 1.442695
    %v5970 = vpow.pop %v5969
    %v5971 = vmul.f32 %v5598, 1.442695
    %v5972 = vpow.pop %v5971
    %v5973 = vmul.f32 %v5599, 1.442695
    %v5974 = vpow.pop %v5973
    %v5975 = vmul.f32 %v5600, 1.442695
    %v5976 = vpow.pop %v5975
    %v5977 = vmul.f32 %v5601, 1.442695
    %v5978 = vpow.pop %v5977
    %v5979 = vmul.f32 %v5602, 1.442695
    %v5980 = vpow.pop %v5979
    %v5981 = vmul.f32 %v5603, 1.442695
    %v5982 = vpow.pop %v5981
    %v5983 = vmul.f32 %v5604, 1.442695
    %v5984 = vpow.pop %v5983
    %v5985 = vmul.f32 %v5605, 1.442695
    %v5986 = vpow.pop %v5985
    %v5987 = vmul.f32 %v5606, 1.442695
    %v5988 = vpow.pop %v5987
    %v5989 = vmul.f32 %v5607, 1.442695
    %v5990 = vpow.pop %v5989
    %v5991 = vmul.f32 %v5608, 1.442695
    %v5992 = vpow.pop %v5991
    %v5993 = vmul.f32 %v5609, 1.442695
    %v5994 = vpow.pop %v5993
    %v5995 = vmul.f32 %v5610, 1.442695
    %v5996 = vpow.pop %v5995
    %v5997 = vmul.f32 %v5611, 1.442695
    %v5998 = vpow.pop %v5997
    %v5999 = vmul.f32 %v5612, 1.442695
    %v6000 = vpow.pop %v5999
    %v6001 = vmul.f32 %v5613, 1.442695
    %v6002 = vpow.pop %v6001
    %v6003 = vmul.f32 %v5614, 1.442695
    %v6004 = vpow.pop %v6003
    %v6005 = vmul.f32 %v5615, 1.442695
    %v6006 = vpow.pop %v6005
    %v6007 = vmul.f32 %v5616, 1.442695
    %v6008 = vpow.pop %v6007
    %v6009 = vmul.f32 %v5617, 1.442695
    %v6010 = vpow.pop %v6009
    %v6011 = vmul.f32 %v5618, 1.442695
    %v6012 = vpow.pop %v6011
    %v6013 = vmul.f32 %v5619, 1.442695
    %v6014 = vpow.pop %v6013
    %v6015 = vmul.f32 %v5620, 1.442695
    %v6016 = vpow.pop %v6015
    %v6017 = vmul.f32 %v5621, 1.442695
    %v6018 = vpow.pop %v6017
    %v6019 = vmul.f32 %v5622, 1.442695
    %v6020 = vpow.pop %v6019
    %v6021 = vmul.f32 %v5623, 1.442695
    %v6022 = vpow.pop %v6021
    %v6023 = vmul.f32 %v5624, 1.442695
    %v6024 = vpow.pop %v6023
    %v6025 = vmul.f32 %v5625, 1.442695
    %v6026 = vpow.pop %v6025
    %v6027 = vmul.f32 %v5626, 1.442695
    %v6028 = vpow.pop %v6027
    %v6029 = vmul.f32 %v5627, 1.442695
    %v6030 = vpow.pop %v6029
    %v6031 = vmul.f32 %v5628, 1.442695
    %v6032 = vpow.pop %v6031
    %v6033 = vmul.f32 %v5629, 1.442695
    %v6034 = vpow.pop %v6033
    %v6035 = vmul.f32 %v5630, 1.442695
    %v6036 = vpow.pop %v6035
    %v6037 = vmul.f32 %v5631, 1.442695
    %v6038 = vpow.pop %v6037
    %v6039 = vmul.f32 %v5632, 1.442695
    %v6040 = vpow.pop %v6039
    %v6041 = vmul.f32 %v5633, 1.442695
    %v6042 = vpow.pop %v6041
    %v6043 = vmul.f32 %v5634, 1.442695
    %v6044 = vpow.pop %v6043
    %v6045 = vmul.f32 %v5635, 1.442695
    %v6046 = vpow.pop %v6045
    %v6047 = vmul.f32 %v5636, 1.442695
    %v6048 = vpow.pop %v6047
    %v6049 = vmul.f32 %v5637, 1.442695
    %v6050 = vpow.pop %v6049
    %v6051 = vmul.f32 %v5638, 1.442695
    %v6052 = vpow.pop %v6051
    %v6053 = vmul.f32 %v5639, 1.442695
    %v6054 = vpow.pop %v6053
    %v6055 = vmul.f32 %v5640, 1.442695
    %v6056 = vpow.pop %v6055
    %v6057 = vmul.f32 %v5641, 1.442695
    %v6058 = vpow.pop %v6057
    %v6059 = vmul.f32 %v5642, 1.442695
    %v6060 = vpow.pop %v6059
    %v6061 = vmul.f32 %v5643, 1.442695
    %v6062 = vpow.pop %v6061
    %v6063 = vmul.f32 %v5644, 1.442695
    %v6064 = vpow.pop %v6063
    %v6065 = vmul.f32 %v5645, 1.442695
    %v6066 = vpow.pop %v6065
    %v6067 = vmul.f32 %v5646, 1.442695
    %v6068 = vpow.pop %v6067
    %v6069 = vmul.f32 %v5647, 1.442695
    %v6070 = vpow.pop %v6069
    %v6071 = vmul.f32 %v5648, 1.442695
    %v6072 = vpow.pop %v6071
    %v6073 = vmul.f32 %v5649, 1.442695
    %v6074 = vpow.pop %v6073
    %v6075 = vmul.f32 %v5650, 1.442695
    %v6076 = vpow.pop %v6075
    %v6077 = vmul.f32 %v5651, 1.442695
    %v6078 = vpow.pop %v6077
    %v6079 = vmul.f32 %v5652, 1.442695
    %v6080 = vpow.pop %v6079
    %v6081 = vmul.f32 %v5653, 1.442695
    %v6082 = vpow.pop %v6081
    %v6083 = vmul.f32 %v5654, 1.442695
    %v6084 = vpow.pop %v6083
    %v6085 = vmul.f32 %v5655, 1.442695
    %v6086 = vpow.pop %v6085
    %v6087 = vmul.f32 %v5656, 1.442695
    %v6088 = vpow.pop %v6087
    %v6089 = vmul.f32 %v5657, 1.442695
    %v6090 = vpow.pop %v6089
    %v6091 = vmul.f32 %v5658, 1.442695
    %v6092 = vpow.pop %v6091
    %v6093 = vmul.f32 %v5659, 1.442695
    %v6094 = vpow.pop %v6093
    %v6095 = vmul.f32 %v5660, 1.442695
    %v6096 = vpow.pop %v6095
    %v6097 = vmul.f32 %v5661, 1.442695
    %v6098 = vpow.pop %v6097
    %v6099 = vmul.f32 %v5662, 1.442695
    %v6100 = vpow.pop %v6099
    %v6101 = vmul.f32 %v5663, 1.442695
    %v6102 = vpow.pop %v6101
    %v6103 = vmul.f32 %v5664, 1.442695
    %v6104 = vpow.pop %v6103
    %v6105 = vmul.f32 %v5665, 1.442695
    %v6106 = vpow.pop %v6105
    %v6107 = vmul.f32 %v5666, 1.442695
    %v6108 = vpow.pop %v6107
    %v6109 = vmul.f32 %v5667, 1.442695
    %v6110 = vpow.pop %v6109
    %v6111 = vmul.f32 %v5668, 1.442695
    %v6112 = vpow.pop %v6111
    %v6113 = vmul.f32 %v5669, 1.442695
    %v6114 = vpow.pop %v6113
    %v6115 = vmul.f32 %v5670, 1.442695
    %v6116 = vpow.pop %v6115
    %v6117 = vmul.f32 %v5671, 1.442695
    %v6118 = vpow.pop %v6117
    %v6119 = vmul.f32 %v5672, 1.442695
    %v6120 = vpow.pop %v6119
    %v6121 = vmul.f32 %v5673, 1.442695
    %v6122 = vpow.pop %v6121
    %v6123 = vmul.f32 %v5674, 1.442695
    %v6124 = vpow.pop %v6123
    %v6125 = vmul.f32 %v5675, 1.442695
    %v6126 = vpow.pop %v6125
    %v6127 = vmul.f32 %v5676, 1.442695
    %v6128 = vpow.pop %v6127
    %v6129 = vmul.f32 %v5677, 1.442695
    %v6130 = vpow.pop %v6129
    %v6131 = vmul.f32 %v5678, 1.442695
    %v6132 = vpow.pop %v6131
    %v6133 = vmul.f32 %v5679, 1.442695
    %v6134 = vpow.pop %v6133
    %v6135 = vmul.f32 %v5680, 1.442695
    %v6136 = vpow.pop %v6135
    %v6137 = vmul.f32 %v5681, 1.442695
    %v6138 = vpow.pop %v6137
    %v6139 = vmul.f32 %v5682, 1.442695
    %v6140 = vpow.pop %v6139
    %v6141 = vmul.f32 %v5683, 1.442695
    %v6142 = vpow.pop %v6141
    %v6143 = vmul.f32 %v5684, 1.442695
    %v6144 = vpow.pop %v6143
    %v6145 = vmul.f32 %v5685, 1.442695
    %v6146 = vpow.pop %v6145
    %v6147 = vmul.f32 %v5686, 1.442695
    %v6148 = vpow.pop %v6147
    %v6149 = vmul.f32 %v5687, 1.442695
    %v6150 = vpow.pop %v6149
    %v6151 = vmul.f32 %v5688, 1.442695
    %v6152 = vpow.pop %v6151
    %v6153 = vmul.f32 %v5689, 1.442695
    %v6154 = vpow.pop %v6153
    %v6155 = vmul.f32 %v5690, 1.442695
    %v6156 = vpow.pop %v6155
    %v6157 = vmul.f32 %v5691, 1.442695
    %v6158 = vpow.pop %v6157
    %v6159 = vmul.f32 %v5692, 1.442695
    %v6160 = vpow.pop %v6159
    %v6161 = vmul.f32 %v5693, 1.442695
    %v6162 = vpow.pop %v6161
    %v6163 = vmul.f32 %v5694, 1.442695
    %v6164 = vpow.pop %v6163
    %v6165 = vmul.f32 %v5695, 1.442695
    %v6166 = vpow.pop %v6165
    %v6167 = vmul.f32 %v5696, 1.442695
    %v6168 = vpow.pop %v6167
    %v6169 = vmul.f32 %v5697, 1.442695
    %v6170 = vpow.pop %v6169
    %v6171 = vmul.f32 %v5698, 1.442695
    %v6172 = vpow.pop %v6171
    %v6173 = vmul.f32 %v5699, 1.442695
    %v6174 = vpow.pop %v6173
    %v6175 = vmul.f32 %v5700, 1.442695
    %v6176 = vpow.pop %v6175
    %v6177 = vmul.f32 %v5701, 1.442695
    %v6178 = vpow.pop %v6177
    %v6179 = vmul.f32 %v5702, 1.442695
    %v6180 = vpow.pop %v6179
    %v6181 = vmul.f32 %v5703, 1.442695
    %v6182 = vpow.pop %v6181
    %v6183 = vmul.f32 %v5704, 1.442695
    %v6184 = vpow.pop %v6183
    %v6185 = vmul.f32 %v5705, 1.442695
    %v6186 = vpow.pop %v6185
    %v6187 = vmul.f32 %v5706, 1.442695
    %v6188 = vpow.pop %v6187
    %v6189 = vmul.f32 %v5707, 1.442695
    %v6190 = vpow.pop %v6189
    %v6191 = vmul.f32 %v5708, 1.442695
    %v6192 = vpow.pop %v6191
    %v6193 = vmul.f32 %v5709, 1.442695
    %v6194 = vpow.pop %v6193
    %v6195 = vmul.f32 %v5710, 1.442695
    %v6196 = vpow.pop %v6195
    %v6197 = vmul.f32 %v5711, 1.442695
    %v6198 = vpow.pop %v6197
    %v6199 = vmul.f32 %v5712, 1.442695
    %v6200 = vpow.pop %v6199
    %v6201 = vmul.f32 %v5713, 1.442695
    %v6202 = vpow.pop %v6201
    %v6203 = vmul.f32 %v5714, 1.442695
    %v6204 = vpow.pop %v6203
    %v6205 = vmul.f32 %v5715, 1.442695
    %v6206 = vpow.pop %v6205
    %v6207 = vmul.f32 %v5716, 1.442695
    %v6208 = vpow.pop %v6207
    %v6209 = vmul.f32 %v5717, 1.442695
    %v6210 = vpow.pop %v6209
    %v6211 = vmul.f32 %v5718, 1.442695
    %v6212 = vpow.pop %v6211
    %v6213 = vmul.f32 %v5719, 1.442695
    %v6214 = vpow.pop %v6213
    %v6215 = vmul.f32 %v5720, 1.442695
    %v6216 = vpow.pop %v6215
    %v6217 = vmul.f32 %v5721, 1.442695
    %v6218 = vpow.pop %v6217
    %v6219 = vmul.f32 %v5722, 1.442695
    %v6220 = vpow.pop %v6219
    %v6221 = vmul.f32 %v5723, 1.442695
    %v6222 = vpow.pop %v6221
    %v6223 = vmul.f32 %v5724, 1.442695
    %v6224 = vpow.pop %v6223
    %v6225 = vmul.f32 %v5725, 1.442695
    %v6226 = vpow.pop %v6225
    %v6227 = vmul.f32 %v5726, 1.442695
    %v6228 = vpow.pop %v6227
    %v6229 = vmul.f32 %v5727, 1.442695
    %v6230 = vpow.pop %v6229
    %v6231 = vmul.f32 %v5728, 1.442695
    %v6232 = vpow.pop %v6231
    %v6233 = vmul.f32 %v5729, 1.442695
    %v6234 = vpow.pop %v6233
    %v6235 = vmul.f32 %v5730, 1.442695
    %v6236 = vpow.pop %v6235
    %v6237 = vmul.f32 %v5731, 1.442695
    %v6238 = vpow.pop %v6237
    %v6239 = vmul.f32 %v5732, 1.442695
    %v6240 = vpow.pop %v6239
    %v6241 = vmul.f32 %v5733, 1.442695
    %v6242 = vpow.pop %v6241
    %v6243 = vmul.f32 %v5734, 1.442695
    %v6244 = vpow.pop %v6243
    %v6245 = vmul.f32 %v5735, 1.442695
    %v6246 = vpow.pop %v6245
    %v6247 = vmul.f32 %v5736, 1.442695
    %v6248 = vpow.pop %v6247
    %v6249 = vmul.f32 %v5737, 1.442695
    %v6250 = vpow.pop %v6249
    %v6251 = vmul.f32 %v5738, 1.442695
    %v6252 = vpow.pop %v6251
    %v6253 = vmul.f32 %v5739, 1.442695
    %v6254 = vpow.pop %v6253
    %v6255 = vmul.f32 %v5740, 1.442695
    %v6256 = vpow.pop %v6255
    %v6257 = vmul.f32 %v5741, 1.442695
    %v6258 = vpow.pop %v6257
    %v6259 = vmul.f32 %v5742, 1.442695
    %v6260 = vpow.pop %v6259
    %v6261 = vmul.f32 %v5743, 1.442695
    %v6262 = vpow.pop %v6261
    %v6263 = vmul.f32 %v5744, 1.442695
    %v6264 = vpow.pop %v6263
    %v6265 = vmul.f32 %v5745, 1.442695
    %v6266 = vpow.pop %v6265
    %v6267 = vmul.f32 %v5746, 1.442695
    %v6268 = vpow.pop %v6267
    %v6269 = vmul.f32 %v5747, 1.442695
    %v6270 = vpow.pop %v6269
    %v6271 = vmul.f32 %v5748, 1.442695
    %v6272 = vpow.pop %v6271
    %v6273 = vmul.f32 %v5749, 1.442695
    %v6274 = vpow.pop %v6273
    %v6275 = vmul.f32 %v5750, 1.442695
    %v6276 = vpow.pop %v6275
    %v6277 = vmul.f32 %v5751, 1.442695
    %v6278 = vpow.pop %v6277
    %v6279 = vmul.f32 %v5752, 1.442695
    %v6280 = vpow.pop %v6279
    %v6281 = vmul.f32 %v5753, 1.442695
    %v6282 = vpow.pop %v6281
    %v6283 = vmul.f32 %v5754, 1.442695
    %v6284 = vpow.pop %v6283
    %v6285 = vmul.f32 %v5755, 1.442695
    %v6286 = vpow.pop %v6285
    %v6287 = vmul.f32 %v5756, 1.442695
    %v6288 = vpow.pop %v6287
    %v6289 = vmul.f32 %v5757, 1.442695
    %v6290 = vpow.pop %v6289
    %v6291 = vmul.f32 %v5758, 1.442695
    %v6292 = vpow.pop %v6291
    %v6293 = vmul.f32 %v5759, 1.442695
    %v6294 = vpow.pop %v6293
    %v6295 = vmul.f32 %v5760, 1.442695
    %v6296 = vpow.pop %v6295
    %v6297 = vmul.f32 %v5761, 1.442695
    %v6298 = vpow.pop %v6297
    %v6299 = vmul.f32 %v5762, 1.442695
    %v6300 = vpow.pop %v6299
    %v6301 = vmul.f32 %v5763, 1.442695
    %v6302 = vpow.pop %v6301
    %v6303 = vmul.f32 %v5764, 1.442695
    %v6304 = vpow.pop %v6303
    %v6305 = vmul.f32 %v5765, 1.442695
    %v6306 = vpow.pop %v6305
    %v6307 = vmul.f32 %v5766, 1.442695
    %v6308 = vpow.pop %v6307
    %v6309 = vmul.f32 %v5767, 1.442695
    %v6310 = vpow.pop %v6309
    %v6311 = vmul.f32 %v5768, 1.442695
    %v6312 = vpow.pop %v6311
    %v6313 = vmul.f32 %v5769, 1.442695
    %v6314 = vpow.pop %v6313
    %v6315 = vmul.f32 %v5770, 1.442695
    %v6316 = vpow.pop %v6315
    %v6317 = vmul.f32 %v5771, 1.442695
    %v6318 = vpow.pop %v6317
    %v6319 = vmul.f32 %v5772, 1.442695
    %v6320 = vpow.pop %v6319
    %v6321 = vmul.f32 %v5773, 1.442695
    %v6322 = vpow.pop %v6321
    %v6323 = vmul.f32 %v5774, 1.442695
    %v6324 = vpow.pop %v6323
    %v6325 = vmul.f32 %v5775, 1.442695
    %v6326 = vpow.pop %v6325
    %v6327 = vmul.f32 %v5776, 1.442695
    %v6328 = vpow.pop %v6327
    %v6329 = vmul.f32 %v5777, 1.442695
    %v6330 = vpow.pop %v6329
    %v6331 = vmul.f32 %v5778, 1.442695
    %v6332 = vpow.pop %v6331
    %v6333 = vmul.f32 %v5779, 1.442695
    %v6334 = vpow.pop %v6333
    %v6335 = vmul.f32 %v5780, 1.442695
    %v6336 = vpow.pop %v6335
    %v6337 = vmul.f32 %v5781, 1.442695
    %v6338 = vpow.pop %v6337
    %v6339 = vmul.f32 %v5782, 1.442695
    %v6340 = vpow.pop %v6339
    %v6341 = vmul.f32 %v5783, 1.442695
    %v6342 = vpow.pop %v6341
    %v6343 = vmul.f32 %v5784, 1.442695
    %v6344 = vpow.pop %v6343
    %v6345 = vmul.f32 %v5785, 1.442695
    %v6346 = vpow.pop %v6345
    %v6347 = vmul.f32 %v5786, 1.442695
    %v6348 = vpow.pop %v6347
    %v6349 = vmul.f32 %v5787, 1.442695
    %v6350 = vpow.pop %v6349
    %v6351 = vmul.f32 %v5788, 1.442695
    %v6352 = vpow.pop %v6351
    %v6353 = vmul.f32 %v5789, 1.442695
    %v6354 = vpow.pop %v6353
    %v6355 = vmul.f32 %v5790, 1.442695
    %v6356 = vpow.pop %v6355
    %v6357 = vmul.f32 %v5791, 1.442695
    %v6358 = vpow.pop %v6357
    %v6359 = vmul.f32 %v5792, 1.442695
    %v6360 = vpow.pop %v6359
    %v6361 = vmul.f32 %v5793, 1.442695
    %v6362 = vpow.pop %v6361
    %v6363 = vmul.f32 %v5794, 1.442695
    %v6364 = vpow.pop %v6363
    %v6365 = vmul.f32 %v5795, 1.442695
    %v6366 = vpow.pop %v6365
    %v6367 = vmul.f32 %v5796, 1.442695
    %v6368 = vpow.pop %v6367
    %v6369 = vmul.f32 %v5797, 1.442695
    %v6370 = vpow.pop %v6369
    %v6371 = vmul.f32 %v5798, 1.442695
    %v6372 = vpow.pop %v6371
    %v6373 = vmul.f32 %v5799, 1.442695
    %v6374 = vpow.pop %v6373
    %v6375 = vmul.f32 %v5800, 1.442695
    %v6376 = vpow.pop %v6375
    %v6377 = vmul.f32 %v5801, 1.442695
    %v6378 = vpow.pop %v6377
    %v6379 = vmul.f32 %v5802, 1.442695
    %v6380 = vpow.pop %v6379
    %v6381 = vmul.f32 %v5803, 1.442695
    %v6382 = vpow.pop %v6381
    %v6383 = vmul.f32 %v5804, 1.442695
    %v6384 = vpow.pop %v6383
    %v6385 = vmul.f32 %v5805, 1.442695
    %v6386 = vpow.pop %v6385
    %v6387 = vmul.f32 %v5806, 1.442695
    %v6388 = vpow.pop %v6387
    %v6389 = vmul.f32 %v5807, 1.442695
    %v6390 = vpow.pop %v6389
    %v6391 = vmul.f32 %v5808, 1.442695
    %v6392 = vpow.pop %v6391
    %v6393 = vmul.f32 %v5809, 1.442695
    %v6394 = vpow.pop %v6393
    %v6395 = vmul.f32 %v5810, 1.442695
    %v6396 = vpow.pop %v6395
    %v6397 = vmul.f32 %v5811, 1.442695
    %v6398 = vpow.pop %v6397
    %v6399 = vmul.f32 %v5812, 1.442695
    %v6400 = vpow.pop %v6399
    %v6401 = vmul.f32 %v5813, 1.442695
    %v6402 = vpow.pop %v6401
    %v6403 = vmul.f32 %v5814, 1.442695
    %v6404 = vpow.pop %v6403
    %v6405 = vmul.f32 %v5815, 1.442695
    %v6406 = vpow.pop %v6405
    %v6407 = vmul.f32 %v5816, 1.442695
    %v6408 = vpow.pop %v6407
    %v6409 = vmul.f32 %v5817, 1.442695
    %v6410 = vpow.pop %v6409
    %v6411 = vmul.f32 %v5818, 1.442695
    %v6412 = vpow.pop %v6411
    %v6413 = vmul.f32 %v5819, 1.442695
    %v6414 = vpow.pop %v6413
    %v6415 = vmul.f32 %v5820, 1.442695
    %v6416 = vpow.pop %v6415
    %v6417 = vmul.f32 %v5821, 1.442695
    %v6418 = vpow.pop %v6417
    %v6419 = vmul.f32 %v5822, 1.442695
    %v6420 = vpow.pop %v6419
    %v6421 = vmul.f32 %v5823, 1.442695
    %v6422 = vpow.pop %v6421
    %v6423 = vmul.f32 %v5824, 1.442695
    %v6424 = vpow.pop %v6423
    %v6425 = vmul.f32 %v5825, 1.442695
    %v6426 = vpow.pop %v6425
    %v6427 = vmul.f32 %v5826, 1.442695
    %v6428 = vpow.pop %v6427
    %v6429 = vmul.f32 %v5827, 1.442695
    %v6430 = vpow.pop %v6429
    %v6431 = vmul.f32 %v5828, 1.442695
    %v6432 = vpow.pop %v6431
    %v6433 = vmul.f32 %v5829, 1.442695
    %v6434 = vpow.pop %v6433
    %v6435 = vmul.f32 %v5830, 1.442695
    %v6436 = vpow.pop %v6435
    %v6437 = vmul.f32 %v5831, 1.442695
    %v6438 = vpow.pop %v6437
    %v6439 = vmul.f32 %v5832, 1.442695
    %v6440 = vpow.pop %v6439
    %v6441 = vmul.f32 %v5833, 1.442695
    %v6442 = vpow.pop %v6441
    %v6443 = vmul.f32 %v5834, 1.442695
    %v6444 = vpow.pop %v6443
    %v6445 = vmul.f32 %v5835, 1.442695
    %v6446 = vpow.pop %v6445
    %v6447 = vmul.f32 %v5836, 1.442695
    %v6448 = vpow.pop %v6447
    %v6449 = vmul.f32 %v5837, 1.442695
    %v6450 = vpow.pop %v6449
    %v6451 = vmul.f32 %v5838, 1.442695
    %v6452 = vpow.pop %v6451
    %v6453 = vmul.f32 %v5839, 1.442695
    %v6454 = vpow.pop %v6453
    %v6455 = vmul.f32 %v5840, 1.442695
    %v6456 = vpow.pop %v6455
    %v6457 = vmul.f32 %v5841, 1.442695
    %v6458 = vpow.pop %v6457
    %v6459 = vmul.f32 %v5842, 1.442695
    %v6460 = vpow.pop %v6459
    %v6461 = vmul.f32 %v5843, 1.442695
    %v6462 = vpow.pop %v6461
    %v6463 = vmul.f32 %v5844, 1.442695
    %v6464 = vpow.pop %v6463
    %v6465 = vmul.f32 %v5845, 1.442695
    %v6466 = vpow.pop %v6465
    %v6467 = vmul.f32 %v5846, 1.442695
    %v6468 = vpow.pop %v6467
    %v6469 = vmul.f32 %v5847, 1.442695
    %v6470 = vpow.pop %v6469
    %v6471 = vmul.f32 %v5848, 1.442695
    %v6472 = vpow.pop %v6471
    %v6473 = vmul.f32 %v5849, 1.442695
    %v6474 = vpow.pop %v6473
    %v6475 = vmul.f32 %v5850, 1.442695
    %v6476 = vpow.pop %v6475
    %v6477 = vmul.f32 %v5851, 1.442695
    %v6478 = vpow.pop %v6477
    %v6479 = vmul.f32 %v5852, 1.442695
    %v6480 = vpow.pop %v6479
    %v6481 = vmul.f32 %v5853, 1.442695
    %v6482 = vpow.pop %v6481
    %v6483 = vmul.f32 %v5854, 1.442695
    %v6484 = vpow.pop %v6483
    %v6485 = vmul.f32 %v5855, 1.442695
    %v6486 = vpow.pop %v6485
    %v6487 = vmul.f32 %v5856, 1.442695
    %v6488 = vpow.pop %v6487
    %v6489 = vmul.f32 %v5857, 1.442695
    %v6490 = vpow.pop %v6489
    %v6491 = vmul.f32 %v5858, 1.442695
    %v6492 = vpow.pop %v6491
    %v6493 = vmul.f32 %v5859, 1.442695
    %v6494 = vpow.pop %v6493
    %v6495 = vmul.f32 %v5860, 1.442695
    %v6496 = vpow.pop %v6495
    %v6497 = vmul.f32 %v5861, 1.442695
    %v6498 = vpow.pop %v6497
    %v6499 = vmul.f32 %v5862, 1.442695
    %v6500 = vpow.pop %v6499
    %v6501 = vmul.f32 %v5863, 1.442695
    %v6502 = vpow.pop %v6501
    %v6503 = vmul.f32 %v5864, 1.442695
    %v6504 = vpow.pop %v6503
    %v6505 = vadd.f32 %v5866, 1.0
    %v6506 = vadd.f32 %v5868, 1.0
    %v6507 = vadd.f32 %v5870, 1.0
    %v6508 = vadd.f32 %v5872, 1.0
    %v6509 = vadd.f32 %v5874, 1.0
    %v6510 = vadd.f32 %v5876, 1.0
    %v6511 = vadd.f32 %v5878, 1.0
    %v6512 = vadd.f32 %v5880, 1.0
    %v6513 = vadd.f32 %v5882, 1.0
    %v6514 = vadd.f32 %v5884, 1.0
    %v6515 = vadd.f32 %v5886, 1.0
    %v6516 = vadd.f32 %v5888, 1.0
    %v6517 = vadd.f32 %v5890, 1.0
    %v6518 = vadd.f32 %v5892, 1.0
    %v6519 = vadd.f32 %v5894, 1.0
    %v6520 = vadd.f32 %v5896, 1.0
    %v6521 = vadd.f32 %v5898, 1.0
    %v6522 = vadd.f32 %v5900, 1.0
    %v6523 = vadd.f32 %v5902, 1.0
    %v6524 = vadd.f32 %v5904, 1.0
    %v6525 = vadd.f32 %v5906, 1.0
    %v6526 = vadd.f32 %v5908, 1.0
    %v6527 = vadd.f32 %v5910, 1.0
    %v6528 = vadd.f32 %v5912, 1.0
    %v6529 = vadd.f32 %v5914, 1.0
    %v6530 = vadd.f32 %v5916, 1.0
    %v6531 = vadd.f32 %v5918, 1.0
    %v6532 = vadd.f32 %v5920, 1.0
    %v6533 = vadd.f32 %v5922, 1.0
    %v6534 = vadd.f32 %v5924, 1.0
    %v6535 = vadd.f32 %v5926, 1.0
    %v6536 = vadd.f32 %v5928, 1.0
    %v6537 = vadd.f32 %v5930, 1.0
    %v6538 = vadd.f32 %v5932, 1.0
    %v6539 = vadd.f32 %v5934, 1.0
    %v6540 = vadd.f32 %v5936, 1.0
    %v6541 = vadd.f32 %v5938, 1.0
    %v6542 = vadd.f32 %v5940, 1.0
    %v6543 = vadd.f32 %v5942, 1.0
    %v6544 = vadd.f32 %v5944, 1.0
    %v6545 = vadd.f32 %v5946, 1.0
    %v6546 = vadd.f32 %v5948, 1.0
    %v6547 = vadd.f32 %v5950, 1.0
    %v6548 = vadd.f32 %v5952, 1.0
    %v6549 = vadd.f32 %v5954, 1.0
    %v6550 = vadd.f32 %v5956, 1.0
    %v6551 = vadd.f32 %v5958, 1.0
    %v6552 = vadd.f32 %v5960, 1.0
    %v6553 = vadd.f32 %v5962, 1.0
    %v6554 = vadd.f32 %v5964, 1.0
    %v6555 = vadd.f32 %v5966, 1.0
    %v6556 = vadd.f32 %v5968, 1.0
    %v6557 = vadd.f32 %v5970, 1.0
    %v6558 = vadd.f32 %v5972, 1.0
    %v6559 = vadd.f32 %v5974, 1.0
    %v6560 = vadd.f32 %v5976, 1.0
    %v6561 = vadd.f32 %v5978, 1.0
    %v6562 = vadd.f32 %v5980, 1.0
    %v6563 = vadd.f32 %v5982, 1.0
    %v6564 = vadd.f32 %v5984, 1.0
    %v6565 = vadd.f32 %v5986, 1.0
    %v6566 = vadd.f32 %v5988, 1.0
    %v6567 = vadd.f32 %v5990, 1.0
    %v6568 = vadd.f32 %v5992, 1.0
    %v6569 = vadd.f32 %v5994, 1.0
    %v6570 = vadd.f32 %v5996, 1.0
    %v6571 = vadd.f32 %v5998, 1.0
    %v6572 = vadd.f32 %v6000, 1.0
    %v6573 = vadd.f32 %v6002, 1.0
    %v6574 = vadd.f32 %v6004, 1.0
    %v6575 = vadd.f32 %v6006, 1.0
    %v6576 = vadd.f32 %v6008, 1.0
    %v6577 = vadd.f32 %v6010, 1.0
    %v6578 = vadd.f32 %v6012, 1.0
    %v6579 = vadd.f32 %v6014, 1.0
    %v6580 = vadd.f32 %v6016, 1.0
    %v6581 = vadd.f32 %v6018, 1.0
    %v6582 = vadd.f32 %v6020, 1.0
    %v6583 = vadd.f32 %v6022, 1.0
    %v6584 = vadd.f32 %v6024, 1.0
    %v6585 = vadd.f32 %v6026, 1.0
    %v6586 = vadd.f32 %v6028, 1.0
    %v6587 = vadd.f32 %v6030, 1.0
    %v6588 = vadd.f32 %v6032, 1.0
    %v6589 = vadd.f32 %v6034, 1.0
    %v6590 = vadd.f32 %v6036, 1.0
    %v6591 = vadd.f32 %v6038, 1.0
    %v6592 = vadd.f32 %v6040, 1.0
    %v6593 = vadd.f32 %v6042, 1.0
    %v6594 = vadd.f32 %v6044, 1.0
    %v6595 = vadd.f32 %v6046, 1.0
    %v6596 = vadd.f32 %v6048, 1.0
    %v6597 = vadd.f32 %v6050, 1.0
    %v6598 = vadd.f32 %v6052, 1.0
    %v6599 = vadd.f32 %v6054, 1.0
    %v6600 = vadd.f32 %v6056, 1.0
    %v6601 = vadd.f32 %v6058, 1.0
    %v6602 = vadd.f32 %v6060, 1.0
    %v6603 = vadd.f32 %v6062, 1.0
    %v6604 = vadd.f32 %v6064, 1.0
    %v6605 = vadd.f32 %v6066, 1.0
    %v6606 = vadd.f32 %v6068, 1.0
    %v6607 = vadd.f32 %v6070, 1.0
    %v6608 = vadd.f32 %v6072, 1.0
    %v6609 = vadd.f32 %v6074, 1.0
    %v6610 = vadd.f32 %v6076, 1.0
    %v6611 = vadd.f32 %v6078, 1.0
    %v6612 = vadd.f32 %v6080, 1.0
    %v6613 = vadd.f32 %v6082, 1.0
    %v6614 = vadd.f32 %v6084, 1.0
    %v6615 = vadd.f32 %v6086, 1.0
    %v6616 = vadd.f32 %v6088, 1.0
    %v6617 = vadd.f32 %v6090, 1.0
    %v6618 = vadd.f32 %v6092, 1.0
    %v6619 = vadd.f32 %v6094, 1.0
    %v6620 = vadd.f32 %v6096, 1.0
    %v6621 = vadd.f32 %v6098, 1.0
    %v6622 = vadd.f32 %v6100, 1.0
    %v6623 = vadd.f32 %v6102, 1.0
    %v6624 = vadd.f32 %v6104, 1.0
    %v6625 = vadd.f32 %v6106, 1.0
    %v6626 = vadd.f32 %v6108, 1.0
    %v6627 = vadd.f32 %v6110, 1.0
    %v6628 = vadd.f32 %v6112, 1.0
    %v6629 = vadd.f32 %v6114, 1.0
    %v6630 = vadd.f32 %v6116, 1.0
    %v6631 = vadd.f32 %v6118, 1.0
    %v6632 = vadd.f32 %v6120, 1.0
    %v6633 = vadd.f32 %v6122, 1.0
    %v6634 = vadd.f32 %v6124, 1.0
    %v6635 = vadd.f32 %v6126, 1.0
    %v6636 = vadd.f32 %v6128, 1.0
    %v6637 = vadd.f32 %v6130, 1.0
    %v6638 = vadd.f32 %v6132, 1.0
    %v6639 = vadd.f32 %v6134, 1.0
    %v6640 = vadd.f32 %v6136, 1.0
    %v6641 = vadd.f32 %v6138, 1.0
    %v6642 = vadd.f32 %v6140, 1.0
    %v6643 = vadd.f32 %v6142, 1.0
    %v6644 = vadd.f32 %v6144, 1.0
    %v6645 = vadd.f32 %v6146, 1.0
    %v6646 = vadd.f32 %v6148, 1.0
    %v6647 = vadd.f32 %v6150, 1.0
    %v6648 = vadd.f32 %v6152, 1.0
    %v6649 = vadd.f32 %v6154, 1.0
    %v6650 = vadd.f32 %v6156, 1.0
    %v6651 = vadd.f32 %v6158, 1.0
    %v6652 = vadd.f32 %v6160, 1.0
    %v6653 = vadd.f32 %v6162, 1.0
    %v6654 = vadd.f32 %v6164, 1.0
    %v6655 = vadd.f32 %v6166, 1.0
    %v6656 = vadd.f32 %v6168, 1.0
    %v6657 = vadd.f32 %v6170, 1.0
    %v6658 = vadd.f32 %v6172, 1.0
    %v6659 = vadd.f32 %v6174, 1.0
    %v6660 = vadd.f32 %v6176, 1.0
    %v6661 = vadd.f32 %v6178, 1.0
    %v6662 = vadd.f32 %v6180, 1.0
    %v6663 = vadd.f32 %v6182, 1.0
    %v6664 = vadd.f32 %v6184, 1.0
    %v6665 = vadd.f32 %v6186, 1.0
    %v6666 = vadd.f32 %v6188, 1.0
    %v6667 = vadd.f32 %v6190, 1.0
    %v6668 = vadd.f32 %v6192, 1.0
    %v6669 = vadd.f32 %v6194, 1.0
    %v6670 = vadd.f32 %v6196, 1.0
    %v6671 = vadd.f32 %v6198, 1.0
    %v6672 = vadd.f32 %v6200, 1.0
    %v6673 = vadd.f32 %v6202, 1.0
    %v6674 = vadd.f32 %v6204, 1.0
    %v6675 = vadd.f32 %v6206, 1.0
    %v6676 = vadd.f32 %v6208, 1.0
    %v6677 = vadd.f32 %v6210, 1.0
    %v6678 = vadd.f32 %v6212, 1.0
    %v6679 = vadd.f32 %v6214, 1.0
    %v6680 = vadd.f32 %v6216, 1.0
    %v6681 = vadd.f32 %v6218, 1.0
    %v6682 = vadd.f32 %v6220, 1.0
    %v6683 = vadd.f32 %v6222, 1.0
    %v6684 = vadd.f32 %v6224, 1.0
    %v6685 = vadd.f32 %v6226, 1.0
    %v6686 = vadd.f32 %v6228, 1.0
    %v6687 = vadd.f32 %v6230, 1.0
    %v6688 = vadd.f32 %v6232, 1.0
    %v6689 = vadd.f32 %v6234, 1.0
    %v6690 = vadd.f32 %v6236, 1.0
    %v6691 = vadd.f32 %v6238, 1.0
    %v6692 = vadd.f32 %v6240, 1.0
    %v6693 = vadd.f32 %v6242, 1.0
    %v6694 = vadd.f32 %v6244, 1.0
    %v6695 = vadd.f32 %v6246, 1.0
    %v6696 = vadd.f32 %v6248, 1.0
    %v6697 = vadd.f32 %v6250, 1.0
    %v6698 = vadd.f32 %v6252, 1.0
    %v6699 = vadd.f32 %v6254, 1.0
    %v6700 = vadd.f32 %v6256, 1.0
    %v6701 = vadd.f32 %v6258, 1.0
    %v6702 = vadd.f32 %v6260, 1.0
    %v6703 = vadd.f32 %v6262, 1.0
    %v6704 = vadd.f32 %v6264, 1.0
    %v6705 = vadd.f32 %v6266, 1.0
    %v6706 = vadd.f32 %v6268, 1.0
    %v6707 = vadd.f32 %v6270, 1.0
    %v6708 = vadd.f32 %v6272, 1.0
    %v6709 = vadd.f32 %v6274, 1.0
    %v6710 = vadd.f32 %v6276, 1.0
    %v6711 = vadd.f32 %v6278, 1.0
    %v6712 = vadd.f32 %v6280, 1.0
    %v6713 = vadd.f32 %v6282, 1.0
    %v6714 = vadd.f32 %v6284, 1.0
    %v6715 = vadd.f32 %v6286, 1.0
    %v6716 = vadd.f32 %v6288, 1.0
    %v6717 = vadd.f32 %v6290, 1.0
    %v6718 = vadd.f32 %v6292, 1.0
    %v6719 = vadd.f32 %v6294, 1.0
    %v6720 = vadd.f32 %v6296, 1.0
    %v6721 = vadd.f32 %v6298, 1.0
    %v6722 = vadd.f32 %v6300, 1.0
    %v6723 = vadd.f32 %v6302, 1.0
    %v6724 = vadd.f32 %v6304, 1.0
    %v6725 = vadd.f32 %v6306, 1.0
    %v6726 = vadd.f32 %v6308, 1.0
    %v6727 = vadd.f32 %v6310, 1.0
    %v6728 = vadd.f32 %v6312, 1.0
    %v6729 = vadd.f32 %v6314, 1.0
    %v6730 = vadd.f32 %v6316, 1.0
    %v6731 = vadd.f32 %v6318, 1.0
    %v6732 = vadd.f32 %v6320, 1.0
    %v6733 = vadd.f32 %v6322, 1.0
    %v6734 = vadd.f32 %v6324, 1.0
    %v6735 = vadd.f32 %v6326, 1.0
    %v6736 = vadd.f32 %v6328, 1.0
    %v6737 = vadd.f32 %v6330, 1.0
    %v6738 = vadd.f32 %v6332, 1.0
    %v6739 = vadd.f32 %v6334, 1.0
    %v6740 = vadd.f32 %v6336, 1.0
    %v6741 = vadd.f32 %v6338, 1.0
    %v6742 = vadd.f32 %v6340, 1.0
    %v6743 = vadd.f32 %v6342, 1.0
    %v6744 = vadd.f32 %v6344, 1.0
    %v6745 = vadd.f32 %v6346, 1.0
    %v6746 = vadd.f32 %v6348, 1.0
    %v6747 = vadd.f32 %v6350, 1.0
    %v6748 = vadd.f32 %v6352, 1.0
    %v6749 = vadd.f32 %v6354, 1.0
    %v6750 = vadd.f32 %v6356, 1.0
    %v6751 = vadd.f32 %v6358, 1.0
    %v6752 = vadd.f32 %v6360, 1.0
    %v6753 = vadd.f32 %v6362, 1.0
    %v6754 = vadd.f32 %v6364, 1.0
    %v6755 = vadd.f32 %v6366, 1.0
    %v6756 = vadd.f32 %v6368, 1.0
    %v6757 = vadd.f32 %v6370, 1.0
    %v6758 = vadd.f32 %v6372, 1.0
    %v6759 = vadd.f32 %v6374, 1.0
    %v6760 = vadd.f32 %v6376, 1.0
    %v6761 = vadd.f32 %v6378, 1.0
    %v6762 = vadd.f32 %v6380, 1.0
    %v6763 = vadd.f32 %v6382, 1.0
    %v6764 = vadd.f32 %v6384, 1.0
    %v6765 = vadd.f32 %v6386, 1.0
    %v6766 = vadd.f32 %v6388, 1.0
    %v6767 = vadd.f32 %v6390, 1.0
    %v6768 = vadd.f32 %v6392, 1.0
    %v6769 = vadd.f32 %v6394, 1.0
    %v6770 = vadd.f32 %v6396, 1.0
    %v6771 = vadd.f32 %v6398, 1.0
    %v6772 = vadd.f32 %v6400, 1.0
    %v6773 = vadd.f32 %v6402, 1.0
    %v6774 = vadd.f32 %v6404, 1.0
    %v6775 = vadd.f32 %v6406, 1.0
    %v6776 = vadd.f32 %v6408, 1.0
    %v6777 = vadd.f32 %v6410, 1.0
    %v6778 = vadd.f32 %v6412, 1.0
    %v6779 = vadd.f32 %v6414, 1.0
    %v6780 = vadd.f32 %v6416, 1.0
    %v6781 = vadd.f32 %v6418, 1.0
    %v6782 = vadd.f32 %v6420, 1.0
    %v6783 = vadd.f32 %v6422, 1.0
    %v6784 = vadd.f32 %v6424, 1.0
    %v6785 = vadd.f32 %v6426, 1.0
    %v6786 = vadd.f32 %v6428, 1.0
    %v6787 = vadd.f32 %v6430, 1.0
    %v6788 = vadd.f32 %v6432, 1.0
    %v6789 = vadd.f32 %v6434, 1.0
    %v6790 = vadd.f32 %v6436, 1.0
    %v6791 = vadd.f32 %v6438, 1.0
    %v6792 = vadd.f32 %v6440, 1.0
    %v6793 = vadd.f32 %v6442, 1.0
    %v6794 = vadd.f32 %v6444, 1.0
    %v6795 = vadd.f32 %v6446, 1.0
    %v6796 = vadd.f32 %v6448, 1.0
    %v6797 = vadd.f32 %v6450, 1.0
    %v6798 = vadd.f32 %v6452, 1.0
    %v6799 = vadd.f32 %v6454, 1.0
    %v6800 = vadd.f32 %v6456, 1.0
    %v6801 = vadd.f32 %v6458, 1.0
    %v6802 = vadd.f32 %v6460, 1.0
    %v6803 = vadd.f32 %v6462, 1.0
    %v6804 = vadd.f32 %v6464, 1.0
    %v6805 = vadd.f32 %v6466, 1.0
    %v6806 = vadd.f32 %v6468, 1.0
    %v6807 = vadd.f32 %v6470, 1.0
    %v6808 = vadd.f32 %v6472, 1.0
    %v6809 = vadd.f32 %v6474, 1.0
    %v6810 = vadd.f32 %v6476, 1.0
    %v6811 = vadd.f32 %v6478, 1.0
    %v6812 = vadd.f32 %v6480, 1.0
    %v6813 = vadd.f32 %v6482, 1.0
    %v6814 = vadd.f32 %v6484, 1.0
    %v6815 = vadd.f32 %v6486, 1.0
    %v6816 = vadd.f32 %v6488, 1.0
    %v6817 = vadd.f32 %v6490, 1.0
    %v6818 = vadd.f32 %v6492, 1.0
    %v6819 = vadd.f32 %v6494, 1.0
    %v6820 = vadd.f32 %v6496, 1.0
    %v6821 = vadd.f32 %v6498, 1.0
    %v6822 = vadd.f32 %v6500, 1.0
    %v6823 = vadd.f32 %v6502, 1.0
    %v6824 = vadd.f32 %v6504, 1.0
    %v6825 = vrcp.pop %v6505
    %v6826 = vmul.f32 1.0, %v6825
    %v6827 = vrcp.pop %v6506
    %v6828 = vmul.f32 1.0, %v6827
    %v6829 = vrcp.pop %v6507
    %v6830 = vmul.f32 1.0, %v6829
    %v6831 = vrcp.pop %v6508
    %v6832 = vmul.f32 1.0, %v6831
    %v6833 = vrcp.pop %v6509
    %v6834 = vmul.f32 1.0, %v6833
    %v6835 = vrcp.pop %v6510
    %v6836 = vmul.f32 1.0, %v6835
    %v6837 = vrcp.pop %v6511
    %v6838 = vmul.f32 1.0, %v6837
    %v6839 = vrcp.pop %v6512
    %v6840 = vmul.f32 1.0, %v6839
    %v6841 = vrcp.pop %v6513
    %v6842 = vmul.f32 1.0, %v6841
    %v6843 = vrcp.pop %v6514
    %v6844 = vmul.f32 1.0, %v6843
    %v6845 = vrcp.pop %v6515
    %v6846 = vmul.f32 1.0, %v6845
    %v6847 = vrcp.pop %v6516
    %v6848 = vmul.f32 1.0, %v6847
    %v6849 = vrcp.pop %v6517
    %v6850 = vmul.f32 1.0, %v6849
    %v6851 = vrcp.pop %v6518
    %v6852 = vmul.f32 1.0, %v6851
    %v6853 = vrcp.pop %v6519
    %v6854 = vmul.f32 1.0, %v6853
    %v6855 = vrcp.pop %v6520
    %v6856 = vmul.f32 1.0, %v6855
    %v6857 = vrcp.pop %v6521
    %v6858 = vmul.f32 1.0, %v6857
    %v6859 = vrcp.pop %v6522
    %v6860 = vmul.f32 1.0, %v6859
    %v6861 = vrcp.pop %v6523
    %v6862 = vmul.f32 1.0, %v6861
    %v6863 = vrcp.pop %v6524
    %v6864 = vmul.f32 1.0, %v6863
    %v6865 = vrcp.pop %v6525
    %v6866 = vmul.f32 1.0, %v6865
    %v6867 = vrcp.pop %v6526
    %v6868 = vmul.f32 1.0, %v6867
    %v6869 = vrcp.pop %v6527
    %v6870 = vmul.f32 1.0, %v6869
    %v6871 = vrcp.pop %v6528
    %v6872 = vmul.f32 1.0, %v6871
    %v6873 = vrcp.pop %v6529
    %v6874 = vmul.f32 1.0, %v6873
    %v6875 = vrcp.pop %v6530
    %v6876 = vmul.f32 1.0, %v6875
    %v6877 = vrcp.pop %v6531
    %v6878 = vmul.f32 1.0, %v6877
    %v6879 = vrcp.pop %v6532
    %v6880 = vmul.f32 1.0, %v6879
    %v6881 = vrcp.pop %v6533
    %v6882 = vmul.f32 1.0, %v6881
    %v6883 = vrcp.pop %v6534
    %v6884 = vmul.f32 1.0, %v6883
    %v6885 = vrcp.pop %v6535
    %v6886 = vmul.f32 1.0, %v6885
    %v6887 = vrcp.pop %v6536
    %v6888 = vmul.f32 1.0, %v6887
    %v6889 = vrcp.pop %v6537
    %v6890 = vmul.f32 1.0, %v6889
    %v6891 = vrcp.pop %v6538
    %v6892 = vmul.f32 1.0, %v6891
    %v6893 = vrcp.pop %v6539
    %v6894 = vmul.f32 1.0, %v6893
    %v6895 = vrcp.pop %v6540
    %v6896 = vmul.f32 1.0, %v6895
    %v6897 = vrcp.pop %v6541
    %v6898 = vmul.f32 1.0, %v6897
    %v6899 = vrcp.pop %v6542
    %v6900 = vmul.f32 1.0, %v6899
    %v6901 = vrcp.pop %v6543
    %v6902 = vmul.f32 1.0, %v6901
    %v6903 = vrcp.pop %v6544
    %v6904 = vmul.f32 1.0, %v6903
    %v6905 = vrcp.pop %v6545
    %v6906 = vmul.f32 1.0, %v6905
    %v6907 = vrcp.pop %v6546
    %v6908 = vmul.f32 1.0, %v6907
    %v6909 = vrcp.pop %v6547
    %v6910 = vmul.f32 1.0, %v6909
    %v6911 = vrcp.pop %v6548
    %v6912 = vmul.f32 1.0, %v6911
    %v6913 = vrcp.pop %v6549
    %v6914 = vmul.f32 1.0, %v6913
    %v6915 = vrcp.pop %v6550
    %v6916 = vmul.f32 1.0, %v6915
    %v6917 = vrcp.pop %v6551
    %v6918 = vmul.f32 1.0, %v6917
    %v6919 = vrcp.pop %v6552
    %v6920 = vmul.f32 1.0, %v6919
    %v6921 = vrcp.pop %v6553
    %v6922 = vmul.f32 1.0, %v6921
    %v6923 = vrcp.pop %v6554
    %v6924 = vmul.f32 1.0, %v6923
    %v6925 = vrcp.pop %v6555
    %v6926 = vmul.f32 1.0, %v6925
    %v6927 = vrcp.pop %v6556
    %v6928 = vmul.f32 1.0, %v6927
    %v6929 = vrcp.pop %v6557
    %v6930 = vmul.f32 1.0, %v6929
    %v6931 = vrcp.pop %v6558
    %v6932 = vmul.f32 1.0, %v6931
    %v6933 = vrcp.pop %v6559
    %v6934 = vmul.f32 1.0, %v6933
    %v6935 = vrcp.pop %v6560
    %v6936 = vmul.f32 1.0, %v6935
    %v6937 = vrcp.pop %v6561
    %v6938 = vmul.f32 1.0, %v6937
    %v6939 = vrcp.pop %v6562
    %v6940 = vmul.f32 1.0, %v6939
    %v6941 = vrcp.pop %v6563
    %v6942 = vmul.f32 1.0, %v6941
    %v6943 = vrcp.pop %v6564
    %v6944 = vmul.f32 1.0, %v6943
    %v6945 = vrcp.pop %v6565
    %v6946 = vmul.f32 1.0, %v6945
    %v6947 = vrcp.pop %v6566
    %v6948 = vmul.f32 1.0, %v6947
    %v6949 = vrcp.pop %v6567
    %v6950 = vmul.f32 1.0, %v6949
    %v6951 = vrcp.pop %v6568
    %v6952 = vmul.f32 1.0, %v6951
    %v6953 = vrcp.pop %v6569
    %v6954 = vmul.f32 1.0, %v6953
    %v6955 = vrcp.pop %v6570
    %v6956 = vmul.f32 1.0, %v6955
    %v6957 = vrcp.pop %v6571
    %v6958 = vmul.f32 1.0, %v6957
    %v6959 = vrcp.pop %v6572
    %v6960 = vmul.f32 1.0, %v6959
    %v6961 = vrcp.pop %v6573
    %v6962 = vmul.f32 1.0, %v6961
    %v6963 = vrcp.pop %v6574
    %v6964 = vmul.f32 1.0, %v6963
    %v6965 = vrcp.pop %v6575
    %v6966 = vmul.f32 1.0, %v6965
    %v6967 = vrcp.pop %v6576
    %v6968 = vmul.f32 1.0, %v6967
    %v6969 = vrcp.pop %v6577
    %v6970 = vmul.f32 1.0, %v6969
    %v6971 = vrcp.pop %v6578
    %v6972 = vmul.f32 1.0, %v6971
    %v6973 = vrcp.pop %v6579
    %v6974 = vmul.f32 1.0, %v6973
    %v6975 = vrcp.pop %v6580
    %v6976 = vmul.f32 1.0, %v6975
    %v6977 = vrcp.pop %v6581
    %v6978 = vmul.f32 1.0, %v6977
    %v6979 = vrcp.pop %v6582
    %v6980 = vmul.f32 1.0, %v6979
    %v6981 = vrcp.pop %v6583
    %v6982 = vmul.f32 1.0, %v6981
    %v6983 = vrcp.pop %v6584
    %v6984 = vmul.f32 1.0, %v6983
    %v6985 = vrcp.pop %v6585
    %v6986 = vmul.f32 1.0, %v6985
    %v6987 = vrcp.pop %v6586
    %v6988 = vmul.f32 1.0, %v6987
    %v6989 = vrcp.pop %v6587
    %v6990 = vmul.f32 1.0, %v6989
    %v6991 = vrcp.pop %v6588
    %v6992 = vmul.f32 1.0, %v6991
    %v6993 = vrcp.pop %v6589
    %v6994 = vmul.f32 1.0, %v6993
    %v6995 = vrcp.pop %v6590
    %v6996 = vmul.f32 1.0, %v6995
    %v6997 = vrcp.pop %v6591
    %v6998 = vmul.f32 1.0, %v6997
    %v6999 = vrcp.pop %v6592
    %v7000 = vmul.f32 1.0, %v6999
    %v7001 = vrcp.pop %v6593
    %v7002 = vmul.f32 1.0, %v7001
    %v7003 = vrcp.pop %v6594
    %v7004 = vmul.f32 1.0, %v7003
    %v7005 = vrcp.pop %v6595
    %v7006 = vmul.f32 1.0, %v7005
    %v7007 = vrcp.pop %v6596
    %v7008 = vmul.f32 1.0, %v7007
    %v7009 = vrcp.pop %v6597
    %v7010 = vmul.f32 1.0, %v7009
    %v7011 = vrcp.pop %v6598
    %v7012 = vmul.f32 1.0, %v7011
    %v7013 = vrcp.pop %v6599
    %v7014 = vmul.f32 1.0, %v7013
    %v7015 = vrcp.pop %v6600
    %v7016 = vmul.f32 1.0, %v7015
    %v7017 = vrcp.pop %v6601
    %v7018 = vmul.f32 1.0, %v7017
    %v7019 = vrcp.pop %v6602
    %v7020 = vmul.f32 1.0, %v7019
    %v7021 = vrcp.pop %v6603
    %v7022 = vmul.f32 1.0, %v7021
    %v7023 = vrcp.pop %v6604
    %v7024 = vmul.f32 1.0, %v7023
    %v7025 = vrcp.pop %v6605
    %v7026 = vmul.f32 1.0, %v7025
    %v7027 = vrcp.pop %v6606
    %v7028 = vmul.f32 1.0, %v7027
    %v7029 = vrcp.pop %v6607
    %v7030 = vmul.f32 1.0, %v7029
    %v7031 = vrcp.pop %v6608
    %v7032 = vmul.f32 1.0, %v7031
    %v7033 = vrcp.pop %v6609
    %v7034 = vmul.f32 1.0, %v7033
    %v7035 = vrcp.pop %v6610
    %v7036 = vmul.f32 1.0, %v7035
    %v7037 = vrcp.pop %v6611
    %v7038 = vmul.f32 1.0, %v7037
    %v7039 = vrcp.pop %v6612
    %v7040 = vmul.f32 1.0, %v7039
    %v7041 = vrcp.pop %v6613
    %v7042 = vmul.f32 1.0, %v7041
    %v7043 = vrcp.pop %v6614
    %v7044 = vmul.f32 1.0, %v7043
    %v7045 = vrcp.pop %v6615
    %v7046 = vmul.f32 1.0, %v7045
    %v7047 = vrcp.pop %v6616
    %v7048 = vmul.f32 1.0, %v7047
    %v7049 = vrcp.pop %v6617
    %v7050 = vmul.f32 1.0, %v7049
    %v7051 = vrcp.pop %v6618
    %v7052 = vmul.f32 1.0, %v7051
    %v7053 = vrcp.pop %v6619
    %v7054 = vmul.f32 1.0, %v7053
    %v7055 = vrcp.pop %v6620
    %v7056 = vmul.f32 1.0, %v7055
    %v7057 = vrcp.pop %v6621
    %v7058 = vmul.f32 1.0, %v7057
    %v7059 = vrcp.pop %v6622
    %v7060 = vmul.f32 1.0, %v7059
    %v7061 = vrcp.pop %v6623
    %v7062 = vmul.f32 1.0, %v7061
    %v7063 = vrcp.pop %v6624
    %v7064 = vmul.f32 1.0, %v7063
    %v7065 = vrcp.pop %v6625
    %v7066 = vmul.f32 1.0, %v7065
    %v7067 = vrcp.pop %v6626
    %v7068 = vmul.f32 1.0, %v7067
    %v7069 = vrcp.pop %v6627
    %v7070 = vmul.f32 1.0, %v7069
    %v7071 = vrcp.pop %v6628
    %v7072 = vmul.f32 1.0, %v7071
    %v7073 = vrcp.pop %v6629
    %v7074 = vmul.f32 1.0, %v7073
    %v7075 = vrcp.pop %v6630
    %v7076 = vmul.f32 1.0, %v7075
    %v7077 = vrcp.pop %v6631
    %v7078 = vmul.f32 1.0, %v7077
    %v7079 = vrcp.pop %v6632
    %v7080 = vmul.f32 1.0, %v7079
    %v7081 = vrcp.pop %v6633
    %v7082 = vmul.f32 1.0, %v7081
    %v7083 = vrcp.pop %v6634
    %v7084 = vmul.f32 1.0, %v7083
    %v7085 = vrcp.pop %v6635
    %v7086 = vmul.f32 1.0, %v7085
    %v7087 = vrcp.pop %v6636
    %v7088 = vmul.f32 1.0, %v7087
    %v7089 = vrcp.pop %v6637
    %v7090 = vmul.f32 1.0, %v7089
    %v7091 = vrcp.pop %v6638
    %v7092 = vmul.f32 1.0, %v7091
    %v7093 = vrcp.pop %v6639
    %v7094 = vmul.f32 1.0, %v7093
    %v7095 = vrcp.pop %v6640
    %v7096 = vmul.f32 1.0, %v7095
    %v7097 = vrcp.pop %v6641
    %v7098 = vmul.f32 1.0, %v7097
    %v7099 = vrcp.pop %v6642
    %v7100 = vmul.f32 1.0, %v7099
    %v7101 = vrcp.pop %v6643
    %v7102 = vmul.f32 1.0, %v7101
    %v7103 = vrcp.pop %v6644
    %v7104 = vmul.f32 1.0, %v7103
    %v7105 = vrcp.pop %v6645
    %v7106 = vmul.f32 1.0, %v7105
    %v7107 = vrcp.pop %v6646
    %v7108 = vmul.f32 1.0, %v7107
    %v7109 = vrcp.pop %v6647
    %v7110 = vmul.f32 1.0, %v7109
    %v7111 = vrcp.pop %v6648
    %v7112 = vmul.f32 1.0, %v7111
    %v7113 = vrcp.pop %v6649
    %v7114 = vmul.f32 1.0, %v7113
    %v7115 = vrcp.pop %v6650
    %v7116 = vmul.f32 1.0, %v7115
    %v7117 = vrcp.pop %v6651
    %v7118 = vmul.f32 1.0, %v7117
    %v7119 = vrcp.pop %v6652
    %v7120 = vmul.f32 1.0, %v7119
    %v7121 = vrcp.pop %v6653
    %v7122 = vmul.f32 1.0, %v7121
    %v7123 = vrcp.pop %v6654
    %v7124 = vmul.f32 1.0, %v7123
    %v7125 = vrcp.pop %v6655
    %v7126 = vmul.f32 1.0, %v7125
    %v7127 = vrcp.pop %v6656
    %v7128 = vmul.f32 1.0, %v7127
    %v7129 = vrcp.pop %v6657
    %v7130 = vmul.f32 1.0, %v7129
    %v7131 = vrcp.pop %v6658
    %v7132 = vmul.f32 1.0, %v7131
    %v7133 = vrcp.pop %v6659
    %v7134 = vmul.f32 1.0, %v7133
    %v7135 = vrcp.pop %v6660
    %v7136 = vmul.f32 1.0, %v7135
    %v7137 = vrcp.pop %v6661
    %v7138 = vmul.f32 1.0, %v7137
    %v7139 = vrcp.pop %v6662
    %v7140 = vmul.f32 1.0, %v7139
    %v7141 = vrcp.pop %v6663
    %v7142 = vmul.f32 1.0, %v7141
    %v7143 = vrcp.pop %v6664
    %v7144 = vmul.f32 1.0, %v7143
    %v7145 = vrcp.pop %v6665
    %v7146 = vmul.f32 1.0, %v7145
    %v7147 = vrcp.pop %v6666
    %v7148 = vmul.f32 1.0, %v7147
    %v7149 = vrcp.pop %v6667
    %v7150 = vmul.f32 1.0, %v7149
    %v7151 = vrcp.pop %v6668
    %v7152 = vmul.f32 1.0, %v7151
    %v7153 = vrcp.pop %v6669
    %v7154 = vmul.f32 1.0, %v7153
    %v7155 = vrcp.pop %v6670
    %v7156 = vmul.f32 1.0, %v7155
    %v7157 = vrcp.pop %v6671
    %v7158 = vmul.f32 1.0, %v7157
    %v7159 = vrcp.pop %v6672
    %v7160 = vmul.f32 1.0, %v7159
    %v7161 = vrcp.pop %v6673
    %v7162 = vmul.f32 1.0, %v7161
    %v7163 = vrcp.pop %v6674
    %v7164 = vmul.f32 1.0, %v7163
    %v7165 = vrcp.pop %v6675
    %v7166 = vmul.f32 1.0, %v7165
    %v7167 = vrcp.pop %v6676
    %v7168 = vmul.f32 1.0, %v7167
    %v7169 = vrcp.pop %v6677
    %v7170 = vmul.f32 1.0, %v7169
    %v7171 = vrcp.pop %v6678
    %v7172 = vmul.f32 1.0, %v7171
    %v7173 = vrcp.pop %v6679
    %v7174 = vmul.f32 1.0, %v7173
    %v7175 = vrcp.pop %v6680
    %v7176 = vmul.f32 1.0, %v7175
    %v7177 = vrcp.pop %v6681
    %v7178 = vmul.f32 1.0, %v7177
    %v7179 = vrcp.pop %v6682
    %v7180 = vmul.f32 1.0, %v7179
    %v7181 = vrcp.pop %v6683
    %v7182 = vmul.f32 1.0, %v7181
    %v7183 = vrcp.pop %v6684
    %v7184 = vmul.f32 1.0, %v7183
    %v7185 = vrcp.pop %v6685
    %v7186 = vmul.f32 1.0, %v7185
    %v7187 = vrcp.pop %v6686
    %v7188 = vmul.f32 1.0, %v7187
    %v7189 = vrcp.pop %v6687
    %v7190 = vmul.f32 1.0, %v7189
    %v7191 = vrcp.pop %v6688
    %v7192 = vmul.f32 1.0, %v7191
    %v7193 = vrcp.pop %v6689
    %v7194 = vmul.f32 1.0, %v7193
    %v7195 = vrcp.pop %v6690
    %v7196 = vmul.f32 1.0, %v7195
    %v7197 = vrcp.pop %v6691
    %v7198 = vmul.f32 1.0, %v7197
    %v7199 = vrcp.pop %v6692
    %v7200 = vmul.f32 1.0, %v7199
    %v7201 = vrcp.pop %v6693
    %v7202 = vmul.f32 1.0, %v7201
    %v7203 = vrcp.pop %v6694
    %v7204 = vmul.f32 1.0, %v7203
    %v7205 = vrcp.pop %v6695
    %v7206 = vmul.f32 1.0, %v7205
    %v7207 = vrcp.pop %v6696
    %v7208 = vmul.f32 1.0, %v7207
    %v7209 = vrcp.pop %v6697
    %v7210 = vmul.f32 1.0, %v7209
    %v7211 = vrcp.pop %v6698
    %v7212 = vmul.f32 1.0, %v7211
    %v7213 = vrcp.pop %v6699
    %v7214 = vmul.f32 1.0, %v7213
    %v7215 = vrcp.pop %v6700
    %v7216 = vmul.f32 1.0, %v7215
    %v7217 = vrcp.pop %v6701
    %v7218 = vmul.f32 1.0, %v7217
    %v7219 = vrcp.pop %v6702
    %v7220 = vmul.f32 1.0, %v7219
    %v7221 = vrcp.pop %v6703
    %v7222 = vmul.f32 1.0, %v7221
    %v7223 = vrcp.pop %v6704
    %v7224 = vmul.f32 1.0, %v7223
    %v7225 = vrcp.pop %v6705
    %v7226 = vmul.f32 1.0, %v7225
    %v7227 = vrcp.pop %v6706
    %v7228 = vmul.f32 1.0, %v7227
    %v7229 = vrcp.pop %v6707
    %v7230 = vmul.f32 1.0, %v7229
    %v7231 = vrcp.pop %v6708
    %v7232 = vmul.f32 1.0, %v7231
    %v7233 = vrcp.pop %v6709
    %v7234 = vmul.f32 1.0, %v7233
    %v7235 = vrcp.pop %v6710
    %v7236 = vmul.f32 1.0, %v7235
    %v7237 = vrcp.pop %v6711
    %v7238 = vmul.f32 1.0, %v7237
    %v7239 = vrcp.pop %v6712
    %v7240 = vmul.f32 1.0, %v7239
    %v7241 = vrcp.pop %v6713
    %v7242 = vmul.f32 1.0, %v7241
    %v7243 = vrcp.pop %v6714
    %v7244 = vmul.f32 1.0, %v7243
    %v7245 = vrcp.pop %v6715
    %v7246 = vmul.f32 1.0, %v7245
    %v7247 = vrcp.pop %v6716
    %v7248 = vmul.f32 1.0, %v7247
    %v7249 = vrcp.pop %v6717
    %v7250 = vmul.f32 1.0, %v7249
    %v7251 = vrcp.pop %v6718
    %v7252 = vmul.f32 1.0, %v7251
    %v7253 = vrcp.pop %v6719
    %v7254 = vmul.f32 1.0, %v7253
    %v7255 = vrcp.pop %v6720
    %v7256 = vmul.f32 1.0, %v7255
    %v7257 = vrcp.pop %v6721
    %v7258 = vmul.f32 1.0, %v7257
    %v7259 = vrcp.pop %v6722
    %v7260 = vmul.f32 1.0, %v7259
    %v7261 = vrcp.pop %v6723
    %v7262 = vmul.f32 1.0, %v7261
    %v7263 = vrcp.pop %v6724
    %v7264 = vmul.f32 1.0, %v7263
    %v7265 = vrcp.pop %v6725
    %v7266 = vmul.f32 1.0, %v7265
    %v7267 = vrcp.pop %v6726
    %v7268 = vmul.f32 1.0, %v7267
    %v7269 = vrcp.pop %v6727
    %v7270 = vmul.f32 1.0, %v7269
    %v7271 = vrcp.pop %v6728
    %v7272 = vmul.f32 1.0, %v7271
    %v7273 = vrcp.pop %v6729
    %v7274 = vmul.f32 1.0, %v7273
    %v7275 = vrcp.pop %v6730
    %v7276 = vmul.f32 1.0, %v7275
    %v7277 = vrcp.pop %v6731
    %v7278 = vmul.f32 1.0, %v7277
    %v7279 = vrcp.pop %v6732
    %v7280 = vmul.f32 1.0, %v7279
    %v7281 = vrcp.pop %v6733
    %v7282 = vmul.f32 1.0, %v7281
    %v7283 = vrcp.pop %v6734
    %v7284 = vmul.f32 1.0, %v7283
    %v7285 = vrcp.pop %v6735
    %v7286 = vmul.f32 1.0, %v7285
    %v7287 = vrcp.pop %v6736
    %v7288 = vmul.f32 1.0, %v7287
    %v7289 = vrcp.pop %v6737
    %v7290 = vmul.f32 1.0, %v7289
    %v7291 = vrcp.pop %v6738
    %v7292 = vmul.f32 1.0, %v7291
    %v7293 = vrcp.pop %v6739
    %v7294 = vmul.f32 1.0, %v7293
    %v7295 = vrcp.pop %v6740
    %v7296 = vmul.f32 1.0, %v7295
    %v7297 = vrcp.pop %v6741
    %v7298 = vmul.f32 1.0, %v7297
    %v7299 = vrcp.pop %v6742
    %v7300 = vmul.f32 1.0, %v7299
    %v7301 = vrcp.pop %v6743
    %v7302 = vmul.f32 1.0, %v7301
    %v7303 = vrcp.pop %v6744
    %v7304 = vmul.f32 1.0, %v7303
    %v7305 = vrcp.pop %v6745
    %v7306 = vmul.f32 1.0, %v7305
    %v7307 = vrcp.pop %v6746
    %v7308 = vmul.f32 1.0, %v7307
    %v7309 = vrcp.pop %v6747
    %v7310 = vmul.f32 1.0, %v7309
    %v7311 = vrcp.pop %v6748
    %v7312 = vmul.f32 1.0, %v7311
    %v7313 = vrcp.pop %v6749
    %v7314 = vmul.f32 1.0, %v7313
    %v7315 = vrcp.pop %v6750
    %v7316 = vmul.f32 1.0, %v7315
    %v7317 = vrcp.pop %v6751
    %v7318 = vmul.f32 1.0, %v7317
    %v7319 = vrcp.pop %v6752
    %v7320 = vmul.f32 1.0, %v7319
    %v7321 = vrcp.pop %v6753
    %v7322 = vmul.f32 1.0, %v7321
    %v7323 = vrcp.pop %v6754
    %v7324 = vmul.f32 1.0, %v7323
    %v7325 = vrcp.pop %v6755
    %v7326 = vmul.f32 1.0, %v7325
    %v7327 = vrcp.pop %v6756
    %v7328 = vmul.f32 1.0, %v7327
    %v7329 = vrcp.pop %v6757
    %v7330 = vmul.f32 1.0, %v7329
    %v7331 = vrcp.pop %v6758
    %v7332 = vmul.f32 1.0, %v7331
    %v7333 = vrcp.pop %v6759
    %v7334 = vmul.f32 1.0, %v7333
    %v7335 = vrcp.pop %v6760
    %v7336 = vmul.f32 1.0, %v7335
    %v7337 = vrcp.pop %v6761
    %v7338 = vmul.f32 1.0, %v7337
    %v7339 = vrcp.pop %v6762
    %v7340 = vmul.f32 1.0, %v7339
    %v7341 = vrcp.pop %v6763
    %v7342 = vmul.f32 1.0, %v7341
    %v7343 = vrcp.pop %v6764
    %v7344 = vmul.f32 1.0, %v7343
    %v7345 = vrcp.pop %v6765
    %v7346 = vmul.f32 1.0, %v7345
    %v7347 = vrcp.pop %v6766
    %v7348 = vmul.f32 1.0, %v7347
    %v7349 = vrcp.pop %v6767
    %v7350 = vmul.f32 1.0, %v7349
    %v7351 = vrcp.pop %v6768
    %v7352 = vmul.f32 1.0, %v7351
    %v7353 = vrcp.pop %v6769
    %v7354 = vmul.f32 1.0, %v7353
    %v7355 = vrcp.pop %v6770
    %v7356 = vmul.f32 1.0, %v7355
    %v7357 = vrcp.pop %v6771
    %v7358 = vmul.f32 1.0, %v7357
    %v7359 = vrcp.pop %v6772
    %v7360 = vmul.f32 1.0, %v7359
    %v7361 = vrcp.pop %v6773
    %v7362 = vmul.f32 1.0, %v7361
    %v7363 = vrcp.pop %v6774
    %v7364 = vmul.f32 1.0, %v7363
    %v7365 = vrcp.pop %v6775
    %v7366 = vmul.f32 1.0, %v7365
    %v7367 = vrcp.pop %v6776
    %v7368 = vmul.f32 1.0, %v7367
    %v7369 = vrcp.pop %v6777
    %v7370 = vmul.f32 1.0, %v7369
    %v7371 = vrcp.pop %v6778
    %v7372 = vmul.f32 1.0, %v7371
    %v7373 = vrcp.pop %v6779
    %v7374 = vmul.f32 1.0, %v7373
    %v7375 = vrcp.pop %v6780
    %v7376 = vmul.f32 1.0, %v7375
    %v7377 = vrcp.pop %v6781
    %v7378 = vmul.f32 1.0, %v7377
    %v7379 = vrcp.pop %v6782
    %v7380 = vmul.f32 1.0, %v7379
    %v7381 = vrcp.pop %v6783
    %v7382 = vmul.f32 1.0, %v7381
    %v7383 = vrcp.pop %v6784
    %v7384 = vmul.f32 1.0, %v7383
    %v7385 = vrcp.pop %v6785
    %v7386 = vmul.f32 1.0, %v7385
    %v7387 = vrcp.pop %v6786
    %v7388 = vmul.f32 1.0, %v7387
    %v7389 = vrcp.pop %v6787
    %v7390 = vmul.f32 1.0, %v7389
    %v7391 = vrcp.pop %v6788
    %v7392 = vmul.f32 1.0, %v7391
    %v7393 = vrcp.pop %v6789
    %v7394 = vmul.f32 1.0, %v7393
    %v7395 = vrcp.pop %v6790
    %v7396 = vmul.f32 1.0, %v7395
    %v7397 = vrcp.pop %v6791
    %v7398 = vmul.f32 1.0, %v7397
    %v7399 = vrcp.pop %v6792
    %v7400 = vmul.f32 1.0, %v7399
    %v7401 = vrcp.pop %v6793
    %v7402 = vmul.f32 1.0, %v7401
    %v7403 = vrcp.pop %v6794
    %v7404 = vmul.f32 1.0, %v7403
    %v7405 = vrcp.pop %v6795
    %v7406 = vmul.f32 1.0, %v7405
    %v7407 = vrcp.pop %v6796
    %v7408 = vmul.f32 1.0, %v7407
    %v7409 = vrcp.pop %v6797
    %v7410 = vmul.f32 1.0, %v7409
    %v7411 = vrcp.pop %v6798
    %v7412 = vmul.f32 1.0, %v7411
    %v7413 = vrcp.pop %v6799
    %v7414 = vmul.f32 1.0, %v7413
    %v7415 = vrcp.pop %v6800
    %v7416 = vmul.f32 1.0, %v7415
    %v7417 = vrcp.pop %v6801
    %v7418 = vmul.f32 1.0, %v7417
    %v7419 = vrcp.pop %v6802
    %v7420 = vmul.f32 1.0, %v7419
    %v7421 = vrcp.pop %v6803
    %v7422 = vmul.f32 1.0, %v7421
    %v7423 = vrcp.pop %v6804
    %v7424 = vmul.f32 1.0, %v7423
    %v7425 = vrcp.pop %v6805
    %v7426 = vmul.f32 1.0, %v7425
    %v7427 = vrcp.pop %v6806
    %v7428 = vmul.f32 1.0, %v7427
    %v7429 = vrcp.pop %v6807
    %v7430 = vmul.f32 1.0, %v7429
    %v7431 = vrcp.pop %v6808
    %v7432 = vmul.f32 1.0, %v7431
    %v7433 = vrcp.pop %v6809
    %v7434 = vmul.f32 1.0, %v7433
    %v7435 = vrcp.pop %v6810
    %v7436 = vmul.f32 1.0, %v7435
    %v7437 = vrcp.pop %v6811
    %v7438 = vmul.f32 1.0, %v7437
    %v7439 = vrcp.pop %v6812
    %v7440 = vmul.f32 1.0, %v7439
    %v7441 = vrcp.pop %v6813
    %v7442 = vmul.f32 1.0, %v7441
    %v7443 = vrcp.pop %v6814
    %v7444 = vmul.f32 1.0, %v7443
    %v7445 = vrcp.pop %v6815
    %v7446 = vmul.f32 1.0, %v7445
    %v7447 = vrcp.pop %v6816
    %v7448 = vmul.f32 1.0, %v7447
    %v7449 = vrcp.pop %v6817
    %v7450 = vmul.f32 1.0, %v7449
    %v7451 = vrcp.pop %v6818
    %v7452 = vmul.f32 1.0, %v7451
    %v7453 = vrcp.pop %v6819
    %v7454 = vmul.f32 1.0, %v7453
    %v7455 = vrcp.pop %v6820
    %v7456 = vmul.f32 1.0, %v7455
    %v7457 = vrcp.pop %v6821
    %v7458 = vmul.f32 1.0, %v7457
    %v7459 = vrcp.pop %v6822
    %v7460 = vmul.f32 1.0, %v7459
    %v7461 = vrcp.pop %v6823
    %v7462 = vmul.f32 1.0, %v7461
    %v7463 = vrcp.pop %v6824
    %v7464 = vmul.f32 1.0, %v7463
    %v7465 = vmul.f32 %v5225, %v6826
    %v7466 = vmul.f32 %v5226, %v6828
    %v7467 = vmul.f32 %v5227, %v6830
    %v7468 = vmul.f32 %v5228, %v6832
    %v7469 = vmul.f32 %v5229, %v6834
    %v7470 = vmul.f32 %v5230, %v6836
    %v7471 = vmul.f32 %v5231, %v6838
    %v7472 = vmul.f32 %v5232, %v6840
    %v7473 = vmul.f32 %v5233, %v6842
    %v7474 = vmul.f32 %v5234, %v6844
    %v7475 = vmul.f32 %v5235, %v6846
    %v7476 = vmul.f32 %v5236, %v6848
    %v7477 = vmul.f32 %v5237, %v6850
    %v7478 = vmul.f32 %v5238, %v6852
    %v7479 = vmul.f32 %v5239, %v6854
    %v7480 = vmul.f32 %v5240, %v6856
    %v7481 = vmul.f32 %v5241, %v6858
    %v7482 = vmul.f32 %v5242, %v6860
    %v7483 = vmul.f32 %v5243, %v6862
    %v7484 = vmul.f32 %v5244, %v6864
    %v7485 = vmul.f32 %v5245, %v6866
    %v7486 = vmul.f32 %v5246, %v6868
    %v7487 = vmul.f32 %v5247, %v6870
    %v7488 = vmul.f32 %v5248, %v6872
    %v7489 = vmul.f32 %v5249, %v6874
    %v7490 = vmul.f32 %v5250, %v6876
    %v7491 = vmul.f32 %v5251, %v6878
    %v7492 = vmul.f32 %v5252, %v6880
    %v7493 = vmul.f32 %v5253, %v6882
    %v7494 = vmul.f32 %v5254, %v6884
    %v7495 = vmul.f32 %v5255, %v6886
    %v7496 = vmul.f32 %v5256, %v6888
    %v7497 = vmul.f32 %v5257, %v6890
    %v7498 = vmul.f32 %v5258, %v6892
    %v7499 = vmul.f32 %v5259, %v6894
    %v7500 = vmul.f32 %v5260, %v6896
    %v7501 = vmul.f32 %v5261, %v6898
    %v7502 = vmul.f32 %v5262, %v6900
    %v7503 = vmul.f32 %v5263, %v6902
    %v7504 = vmul.f32 %v5264, %v6904
    %v7505 = vmul.f32 %v5265, %v6906
    %v7506 = vmul.f32 %v5266, %v6908
    %v7507 = vmul.f32 %v5267, %v6910
    %v7508 = vmul.f32 %v5268, %v6912
    %v7509 = vmul.f32 %v5269, %v6914
    %v7510 = vmul.f32 %v5270, %v6916
    %v7511 = vmul.f32 %v5271, %v6918
    %v7512 = vmul.f32 %v5272, %v6920
    %v7513 = vmul.f32 %v5273, %v6922
    %v7514 = vmul.f32 %v5274, %v6924
    %v7515 = vmul.f32 %v5275, %v6926
    %v7516 = vmul.f32 %v5276, %v6928
    %v7517 = vmul.f32 %v5277, %v6930
    %v7518 = vmul.f32 %v5278, %v6932
    %v7519 = vmul.f32 %v5279, %v6934
    %v7520 = vmul.f32 %v5280, %v6936
    %v7521 = vmul.f32 %v5281, %v6938
    %v7522 = vmul.f32 %v5282, %v6940
    %v7523 = vmul.f32 %v5283, %v6942
    %v7524 = vmul.f32 %v5284, %v6944
    %v7525 = vmul.f32 %v5285, %v6946
    %v7526 = vmul.f32 %v5286, %v6948
    %v7527 = vmul.f32 %v5287, %v6950
    %v7528 = vmul.f32 %v5288, %v6952
    %v7529 = vmul.f32 %v5289, %v6954
    %v7530 = vmul.f32 %v5290, %v6956
    %v7531 = vmul.f32 %v5291, %v6958
    %v7532 = vmul.f32 %v5292, %v6960
    %v7533 = vmul.f32 %v5293, %v6962
    %v7534 = vmul.f32 %v5294, %v6964
    %v7535 = vmul.f32 %v5295, %v6966
    %v7536 = vmul.f32 %v5296, %v6968
    %v7537 = vmul.f32 %v5297, %v6970
    %v7538 = vmul.f32 %v5298, %v6972
    %v7539 = vmul.f32 %v5299, %v6974
    %v7540 = vmul.f32 %v5300, %v6976
    %v7541 = vmul.f32 %v5301, %v6978
    %v7542 = vmul.f32 %v5302, %v6980
    %v7543 = vmul.f32 %v5303, %v6982
    %v7544 = vmul.f32 %v5304, %v6984
    %v7545 = vmul.f32 %v5305, %v6986
    %v7546 = vmul.f32 %v5306, %v6988
    %v7547 = vmul.f32 %v5307, %v6990
    %v7548 = vmul.f32 %v5308, %v6992
    %v7549 = vmul.f32 %v5309, %v6994
    %v7550 = vmul.f32 %v5310, %v6996
    %v7551 = vmul.f32 %v5311, %v6998
    %v7552 = vmul.f32 %v5312, %v7000
    %v7553 = vmul.f32 %v5313, %v7002
    %v7554 = vmul.f32 %v5314, %v7004
    %v7555 = vmul.f32 %v5315, %v7006
    %v7556 = vmul.f32 %v5316, %v7008
    %v7557 = vmul.f32 %v5317, %v7010
    %v7558 = vmul.f32 %v5318, %v7012
    %v7559 = vmul.f32 %v5319, %v7014
    %v7560 = vmul.f32 %v5320, %v7016
    %v7561 = vmul.f32 %v5321, %v7018
    %v7562 = vmul.f32 %v5322, %v7020
    %v7563 = vmul.f32 %v5323, %v7022
    %v7564 = vmul.f32 %v5324, %v7024
    %v7565 = vmul.f32 %v5325, %v7026
    %v7566 = vmul.f32 %v5326, %v7028
    %v7567 = vmul.f32 %v5327, %v7030
    %v7568 = vmul.f32 %v5328, %v7032
    %v7569 = vmul.f32 %v5329, %v7034
    %v7570 = vmul.f32 %v5330, %v7036
    %v7571 = vmul.f32 %v5331, %v7038
    %v7572 = vmul.f32 %v5332, %v7040
    %v7573 = vmul.f32 %v5333, %v7042
    %v7574 = vmul.f32 %v5334, %v7044
    %v7575 = vmul.f32 %v5335, %v7046
    %v7576 = vmul.f32 %v5336, %v7048
    %v7577 = vmul.f32 %v5337, %v7050
    %v7578 = vmul.f32 %v5338, %v7052
    %v7579 = vmul.f32 %v5339, %v7054
    %v7580 = vmul.f32 %v5340, %v7056
    %v7581 = vmul.f32 %v5341, %v7058
    %v7582 = vmul.f32 %v5342, %v7060
    %v7583 = vmul.f32 %v5343, %v7062
    %v7584 = vmul.f32 %v5344, %v7064
    %v7585 = vmul.f32 %v5345, %v7066
    %v7586 = vmul.f32 %v5346, %v7068
    %v7587 = vmul.f32 %v5347, %v7070
    %v7588 = vmul.f32 %v5348, %v7072
    %v7589 = vmul.f32 %v5349, %v7074
    %v7590 = vmul.f32 %v5350, %v7076
    %v7591 = vmul.f32 %v5351, %v7078
    %v7592 = vmul.f32 %v5352, %v7080
    %v7593 = vmul.f32 %v5353, %v7082
    %v7594 = vmul.f32 %v5354, %v7084
    %v7595 = vmul.f32 %v5355, %v7086
    %v7596 = vmul.f32 %v5356, %v7088
    %v7597 = vmul.f32 %v5357, %v7090
    %v7598 = vmul.f32 %v5358, %v7092
    %v7599 = vmul.f32 %v5359, %v7094
    %v7600 = vmul.f32 %v5360, %v7096
    %v7601 = vmul.f32 %v5361, %v7098
    %v7602 = vmul.f32 %v5362, %v7100
    %v7603 = vmul.f32 %v5363, %v7102
    %v7604 = vmul.f32 %v5364, %v7104
    %v7605 = vmul.f32 %v5365, %v7106
    %v7606 = vmul.f32 %v5366, %v7108
    %v7607 = vmul.f32 %v5367, %v7110
    %v7608 = vmul.f32 %v5368, %v7112
    %v7609 = vmul.f32 %v5369, %v7114
    %v7610 = vmul.f32 %v5370, %v7116
    %v7611 = vmul.f32 %v5371, %v7118
    %v7612 = vmul.f32 %v5372, %v7120
    %v7613 = vmul.f32 %v5373, %v7122
    %v7614 = vmul.f32 %v5374, %v7124
    %v7615 = vmul.f32 %v5375, %v7126
    %v7616 = vmul.f32 %v5376, %v7128
    %v7617 = vmul.f32 %v5377, %v7130
    %v7618 = vmul.f32 %v5378, %v7132
    %v7619 = vmul.f32 %v5379, %v7134
    %v7620 = vmul.f32 %v5380, %v7136
    %v7621 = vmul.f32 %v5381, %v7138
    %v7622 = vmul.f32 %v5382, %v7140
    %v7623 = vmul.f32 %v5383, %v7142
    %v7624 = vmul.f32 %v5384, %v7144
    %v7625 = vmul.f32 %v5385, %v7146
    %v7626 = vmul.f32 %v5386, %v7148
    %v7627 = vmul.f32 %v5387, %v7150
    %v7628 = vmul.f32 %v5388, %v7152
    %v7629 = vmul.f32 %v5389, %v7154
    %v7630 = vmul.f32 %v5390, %v7156
    %v7631 = vmul.f32 %v5391, %v7158
    %v7632 = vmul.f32 %v5392, %v7160
    %v7633 = vmul.f32 %v5393, %v7162
    %v7634 = vmul.f32 %v5394, %v7164
    %v7635 = vmul.f32 %v5395, %v7166
    %v7636 = vmul.f32 %v5396, %v7168
    %v7637 = vmul.f32 %v5397, %v7170
    %v7638 = vmul.f32 %v5398, %v7172
    %v7639 = vmul.f32 %v5399, %v7174
    %v7640 = vmul.f32 %v5400, %v7176
    %v7641 = vmul.f32 %v5401, %v7178
    %v7642 = vmul.f32 %v5402, %v7180
    %v7643 = vmul.f32 %v5403, %v7182
    %v7644 = vmul.f32 %v5404, %v7184
    %v7645 = vmul.f32 %v5405, %v7186
    %v7646 = vmul.f32 %v5406, %v7188
    %v7647 = vmul.f32 %v5407, %v7190
    %v7648 = vmul.f32 %v5408, %v7192
    %v7649 = vmul.f32 %v5409, %v7194
    %v7650 = vmul.f32 %v5410, %v7196
    %v7651 = vmul.f32 %v5411, %v7198
    %v7652 = vmul.f32 %v5412, %v7200
    %v7653 = vmul.f32 %v5413, %v7202
    %v7654 = vmul.f32 %v5414, %v7204
    %v7655 = vmul.f32 %v5415, %v7206
    %v7656 = vmul.f32 %v5416, %v7208
    %v7657 = vmul.f32 %v5417, %v7210
    %v7658 = vmul.f32 %v5418, %v7212
    %v7659 = vmul.f32 %v5419, %v7214
    %v7660 = vmul.f32 %v5420, %v7216
    %v7661 = vmul.f32 %v5421, %v7218
    %v7662 = vmul.f32 %v5422, %v7220
    %v7663 = vmul.f32 %v5423, %v7222
    %v7664 = vmul.f32 %v5424, %v7224
    %v7665 = vmul.f32 %v5425, %v7226
    %v7666 = vmul.f32 %v5426, %v7228
    %v7667 = vmul.f32 %v5427, %v7230
    %v7668 = vmul.f32 %v5428, %v7232
    %v7669 = vmul.f32 %v5429, %v7234
    %v7670 = vmul.f32 %v5430, %v7236
    %v7671 = vmul.f32 %v5431, %v7238
    %v7672 = vmul.f32 %v5432, %v7240
    %v7673 = vmul.f32 %v5433, %v7242
    %v7674 = vmul.f32 %v5434, %v7244
    %v7675 = vmul.f32 %v5435, %v7246
    %v7676 = vmul.f32 %v5436, %v7248
    %v7677 = vmul.f32 %v5437, %v7250
    %v7678 = vmul.f32 %v5438, %v7252
    %v7679 = vmul.f32 %v5439, %v7254
    %v7680 = vmul.f32 %v5440, %v7256
    %v7681 = vmul.f32 %v5441, %v7258
    %v7682 = vmul.f32 %v5442, %v7260
    %v7683 = vmul.f32 %v5443, %v7262
    %v7684 = vmul.f32 %v5444, %v7264
    %v7685 = vmul.f32 %v5445, %v7266
    %v7686 = vmul.f32 %v5446, %v7268
    %v7687 = vmul.f32 %v5447, %v7270
    %v7688 = vmul.f32 %v5448, %v7272
    %v7689 = vmul.f32 %v5449, %v7274
    %v7690 = vmul.f32 %v5450, %v7276
    %v7691 = vmul.f32 %v5451, %v7278
    %v7692 = vmul.f32 %v5452, %v7280
    %v7693 = vmul.f32 %v5453, %v7282
    %v7694 = vmul.f32 %v5454, %v7284
    %v7695 = vmul.f32 %v5455, %v7286
    %v7696 = vmul.f32 %v5456, %v7288
    %v7697 = vmul.f32 %v5457, %v7290
    %v7698 = vmul.f32 %v5458, %v7292
    %v7699 = vmul.f32 %v5459, %v7294
    %v7700 = vmul.f32 %v5460, %v7296
    %v7701 = vmul.f32 %v5461, %v7298
    %v7702 = vmul.f32 %v5462, %v7300
    %v7703 = vmul.f32 %v5463, %v7302
    %v7704 = vmul.f32 %v5464, %v7304
    %v7705 = vmul.f32 %v5465, %v7306
    %v7706 = vmul.f32 %v5466, %v7308
    %v7707 = vmul.f32 %v5467, %v7310
    %v7708 = vmul.f32 %v5468, %v7312
    %v7709 = vmul.f32 %v5469, %v7314
    %v7710 = vmul.f32 %v5470, %v7316
    %v7711 = vmul.f32 %v5471, %v7318
    %v7712 = vmul.f32 %v5472, %v7320
    %v7713 = vmul.f32 %v5473, %v7322
    %v7714 = vmul.f32 %v5474, %v7324
    %v7715 = vmul.f32 %v5475, %v7326
    %v7716 = vmul.f32 %v5476, %v7328
    %v7717 = vmul.f32 %v5477, %v7330
    %v7718 = vmul.f32 %v5478, %v7332
    %v7719 = vmul.f32 %v5479, %v7334
    %v7720 = vmul.f32 %v5480, %v7336
    %v7721 = vmul.f32 %v5481, %v7338
    %v7722 = vmul.f32 %v5482, %v7340
    %v7723 = vmul.f32 %v5483, %v7342
    %v7724 = vmul.f32 %v5484, %v7344
    %v7725 = vmul.f32 %v5485, %v7346
    %v7726 = vmul.f32 %v5486, %v7348
    %v7727 = vmul.f32 %v5487, %v7350
    %v7728 = vmul.f32 %v5488, %v7352
    %v7729 = vmul.f32 %v5489, %v7354
    %v7730 = vmul.f32 %v5490, %v7356
    %v7731 = vmul.f32 %v5491, %v7358
    %v7732 = vmul.f32 %v5492, %v7360
    %v7733 = vmul.f32 %v5493, %v7362
    %v7734 = vmul.f32 %v5494, %v7364
    %v7735 = vmul.f32 %v5495, %v7366
    %v7736 = vmul.f32 %v5496, %v7368
    %v7737 = vmul.f32 %v5497, %v7370
    %v7738 = vmul.f32 %v5498, %v7372
    %v7739 = vmul.f32 %v5499, %v7374
    %v7740 = vmul.f32 %v5500, %v7376
    %v7741 = vmul.f32 %v5501, %v7378
    %v7742 = vmul.f32 %v5502, %v7380
    %v7743 = vmul.f32 %v5503, %v7382
    %v7744 = vmul.f32 %v5504, %v7384
    %v7745 = vmul.f32 %v5505, %v7386
    %v7746 = vmul.f32 %v5506, %v7388
    %v7747 = vmul.f32 %v5507, %v7390
    %v7748 = vmul.f32 %v5508, %v7392
    %v7749 = vmul.f32 %v5509, %v7394
    %v7750 = vmul.f32 %v5510, %v7396
    %v7751 = vmul.f32 %v5511, %v7398
    %v7752 = vmul.f32 %v5512, %v7400
    %v7753 = vmul.f32 %v5513, %v7402
    %v7754 = vmul.f32 %v5514, %v7404
    %v7755 = vmul.f32 %v5515, %v7406
    %v7756 = vmul.f32 %v5516, %v7408
    %v7757 = vmul.f32 %v5517, %v7410
    %v7758 = vmul.f32 %v5518, %v7412
    %v7759 = vmul.f32 %v5519, %v7414
    %v7760 = vmul.f32 %v5520, %v7416
    %v7761 = vmul.f32 %v5521, %v7418
    %v7762 = vmul.f32 %v5522, %v7420
    %v7763 = vmul.f32 %v5523, %v7422
    %v7764 = vmul.f32 %v5524, %v7424
    %v7765 = vmul.f32 %v5525, %v7426
    %v7766 = vmul.f32 %v5526, %v7428
    %v7767 = vmul.f32 %v5527, %v7430
    %v7768 = vmul.f32 %v5528, %v7432
    %v7769 = vmul.f32 %v5529, %v7434
    %v7770 = vmul.f32 %v5530, %v7436
    %v7771 = vmul.f32 %v5531, %v7438
    %v7772 = vmul.f32 %v5532, %v7440
    %v7773 = vmul.f32 %v5533, %v7442
    %v7774 = vmul.f32 %v5534, %v7444
    %v7775 = vmul.f32 %v5535, %v7446
    %v7776 = vmul.f32 %v5536, %v7448
    %v7777 = vmul.f32 %v5537, %v7450
    %v7778 = vmul.f32 %v5538, %v7452
    %v7779 = vmul.f32 %v5539, %v7454
    %v7780 = vmul.f32 %v5540, %v7456
    %v7781 = vmul.f32 %v5541, %v7458
    %v7782 = vmul.f32 %v5542, %v7460
    %v7783 = vmul.f32 %v5543, %v7462
    %v7784 = vmul.f32 %v5544, %v7464
    %v7785 = vpack.c.bf16 %v7466, %v7465
    %v7786 = vpack.c.bf16 %v7468, %v7467
    %v7787 = vpack.c.bf16 %v7470, %v7469
    %v7788 = vpack.c.bf16 %v7472, %v7471
    %v7789 = vpack.c.bf16 %v7474, %v7473
    %v7790 = vpack.c.bf16 %v7476, %v7475
    %v7791 = vpack.c.bf16 %v7478, %v7477
    %v7792 = vpack.c.bf16 %v7480, %v7479
    %v7793 = vpack.c.bf16 %v7482, %v7481
    %v7794 = vpack.c.bf16 %v7484, %v7483
    %v7795 = vpack.c.bf16 %v7486, %v7485
    %v7796 = vpack.c.bf16 %v7488, %v7487
    %v7797 = vpack.c.bf16 %v7490, %v7489
    %v7798 = vpack.c.bf16 %v7492, %v7491
    %v7799 = vpack.c.bf16 %v7494, %v7493
    %v7800 = vpack.c.bf16 %v7496, %v7495
    %v7801 = vpack.c.bf16 %v7498, %v7497
    %v7802 = vpack.c.bf16 %v7500, %v7499
    %v7803 = vpack.c.bf16 %v7502, %v7501
    %v7804 = vpack.c.bf16 %v7504, %v7503
    %v7805 = vpack.c.bf16 %v7506, %v7505
    %v7806 = vpack.c.bf16 %v7508, %v7507
    %v7807 = vpack.c.bf16 %v7510, %v7509
    %v7808 = vpack.c.bf16 %v7512, %v7511
    %v7809 = vpack.c.bf16 %v7514, %v7513
    %v7810 = vpack.c.bf16 %v7516, %v7515
    %v7811 = vpack.c.bf16 %v7518, %v7517
    %v7812 = vpack.c.bf16 %v7520, %v7519
    %v7813 = vpack.c.bf16 %v7522, %v7521
    %v7814 = vpack.c.bf16 %v7524, %v7523
    %v7815 = vpack.c.bf16 %v7526, %v7525
    %v7816 = vpack.c.bf16 %v7528, %v7527
    %v7817 = vpack.c.bf16 %v7530, %v7529
    %v7818 = vpack.c.bf16 %v7532, %v7531
    %v7819 = vpack.c.bf16 %v7534, %v7533
    %v7820 = vpack.c.bf16 %v7536, %v7535
    %v7821 = vpack.c.bf16 %v7538, %v7537
    %v7822 = vpack.c.bf16 %v7540, %v7539
    %v7823 = vpack.c.bf16 %v7542, %v7541
    %v7824 = vpack.c.bf16 %v7544, %v7543
    %v7825 = vpack.c.bf16 %v7546, %v7545
    %v7826 = vpack.c.bf16 %v7548, %v7547
    %v7827 = vpack.c.bf16 %v7550, %v7549
    %v7828 = vpack.c.bf16 %v7552, %v7551
    %v7829 = vpack.c.bf16 %v7554, %v7553
    %v7830 = vpack.c.bf16 %v7556, %v7555
    %v7831 = vpack.c.bf16 %v7558, %v7557
    %v7832 = vpack.c.bf16 %v7560, %v7559
    %v7833 = vpack.c.bf16 %v7562, %v7561
    %v7834 = vpack.c.bf16 %v7564, %v7563
    %v7835 = vpack.c.bf16 %v7566, %v7565
    %v7836 = vpack.c.bf16 %v7568, %v7567
    %v7837 = vpack.c.bf16 %v7570, %v7569
    %v7838 = vpack.c.bf16 %v7572, %v7571
    %v7839 = vpack.c.bf16 %v7574, %v7573
    %v7840 = vpack.c.bf16 %v7576, %v7575
    %v7841 = vpack.c.bf16 %v7578, %v7577
    %v7842 = vpack.c.bf16 %v7580, %v7579
    %v7843 = vpack.c.bf16 %v7582, %v7581
    %v7844 = vpack.c.bf16 %v7584, %v7583
    %v7845 = vpack.c.bf16 %v7586, %v7585
    %v7846 = vpack.c.bf16 %v7588, %v7587
    %v7847 = vpack.c.bf16 %v7590, %v7589
    %v7848 = vpack.c.bf16 %v7592, %v7591
    %v7849 = vpack.c.bf16 %v7594, %v7593
    %v7850 = vpack.c.bf16 %v7596, %v7595
    %v7851 = vpack.c.bf16 %v7598, %v7597
    %v7852 = vpack.c.bf16 %v7600, %v7599
    %v7853 = vpack.c.bf16 %v7602, %v7601
    %v7854 = vpack.c.bf16 %v7604, %v7603
    %v7855 = vpack.c.bf16 %v7606, %v7605
    %v7856 = vpack.c.bf16 %v7608, %v7607
    %v7857 = vpack.c.bf16 %v7610, %v7609
    %v7858 = vpack.c.bf16 %v7612, %v7611
    %v7859 = vpack.c.bf16 %v7614, %v7613
    %v7860 = vpack.c.bf16 %v7616, %v7615
    %v7861 = vpack.c.bf16 %v7618, %v7617
    %v7862 = vpack.c.bf16 %v7620, %v7619
    %v7863 = vpack.c.bf16 %v7622, %v7621
    %v7864 = vpack.c.bf16 %v7624, %v7623
    %v7865 = vpack.c.bf16 %v7626, %v7625
    %v7866 = vpack.c.bf16 %v7628, %v7627
    %v7867 = vpack.c.bf16 %v7630, %v7629
    %v7868 = vpack.c.bf16 %v7632, %v7631
    %v7869 = vpack.c.bf16 %v7634, %v7633
    %v7870 = vpack.c.bf16 %v7636, %v7635
    %v7871 = vpack.c.bf16 %v7638, %v7637
    %v7872 = vpack.c.bf16 %v7640, %v7639
    %v7873 = vpack.c.bf16 %v7642, %v7641
    %v7874 = vpack.c.bf16 %v7644, %v7643
    %v7875 = vpack.c.bf16 %v7646, %v7645
    %v7876 = vpack.c.bf16 %v7648, %v7647
    %v7877 = vpack.c.bf16 %v7650, %v7649
    %v7878 = vpack.c.bf16 %v7652, %v7651
    %v7879 = vpack.c.bf16 %v7654, %v7653
    %v7880 = vpack.c.bf16 %v7656, %v7655
    %v7881 = vpack.c.bf16 %v7658, %v7657
    %v7882 = vpack.c.bf16 %v7660, %v7659
    %v7883 = vpack.c.bf16 %v7662, %v7661
    %v7884 = vpack.c.bf16 %v7664, %v7663
    %v7885 = vpack.c.bf16 %v7666, %v7665
    %v7886 = vpack.c.bf16 %v7668, %v7667
    %v7887 = vpack.c.bf16 %v7670, %v7669
    %v7888 = vpack.c.bf16 %v7672, %v7671
    %v7889 = vpack.c.bf16 %v7674, %v7673
    %v7890 = vpack.c.bf16 %v7676, %v7675
    %v7891 = vpack.c.bf16 %v7678, %v7677
    %v7892 = vpack.c.bf16 %v7680, %v7679
    %v7893 = vpack.c.bf16 %v7682, %v7681
    %v7894 = vpack.c.bf16 %v7684, %v7683
    %v7895 = vpack.c.bf16 %v7686, %v7685
    %v7896 = vpack.c.bf16 %v7688, %v7687
    %v7897 = vpack.c.bf16 %v7690, %v7689
    %v7898 = vpack.c.bf16 %v7692, %v7691
    %v7899 = vpack.c.bf16 %v7694, %v7693
    %v7900 = vpack.c.bf16 %v7696, %v7695
    %v7901 = vpack.c.bf16 %v7698, %v7697
    %v7902 = vpack.c.bf16 %v7700, %v7699
    %v7903 = vpack.c.bf16 %v7702, %v7701
    %v7904 = vpack.c.bf16 %v7704, %v7703
    %v7905 = vpack.c.bf16 %v7706, %v7705
    %v7906 = vpack.c.bf16 %v7708, %v7707
    %v7907 = vpack.c.bf16 %v7710, %v7709
    %v7908 = vpack.c.bf16 %v7712, %v7711
    %v7909 = vpack.c.bf16 %v7714, %v7713
    %v7910 = vpack.c.bf16 %v7716, %v7715
    %v7911 = vpack.c.bf16 %v7718, %v7717
    %v7912 = vpack.c.bf16 %v7720, %v7719
    %v7913 = vpack.c.bf16 %v7722, %v7721
    %v7914 = vpack.c.bf16 %v7724, %v7723
    %v7915 = vpack.c.bf16 %v7726, %v7725
    %v7916 = vpack.c.bf16 %v7728, %v7727
    %v7917 = vpack.c.bf16 %v7730, %v7729
    %v7918 = vpack.c.bf16 %v7732, %v7731
    %v7919 = vpack.c.bf16 %v7734, %v7733
    %v7920 = vpack.c.bf16 %v7736, %v7735
    %v7921 = vpack.c.bf16 %v7738, %v7737
    %v7922 = vpack.c.bf16 %v7740, %v7739
    %v7923 = vpack.c.bf16 %v7742, %v7741
    %v7924 = vpack.c.bf16 %v7744, %v7743
    %v7925 = vpack.c.bf16 %v7746, %v7745
    %v7926 = vpack.c.bf16 %v7748, %v7747
    %v7927 = vpack.c.bf16 %v7750, %v7749
    %v7928 = vpack.c.bf16 %v7752, %v7751
    %v7929 = vpack.c.bf16 %v7754, %v7753
    %v7930 = vpack.c.bf16 %v7756, %v7755
    %v7931 = vpack.c.bf16 %v7758, %v7757
    %v7932 = vpack.c.bf16 %v7760, %v7759
    %v7933 = vpack.c.bf16 %v7762, %v7761
    %v7934 = vpack.c.bf16 %v7764, %v7763
    %v7935 = vpack.c.bf16 %v7766, %v7765
    %v7936 = vpack.c.bf16 %v7768, %v7767
    %v7937 = vpack.c.bf16 %v7770, %v7769
    %v7938 = vpack.c.bf16 %v7772, %v7771
    %v7939 = vpack.c.bf16 %v7774, %v7773
    %v7940 = vpack.c.bf16 %v7776, %v7775
    %v7941 = vpack.c.bf16 %v7778, %v7777
    %v7942 = vpack.c.bf16 %v7780, %v7779
    %v7943 = vpack.c.bf16 %v7782, %v7781
    %v7944 = vpack.c.bf16 %v7784, %v7783
    %v7945 = vld [vmem:[#allocation2] sm:$0xff]
    %v7946 = vld [vmem:[#allocation2 + $0x8] sm:$0xff]
    %v7947 = vld [vmem:[#allocation2 + $0x10] sm:$0xff]
    %v7948 = vld [vmem:[#allocation2 + $0x18] sm:$0xff]
    %v7949 = vld [vmem:[#allocation2 + $0x20] sm:$0xff]
    %v7950 = vld [vmem:[#allocation2 + $0x28] sm:$0xff]
    %v7951 = vld [vmem:[#allocation2 + $0x30] sm:$0xff]
    %v7952 = vld [vmem:[#allocation2 + $0x38] sm:$0xff]
    %v7953 = vld [vmem:[#allocation2 + $0x40] sm:$0xff]
    %v7954 = vld [vmem:[#allocation2 + $0x48] sm:$0xff]
    %v7955 = vld [vmem:[#allocation2 + $0x50] sm:$0xff]
    %v7956 = vld [vmem:[#allocation2 + $0x58] sm:$0xff]
    %v7957 = vld [vmem:[#allocation2 + $0x60] sm:$0xff]
    %v7958 = vld [vmem:[#allocation2 + $0x68] sm:$0xff]
    %v7959 = vld [vmem:[#allocation2 + $0x70] sm:$0xff]
    %v7960 = vld [vmem:[#allocation2 + $0x78] sm:$0xff]
    %v7961 = vld [vmem:[#allocation2 + $0x80] sm:$0xff]
    %v7962 = vld [vmem:[#allocation2 + $0x88] sm:$0xff]
    %v7963 = vld [vmem:[#allocation2 + $0x90] sm:$0xff]
    %v7964 = vld [vmem:[#allocation2 + $0x98] sm:$0xff]
    %v7965 = vld [vmem:[#allocation2 + $0xa0] sm:$0xff]
    %v7966 = vld [vmem:[#allocation2 + $0xa8] sm:$0xff]
    %v7967 = vld [vmem:[#allocation2 + $0xb0] sm:$0xff]
    %v7968 = vld [vmem:[#allocation2 + $0xb8] sm:$0xff]
    %v7969 = vld [vmem:[#allocation2 + $0xc0] sm:$0xff]
    %v7970 = vld [vmem:[#allocation2 + $0xc8] sm:$0xff]
    %v7971 = vld [vmem:[#allocation2 + $0xd0] sm:$0xff]
    %v7972 = vld [vmem:[#allocation2 + $0xd8] sm:$0xff]
    %v7973 = vld [vmem:[#allocation2 + $0xe0] sm:$0xff]
    %v7974 = vld [vmem:[#allocation2 + $0xe8] sm:$0xff]
    %v7975 = vld [vmem:[#allocation2 + $0xf0] sm:$0xff]
    %v7976 = vld [vmem:[#allocation2 + $0xf8] sm:$0xff]
    %v7977 = vld [vmem:[#allocation2 + $0x100] sm:$0xff]
    %v7978 = vld [vmem:[#allocation2 + $0x108] sm:$0xff]
    %v7979 = vld [vmem:[#allocation2 + $0x110] sm:$0xff]
    %v7980 = vld [vmem:[#allocation2 + $0x118] sm:$0xff]
    %v7981 = vld [vmem:[#allocation2 + $0x120] sm:$0xff]
    %v7982 = vld [vmem:[#allocation2 + $0x128] sm:$0xff]
    %v7983 = vld [vmem:[#allocation2 + $0x130] sm:$0xff]
    %v7984 = vld [vmem:[#allocation2 + $0x138] sm:$0xff]
    %v7985 = vld [vmem:[#allocation2 + $0x140] sm:$0xff]
    %v7986 = vld [vmem:[#allocation2 + $0x148] sm:$0xff]
    %v7987 = vld [vmem:[#allocation2 + $0x150] sm:$0xff]
    %v7988 = vld [vmem:[#allocation2 + $0x158] sm:$0xff]
    %v7989 = vld [vmem:[#allocation2 + $0x160] sm:$0xff]
    %v7990 = vld [vmem:[#allocation2 + $0x168] sm:$0xff]
    %v7991 = vld [vmem:[#allocation2 + $0x170] sm:$0xff]
    %v7992 = vld [vmem:[#allocation2 + $0x178] sm:$0xff]
    %v7993 = vld [vmem:[#allocation2 + $0x180] sm:$0xff]
    %v7994 = vld [vmem:[#allocation2 + $0x188] sm:$0xff]
    %v7995 = vld [vmem:[#allocation2 + $0x190] sm:$0xff]
    %v7996 = vld [vmem:[#allocation2 + $0x198] sm:$0xff]
    %v7997 = vld [vmem:[#allocation2 + $0x1a0] sm:$0xff]
    %v7998 = vld [vmem:[#allocation2 + $0x1a8] sm:$0xff]
    %v7999 = vld [vmem:[#allocation2 + $0x1b0] sm:$0xff]
    %v8000 = vld [vmem:[#allocation2 + $0x1b8] sm:$0xff]
    %v8001 = vld [vmem:[#allocation2 + $0x1c0] sm:$0xff]
    %v8002 = vld [vmem:[#allocation2 + $0x1c8] sm:$0xff]
    %v8003 = vld [vmem:[#allocation2 + $0x1d0] sm:$0xff]
    %v8004 = vld [vmem:[#allocation2 + $0x1d8] sm:$0xff]
    %v8005 = vld [vmem:[#allocation2 + $0x1e0] sm:$0xff]
    %v8006 = vld [vmem:[#allocation2 + $0x1e8] sm:$0xff]
    %v8007 = vld [vmem:[#allocation2 + $0x1f0] sm:$0xff]
    %v8008 = vld [vmem:[#allocation2 + $0x1f8] sm:$0xff]
    %v8009 = vld [vmem:[#allocation2 + $0x200] sm:$0xff]
    %v8010 = vld [vmem:[#allocation2 + $0x208] sm:$0xff]
    %v8011 = vld [vmem:[#allocation2 + $0x210] sm:$0xff]
    %v8012 = vld [vmem:[#allocation2 + $0x218] sm:$0xff]
    %v8013 = vld [vmem:[#allocation2 + $0x220] sm:$0xff]
    %v8014 = vld [vmem:[#allocation2 + $0x228] sm:$0xff]
    %v8015 = vld [vmem:[#allocation2 + $0x230] sm:$0xff]
    %v8016 = vld [vmem:[#allocation2 + $0x238] sm:$0xff]
    %v8017 = vld [vmem:[#allocation2 + $0x240] sm:$0xff]
    %v8018 = vld [vmem:[#allocation2 + $0x248] sm:$0xff]
    %v8019 = vld [vmem:[#allocation2 + $0x250] sm:$0xff]
    %v8020 = vld [vmem:[#allocation2 + $0x258] sm:$0xff]
    %v8021 = vld [vmem:[#allocation2 + $0x260] sm:$0xff]
    %v8022 = vld [vmem:[#allocation2 + $0x268] sm:$0xff]
    %v8023 = vld [vmem:[#allocation2 + $0x270] sm:$0xff]
    %v8024 = vld [vmem:[#allocation2 + $0x278] sm:$0xff]
    %v8025 = vld [vmem:[#allocation2 + $0x280] sm:$0xff]
    %v8026 = vld [vmem:[#allocation2 + $0x288] sm:$0xff]
    %v8027 = vld [vmem:[#allocation2 + $0x290] sm:$0xff]
    %v8028 = vld [vmem:[#allocation2 + $0x298] sm:$0xff]
    %v8029 = vld [vmem:[#allocation2 + $0x2a0] sm:$0xff]
    %v8030 = vld [vmem:[#allocation2 + $0x2a8] sm:$0xff]
    %v8031 = vld [vmem:[#allocation2 + $0x2b0] sm:$0xff]
    %v8032 = vld [vmem:[#allocation2 + $0x2b8] sm:$0xff]
    %v8033 = vld [vmem:[#allocation2 + $0x2c0] sm:$0xff]
    %v8034 = vld [vmem:[#allocation2 + $0x2c8] sm:$0xff]
    %v8035 = vld [vmem:[#allocation2 + $0x2d0] sm:$0xff]
    %v8036 = vld [vmem:[#allocation2 + $0x2d8] sm:$0xff]
    %v8037 = vld [vmem:[#allocation2 + $0x2e0] sm:$0xff]
    %v8038 = vld [vmem:[#allocation2 + $0x2e8] sm:$0xff]
    %v8039 = vld [vmem:[#allocation2 + $0x2f0] sm:$0xff]
    %v8040 = vld [vmem:[#allocation2 + $0x2f8] sm:$0xff]
    %v8041 = vld [vmem:[#allocation2 + $0x300] sm:$0xff]
    %v8042 = vld [vmem:[#allocation2 + $0x308] sm:$0xff]
    %v8043 = vld [vmem:[#allocation2 + $0x310] sm:$0xff]
    %v8044 = vld [vmem:[#allocation2 + $0x318] sm:$0xff]
    %v8045 = vld [vmem:[#allocation2 + $0x320] sm:$0xff]
    %v8046 = vld [vmem:[#allocation2 + $0x328] sm:$0xff]
    %v8047 = vld [vmem:[#allocation2 + $0x330] sm:$0xff]
    %v8048 = vld [vmem:[#allocation2 + $0x338] sm:$0xff]
    %v8049 = vld [vmem:[#allocation2 + $0x340] sm:$0xff]
    %v8050 = vld [vmem:[#allocation2 + $0x348] sm:$0xff]
    %v8051 = vld [vmem:[#allocation2 + $0x350] sm:$0xff]
    %v8052 = vld [vmem:[#allocation2 + $0x358] sm:$0xff]
    %v8053 = vld [vmem:[#allocation2 + $0x360] sm:$0xff]
    %v8054 = vld [vmem:[#allocation2 + $0x368] sm:$0xff]
    %v8055 = vld [vmem:[#allocation2 + $0x370] sm:$0xff]
    %v8056 = vld [vmem:[#allocation2 + $0x378] sm:$0xff]
    %v8057 = vld [vmem:[#allocation2 + $0x380] sm:$0xff]
    %v8058 = vld [vmem:[#allocation2 + $0x388] sm:$0xff]
    %v8059 = vld [vmem:[#allocation2 + $0x390] sm:$0xff]
    %v8060 = vld [vmem:[#allocation2 + $0x398] sm:$0xff]
    %v8061 = vld [vmem:[#allocation2 + $0x3a0] sm:$0xff]
    %v8062 = vld [vmem:[#allocation2 + $0x3a8] sm:$0xff]
    %v8063 = vld [vmem:[#allocation2 + $0x3b0] sm:$0xff]
    %v8064 = vld [vmem:[#allocation2 + $0x3b8] sm:$0xff]
    %v8065 = vld [vmem:[#allocation2 + $0x3c0] sm:$0xff]
    %v8066 = vld [vmem:[#allocation2 + $0x3c8] sm:$0xff]
    %v8067 = vld [vmem:[#allocation2 + $0x3d0] sm:$0xff]
    %v8068 = vld [vmem:[#allocation2 + $0x3d8] sm:$0xff]
    %v8069 = vld [vmem:[#allocation2 + $0x3e0] sm:$0xff]
    %v8070 = vld [vmem:[#allocation2 + $0x3e8] sm:$0xff]
    %v8071 = vld [vmem:[#allocation2 + $0x3f0] sm:$0xff]
    %v8072 = vld [vmem:[#allocation2 + $0x3f8] sm:$0xff]
    %v8073 = vld [vmem:[#allocation2 + $0x400] sm:$0xff]
    %v8074 = vld [vmem:[#allocation2 + $0x408] sm:$0xff]
    %v8075 = vld [vmem:[#allocation2 + $0x410] sm:$0xff]
    %v8076 = vld [vmem:[#allocation2 + $0x418] sm:$0xff]
    %v8077 = vld [vmem:[#allocation2 + $0x420] sm:$0xff]
    %v8078 = vld [vmem:[#allocation2 + $0x428] sm:$0xff]
    %v8079 = vld [vmem:[#allocation2 + $0x430] sm:$0xff]
    %v8080 = vld [vmem:[#allocation2 + $0x438] sm:$0xff]
    %v8081 = vld [vmem:[#allocation2 + $0x440] sm:$0xff]
    %v8082 = vld [vmem:[#allocation2 + $0x448] sm:$0xff]
    %v8083 = vld [vmem:[#allocation2 + $0x450] sm:$0xff]
    %v8084 = vld [vmem:[#allocation2 + $0x458] sm:$0xff]
    %v8085 = vld [vmem:[#allocation2 + $0x460] sm:$0xff]
    %v8086 = vld [vmem:[#allocation2 + $0x468] sm:$0xff]
    %v8087 = vld [vmem:[#allocation2 + $0x470] sm:$0xff]
    %v8088 = vld [vmem:[#allocation2 + $0x478] sm:$0xff]
    %v8089 = vld [vmem:[#allocation2 + $0x480] sm:$0xff]
    %v8090 = vld [vmem:[#allocation2 + $0x488] sm:$0xff]
    %v8091 = vld [vmem:[#allocation2 + $0x490] sm:$0xff]
    %v8092 = vld [vmem:[#allocation2 + $0x498] sm:$0xff]
    %v8093 = vld [vmem:[#allocation2 + $0x4a0] sm:$0xff]
    %v8094 = vld [vmem:[#allocation2 + $0x4a8] sm:$0xff]
    %v8095 = vld [vmem:[#allocation2 + $0x4b0] sm:$0xff]
    %v8096 = vld [vmem:[#allocation2 + $0x4b8] sm:$0xff]
    %v8097 = vld [vmem:[#allocation2 + $0x4c0] sm:$0xff]
    %v8098 = vld [vmem:[#allocation2 + $0x4c8] sm:$0xff]
    %v8099 = vld [vmem:[#allocation2 + $0x4d0] sm:$0xff]
    %v8100 = vld [vmem:[#allocation2 + $0x4d8] sm:$0xff]
    %v8101 = vld [vmem:[#allocation2 + $0x4e0] sm:$0xff]
    %v8102 = vld [vmem:[#allocation2 + $0x4e8] sm:$0xff]
    %v8103 = vld [vmem:[#allocation2 + $0x4f0] sm:$0xff]
    %v8104 = vld [vmem:[#allocation2 + $0x4f8] sm:$0xff]
    %v8105 = vld [vmem:[%s6] sm:$0x3]
    %v8107 = vlaneseq
    %v8108 = vshrl.u32 %v8107, 7
    %v8109 = vsub.s32 0, %v8108
    %v8110 = vrot.slane %v8105, %v8109
    %v8111 = vlaneseq
    %v8112 = vshrl.u32 %v8111, 7
    %v8113 = vsub.s32 1, %v8112
    %v8114 = vrot.slane %v8105, %v8113
    %v8277 = vunpack.c.l.b16 %v7785
    %v8278 = vunpack.c.h.b16 %v7785
    %v8279 = vunpack.c.l.b16 %v7786
    %v8280 = vunpack.c.h.b16 %v7786
    %v8281 = vunpack.c.l.b16 %v7787
    %v8282 = vunpack.c.h.b16 %v7787
    %v8283 = vunpack.c.l.b16 %v7788
    %v8284 = vunpack.c.h.b16 %v7788
    %v8285 = vunpack.c.l.b16 %v7789
    %v8286 = vunpack.c.h.b16 %v7789
    %v8287 = vunpack.c.l.b16 %v7790
    %v8288 = vunpack.c.h.b16 %v7790
    %v8289 = vunpack.c.l.b16 %v7791
    %v8290 = vunpack.c.h.b16 %v7791
    %v8291 = vunpack.c.l.b16 %v7792
    %v8292 = vunpack.c.h.b16 %v7792
    %v8293 = vunpack.c.l.b16 %v7793
    %v8294 = vunpack.c.h.b16 %v7793
    %v8295 = vunpack.c.l.b16 %v7794
    %v8296 = vunpack.c.h.b16 %v7794
    %v8297 = vunpack.c.l.b16 %v7795
    %v8298 = vunpack.c.h.b16 %v7795
    %v8299 = vunpack.c.l.b16 %v7796
    %v8300 = vunpack.c.h.b16 %v7796
    %v8301 = vunpack.c.l.b16 %v7797
    %v8302 = vunpack.c.h.b16 %v7797
    %v8303 = vunpack.c.l.b16 %v7798
    %v8304 = vunpack.c.h.b16 %v7798
    %v8305 = vunpack.c.l.b16 %v7799
    %v8306 = vunpack.c.h.b16 %v7799
    %v8307 = vunpack.c.l.b16 %v7800
    %v8308 = vunpack.c.h.b16 %v7800
    %v8309 = vunpack.c.l.b16 %v7801
    %v8310 = vunpack.c.h.b16 %v7801
    %v8311 = vunpack.c.l.b16 %v7802
    %v8312 = vunpack.c.h.b16 %v7802
    %v8313 = vunpack.c.l.b16 %v7803
    %v8314 = vunpack.c.h.b16 %v7803
    %v8315 = vunpack.c.l.b16 %v7804
    %v8316 = vunpack.c.h.b16 %v7804
    %v8317 = vunpack.c.l.b16 %v7805
    %v8318 = vunpack.c.h.b16 %v7805
    %v8319 = vunpack.c.l.b16 %v7806
    %v8320 = vunpack.c.h.b16 %v7806
    %v8321 = vunpack.c.l.b16 %v7807
    %v8322 = vunpack.c.h.b16 %v7807
    %v8323 = vunpack.c.l.b16 %v7808
    %v8324 = vunpack.c.h.b16 %v7808
    %v8325 = vunpack.c.l.b16 %v7809
    %v8326 = vunpack.c.h.b16 %v7809
    %v8327 = vunpack.c.l.b16 %v7810
    %v8328 = vunpack.c.h.b16 %v7810
    %v8329 = vunpack.c.l.b16 %v7811
    %v8330 = vunpack.c.h.b16 %v7811
    %v8331 = vunpack.c.l.b16 %v7812
    %v8332 = vunpack.c.h.b16 %v7812
    %v8333 = vunpack.c.l.b16 %v7813
    %v8334 = vunpack.c.h.b16 %v7813
    %v8335 = vunpack.c.l.b16 %v7814
    %v8336 = vunpack.c.h.b16 %v7814
    %v8337 = vunpack.c.l.b16 %v7815
    %v8338 = vunpack.c.h.b16 %v7815
    %v8339 = vunpack.c.l.b16 %v7816
    %v8340 = vunpack.c.h.b16 %v7816
    %v8341 = vunpack.c.l.b16 %v7817
    %v8342 = vunpack.c.h.b16 %v7817
    %v8343 = vunpack.c.l.b16 %v7818
    %v8344 = vunpack.c.h.b16 %v7818
    %v8345 = vunpack.c.l.b16 %v7819
    %v8346 = vunpack.c.h.b16 %v7819
    %v8347 = vunpack.c.l.b16 %v7820
    %v8348 = vunpack.c.h.b16 %v7820
    %v8349 = vunpack.c.l.b16 %v7821
    %v8350 = vunpack.c.h.b16 %v7821
    %v8351 = vunpack.c.l.b16 %v7822
    %v8352 = vunpack.c.h.b16 %v7822
    %v8353 = vunpack.c.l.b16 %v7823
    %v8354 = vunpack.c.h.b16 %v7823
    %v8355 = vunpack.c.l.b16 %v7824
    %v8356 = vunpack.c.h.b16 %v7824
    %v8357 = vunpack.c.l.b16 %v7825
    %v8358 = vunpack.c.h.b16 %v7825
    %v8359 = vunpack.c.l.b16 %v7826
    %v8360 = vunpack.c.h.b16 %v7826
    %v8361 = vunpack.c.l.b16 %v7827
    %v8362 = vunpack.c.h.b16 %v7827
    %v8363 = vunpack.c.l.b16 %v7828
    %v8364 = vunpack.c.h.b16 %v7828
    %v8365 = vunpack.c.l.b16 %v7829
    %v8366 = vunpack.c.h.b16 %v7829
    %v8367 = vunpack.c.l.b16 %v7830
    %v8368 = vunpack.c.h.b16 %v7830
    %v8369 = vunpack.c.l.b16 %v7831
    %v8370 = vunpack.c.h.b16 %v7831
    %v8371 = vunpack.c.l.b16 %v7832
    %v8372 = vunpack.c.h.b16 %v7832
    %v8373 = vunpack.c.l.b16 %v7833
    %v8374 = vunpack.c.h.b16 %v7833
    %v8375 = vunpack.c.l.b16 %v7834
    %v8376 = vunpack.c.h.b16 %v7834
    %v8377 = vunpack.c.l.b16 %v7835
    %v8378 = vunpack.c.h.b16 %v7835
    %v8379 = vunpack.c.l.b16 %v7836
    %v8380 = vunpack.c.h.b16 %v7836
    %v8381 = vunpack.c.l.b16 %v7837
    %v8382 = vunpack.c.h.b16 %v7837
    %v8383 = vunpack.c.l.b16 %v7838
    %v8384 = vunpack.c.h.b16 %v7838
    %v8385 = vunpack.c.l.b16 %v7839
    %v8386 = vunpack.c.h.b16 %v7839
    %v8387 = vunpack.c.l.b16 %v7840
    %v8388 = vunpack.c.h.b16 %v7840
    %v8389 = vunpack.c.l.b16 %v7841
    %v8390 = vunpack.c.h.b16 %v7841
    %v8391 = vunpack.c.l.b16 %v7842
    %v8392 = vunpack.c.h.b16 %v7842
    %v8393 = vunpack.c.l.b16 %v7843
    %v8394 = vunpack.c.h.b16 %v7843
    %v8395 = vunpack.c.l.b16 %v7844
    %v8396 = vunpack.c.h.b16 %v7844
    %v8397 = vunpack.c.l.b16 %v7845
    %v8398 = vunpack.c.h.b16 %v7845
    %v8399 = vunpack.c.l.b16 %v7846
    %v8400 = vunpack.c.h.b16 %v7846
    %v8401 = vunpack.c.l.b16 %v7847
    %v8402 = vunpack.c.h.b16 %v7847
    %v8403 = vunpack.c.l.b16 %v7848
    %v8404 = vunpack.c.h.b16 %v7848
    %v8405 = vunpack.c.l.b16 %v7849
    %v8406 = vunpack.c.h.b16 %v7849
    %v8407 = vunpack.c.l.b16 %v7850
    %v8408 = vunpack.c.h.b16 %v7850
    %v8409 = vunpack.c.l.b16 %v7851
    %v8410 = vunpack.c.h.b16 %v7851
    %v8411 = vunpack.c.l.b16 %v7852
    %v8412 = vunpack.c.h.b16 %v7852
    %v8413 = vunpack.c.l.b16 %v7853
    %v8414 = vunpack.c.h.b16 %v7853
    %v8415 = vunpack.c.l.b16 %v7854
    %v8416 = vunpack.c.h.b16 %v7854
    %v8417 = vunpack.c.l.b16 %v7855
    %v8418 = vunpack.c.h.b16 %v7855
    %v8419 = vunpack.c.l.b16 %v7856
    %v8420 = vunpack.c.h.b16 %v7856
    %v8421 = vunpack.c.l.b16 %v7857
    %v8422 = vunpack.c.h.b16 %v7857
    %v8423 = vunpack.c.l.b16 %v7858
    %v8424 = vunpack.c.h.b16 %v7858
    %v8425 = vunpack.c.l.b16 %v7859
    %v8426 = vunpack.c.h.b16 %v7859
    %v8427 = vunpack.c.l.b16 %v7860
    %v8428 = vunpack.c.h.b16 %v7860
    %v8429 = vunpack.c.l.b16 %v7861
    %v8430 = vunpack.c.h.b16 %v7861
    %v8431 = vunpack.c.l.b16 %v7862
    %v8432 = vunpack.c.h.b16 %v7862
    %v8433 = vunpack.c.l.b16 %v7863
    %v8434 = vunpack.c.h.b16 %v7863
    %v8435 = vunpack.c.l.b16 %v7864
    %v8436 = vunpack.c.h.b16 %v7864
    %v8437 = vunpack.c.l.b16 %v7865
    %v8438 = vunpack.c.h.b16 %v7865
    %v8439 = vunpack.c.l.b16 %v7866
    %v8440 = vunpack.c.h.b16 %v7866
    %v8441 = vunpack.c.l.b16 %v7867
    %v8442 = vunpack.c.h.b16 %v7867
    %v8443 = vunpack.c.l.b16 %v7868
    %v8444 = vunpack.c.h.b16 %v7868
    %v8445 = vunpack.c.l.b16 %v7869
    %v8446 = vunpack.c.h.b16 %v7869
    %v8447 = vunpack.c.l.b16 %v7870
    %v8448 = vunpack.c.h.b16 %v7870
    %v8449 = vunpack.c.l.b16 %v7871
    %v8450 = vunpack.c.h.b16 %v7871
    %v8451 = vunpack.c.l.b16 %v7872
    %v8452 = vunpack.c.h.b16 %v7872
    %v8453 = vunpack.c.l.b16 %v7873
    %v8454 = vunpack.c.h.b16 %v7873
    %v8455 = vunpack.c.l.b16 %v7874
    %v8456 = vunpack.c.h.b16 %v7874
    %v8457 = vunpack.c.l.b16 %v7875
    %v8458 = vunpack.c.h.b16 %v7875
    %v8459 = vunpack.c.l.b16 %v7876
    %v8460 = vunpack.c.h.b16 %v7876
    %v8461 = vunpack.c.l.b16 %v7877
    %v8462 = vunpack.c.h.b16 %v7877
    %v8463 = vunpack.c.l.b16 %v7878
    %v8464 = vunpack.c.h.b16 %v7878
    %v8465 = vunpack.c.l.b16 %v7879
    %v8466 = vunpack.c.h.b16 %v7879
    %v8467 = vunpack.c.l.b16 %v7880
    %v8468 = vunpack.c.h.b16 %v7880
    %v8469 = vunpack.c.l.b16 %v7881
    %v8470 = vunpack.c.h.b16 %v7881
    %v8471 = vunpack.c.l.b16 %v7882
    %v8472 = vunpack.c.h.b16 %v7882
    %v8473 = vunpack.c.l.b16 %v7883
    %v8474 = vunpack.c.h.b16 %v7883
    %v8475 = vunpack.c.l.b16 %v7884
    %v8476 = vunpack.c.h.b16 %v7884
    %v8477 = vunpack.c.l.b16 %v7885
    %v8478 = vunpack.c.h.b16 %v7885
    %v8479 = vunpack.c.l.b16 %v7886
    %v8480 = vunpack.c.h.b16 %v7886
    %v8481 = vunpack.c.l.b16 %v7887
    %v8482 = vunpack.c.h.b16 %v7887
    %v8483 = vunpack.c.l.b16 %v7888
    %v8484 = vunpack.c.h.b16 %v7888
    %v8485 = vunpack.c.l.b16 %v7889
    %v8486 = vunpack.c.h.b16 %v7889
    %v8487 = vunpack.c.l.b16 %v7890
    %v8488 = vunpack.c.h.b16 %v7890
    %v8489 = vunpack.c.l.b16 %v7891
    %v8490 = vunpack.c.h.b16 %v7891
    %v8491 = vunpack.c.l.b16 %v7892
    %v8492 = vunpack.c.h.b16 %v7892
    %v8493 = vunpack.c.l.b16 %v7893
    %v8494 = vunpack.c.h.b16 %v7893
    %v8495 = vunpack.c.l.b16 %v7894
    %v8496 = vunpack.c.h.b16 %v7894
    %v8497 = vunpack.c.l.b16 %v7895
    %v8498 = vunpack.c.h.b16 %v7895
    %v8499 = vunpack.c.l.b16 %v7896
    %v8500 = vunpack.c.h.b16 %v7896
    %v8501 = vunpack.c.l.b16 %v7897
    %v8502 = vunpack.c.h.b16 %v7897
    %v8503 = vunpack.c.l.b16 %v7898
    %v8504 = vunpack.c.h.b16 %v7898
    %v8505 = vunpack.c.l.b16 %v7899
    %v8506 = vunpack.c.h.b16 %v7899
    %v8507 = vunpack.c.l.b16 %v7900
    %v8508 = vunpack.c.h.b16 %v7900
    %v8509 = vunpack.c.l.b16 %v7901
    %v8510 = vunpack.c.h.b16 %v7901
    %v8511 = vunpack.c.l.b16 %v7902
    %v8512 = vunpack.c.h.b16 %v7902
    %v8513 = vunpack.c.l.b16 %v7903
    %v8514 = vunpack.c.h.b16 %v7903
    %v8515 = vunpack.c.l.b16 %v7904
    %v8516 = vunpack.c.h.b16 %v7904
    %v8517 = vunpack.c.l.b16 %v7905
    %v8518 = vunpack.c.h.b16 %v7905
    %v8519 = vunpack.c.l.b16 %v7906
    %v8520 = vunpack.c.h.b16 %v7906
    %v8521 = vunpack.c.l.b16 %v7907
    %v8522 = vunpack.c.h.b16 %v7907
    %v8523 = vunpack.c.l.b16 %v7908
    %v8524 = vunpack.c.h.b16 %v7908
    %v8525 = vunpack.c.l.b16 %v7909
    %v8526 = vunpack.c.h.b16 %v7909
    %v8527 = vunpack.c.l.b16 %v7910
    %v8528 = vunpack.c.h.b16 %v7910
    %v8529 = vunpack.c.l.b16 %v7911
    %v8530 = vunpack.c.h.b16 %v7911
    %v8531 = vunpack.c.l.b16 %v7912
    %v8532 = vunpack.c.h.b16 %v7912
    %v8533 = vunpack.c.l.b16 %v7913
    %v8534 = vunpack.c.h.b16 %v7913
    %v8535 = vunpack.c.l.b16 %v7914
    %v8536 = vunpack.c.h.b16 %v7914
    %v8537 = vunpack.c.l.b16 %v7915
    %v8538 = vunpack.c.h.b16 %v7915
    %v8539 = vunpack.c.l.b16 %v7916
    %v8540 = vunpack.c.h.b16 %v7916
    %v8541 = vunpack.c.l.b16 %v7917
    %v8542 = vunpack.c.h.b16 %v7917
    %v8543 = vunpack.c.l.b16 %v7918
    %v8544 = vunpack.c.h.b16 %v7918
    %v8545 = vunpack.c.l.b16 %v7919
    %v8546 = vunpack.c.h.b16 %v7919
    %v8547 = vunpack.c.l.b16 %v7920
    %v8548 = vunpack.c.h.b16 %v7920
    %v8549 = vunpack.c.l.b16 %v7921
    %v8550 = vunpack.c.h.b16 %v7921
    %v8551 = vunpack.c.l.b16 %v7922
    %v8552 = vunpack.c.h.b16 %v7922
    %v8553 = vunpack.c.l.b16 %v7923
    %v8554 = vunpack.c.h.b16 %v7923
    %v8555 = vunpack.c.l.b16 %v7924
    %v8556 = vunpack.c.h.b16 %v7924
    %v8557 = vunpack.c.l.b16 %v7925
    %v8558 = vunpack.c.h.b16 %v7925
    %v8559 = vunpack.c.l.b16 %v7926
    %v8560 = vunpack.c.h.b16 %v7926
    %v8561 = vunpack.c.l.b16 %v7927
    %v8562 = vunpack.c.h.b16 %v7927
    %v8563 = vunpack.c.l.b16 %v7928
    %v8564 = vunpack.c.h.b16 %v7928
    %v8565 = vunpack.c.l.b16 %v7929
    %v8566 = vunpack.c.h.b16 %v7929
    %v8567 = vunpack.c.l.b16 %v7930
    %v8568 = vunpack.c.h.b16 %v7930
    %v8569 = vunpack.c.l.b16 %v7931
    %v8570 = vunpack.c.h.b16 %v7931
    %v8571 = vunpack.c.l.b16 %v7932
    %v8572 = vunpack.c.h.b16 %v7932
    %v8573 = vunpack.c.l.b16 %v7933
    %v8574 = vunpack.c.h.b16 %v7933
    %v8575 = vunpack.c.l.b16 %v7934
    %v8576 = vunpack.c.h.b16 %v7934
    %v8577 = vunpack.c.l.b16 %v7935
    %v8578 = vunpack.c.h.b16 %v7935
    %v8579 = vunpack.c.l.b16 %v7936
    %v8580 = vunpack.c.h.b16 %v7936
    %v8581 = vunpack.c.l.b16 %v7937
    %v8582 = vunpack.c.h.b16 %v7937
    %v8583 = vunpack.c.l.b16 %v7938
    %v8584 = vunpack.c.h.b16 %v7938
    %v8585 = vunpack.c.l.b16 %v7939
    %v8586 = vunpack.c.h.b16 %v7939
    %v8587 = vunpack.c.l.b16 %v7940
    %v8588 = vunpack.c.h.b16 %v7940
    %v8589 = vunpack.c.l.b16 %v7941
    %v8590 = vunpack.c.h.b16 %v7941
    %v8591 = vunpack.c.l.b16 %v7942
    %v8592 = vunpack.c.h.b16 %v7942
    %v8593 = vunpack.c.l.b16 %v7943
    %v8594 = vunpack.c.h.b16 %v7943
    %v8595 = vunpack.c.l.b16 %v7944
    %v8596 = vunpack.c.h.b16 %v7944
    %8597 = vset.pattern.permute.xlu0 0
    %8598 = vperm.xlu0 %8597, %v8277
    %v8599 = vpop.permute.xlu0 %8598
    %8600 = vset.pattern.permute.xlu0 0
    %8601 = vperm.xlu0 %8600, %v8278
    %v8602 = vpop.permute.xlu0 %8601
    %8603 = vset.pattern.permute.xlu0 0
    %8604 = vperm.xlu0 %8603, %v8279
    %v8605 = vpop.permute.xlu0 %8604
    %8606 = vset.pattern.permute.xlu0 0
    %8607 = vperm.xlu0 %8606, %v8280
    %v8608 = vpop.permute.xlu0 %8607
    %8609 = vset.pattern.permute.xlu0 0
    %8610 = vperm.xlu0 %8609, %v8281
    %v8611 = vpop.permute.xlu0 %8610
    %8612 = vset.pattern.permute.xlu0 0
    %8613 = vperm.xlu0 %8612, %v8282
    %v8614 = vpop.permute.xlu0 %8613
    %8615 = vset.pattern.permute.xlu0 0
    %8616 = vperm.xlu0 %8615, %v8283
    %v8617 = vpop.permute.xlu0 %8616
    %8618 = vset.pattern.permute.xlu0 0
    %8619 = vperm.xlu0 %8618, %v8284
    %v8620 = vpop.permute.xlu0 %8619
    %8621 = vset.pattern.permute.xlu0 0
    %8622 = vperm.xlu0 %8621, %v8285
    %v8623 = vpop.permute.xlu0 %8622
    %8624 = vset.pattern.permute.xlu0 0
    %8625 = vperm.xlu0 %8624, %v8286
    %v8626 = vpop.permute.xlu0 %8625
    %8627 = vset.pattern.permute.xlu0 0
    %8628 = vperm.xlu0 %8627, %v8287
    %v8629 = vpop.permute.xlu0 %8628
    %8630 = vset.pattern.permute.xlu0 0
    %8631 = vperm.xlu0 %8630, %v8288
    %v8632 = vpop.permute.xlu0 %8631
    %8633 = vset.pattern.permute.xlu0 0
    %8634 = vperm.xlu0 %8633, %v8289
    %v8635 = vpop.permute.xlu0 %8634
    %8636 = vset.pattern.permute.xlu0 0
    %8637 = vperm.xlu0 %8636, %v8290
    %v8638 = vpop.permute.xlu0 %8637
    %8639 = vset.pattern.permute.xlu0 0
    %8640 = vperm.xlu0 %8639, %v8291
    %v8641 = vpop.permute.xlu0 %8640
    %8642 = vset.pattern.permute.xlu0 0
    %8643 = vperm.xlu0 %8642, %v8292
    %v8644 = vpop.permute.xlu0 %8643
    %8645 = vset.pattern.permute.xlu0 0
    %8646 = vperm.xlu0 %8645, %v8293
    %v8647 = vpop.permute.xlu0 %8646
    %8648 = vset.pattern.permute.xlu0 0
    %8649 = vperm.xlu0 %8648, %v8294
    %v8650 = vpop.permute.xlu0 %8649
    %8651 = vset.pattern.permute.xlu0 0
    %8652 = vperm.xlu0 %8651, %v8295
    %v8653 = vpop.permute.xlu0 %8652
    %8654 = vset.pattern.permute.xlu0 0
    %8655 = vperm.xlu0 %8654, %v8296
    %v8656 = vpop.permute.xlu0 %8655
    %8657 = vset.pattern.permute.xlu0 0
    %8658 = vperm.xlu0 %8657, %v8297
    %v8659 = vpop.permute.xlu0 %8658
    %8660 = vset.pattern.permute.xlu0 0
    %8661 = vperm.xlu0 %8660, %v8298
    %v8662 = vpop.permute.xlu0 %8661
    %8663 = vset.pattern.permute.xlu0 0
    %8664 = vperm.xlu0 %8663, %v8299
    %v8665 = vpop.permute.xlu0 %8664
    %8666 = vset.pattern.permute.xlu0 0
    %8667 = vperm.xlu0 %8666, %v8300
    %v8668 = vpop.permute.xlu0 %8667
    %8669 = vset.pattern.permute.xlu0 0
    %8670 = vperm.xlu0 %8669, %v8301
    %v8671 = vpop.permute.xlu0 %8670
    %8672 = vset.pattern.permute.xlu0 0
    %8673 = vperm.xlu0 %8672, %v8302
    %v8674 = vpop.permute.xlu0 %8673
    %8675 = vset.pattern.permute.xlu0 0
    %8676 = vperm.xlu0 %8675, %v8303
    %v8677 = vpop.permute.xlu0 %8676
    %8678 = vset.pattern.permute.xlu0 0
    %8679 = vperm.xlu0 %8678, %v8304
    %v8680 = vpop.permute.xlu0 %8679
    %8681 = vset.pattern.permute.xlu0 0
    %8682 = vperm.xlu0 %8681, %v8305
    %v8683 = vpop.permute.xlu0 %8682
    %8684 = vset.pattern.permute.xlu0 0
    %8685 = vperm.xlu0 %8684, %v8306
    %v8686 = vpop.permute.xlu0 %8685
    %8687 = vset.pattern.permute.xlu0 0
    %8688 = vperm.xlu0 %8687, %v8307
    %v8689 = vpop.permute.xlu0 %8688
    %8690 = vset.pattern.permute.xlu0 0
    %8691 = vperm.xlu0 %8690, %v8308
    %v8692 = vpop.permute.xlu0 %8691
    %8693 = vset.pattern.permute.xlu0 0
    %8694 = vperm.xlu0 %8693, %v8309
    %v8695 = vpop.permute.xlu0 %8694
    %8696 = vset.pattern.permute.xlu0 0
    %8697 = vperm.xlu0 %8696, %v8310
    %v8698 = vpop.permute.xlu0 %8697
    %8699 = vset.pattern.permute.xlu0 0
    %8700 = vperm.xlu0 %8699, %v8311
    %v8701 = vpop.permute.xlu0 %8700
    %8702 = vset.pattern.permute.xlu0 0
    %8703 = vperm.xlu0 %8702, %v8312
    %v8704 = vpop.permute.xlu0 %8703
    %8705 = vset.pattern.permute.xlu0 0
    %8706 = vperm.xlu0 %8705, %v8313
    %v8707 = vpop.permute.xlu0 %8706
    %8708 = vset.pattern.permute.xlu0 0
    %8709 = vperm.xlu0 %8708, %v8314
    %v8710 = vpop.permute.xlu0 %8709
    %8711 = vset.pattern.permute.xlu0 0
    %8712 = vperm.xlu0 %8711, %v8315
    %v8713 = vpop.permute.xlu0 %8712
    %8714 = vset.pattern.permute.xlu0 0
    %8715 = vperm.xlu0 %8714, %v8316
    %v8716 = vpop.permute.xlu0 %8715
    %8717 = vset.pattern.permute.xlu0 0
    %8718 = vperm.xlu0 %8717, %v8317
    %v8719 = vpop.permute.xlu0 %8718
    %8720 = vset.pattern.permute.xlu0 0
    %8721 = vperm.xlu0 %8720, %v8318
    %v8722 = vpop.permute.xlu0 %8721
    %8723 = vset.pattern.permute.xlu0 0
    %8724 = vperm.xlu0 %8723, %v8319
    %v8725 = vpop.permute.xlu0 %8724
    %8726 = vset.pattern.permute.xlu0 0
    %8727 = vperm.xlu0 %8726, %v8320
    %v8728 = vpop.permute.xlu0 %8727
    %8729 = vset.pattern.permute.xlu0 0
    %8730 = vperm.xlu0 %8729, %v8321
    %v8731 = vpop.permute.xlu0 %8730
    %8732 = vset.pattern.permute.xlu0 0
    %8733 = vperm.xlu0 %8732, %v8322
    %v8734 = vpop.permute.xlu0 %8733
    %8735 = vset.pattern.permute.xlu0 0
    %8736 = vperm.xlu0 %8735, %v8323
    %v8737 = vpop.permute.xlu0 %8736
    %8738 = vset.pattern.permute.xlu0 0
    %8739 = vperm.xlu0 %8738, %v8324
    %v8740 = vpop.permute.xlu0 %8739
    %8741 = vset.pattern.permute.xlu0 0
    %8742 = vperm.xlu0 %8741, %v8325
    %v8743 = vpop.permute.xlu0 %8742
    %8744 = vset.pattern.permute.xlu0 0
    %8745 = vperm.xlu0 %8744, %v8326
    %v8746 = vpop.permute.xlu0 %8745
    %8747 = vset.pattern.permute.xlu0 0
    %8748 = vperm.xlu0 %8747, %v8327
    %v8749 = vpop.permute.xlu0 %8748
    %8750 = vset.pattern.permute.xlu0 0
    %8751 = vperm.xlu0 %8750, %v8328
    %v8752 = vpop.permute.xlu0 %8751
    %8753 = vset.pattern.permute.xlu0 0
    %8754 = vperm.xlu0 %8753, %v8329
    %v8755 = vpop.permute.xlu0 %8754
    %8756 = vset.pattern.permute.xlu0 0
    %8757 = vperm.xlu0 %8756, %v8330
    %v8758 = vpop.permute.xlu0 %8757
    %8759 = vset.pattern.permute.xlu0 0
    %8760 = vperm.xlu0 %8759, %v8331
    %v8761 = vpop.permute.xlu0 %8760
    %8762 = vset.pattern.permute.xlu0 0
    %8763 = vperm.xlu0 %8762, %v8332
    %v8764 = vpop.permute.xlu0 %8763
    %8765 = vset.pattern.permute.xlu0 0
    %8766 = vperm.xlu0 %8765, %v8333
    %v8767 = vpop.permute.xlu0 %8766
    %8768 = vset.pattern.permute.xlu0 0
    %8769 = vperm.xlu0 %8768, %v8334
    %v8770 = vpop.permute.xlu0 %8769
    %8771 = vset.pattern.permute.xlu0 0
    %8772 = vperm.xlu0 %8771, %v8335
    %v8773 = vpop.permute.xlu0 %8772
    %8774 = vset.pattern.permute.xlu0 0
    %8775 = vperm.xlu0 %8774, %v8336
    %v8776 = vpop.permute.xlu0 %8775
    %8777 = vset.pattern.permute.xlu0 0
    %8778 = vperm.xlu0 %8777, %v8337
    %v8779 = vpop.permute.xlu0 %8778
    %8780 = vset.pattern.permute.xlu0 0
    %8781 = vperm.xlu0 %8780, %v8338
    %v8782 = vpop.permute.xlu0 %8781
    %8783 = vset.pattern.permute.xlu0 0
    %8784 = vperm.xlu0 %8783, %v8339
    %v8785 = vpop.permute.xlu0 %8784
    %8786 = vset.pattern.permute.xlu0 0
    %8787 = vperm.xlu0 %8786, %v8340
    %v8788 = vpop.permute.xlu0 %8787
    %8789 = vset.pattern.permute.xlu0 0
    %8790 = vperm.xlu0 %8789, %v8341
    %v8791 = vpop.permute.xlu0 %8790
    %8792 = vset.pattern.permute.xlu0 0
    %8793 = vperm.xlu0 %8792, %v8342
    %v8794 = vpop.permute.xlu0 %8793
    %8795 = vset.pattern.permute.xlu0 0
    %8796 = vperm.xlu0 %8795, %v8343
    %v8797 = vpop.permute.xlu0 %8796
    %8798 = vset.pattern.permute.xlu0 0
    %8799 = vperm.xlu0 %8798, %v8344
    %v8800 = vpop.permute.xlu0 %8799
    %8801 = vset.pattern.permute.xlu0 0
    %8802 = vperm.xlu0 %8801, %v8345
    %v8803 = vpop.permute.xlu0 %8802
    %8804 = vset.pattern.permute.xlu0 0
    %8805 = vperm.xlu0 %8804, %v8346
    %v8806 = vpop.permute.xlu0 %8805
    %8807 = vset.pattern.permute.xlu0 0
    %8808 = vperm.xlu0 %8807, %v8347
    %v8809 = vpop.permute.xlu0 %8808
    %8810 = vset.pattern.permute.xlu0 0
    %8811 = vperm.xlu0 %8810, %v8348
    %v8812 = vpop.permute.xlu0 %8811
    %8813 = vset.pattern.permute.xlu0 0
    %8814 = vperm.xlu0 %8813, %v8349
    %v8815 = vpop.permute.xlu0 %8814
    %8816 = vset.pattern.permute.xlu0 0
    %8817 = vperm.xlu0 %8816, %v8350
    %v8818 = vpop.permute.xlu0 %8817
    %8819 = vset.pattern.permute.xlu0 0
    %8820 = vperm.xlu0 %8819, %v8351
    %v8821 = vpop.permute.xlu0 %8820
    %8822 = vset.pattern.permute.xlu0 0
    %8823 = vperm.xlu0 %8822, %v8352
    %v8824 = vpop.permute.xlu0 %8823
    %8825 = vset.pattern.permute.xlu0 0
    %8826 = vperm.xlu0 %8825, %v8353
    %v8827 = vpop.permute.xlu0 %8826
    %8828 = vset.pattern.permute.xlu0 0
    %8829 = vperm.xlu0 %8828, %v8354
    %v8830 = vpop.permute.xlu0 %8829
    %8831 = vset.pattern.permute.xlu0 0
    %8832 = vperm.xlu0 %8831, %v8355
    %v8833 = vpop.permute.xlu0 %8832
    %8834 = vset.pattern.permute.xlu0 0
    %8835 = vperm.xlu0 %8834, %v8356
    %v8836 = vpop.permute.xlu0 %8835
    %8837 = vset.pattern.permute.xlu0 0
    %8838 = vperm.xlu0 %8837, %v8357
    %v8839 = vpop.permute.xlu0 %8838
    %8840 = vset.pattern.permute.xlu0 0
    %8841 = vperm.xlu0 %8840, %v8358
    %v8842 = vpop.permute.xlu0 %8841
    %8843 = vset.pattern.permute.xlu0 0
    %8844 = vperm.xlu0 %8843, %v8359
    %v8845 = vpop.permute.xlu0 %8844
    %8846 = vset.pattern.permute.xlu0 0
    %8847 = vperm.xlu0 %8846, %v8360
    %v8848 = vpop.permute.xlu0 %8847
    %8849 = vset.pattern.permute.xlu0 0
    %8850 = vperm.xlu0 %8849, %v8361
    %v8851 = vpop.permute.xlu0 %8850
    %8852 = vset.pattern.permute.xlu0 0
    %8853 = vperm.xlu0 %8852, %v8362
    %v8854 = vpop.permute.xlu0 %8853
    %8855 = vset.pattern.permute.xlu0 0
    %8856 = vperm.xlu0 %8855, %v8363
    %v8857 = vpop.permute.xlu0 %8856
    %8858 = vset.pattern.permute.xlu0 0
    %8859 = vperm.xlu0 %8858, %v8364
    %v8860 = vpop.permute.xlu0 %8859
    %8861 = vset.pattern.permute.xlu0 0
    %8862 = vperm.xlu0 %8861, %v8365
    %v8863 = vpop.permute.xlu0 %8862
    %8864 = vset.pattern.permute.xlu0 0
    %8865 = vperm.xlu0 %8864, %v8366
    %v8866 = vpop.permute.xlu0 %8865
    %8867 = vset.pattern.permute.xlu0 0
    %8868 = vperm.xlu0 %8867, %v8367
    %v8869 = vpop.permute.xlu0 %8868
    %8870 = vset.pattern.permute.xlu0 0
    %8871 = vperm.xlu0 %8870, %v8368
    %v8872 = vpop.permute.xlu0 %8871
    %8873 = vset.pattern.permute.xlu0 0
    %8874 = vperm.xlu0 %8873, %v8369
    %v8875 = vpop.permute.xlu0 %8874
    %8876 = vset.pattern.permute.xlu0 0
    %8877 = vperm.xlu0 %8876, %v8370
    %v8878 = vpop.permute.xlu0 %8877
    %8879 = vset.pattern.permute.xlu0 0
    %8880 = vperm.xlu0 %8879, %v8371
    %v8881 = vpop.permute.xlu0 %8880
    %8882 = vset.pattern.permute.xlu0 0
    %8883 = vperm.xlu0 %8882, %v8372
    %v8884 = vpop.permute.xlu0 %8883
    %8885 = vset.pattern.permute.xlu0 0
    %8886 = vperm.xlu0 %8885, %v8373
    %v8887 = vpop.permute.xlu0 %8886
    %8888 = vset.pattern.permute.xlu0 0
    %8889 = vperm.xlu0 %8888, %v8374
    %v8890 = vpop.permute.xlu0 %8889
    %8891 = vset.pattern.permute.xlu0 0
    %8892 = vperm.xlu0 %8891, %v8375
    %v8893 = vpop.permute.xlu0 %8892
    %8894 = vset.pattern.permute.xlu0 0
    %8895 = vperm.xlu0 %8894, %v8376
    %v8896 = vpop.permute.xlu0 %8895
    %8897 = vset.pattern.permute.xlu0 0
    %8898 = vperm.xlu0 %8897, %v8377
    %v8899 = vpop.permute.xlu0 %8898
    %8900 = vset.pattern.permute.xlu0 0
    %8901 = vperm.xlu0 %8900, %v8378
    %v8902 = vpop.permute.xlu0 %8901
    %8903 = vset.pattern.permute.xlu0 0
    %8904 = vperm.xlu0 %8903, %v8379
    %v8905 = vpop.permute.xlu0 %8904
    %8906 = vset.pattern.permute.xlu0 0
    %8907 = vperm.xlu0 %8906, %v8380
    %v8908 = vpop.permute.xlu0 %8907
    %8909 = vset.pattern.permute.xlu0 0
    %8910 = vperm.xlu0 %8909, %v8381
    %v8911 = vpop.permute.xlu0 %8910
    %8912 = vset.pattern.permute.xlu0 0
    %8913 = vperm.xlu0 %8912, %v8382
    %v8914 = vpop.permute.xlu0 %8913
    %8915 = vset.pattern.permute.xlu0 0
    %8916 = vperm.xlu0 %8915, %v8383
    %v8917 = vpop.permute.xlu0 %8916
    %8918 = vset.pattern.permute.xlu0 0
    %8919 = vperm.xlu0 %8918, %v8384
    %v8920 = vpop.permute.xlu0 %8919
    %8921 = vset.pattern.permute.xlu0 0
    %8922 = vperm.xlu0 %8921, %v8385
    %v8923 = vpop.permute.xlu0 %8922
    %8924 = vset.pattern.permute.xlu0 0
    %8925 = vperm.xlu0 %8924, %v8386
    %v8926 = vpop.permute.xlu0 %8925
    %8927 = vset.pattern.permute.xlu0 0
    %8928 = vperm.xlu0 %8927, %v8387
    %v8929 = vpop.permute.xlu0 %8928
    %8930 = vset.pattern.permute.xlu0 0
    %8931 = vperm.xlu0 %8930, %v8388
    %v8932 = vpop.permute.xlu0 %8931
    %8933 = vset.pattern.permute.xlu0 0
    %8934 = vperm.xlu0 %8933, %v8389
    %v8935 = vpop.permute.xlu0 %8934
    %8936 = vset.pattern.permute.xlu0 0
    %8937 = vperm.xlu0 %8936, %v8390
    %v8938 = vpop.permute.xlu0 %8937
    %8939 = vset.pattern.permute.xlu0 0
    %8940 = vperm.xlu0 %8939, %v8391
    %v8941 = vpop.permute.xlu0 %8940
    %8942 = vset.pattern.permute.xlu0 0
    %8943 = vperm.xlu0 %8942, %v8392
    %v8944 = vpop.permute.xlu0 %8943
    %8945 = vset.pattern.permute.xlu0 0
    %8946 = vperm.xlu0 %8945, %v8393
    %v8947 = vpop.permute.xlu0 %8946
    %8948 = vset.pattern.permute.xlu0 0
    %8949 = vperm.xlu0 %8948, %v8394
    %v8950 = vpop.permute.xlu0 %8949
    %8951 = vset.pattern.permute.xlu0 0
    %8952 = vperm.xlu0 %8951, %v8395
    %v8953 = vpop.permute.xlu0 %8952
    %8954 = vset.pattern.permute.xlu0 0
    %8955 = vperm.xlu0 %8954, %v8396
    %v8956 = vpop.permute.xlu0 %8955
    %8957 = vset.pattern.permute.xlu0 0
    %8958 = vperm.xlu0 %8957, %v8397
    %v8959 = vpop.permute.xlu0 %8958
    %8960 = vset.pattern.permute.xlu0 0
    %8961 = vperm.xlu0 %8960, %v8398
    %v8962 = vpop.permute.xlu0 %8961
    %8963 = vset.pattern.permute.xlu0 0
    %8964 = vperm.xlu0 %8963, %v8399
    %v8965 = vpop.permute.xlu0 %8964
    %8966 = vset.pattern.permute.xlu0 0
    %8967 = vperm.xlu0 %8966, %v8400
    %v8968 = vpop.permute.xlu0 %8967
    %8969 = vset.pattern.permute.xlu0 0
    %8970 = vperm.xlu0 %8969, %v8401
    %v8971 = vpop.permute.xlu0 %8970
    %8972 = vset.pattern.permute.xlu0 0
    %8973 = vperm.xlu0 %8972, %v8402
    %v8974 = vpop.permute.xlu0 %8973
    %8975 = vset.pattern.permute.xlu0 0
    %8976 = vperm.xlu0 %8975, %v8403
    %v8977 = vpop.permute.xlu0 %8976
    %8978 = vset.pattern.permute.xlu0 0
    %8979 = vperm.xlu0 %8978, %v8404
    %v8980 = vpop.permute.xlu0 %8979
    %8981 = vset.pattern.permute.xlu0 0
    %8982 = vperm.xlu0 %8981, %v8405
    %v8983 = vpop.permute.xlu0 %8982
    %8984 = vset.pattern.permute.xlu0 0
    %8985 = vperm.xlu0 %8984, %v8406
    %v8986 = vpop.permute.xlu0 %8985
    %8987 = vset.pattern.permute.xlu0 0
    %8988 = vperm.xlu0 %8987, %v8407
    %v8989 = vpop.permute.xlu0 %8988
    %8990 = vset.pattern.permute.xlu0 0
    %8991 = vperm.xlu0 %8990, %v8408
    %v8992 = vpop.permute.xlu0 %8991
    %8993 = vset.pattern.permute.xlu0 0
    %8994 = vperm.xlu0 %8993, %v8409
    %v8995 = vpop.permute.xlu0 %8994
    %8996 = vset.pattern.permute.xlu0 0
    %8997 = vperm.xlu0 %8996, %v8410
    %v8998 = vpop.permute.xlu0 %8997
    %8999 = vset.pattern.permute.xlu0 0
    %9000 = vperm.xlu0 %8999, %v8411
    %v9001 = vpop.permute.xlu0 %9000
    %9002 = vset.pattern.permute.xlu0 0
    %9003 = vperm.xlu0 %9002, %v8412
    %v9004 = vpop.permute.xlu0 %9003
    %9005 = vset.pattern.permute.xlu0 0
    %9006 = vperm.xlu0 %9005, %v8413
    %v9007 = vpop.permute.xlu0 %9006
    %9008 = vset.pattern.permute.xlu0 0
    %9009 = vperm.xlu0 %9008, %v8414
    %v9010 = vpop.permute.xlu0 %9009
    %9011 = vset.pattern.permute.xlu0 0
    %9012 = vperm.xlu0 %9011, %v8415
    %v9013 = vpop.permute.xlu0 %9012
    %9014 = vset.pattern.permute.xlu0 0
    %9015 = vperm.xlu0 %9014, %v8416
    %v9016 = vpop.permute.xlu0 %9015
    %9017 = vset.pattern.permute.xlu0 0
    %9018 = vperm.xlu0 %9017, %v8417
    %v9019 = vpop.permute.xlu0 %9018
    %9020 = vset.pattern.permute.xlu0 0
    %9021 = vperm.xlu0 %9020, %v8418
    %v9022 = vpop.permute.xlu0 %9021
    %9023 = vset.pattern.permute.xlu0 0
    %9024 = vperm.xlu0 %9023, %v8419
    %v9025 = vpop.permute.xlu0 %9024
    %9026 = vset.pattern.permute.xlu0 0
    %9027 = vperm.xlu0 %9026, %v8420
    %v9028 = vpop.permute.xlu0 %9027
    %9029 = vset.pattern.permute.xlu0 0
    %9030 = vperm.xlu0 %9029, %v8421
    %v9031 = vpop.permute.xlu0 %9030
    %9032 = vset.pattern.permute.xlu0 0
    %9033 = vperm.xlu0 %9032, %v8422
    %v9034 = vpop.permute.xlu0 %9033
    %9035 = vset.pattern.permute.xlu0 0
    %9036 = vperm.xlu0 %9035, %v8423
    %v9037 = vpop.permute.xlu0 %9036
    %9038 = vset.pattern.permute.xlu0 0
    %9039 = vperm.xlu0 %9038, %v8424
    %v9040 = vpop.permute.xlu0 %9039
    %9041 = vset.pattern.permute.xlu0 0
    %9042 = vperm.xlu0 %9041, %v8425
    %v9043 = vpop.permute.xlu0 %9042
    %9044 = vset.pattern.permute.xlu0 0
    %9045 = vperm.xlu0 %9044, %v8426
    %v9046 = vpop.permute.xlu0 %9045
    %9047 = vset.pattern.permute.xlu0 0
    %9048 = vperm.xlu0 %9047, %v8427
    %v9049 = vpop.permute.xlu0 %9048
    %9050 = vset.pattern.permute.xlu0 0
    %9051 = vperm.xlu0 %9050, %v8428
    %v9052 = vpop.permute.xlu0 %9051
    %9053 = vset.pattern.permute.xlu0 0
    %9054 = vperm.xlu0 %9053, %v8429
    %v9055 = vpop.permute.xlu0 %9054
    %9056 = vset.pattern.permute.xlu0 0
    %9057 = vperm.xlu0 %9056, %v8430
    %v9058 = vpop.permute.xlu0 %9057
    %9059 = vset.pattern.permute.xlu0 0
    %9060 = vperm.xlu0 %9059, %v8431
    %v9061 = vpop.permute.xlu0 %9060
    %9062 = vset.pattern.permute.xlu0 0
    %9063 = vperm.xlu0 %9062, %v8432
    %v9064 = vpop.permute.xlu0 %9063
    %9065 = vset.pattern.permute.xlu0 0
    %9066 = vperm.xlu0 %9065, %v8433
    %v9067 = vpop.permute.xlu0 %9066
    %9068 = vset.pattern.permute.xlu0 0
    %9069 = vperm.xlu0 %9068, %v8434
    %v9070 = vpop.permute.xlu0 %9069
    %9071 = vset.pattern.permute.xlu0 0
    %9072 = vperm.xlu0 %9071, %v8435
    %v9073 = vpop.permute.xlu0 %9072
    %9074 = vset.pattern.permute.xlu0 0
    %9075 = vperm.xlu0 %9074, %v8436
    %v9076 = vpop.permute.xlu0 %9075
    %9077 = vset.pattern.permute.xlu0 0
    %9078 = vperm.xlu0 %9077, %v8437
    %v9079 = vpop.permute.xlu0 %9078
    %9080 = vset.pattern.permute.xlu0 0
    %9081 = vperm.xlu0 %9080, %v8438
    %v9082 = vpop.permute.xlu0 %9081
    %9083 = vset.pattern.permute.xlu0 0
    %9084 = vperm.xlu0 %9083, %v8439
    %v9085 = vpop.permute.xlu0 %9084
    %9086 = vset.pattern.permute.xlu0 0
    %9087 = vperm.xlu0 %9086, %v8440
    %v9088 = vpop.permute.xlu0 %9087
    %9089 = vset.pattern.permute.xlu0 0
    %9090 = vperm.xlu0 %9089, %v8441
    %v9091 = vpop.permute.xlu0 %9090
    %9092 = vset.pattern.permute.xlu0 0
    %9093 = vperm.xlu0 %9092, %v8442
    %v9094 = vpop.permute.xlu0 %9093
    %9095 = vset.pattern.permute.xlu0 0
    %9096 = vperm.xlu0 %9095, %v8443
    %v9097 = vpop.permute.xlu0 %9096
    %9098 = vset.pattern.permute.xlu0 0
    %9099 = vperm.xlu0 %9098, %v8444
    %v9100 = vpop.permute.xlu0 %9099
    %9101 = vset.pattern.permute.xlu0 0
    %9102 = vperm.xlu0 %9101, %v8445
    %v9103 = vpop.permute.xlu0 %9102
    %9104 = vset.pattern.permute.xlu0 0
    %9105 = vperm.xlu0 %9104, %v8446
    %v9106 = vpop.permute.xlu0 %9105
    %9107 = vset.pattern.permute.xlu0 0
    %9108 = vperm.xlu0 %9107, %v8447
    %v9109 = vpop.permute.xlu0 %9108
    %9110 = vset.pattern.permute.xlu0 0
    %9111 = vperm.xlu0 %9110, %v8448
    %v9112 = vpop.permute.xlu0 %9111
    %9113 = vset.pattern.permute.xlu0 0
    %9114 = vperm.xlu0 %9113, %v8449
    %v9115 = vpop.permute.xlu0 %9114
    %9116 = vset.pattern.permute.xlu0 0
    %9117 = vperm.xlu0 %9116, %v8450
    %v9118 = vpop.permute.xlu0 %9117
    %9119 = vset.pattern.permute.xlu0 0
    %9120 = vperm.xlu0 %9119, %v8451
    %v9121 = vpop.permute.xlu0 %9120
    %9122 = vset.pattern.permute.xlu0 0
    %9123 = vperm.xlu0 %9122, %v8452
    %v9124 = vpop.permute.xlu0 %9123
    %9125 = vset.pattern.permute.xlu0 0
    %9126 = vperm.xlu0 %9125, %v8453
    %v9127 = vpop.permute.xlu0 %9126
    %9128 = vset.pattern.permute.xlu0 0
    %9129 = vperm.xlu0 %9128, %v8454
    %v9130 = vpop.permute.xlu0 %9129
    %9131 = vset.pattern.permute.xlu0 0
    %9132 = vperm.xlu0 %9131, %v8455
    %v9133 = vpop.permute.xlu0 %9132
    %9134 = vset.pattern.permute.xlu0 0
    %9135 = vperm.xlu0 %9134, %v8456
    %v9136 = vpop.permute.xlu0 %9135
    %9137 = vset.pattern.permute.xlu0 0
    %9138 = vperm.xlu0 %9137, %v8457
    %v9139 = vpop.permute.xlu0 %9138
    %9140 = vset.pattern.permute.xlu0 0
    %9141 = vperm.xlu0 %9140, %v8458
    %v9142 = vpop.permute.xlu0 %9141
    %9143 = vset.pattern.permute.xlu0 0
    %9144 = vperm.xlu0 %9143, %v8459
    %v9145 = vpop.permute.xlu0 %9144
    %9146 = vset.pattern.permute.xlu0 0
    %9147 = vperm.xlu0 %9146, %v8460
    %v9148 = vpop.permute.xlu0 %9147
    %9149 = vset.pattern.permute.xlu0 0
    %9150 = vperm.xlu0 %9149, %v8461
    %v9151 = vpop.permute.xlu0 %9150
    %9152 = vset.pattern.permute.xlu0 0
    %9153 = vperm.xlu0 %9152, %v8462
    %v9154 = vpop.permute.xlu0 %9153
    %9155 = vset.pattern.permute.xlu0 0
    %9156 = vperm.xlu0 %9155, %v8463
    %v9157 = vpop.permute.xlu0 %9156
    %9158 = vset.pattern.permute.xlu0 0
    %9159 = vperm.xlu0 %9158, %v8464
    %v9160 = vpop.permute.xlu0 %9159
    %9161 = vset.pattern.permute.xlu0 0
    %9162 = vperm.xlu0 %9161, %v8465
    %v9163 = vpop.permute.xlu0 %9162
    %9164 = vset.pattern.permute.xlu0 0
    %9165 = vperm.xlu0 %9164, %v8466
    %v9166 = vpop.permute.xlu0 %9165
    %9167 = vset.pattern.permute.xlu0 0
    %9168 = vperm.xlu0 %9167, %v8467
    %v9169 = vpop.permute.xlu0 %9168
    %9170 = vset.pattern.permute.xlu0 0
    %9171 = vperm.xlu0 %9170, %v8468
    %v9172 = vpop.permute.xlu0 %9171
    %9173 = vset.pattern.permute.xlu0 0
    %9174 = vperm.xlu0 %9173, %v8469
    %v9175 = vpop.permute.xlu0 %9174
    %9176 = vset.pattern.permute.xlu0 0
    %9177 = vperm.xlu0 %9176, %v8470
    %v9178 = vpop.permute.xlu0 %9177
    %9179 = vset.pattern.permute.xlu0 0
    %9180 = vperm.xlu0 %9179, %v8471
    %v9181 = vpop.permute.xlu0 %9180
    %9182 = vset.pattern.permute.xlu0 0
    %9183 = vperm.xlu0 %9182, %v8472
    %v9184 = vpop.permute.xlu0 %9183
    %9185 = vset.pattern.permute.xlu0 0
    %9186 = vperm.xlu0 %9185, %v8473
    %v9187 = vpop.permute.xlu0 %9186
    %9188 = vset.pattern.permute.xlu0 0
    %9189 = vperm.xlu0 %9188, %v8474
    %v9190 = vpop.permute.xlu0 %9189
    %9191 = vset.pattern.permute.xlu0 0
    %9192 = vperm.xlu0 %9191, %v8475
    %v9193 = vpop.permute.xlu0 %9192
    %9194 = vset.pattern.permute.xlu0 0
    %9195 = vperm.xlu0 %9194, %v8476
    %v9196 = vpop.permute.xlu0 %9195
    %9197 = vset.pattern.permute.xlu0 0
    %9198 = vperm.xlu0 %9197, %v8477
    %v9199 = vpop.permute.xlu0 %9198
    %9200 = vset.pattern.permute.xlu0 0
    %9201 = vperm.xlu0 %9200, %v8478
    %v9202 = vpop.permute.xlu0 %9201
    %9203 = vset.pattern.permute.xlu0 0
    %9204 = vperm.xlu0 %9203, %v8479
    %v9205 = vpop.permute.xlu0 %9204
    %9206 = vset.pattern.permute.xlu0 0
    %9207 = vperm.xlu0 %9206, %v8480
    %v9208 = vpop.permute.xlu0 %9207
    %9209 = vset.pattern.permute.xlu0 0
    %9210 = vperm.xlu0 %9209, %v8481
    %v9211 = vpop.permute.xlu0 %9210
    %9212 = vset.pattern.permute.xlu0 0
    %9213 = vperm.xlu0 %9212, %v8482
    %v9214 = vpop.permute.xlu0 %9213
    %9215 = vset.pattern.permute.xlu0 0
    %9216 = vperm.xlu0 %9215, %v8483
    %v9217 = vpop.permute.xlu0 %9216
    %9218 = vset.pattern.permute.xlu0 0
    %9219 = vperm.xlu0 %9218, %v8484
    %v9220 = vpop.permute.xlu0 %9219
    %9221 = vset.pattern.permute.xlu0 0
    %9222 = vperm.xlu0 %9221, %v8485
    %v9223 = vpop.permute.xlu0 %9222
    %9224 = vset.pattern.permute.xlu0 0
    %9225 = vperm.xlu0 %9224, %v8486
    %v9226 = vpop.permute.xlu0 %9225
    %9227 = vset.pattern.permute.xlu0 0
    %9228 = vperm.xlu0 %9227, %v8487
    %v9229 = vpop.permute.xlu0 %9228
    %9230 = vset.pattern.permute.xlu0 0
    %9231 = vperm.xlu0 %9230, %v8488
    %v9232 = vpop.permute.xlu0 %9231
    %9233 = vset.pattern.permute.xlu0 0
    %9234 = vperm.xlu0 %9233, %v8489
    %v9235 = vpop.permute.xlu0 %9234
    %9236 = vset.pattern.permute.xlu0 0
    %9237 = vperm.xlu0 %9236, %v8490
    %v9238 = vpop.permute.xlu0 %9237
    %9239 = vset.pattern.permute.xlu0 0
    %9240 = vperm.xlu0 %9239, %v8491
    %v9241 = vpop.permute.xlu0 %9240
    %9242 = vset.pattern.permute.xlu0 0
    %9243 = vperm.xlu0 %9242, %v8492
    %v9244 = vpop.permute.xlu0 %9243
    %9245 = vset.pattern.permute.xlu0 0
    %9246 = vperm.xlu0 %9245, %v8493
    %v9247 = vpop.permute.xlu0 %9246
    %9248 = vset.pattern.permute.xlu0 0
    %9249 = vperm.xlu0 %9248, %v8494
    %v9250 = vpop.permute.xlu0 %9249
    %9251 = vset.pattern.permute.xlu0 0
    %9252 = vperm.xlu0 %9251, %v8495
    %v9253 = vpop.permute.xlu0 %9252
    %9254 = vset.pattern.permute.xlu0 0
    %9255 = vperm.xlu0 %9254, %v8496
    %v9256 = vpop.permute.xlu0 %9255
    %9257 = vset.pattern.permute.xlu0 0
    %9258 = vperm.xlu0 %9257, %v8497
    %v9259 = vpop.permute.xlu0 %9258
    %9260 = vset.pattern.permute.xlu0 0
    %9261 = vperm.xlu0 %9260, %v8498
    %v9262 = vpop.permute.xlu0 %9261
    %9263 = vset.pattern.permute.xlu0 0
    %9264 = vperm.xlu0 %9263, %v8499
    %v9265 = vpop.permute.xlu0 %9264
    %9266 = vset.pattern.permute.xlu0 0
    %9267 = vperm.xlu0 %9266, %v8500
    %v9268 = vpop.permute.xlu0 %9267
    %9269 = vset.pattern.permute.xlu0 0
    %9270 = vperm.xlu0 %9269, %v8501
    %v9271 = vpop.permute.xlu0 %9270
    %9272 = vset.pattern.permute.xlu0 0
    %9273 = vperm.xlu0 %9272, %v8502
    %v9274 = vpop.permute.xlu0 %9273
    %9275 = vset.pattern.permute.xlu0 0
    %9276 = vperm.xlu0 %9275, %v8503
    %v9277 = vpop.permute.xlu0 %9276
    %9278 = vset.pattern.permute.xlu0 0
    %9279 = vperm.xlu0 %9278, %v8504
    %v9280 = vpop.permute.xlu0 %9279
    %9281 = vset.pattern.permute.xlu0 0
    %9282 = vperm.xlu0 %9281, %v8505
    %v9283 = vpop.permute.xlu0 %9282
    %9284 = vset.pattern.permute.xlu0 0
    %9285 = vperm.xlu0 %9284, %v8506
    %v9286 = vpop.permute.xlu0 %9285
    %9287 = vset.pattern.permute.xlu0 0
    %9288 = vperm.xlu0 %9287, %v8507
    %v9289 = vpop.permute.xlu0 %9288
    %9290 = vset.pattern.permute.xlu0 0
    %9291 = vperm.xlu0 %9290, %v8508
    %v9292 = vpop.permute.xlu0 %9291
    %9293 = vset.pattern.permute.xlu0 0
    %9294 = vperm.xlu0 %9293, %v8509
    %v9295 = vpop.permute.xlu0 %9294
    %9296 = vset.pattern.permute.xlu0 0
    %9297 = vperm.xlu0 %9296, %v8510
    %v9298 = vpop.permute.xlu0 %9297
    %9299 = vset.pattern.permute.xlu0 0
    %9300 = vperm.xlu0 %9299, %v8511
    %v9301 = vpop.permute.xlu0 %9300
    %9302 = vset.pattern.permute.xlu0 0
    %9303 = vperm.xlu0 %9302, %v8512
    %v9304 = vpop.permute.xlu0 %9303
    %9305 = vset.pattern.permute.xlu0 0
    %9306 = vperm.xlu0 %9305, %v8513
    %v9307 = vpop.permute.xlu0 %9306
    %9308 = vset.pattern.permute.xlu0 0
    %9309 = vperm.xlu0 %9308, %v8514
    %v9310 = vpop.permute.xlu0 %9309
    %9311 = vset.pattern.permute.xlu0 0
    %9312 = vperm.xlu0 %9311, %v8515
    %v9313 = vpop.permute.xlu0 %9312
    %9314 = vset.pattern.permute.xlu0 0
    %9315 = vperm.xlu0 %9314, %v8516
    %v9316 = vpop.permute.xlu0 %9315
    %9317 = vset.pattern.permute.xlu0 0
    %9318 = vperm.xlu0 %9317, %v8517
    %v9319 = vpop.permute.xlu0 %9318
    %9320 = vset.pattern.permute.xlu0 0
    %9321 = vperm.xlu0 %9320, %v8518
    %v9322 = vpop.permute.xlu0 %9321
    %9323 = vset.pattern.permute.xlu0 0
    %9324 = vperm.xlu0 %9323, %v8519
    %v9325 = vpop.permute.xlu0 %9324
    %9326 = vset.pattern.permute.xlu0 0
    %9327 = vperm.xlu0 %9326, %v8520
    %v9328 = vpop.permute.xlu0 %9327
    %9329 = vset.pattern.permute.xlu0 0
    %9330 = vperm.xlu0 %9329, %v8521
    %v9331 = vpop.permute.xlu0 %9330
    %9332 = vset.pattern.permute.xlu0 0
    %9333 = vperm.xlu0 %9332, %v8522
    %v9334 = vpop.permute.xlu0 %9333
    %9335 = vset.pattern.permute.xlu0 0
    %9336 = vperm.xlu0 %9335, %v8523
    %v9337 = vpop.permute.xlu0 %9336
    %9338 = vset.pattern.permute.xlu0 0
    %9339 = vperm.xlu0 %9338, %v8524
    %v9340 = vpop.permute.xlu0 %9339
    %9341 = vset.pattern.permute.xlu0 0
    %9342 = vperm.xlu0 %9341, %v8525
    %v9343 = vpop.permute.xlu0 %9342
    %9344 = vset.pattern.permute.xlu0 0
    %9345 = vperm.xlu0 %9344, %v8526
    %v9346 = vpop.permute.xlu0 %9345
    %9347 = vset.pattern.permute.xlu0 0
    %9348 = vperm.xlu0 %9347, %v8527
    %v9349 = vpop.permute.xlu0 %9348
    %9350 = vset.pattern.permute.xlu0 0
    %9351 = vperm.xlu0 %9350, %v8528
    %v9352 = vpop.permute.xlu0 %9351
    %9353 = vset.pattern.permute.xlu0 0
    %9354 = vperm.xlu0 %9353, %v8529
    %v9355 = vpop.permute.xlu0 %9354
    %9356 = vset.pattern.permute.xlu0 0
    %9357 = vperm.xlu0 %9356, %v8530
    %v9358 = vpop.permute.xlu0 %9357
    %9359 = vset.pattern.permute.xlu0 0
    %9360 = vperm.xlu0 %9359, %v8531
    %v9361 = vpop.permute.xlu0 %9360
    %9362 = vset.pattern.permute.xlu0 0
    %9363 = vperm.xlu0 %9362, %v8532
    %v9364 = vpop.permute.xlu0 %9363
    %9365 = vset.pattern.permute.xlu0 0
    %9366 = vperm.xlu0 %9365, %v8533
    %v9367 = vpop.permute.xlu0 %9366
    %9368 = vset.pattern.permute.xlu0 0
    %9369 = vperm.xlu0 %9368, %v8534
    %v9370 = vpop.permute.xlu0 %9369
    %9371 = vset.pattern.permute.xlu0 0
    %9372 = vperm.xlu0 %9371, %v8535
    %v9373 = vpop.permute.xlu0 %9372
    %9374 = vset.pattern.permute.xlu0 0
    %9375 = vperm.xlu0 %9374, %v8536
    %v9376 = vpop.permute.xlu0 %9375
    %9377 = vset.pattern.permute.xlu0 0
    %9378 = vperm.xlu0 %9377, %v8537
    %v9379 = vpop.permute.xlu0 %9378
    %9380 = vset.pattern.permute.xlu0 0
    %9381 = vperm.xlu0 %9380, %v8538
    %v9382 = vpop.permute.xlu0 %9381
    %9383 = vset.pattern.permute.xlu0 0
    %9384 = vperm.xlu0 %9383, %v8539
    %v9385 = vpop.permute.xlu0 %9384
    %9386 = vset.pattern.permute.xlu0 0
    %9387 = vperm.xlu0 %9386, %v8540
    %v9388 = vpop.permute.xlu0 %9387
    %9389 = vset.pattern.permute.xlu0 0
    %9390 = vperm.xlu0 %9389, %v8541
    %v9391 = vpop.permute.xlu0 %9390
    %9392 = vset.pattern.permute.xlu0 0
    %9393 = vperm.xlu0 %9392, %v8542
    %v9394 = vpop.permute.xlu0 %9393
    %9395 = vset.pattern.permute.xlu0 0
    %9396 = vperm.xlu0 %9395, %v8543
    %v9397 = vpop.permute.xlu0 %9396
    %9398 = vset.pattern.permute.xlu0 0
    %9399 = vperm.xlu0 %9398, %v8544
    %v9400 = vpop.permute.xlu0 %9399
    %9401 = vset.pattern.permute.xlu0 0
    %9402 = vperm.xlu0 %9401, %v8545
    %v9403 = vpop.permute.xlu0 %9402
    %9404 = vset.pattern.permute.xlu0 0
    %9405 = vperm.xlu0 %9404, %v8546
    %v9406 = vpop.permute.xlu0 %9405
    %9407 = vset.pattern.permute.xlu0 0
    %9408 = vperm.xlu0 %9407, %v8547
    %v9409 = vpop.permute.xlu0 %9408
    %9410 = vset.pattern.permute.xlu0 0
    %9411 = vperm.xlu0 %9410, %v8548
    %v9412 = vpop.permute.xlu0 %9411
    %9413 = vset.pattern.permute.xlu0 0
    %9414 = vperm.xlu0 %9413, %v8549
    %v9415 = vpop.permute.xlu0 %9414
    %9416 = vset.pattern.permute.xlu0 0
    %9417 = vperm.xlu0 %9416, %v8550
    %v9418 = vpop.permute.xlu0 %9417
    %9419 = vset.pattern.permute.xlu0 0
    %9420 = vperm.xlu0 %9419, %v8551
    %v9421 = vpop.permute.xlu0 %9420
    %9422 = vset.pattern.permute.xlu0 0
    %9423 = vperm.xlu0 %9422, %v8552
    %v9424 = vpop.permute.xlu0 %9423
    %9425 = vset.pattern.permute.xlu0 0
    %9426 = vperm.xlu0 %9425, %v8553
    %v9427 = vpop.permute.xlu0 %9426
    %9428 = vset.pattern.permute.xlu0 0
    %9429 = vperm.xlu0 %9428, %v8554
    %v9430 = vpop.permute.xlu0 %9429
    %9431 = vset.pattern.permute.xlu0 0
    %9432 = vperm.xlu0 %9431, %v8555
    %v9433 = vpop.permute.xlu0 %9432
    %9434 = vset.pattern.permute.xlu0 0
    %9435 = vperm.xlu0 %9434, %v8556
    %v9436 = vpop.permute.xlu0 %9435
    %9437 = vset.pattern.permute.xlu0 0
    %9438 = vperm.xlu0 %9437, %v8557
    %v9439 = vpop.permute.xlu0 %9438
    %9440 = vset.pattern.permute.xlu0 0
    %9441 = vperm.xlu0 %9440, %v8558
    %v9442 = vpop.permute.xlu0 %9441
    %9443 = vset.pattern.permute.xlu0 0
    %9444 = vperm.xlu0 %9443, %v8559
    %v9445 = vpop.permute.xlu0 %9444
    %9446 = vset.pattern.permute.xlu0 0
    %9447 = vperm.xlu0 %9446, %v8560
    %v9448 = vpop.permute.xlu0 %9447
    %9449 = vset.pattern.permute.xlu0 0
    %9450 = vperm.xlu0 %9449, %v8561
    %v9451 = vpop.permute.xlu0 %9450
    %9452 = vset.pattern.permute.xlu0 0
    %9453 = vperm.xlu0 %9452, %v8562
    %v9454 = vpop.permute.xlu0 %9453
    %9455 = vset.pattern.permute.xlu0 0
    %9456 = vperm.xlu0 %9455, %v8563
    %v9457 = vpop.permute.xlu0 %9456
    %9458 = vset.pattern.permute.xlu0 0
    %9459 = vperm.xlu0 %9458, %v8564
    %v9460 = vpop.permute.xlu0 %9459
    %9461 = vset.pattern.permute.xlu0 0
    %9462 = vperm.xlu0 %9461, %v8565
    %v9463 = vpop.permute.xlu0 %9462
    %9464 = vset.pattern.permute.xlu0 0
    %9465 = vperm.xlu0 %9464, %v8566
    %v9466 = vpop.permute.xlu0 %9465
    %9467 = vset.pattern.permute.xlu0 0
    %9468 = vperm.xlu0 %9467, %v8567
    %v9469 = vpop.permute.xlu0 %9468
    %9470 = vset.pattern.permute.xlu0 0
    %9471 = vperm.xlu0 %9470, %v8568
    %v9472 = vpop.permute.xlu0 %9471
    %9473 = vset.pattern.permute.xlu0 0
    %9474 = vperm.xlu0 %9473, %v8569
    %v9475 = vpop.permute.xlu0 %9474
    %9476 = vset.pattern.permute.xlu0 0
    %9477 = vperm.xlu0 %9476, %v8570
    %v9478 = vpop.permute.xlu0 %9477
    %9479 = vset.pattern.permute.xlu0 0
    %9480 = vperm.xlu0 %9479, %v8571
    %v9481 = vpop.permute.xlu0 %9480
    %9482 = vset.pattern.permute.xlu0 0
    %9483 = vperm.xlu0 %9482, %v8572
    %v9484 = vpop.permute.xlu0 %9483
    %9485 = vset.pattern.permute.xlu0 0
    %9486 = vperm.xlu0 %9485, %v8573
    %v9487 = vpop.permute.xlu0 %9486
    %9488 = vset.pattern.permute.xlu0 0
    %9489 = vperm.xlu0 %9488, %v8574
    %v9490 = vpop.permute.xlu0 %9489
    %9491 = vset.pattern.permute.xlu0 0
    %9492 = vperm.xlu0 %9491, %v8575
    %v9493 = vpop.permute.xlu0 %9492
    %9494 = vset.pattern.permute.xlu0 0
    %9495 = vperm.xlu0 %9494, %v8576
    %v9496 = vpop.permute.xlu0 %9495
    %9497 = vset.pattern.permute.xlu0 0
    %9498 = vperm.xlu0 %9497, %v8577
    %v9499 = vpop.permute.xlu0 %9498
    %9500 = vset.pattern.permute.xlu0 0
    %9501 = vperm.xlu0 %9500, %v8578
    %v9502 = vpop.permute.xlu0 %9501
    %9503 = vset.pattern.permute.xlu0 0
    %9504 = vperm.xlu0 %9503, %v8579
    %v9505 = vpop.permute.xlu0 %9504
    %9506 = vset.pattern.permute.xlu0 0
    %9507 = vperm.xlu0 %9506, %v8580
    %v9508 = vpop.permute.xlu0 %9507
    %9509 = vset.pattern.permute.xlu0 0
    %9510 = vperm.xlu0 %9509, %v8581
    %v9511 = vpop.permute.xlu0 %9510
    %9512 = vset.pattern.permute.xlu0 0
    %9513 = vperm.xlu0 %9512, %v8582
    %v9514 = vpop.permute.xlu0 %9513
    %9515 = vset.pattern.permute.xlu0 0
    %9516 = vperm.xlu0 %9515, %v8583
    %v9517 = vpop.permute.xlu0 %9516
    %9518 = vset.pattern.permute.xlu0 0
    %9519 = vperm.xlu0 %9518, %v8584
    %v9520 = vpop.permute.xlu0 %9519
    %9521 = vset.pattern.permute.xlu0 0
    %9522 = vperm.xlu0 %9521, %v8585
    %v9523 = vpop.permute.xlu0 %9522
    %9524 = vset.pattern.permute.xlu0 0
    %9525 = vperm.xlu0 %9524, %v8586
    %v9526 = vpop.permute.xlu0 %9525
    %9527 = vset.pattern.permute.xlu0 0
    %9528 = vperm.xlu0 %9527, %v8587
    %v9529 = vpop.permute.xlu0 %9528
    %9530 = vset.pattern.permute.xlu0 0
    %9531 = vperm.xlu0 %9530, %v8588
    %v9532 = vpop.permute.xlu0 %9531
    %9533 = vset.pattern.permute.xlu0 0
    %9534 = vperm.xlu0 %9533, %v8589
    %v9535 = vpop.permute.xlu0 %9534
    %9536 = vset.pattern.permute.xlu0 0
    %9537 = vperm.xlu0 %9536, %v8590
    %v9538 = vpop.permute.xlu0 %9537
    %9539 = vset.pattern.permute.xlu0 0
    %9540 = vperm.xlu0 %9539, %v8591
    %v9541 = vpop.permute.xlu0 %9540
    %9542 = vset.pattern.permute.xlu0 0
    %9543 = vperm.xlu0 %9542, %v8592
    %v9544 = vpop.permute.xlu0 %9543
    %9545 = vset.pattern.permute.xlu0 0
    %9546 = vperm.xlu0 %9545, %v8593
    %v9547 = vpop.permute.xlu0 %9546
    %9548 = vset.pattern.permute.xlu0 0
    %9549 = vperm.xlu0 %9548, %v8594
    %v9550 = vpop.permute.xlu0 %9549
    %9551 = vset.pattern.permute.xlu0 0
    %9552 = vperm.xlu0 %9551, %v8595
    %v9553 = vpop.permute.xlu0 %9552
    %9554 = vset.pattern.permute.xlu0 0
    %9555 = vperm.xlu0 %9554, %v8596
    %v9556 = vpop.permute.xlu0 %9555
    %v9557 = vlaneseq
    %v9558 = vand.u32 %v9557, 127
    %v9559 = vlaneseq
    %v9560 = vshrl.u32 %v9559, 7
    %v9561 = vsub.s32 %v9558, %v9560
    %v9562 = vrot.slane %v8599, %v9561
    %v9563 = vadd.s32 %v9558, 4294967288
    %v9564 = vlaneseq
    %v9565 = vshrl.u32 %v9564, 7
    %v9566 = vsub.s32 %v9563, %v9565
    %v9567 = vrot.slane %v8602, %v9566
    %vm9568 = vcmask 130112
    %v9569 = vsel %vm9568, %v9567, %v9562
    %v9570 = vadd.s32 %v9558, 4294967280
    %v9571 = vlaneseq
    %v9572 = vshrl.u32 %v9571, 7
    %v9573 = vsub.s32 %v9570, %v9572
    %v9574 = vrot.slane %v8605, %v9573
    %vm9575 = vcmask 195712
    %v9576 = vsel %vm9575, %v9574, %v9569
    %v9577 = vadd.s32 %v9558, 4294967272
    %v9578 = vlaneseq
    %v9579 = vshrl.u32 %v9578, 7
    %v9580 = vsub.s32 %v9577, %v9579
    %v9581 = vrot.slane %v8608, %v9580
    %vm9582 = vcmask 261312
    %v9583 = vsel %vm9582, %v9581, %v9576
    %v9584 = vadd.s32 %v9558, 4294967264
    %v9585 = vlaneseq
    %v9586 = vshrl.u32 %v9585, 7
    %v9587 = vsub.s32 %v9584, %v9586
    %v9588 = vrot.slane %v8611, %v9587
    %vm9589 = vcmask 326912
    %v9590 = vsel %vm9589, %v9588, %v9583
    %v9591 = vadd.s32 %v9558, 4294967256
    %v9592 = vlaneseq
    %v9593 = vshrl.u32 %v9592, 7
    %v9594 = vsub.s32 %v9591, %v9593
    %v9595 = vrot.slane %v8614, %v9594
    %vm9596 = vcmask 392512
    %v9597 = vsel %vm9596, %v9595, %v9590
    %v9598 = vadd.s32 %v9558, 4294967248
    %v9599 = vlaneseq
    %v9600 = vshrl.u32 %v9599, 7
    %v9601 = vsub.s32 %v9598, %v9600
    %v9602 = vrot.slane %v8617, %v9601
    %vm9603 = vcmask 458112
    %v9604 = vsel %vm9603, %v9602, %v9597
    %v9605 = vadd.s32 %v9558, 4294967240
    %v9606 = vlaneseq
    %v9607 = vshrl.u32 %v9606, 7
    %v9608 = vsub.s32 %v9605, %v9607
    %v9609 = vrot.slane %v8620, %v9608
    %vm9610 = vcmask 523712
    %v9611 = vsel %vm9610, %v9609, %v9604
    %v9612 = vadd.s32 %v9558, 4294967232
    %v9613 = vlaneseq
    %v9614 = vshrl.u32 %v9613, 7
    %v9615 = vsub.s32 %v9612, %v9614
    %v9616 = vrot.slane %v8623, %v9615
    %vm9617 = vcmask 589312
    %v9618 = vsel %vm9617, %v9616, %v9611
    %v9619 = vadd.s32 %v9558, 4294967224
    %v9620 = vlaneseq
    %v9621 = vshrl.u32 %v9620, 7
    %v9622 = vsub.s32 %v9619, %v9621
    %v9623 = vrot.slane %v8626, %v9622
    %vm9624 = vcmask 654912
    %v9625 = vsel %vm9624, %v9623, %v9618
    %v9626 = vadd.s32 %v9558, 4294967216
    %v9627 = vlaneseq
    %v9628 = vshrl.u32 %v9627, 7
    %v9629 = vsub.s32 %v9626, %v9628
    %v9630 = vrot.slane %v8629, %v9629
    %vm9631 = vcmask 720512
    %v9632 = vsel %vm9631, %v9630, %v9625
    %v9633 = vadd.s32 %v9558, 4294967208
    %v9634 = vlaneseq
    %v9635 = vshrl.u32 %v9634, 7
    %v9636 = vsub.s32 %v9633, %v9635
    %v9637 = vrot.slane %v8632, %v9636
    %vm9638 = vcmask 786112
    %v9639 = vsel %vm9638, %v9637, %v9632
    %v9640 = vadd.s32 %v9558, 4294967200
    %v9641 = vlaneseq
    %v9642 = vshrl.u32 %v9641, 7
    %v9643 = vsub.s32 %v9640, %v9642
    %v9644 = vrot.slane %v8635, %v9643
    %vm9645 = vcmask 851712
    %v9646 = vsel %vm9645, %v9644, %v9639
    %v9647 = vadd.s32 %v9558, 4294967192
    %v9648 = vlaneseq
    %v9649 = vshrl.u32 %v9648, 7
    %v9650 = vsub.s32 %v9647, %v9649
    %v9651 = vrot.slane %v8638, %v9650
    %vm9652 = vcmask 917312
    %v9653 = vsel %vm9652, %v9651, %v9646
    %v9654 = vadd.s32 %v9558, 4294967184
    %v9655 = vlaneseq
    %v9656 = vshrl.u32 %v9655, 7
    %v9657 = vsub.s32 %v9654, %v9656
    %v9658 = vrot.slane %v8641, %v9657
    %vm9659 = vcmask 982912
    %v9660 = vsel %vm9659, %v9658, %v9653
    %v9661 = vadd.s32 %v9558, 4294967176
    %v9662 = vlaneseq
    %v9663 = vshrl.u32 %v9662, 7
    %v9664 = vsub.s32 %v9661, %v9663
    %v9665 = vrot.slane %v8644, %v9664
    %vm9666 = vcmask 1048512
    %v9667 = vsel %vm9666, %v9665, %v9660
    %v9668 = vlaneseq
    %v9669 = vshrl.u32 %v9668, 7
    %v9670 = vsub.s32 %v9558, %v9669
    %v9671 = vrot.slane %v8647, %v9670
    %v9672 = vlaneseq
    %v9673 = vshrl.u32 %v9672, 7
    %v9674 = vsub.s32 %v9563, %v9673
    %v9675 = vrot.slane %v8650, %v9674
    %v9676 = vsel %vm9568, %v9675, %v9671
    %v9677 = vlaneseq
    %v9678 = vshrl.u32 %v9677, 7
    %v9679 = vsub.s32 %v9570, %v9678
    %v9680 = vrot.slane %v8653, %v9679
    %v9681 = vsel %vm9575, %v9680, %v9676
    %v9682 = vlaneseq
    %v9683 = vshrl.u32 %v9682, 7
    %v9684 = vsub.s32 %v9577, %v9683
    %v9685 = vrot.slane %v8656, %v9684
    %v9686 = vsel %vm9582, %v9685, %v9681
    %v9687 = vlaneseq
    %v9688 = vshrl.u32 %v9687, 7
    %v9689 = vsub.s32 %v9584, %v9688
    %v9690 = vrot.slane %v8659, %v9689
    %v9691 = vsel %vm9589, %v9690, %v9686
    %v9692 = vlaneseq
    %v9693 = vshrl.u32 %v9692, 7
    %v9694 = vsub.s32 %v9591, %v9693
    %v9695 = vrot.slane %v8662, %v9694
    %v9696 = vsel %vm9596, %v9695, %v9691
    %v9697 = vlaneseq
    %v9698 = vshrl.u32 %v9697, 7
    %v9699 = vsub.s32 %v9598, %v9698
    %v9700 = vrot.slane %v8665, %v9699
    %v9701 = vsel %vm9603, %v9700, %v9696
    %v9702 = vlaneseq
    %v9703 = vshrl.u32 %v9702, 7
    %v9704 = vsub.s32 %v9605, %v9703
    %v9705 = vrot.slane %v8668, %v9704
    %v9706 = vsel %vm9610, %v9705, %v9701
    %v9707 = vlaneseq
    %v9708 = vshrl.u32 %v9707, 7
    %v9709 = vsub.s32 %v9612, %v9708
    %v9710 = vrot.slane %v8671, %v9709
    %v9711 = vsel %vm9617, %v9710, %v9706
    %v9712 = vlaneseq
    %v9713 = vshrl.u32 %v9712, 7
    %v9714 = vsub.s32 %v9619, %v9713
    %v9715 = vrot.slane %v8674, %v9714
    %v9716 = vsel %vm9624, %v9715, %v9711
    %v9717 = vlaneseq
    %v9718 = vshrl.u32 %v9717, 7
    %v9719 = vsub.s32 %v9626, %v9718
    %v9720 = vrot.slane %v8677, %v9719
    %v9721 = vsel %vm9631, %v9720, %v9716
    %v9722 = vlaneseq
    %v9723 = vshrl.u32 %v9722, 7
    %v9724 = vsub.s32 %v9633, %v9723
    %v9725 = vrot.slane %v8680, %v9724
    %v9726 = vsel %vm9638, %v9725, %v9721
    %v9727 = vlaneseq
    %v9728 = vshrl.u32 %v9727, 7
    %v9729 = vsub.s32 %v9640, %v9728
    %v9730 = vrot.slane %v8683, %v9729
    %v9731 = vsel %vm9645, %v9730, %v9726
    %v9732 = vlaneseq
    %v9733 = vshrl.u32 %v9732, 7
    %v9734 = vsub.s32 %v9647, %v9733
    %v9735 = vrot.slane %v8686, %v9734
    %v9736 = vsel %vm9652, %v9735, %v9731
    %v9737 = vlaneseq
    %v9738 = vshrl.u32 %v9737, 7
    %v9739 = vsub.s32 %v9654, %v9738
    %v9740 = vrot.slane %v8689, %v9739
    %v9741 = vsel %vm9659, %v9740, %v9736
    %v9742 = vlaneseq
    %v9743 = vshrl.u32 %v9742, 7
    %v9744 = vsub.s32 %v9661, %v9743
    %v9745 = vrot.slane %v8692, %v9744
    %v9746 = vsel %vm9666, %v9745, %v9741
    %v9747 = vlaneseq
    %v9748 = vshrl.u32 %v9747, 7
    %v9749 = vsub.s32 %v9558, %v9748
    %v9750 = vrot.slane %v8695, %v9749
    %v9751 = vlaneseq
    %v9752 = vshrl.u32 %v9751, 7
    %v9753 = vsub.s32 %v9563, %v9752
    %v9754 = vrot.slane %v8698, %v9753
    %v9755 = vsel %vm9568, %v9754, %v9750
    %v9756 = vlaneseq
    %v9757 = vshrl.u32 %v9756, 7
    %v9758 = vsub.s32 %v9570, %v9757
    %v9759 = vrot.slane %v8701, %v9758
    %v9760 = vsel %vm9575, %v9759, %v9755
    %v9761 = vlaneseq
    %v9762 = vshrl.u32 %v9761, 7
    %v9763 = vsub.s32 %v9577, %v9762
    %v9764 = vrot.slane %v8704, %v9763
    %v9765 = vsel %vm9582, %v9764, %v9760
    %v9766 = vlaneseq
    %v9767 = vshrl.u32 %v9766, 7
    %v9768 = vsub.s32 %v9584, %v9767
    %v9769 = vrot.slane %v8707, %v9768
    %v9770 = vsel %vm9589, %v9769, %v9765
    %v9771 = vlaneseq
    %v9772 = vshrl.u32 %v9771, 7
    %v9773 = vsub.s32 %v9591, %v9772
    %v9774 = vrot.slane %v8710, %v9773
    %v9775 = vsel %vm9596, %v9774, %v9770
    %v9776 = vlaneseq
    %v9777 = vshrl.u32 %v9776, 7
    %v9778 = vsub.s32 %v9598, %v9777
    %v9779 = vrot.slane %v8713, %v9778
    %v9780 = vsel %vm9603, %v9779, %v9775
    %v9781 = vlaneseq
    %v9782 = vshrl.u32 %v9781, 7
    %v9783 = vsub.s32 %v9605, %v9782
    %v9784 = vrot.slane %v8716, %v9783
    %v9785 = vsel %vm9610, %v9784, %v9780
    %v9786 = vlaneseq
    %v9787 = vshrl.u32 %v9786, 7
    %v9788 = vsub.s32 %v9612, %v9787
    %v9789 = vrot.slane %v8719, %v9788
    %v9790 = vsel %vm9617, %v9789, %v9785
    %v9791 = vlaneseq
    %v9792 = vshrl.u32 %v9791, 7
    %v9793 = vsub.s32 %v9619, %v9792
    %v9794 = vrot.slane %v8722, %v9793
    %v9795 = vsel %vm9624, %v9794, %v9790
    %v9796 = vlaneseq
    %v9797 = vshrl.u32 %v9796, 7
    %v9798 = vsub.s32 %v9626, %v9797
    %v9799 = vrot.slane %v8725, %v9798
    %v9800 = vsel %vm9631, %v9799, %v9795
    %v9801 = vlaneseq
    %v9802 = vshrl.u32 %v9801, 7
    %v9803 = vsub.s32 %v9633, %v9802
    %v9804 = vrot.slane %v8728, %v9803
    %v9805 = vsel %vm9638, %v9804, %v9800
    %v9806 = vlaneseq
    %v9807 = vshrl.u32 %v9806, 7
    %v9808 = vsub.s32 %v9640, %v9807
    %v9809 = vrot.slane %v8731, %v9808
    %v9810 = vsel %vm9645, %v9809, %v9805
    %v9811 = vlaneseq
    %v9812 = vshrl.u32 %v9811, 7
    %v9813 = vsub.s32 %v9647, %v9812
    %v9814 = vrot.slane %v8734, %v9813
    %v9815 = vsel %vm9652, %v9814, %v9810
    %v9816 = vlaneseq
    %v9817 = vshrl.u32 %v9816, 7
    %v9818 = vsub.s32 %v9654, %v9817
    %v9819 = vrot.slane %v8737, %v9818
    %v9820 = vsel %vm9659, %v9819, %v9815
    %v9821 = vlaneseq
    %v9822 = vshrl.u32 %v9821, 7
    %v9823 = vsub.s32 %v9661, %v9822
    %v9824 = vrot.slane %v8740, %v9823
    %v9825 = vsel %vm9666, %v9824, %v9820
    %v9826 = vlaneseq
    %v9827 = vshrl.u32 %v9826, 7
    %v9828 = vsub.s32 %v9558, %v9827
    %v9829 = vrot.slane %v8743, %v9828
    %v9830 = vlaneseq
    %v9831 = vshrl.u32 %v9830, 7
    %v9832 = vsub.s32 %v9563, %v9831
    %v9833 = vrot.slane %v8746, %v9832
    %v9834 = vsel %vm9568, %v9833, %v9829
    %v9835 = vlaneseq
    %v9836 = vshrl.u32 %v9835, 7
    %v9837 = vsub.s32 %v9570, %v9836
    %v9838 = vrot.slane %v8749, %v9837
    %v9839 = vsel %vm9575, %v9838, %v9834
    %v9840 = vlaneseq
    %v9841 = vshrl.u32 %v9840, 7
    %v9842 = vsub.s32 %v9577, %v9841
    %v9843 = vrot.slane %v8752, %v9842
    %v9844 = vsel %vm9582, %v9843, %v9839
    %v9845 = vlaneseq
    %v9846 = vshrl.u32 %v9845, 7
    %v9847 = vsub.s32 %v9584, %v9846
    %v9848 = vrot.slane %v8755, %v9847
    %v9849 = vsel %vm9589, %v9848, %v9844
    %v9850 = vlaneseq
    %v9851 = vshrl.u32 %v9850, 7
    %v9852 = vsub.s32 %v9591, %v9851
    %v9853 = vrot.slane %v8758, %v9852
    %v9854 = vsel %vm9596, %v9853, %v9849
    %v9855 = vlaneseq
    %v9856 = vshrl.u32 %v9855, 7
    %v9857 = vsub.s32 %v9598, %v9856
    %v9858 = vrot.slane %v8761, %v9857
    %v9859 = vsel %vm9603, %v9858, %v9854
    %v9860 = vlaneseq
    %v9861 = vshrl.u32 %v9860, 7
    %v9862 = vsub.s32 %v9605, %v9861
    %v9863 = vrot.slane %v8764, %v9862
    %v9864 = vsel %vm9610, %v9863, %v9859
    %v9865 = vlaneseq
    %v9866 = vshrl.u32 %v9865, 7
    %v9867 = vsub.s32 %v9612, %v9866
    %v9868 = vrot.slane %v8767, %v9867
    %v9869 = vsel %vm9617, %v9868, %v9864
    %v9870 = vlaneseq
    %v9871 = vshrl.u32 %v9870, 7
    %v9872 = vsub.s32 %v9619, %v9871
    %v9873 = vrot.slane %v8770, %v9872
    %v9874 = vsel %vm9624, %v9873, %v9869
    %v9875 = vlaneseq
    %v9876 = vshrl.u32 %v9875, 7
    %v9877 = vsub.s32 %v9626, %v9876
    %v9878 = vrot.slane %v8773, %v9877
    %v9879 = vsel %vm9631, %v9878, %v9874
    %v9880 = vlaneseq
    %v9881 = vshrl.u32 %v9880, 7
    %v9882 = vsub.s32 %v9633, %v9881
    %v9883 = vrot.slane %v8776, %v9882
    %v9884 = vsel %vm9638, %v9883, %v9879
    %v9885 = vlaneseq
    %v9886 = vshrl.u32 %v9885, 7
    %v9887 = vsub.s32 %v9640, %v9886
    %v9888 = vrot.slane %v8779, %v9887
    %v9889 = vsel %vm9645, %v9888, %v9884
    %v9890 = vlaneseq
    %v9891 = vshrl.u32 %v9890, 7
    %v9892 = vsub.s32 %v9647, %v9891
    %v9893 = vrot.slane %v8782, %v9892
    %v9894 = vsel %vm9652, %v9893, %v9889
    %v9895 = vlaneseq
    %v9896 = vshrl.u32 %v9895, 7
    %v9897 = vsub.s32 %v9654, %v9896
    %v9898 = vrot.slane %v8785, %v9897
    %v9899 = vsel %vm9659, %v9898, %v9894
    %v9900 = vlaneseq
    %v9901 = vshrl.u32 %v9900, 7
    %v9902 = vsub.s32 %v9661, %v9901
    %v9903 = vrot.slane %v8788, %v9902
    %v9904 = vsel %vm9666, %v9903, %v9899
    %v9905 = vlaneseq
    %v9906 = vshrl.u32 %v9905, 7
    %v9907 = vsub.s32 %v9558, %v9906
    %v9908 = vrot.slane %v8791, %v9907
    %v9909 = vlaneseq
    %v9910 = vshrl.u32 %v9909, 7
    %v9911 = vsub.s32 %v9563, %v9910
    %v9912 = vrot.slane %v8794, %v9911
    %v9913 = vsel %vm9568, %v9912, %v9908
    %v9914 = vlaneseq
    %v9915 = vshrl.u32 %v9914, 7
    %v9916 = vsub.s32 %v9570, %v9915
    %v9917 = vrot.slane %v8797, %v9916
    %v9918 = vsel %vm9575, %v9917, %v9913
    %v9919 = vlaneseq
    %v9920 = vshrl.u32 %v9919, 7
    %v9921 = vsub.s32 %v9577, %v9920
    %v9922 = vrot.slane %v8800, %v9921
    %v9923 = vsel %vm9582, %v9922, %v9918
    %v9924 = vlaneseq
    %v9925 = vshrl.u32 %v9924, 7
    %v9926 = vsub.s32 %v9584, %v9925
    %v9927 = vrot.slane %v8803, %v9926
    %v9928 = vsel %vm9589, %v9927, %v9923
    %v9929 = vlaneseq
    %v9930 = vshrl.u32 %v9929, 7
    %v9931 = vsub.s32 %v9591, %v9930
    %v9932 = vrot.slane %v8806, %v9931
    %v9933 = vsel %vm9596, %v9932, %v9928
    %v9934 = vlaneseq
    %v9935 = vshrl.u32 %v9934, 7
    %v9936 = vsub.s32 %v9598, %v9935
    %v9937 = vrot.slane %v8809, %v9936
    %v9938 = vsel %vm9603, %v9937, %v9933
    %v9939 = vlaneseq
    %v9940 = vshrl.u32 %v9939, 7
    %v9941 = vsub.s32 %v9605, %v9940
    %v9942 = vrot.slane %v8812, %v9941
    %v9943 = vsel %vm9610, %v9942, %v9938
    %v9944 = vlaneseq
    %v9945 = vshrl.u32 %v9944, 7
    %v9946 = vsub.s32 %v9612, %v9945
    %v9947 = vrot.slane %v8815, %v9946
    %v9948 = vsel %vm9617, %v9947, %v9943
    %v9949 = vlaneseq
    %v9950 = vshrl.u32 %v9949, 7
    %v9951 = vsub.s32 %v9619, %v9950
    %v9952 = vrot.slane %v8818, %v9951
    %v9953 = vsel %vm9624, %v9952, %v9948
    %v9954 = vlaneseq
    %v9955 = vshrl.u32 %v9954, 7
    %v9956 = vsub.s32 %v9626, %v9955
    %v9957 = vrot.slane %v8821, %v9956
    %v9958 = vsel %vm9631, %v9957, %v9953
    %v9959 = vlaneseq
    %v9960 = vshrl.u32 %v9959, 7
    %v9961 = vsub.s32 %v9633, %v9960
    %v9962 = vrot.slane %v8824, %v9961
    %v9963 = vsel %vm9638, %v9962, %v9958
    %v9964 = vlaneseq
    %v9965 = vshrl.u32 %v9964, 7
    %v9966 = vsub.s32 %v9640, %v9965
    %v9967 = vrot.slane %v8827, %v9966
    %v9968 = vsel %vm9645, %v9967, %v9963
    %v9969 = vlaneseq
    %v9970 = vshrl.u32 %v9969, 7
    %v9971 = vsub.s32 %v9647, %v9970
    %v9972 = vrot.slane %v8830, %v9971
    %v9973 = vsel %vm9652, %v9972, %v9968
    %v9974 = vlaneseq
    %v9975 = vshrl.u32 %v9974, 7
    %v9976 = vsub.s32 %v9654, %v9975
    %v9977 = vrot.slane %v8833, %v9976
    %v9978 = vsel %vm9659, %v9977, %v9973
    %v9979 = vlaneseq
    %v9980 = vshrl.u32 %v9979, 7
    %v9981 = vsub.s32 %v9661, %v9980
    %v9982 = vrot.slane %v8836, %v9981
    %v9983 = vsel %vm9666, %v9982, %v9978
    %v9984 = vlaneseq
    %v9985 = vshrl.u32 %v9984, 7
    %v9986 = vsub.s32 %v9558, %v9985
    %v9987 = vrot.slane %v8839, %v9986
    %v9988 = vlaneseq
    %v9989 = vshrl.u32 %v9988, 7
    %v9990 = vsub.s32 %v9563, %v9989
    %v9991 = vrot.slane %v8842, %v9990
    %v9992 = vsel %vm9568, %v9991, %v9987
    %v9993 = vlaneseq
    %v9994 = vshrl.u32 %v9993, 7
    %v9995 = vsub.s32 %v9570, %v9994
    %v9996 = vrot.slane %v8845, %v9995
    %v9997 = vsel %vm9575, %v9996, %v9992
    %v9998 = vlaneseq
    %v9999 = vshrl.u32 %v9998, 7
    %v10000 = vsub.s32 %v9577, %v9999
    %v10001 = vrot.slane %v8848, %v10000
    %v10002 = vsel %vm9582, %v10001, %v9997
    %v10003 = vlaneseq
    %v10004 = vshrl.u32 %v10003, 7
    %v10005 = vsub.s32 %v9584, %v10004
    %v10006 = vrot.slane %v8851, %v10005
    %v10007 = vsel %vm9589, %v10006, %v10002
    %v10008 = vlaneseq
    %v10009 = vshrl.u32 %v10008, 7
    %v10010 = vsub.s32 %v9591, %v10009
    %v10011 = vrot.slane %v8854, %v10010
    %v10012 = vsel %vm9596, %v10011, %v10007
    %v10013 = vlaneseq
    %v10014 = vshrl.u32 %v10013, 7
    %v10015 = vsub.s32 %v9598, %v10014
    %v10016 = vrot.slane %v8857, %v10015
    %v10017 = vsel %vm9603, %v10016, %v10012
    %v10018 = vlaneseq
    %v10019 = vshrl.u32 %v10018, 7
    %v10020 = vsub.s32 %v9605, %v10019
    %v10021 = vrot.slane %v8860, %v10020
    %v10022 = vsel %vm9610, %v10021, %v10017
    %v10023 = vlaneseq
    %v10024 = vshrl.u32 %v10023, 7
    %v10025 = vsub.s32 %v9612, %v10024
    %v10026 = vrot.slane %v8863, %v10025
    %v10027 = vsel %vm9617, %v10026, %v10022
    %v10028 = vlaneseq
    %v10029 = vshrl.u32 %v10028, 7
    %v10030 = vsub.s32 %v9619, %v10029
    %v10031 = vrot.slane %v8866, %v10030
    %v10032 = vsel %vm9624, %v10031, %v10027
    %v10033 = vlaneseq
    %v10034 = vshrl.u32 %v10033, 7
    %v10035 = vsub.s32 %v9626, %v10034
    %v10036 = vrot.slane %v8869, %v10035
    %v10037 = vsel %vm9631, %v10036, %v10032
    %v10038 = vlaneseq
    %v10039 = vshrl.u32 %v10038, 7
    %v10040 = vsub.s32 %v9633, %v10039
    %v10041 = vrot.slane %v8872, %v10040
    %v10042 = vsel %vm9638, %v10041, %v10037
    %v10043 = vlaneseq
    %v10044 = vshrl.u32 %v10043, 7
    %v10045 = vsub.s32 %v9640, %v10044
    %v10046 = vrot.slane %v8875, %v10045
    %v10047 = vsel %vm9645, %v10046, %v10042
    %v10048 = vlaneseq
    %v10049 = vshrl.u32 %v10048, 7
    %v10050 = vsub.s32 %v9647, %v10049
    %v10051 = vrot.slane %v8878, %v10050
    %v10052 = vsel %vm9652, %v10051, %v10047
    %v10053 = vlaneseq
    %v10054 = vshrl.u32 %v10053, 7
    %v10055 = vsub.s32 %v9654, %v10054
    %v10056 = vrot.slane %v8881, %v10055
    %v10057 = vsel %vm9659, %v10056, %v10052
    %v10058 = vlaneseq
    %v10059 = vshrl.u32 %v10058, 7
    %v10060 = vsub.s32 %v9661, %v10059
    %v10061 = vrot.slane %v8884, %v10060
    %v10062 = vsel %vm9666, %v10061, %v10057
    %v10063 = vlaneseq
    %v10064 = vshrl.u32 %v10063, 7
    %v10065 = vsub.s32 %v9558, %v10064
    %v10066 = vrot.slane %v8887, %v10065
    %v10067 = vlaneseq
    %v10068 = vshrl.u32 %v10067, 7
    %v10069 = vsub.s32 %v9563, %v10068
    %v10070 = vrot.slane %v8890, %v10069
    %v10071 = vsel %vm9568, %v10070, %v10066
    %v10072 = vlaneseq
    %v10073 = vshrl.u32 %v10072, 7
    %v10074 = vsub.s32 %v9570, %v10073
    %v10075 = vrot.slane %v8893, %v10074
    %v10076 = vsel %vm9575, %v10075, %v10071
    %v10077 = vlaneseq
    %v10078 = vshrl.u32 %v10077, 7
    %v10079 = vsub.s32 %v9577, %v10078
    %v10080 = vrot.slane %v8896, %v10079
    %v10081 = vsel %vm9582, %v10080, %v10076
    %v10082 = vlaneseq
    %v10083 = vshrl.u32 %v10082, 7
    %v10084 = vsub.s32 %v9584, %v10083
    %v10085 = vrot.slane %v8899, %v10084
    %v10086 = vsel %vm9589, %v10085, %v10081
    %v10087 = vlaneseq
    %v10088 = vshrl.u32 %v10087, 7
    %v10089 = vsub.s32 %v9591, %v10088
    %v10090 = vrot.slane %v8902, %v10089
    %v10091 = vsel %vm9596, %v10090, %v10086
    %v10092 = vlaneseq
    %v10093 = vshrl.u32 %v10092, 7
    %v10094 = vsub.s32 %v9598, %v10093
    %v10095 = vrot.slane %v8905, %v10094
    %v10096 = vsel %vm9603, %v10095, %v10091
    %v10097 = vlaneseq
    %v10098 = vshrl.u32 %v10097, 7
    %v10099 = vsub.s32 %v9605, %v10098
    %v10100 = vrot.slane %v8908, %v10099
    %v10101 = vsel %vm9610, %v10100, %v10096
    %v10102 = vlaneseq
    %v10103 = vshrl.u32 %v10102, 7
    %v10104 = vsub.s32 %v9612, %v10103
    %v10105 = vrot.slane %v8911, %v10104
    %v10106 = vsel %vm9617, %v10105, %v10101
    %v10107 = vlaneseq
    %v10108 = vshrl.u32 %v10107, 7
    %v10109 = vsub.s32 %v9619, %v10108
    %v10110 = vrot.slane %v8914, %v10109
    %v10111 = vsel %vm9624, %v10110, %v10106
    %v10112 = vlaneseq
    %v10113 = vshrl.u32 %v10112, 7
    %v10114 = vsub.s32 %v9626, %v10113
    %v10115 = vrot.slane %v8917, %v10114
    %v10116 = vsel %vm9631, %v10115, %v10111
    %v10117 = vlaneseq
    %v10118 = vshrl.u32 %v10117, 7
    %v10119 = vsub.s32 %v9633, %v10118
    %v10120 = vrot.slane %v8920, %v10119
    %v10121 = vsel %vm9638, %v10120, %v10116
    %v10122 = vlaneseq
    %v10123 = vshrl.u32 %v10122, 7
    %v10124 = vsub.s32 %v9640, %v10123
    %v10125 = vrot.slane %v8923, %v10124
    %v10126 = vsel %vm9645, %v10125, %v10121
    %v10127 = vlaneseq
    %v10128 = vshrl.u32 %v10127, 7
    %v10129 = vsub.s32 %v9647, %v10128
    %v10130 = vrot.slane %v8926, %v10129
    %v10131 = vsel %vm9652, %v10130, %v10126
    %v10132 = vlaneseq
    %v10133 = vshrl.u32 %v10132, 7
    %v10134 = vsub.s32 %v9654, %v10133
    %v10135 = vrot.slane %v8929, %v10134
    %v10136 = vsel %vm9659, %v10135, %v10131
    %v10137 = vlaneseq
    %v10138 = vshrl.u32 %v10137, 7
    %v10139 = vsub.s32 %v9661, %v10138
    %v10140 = vrot.slane %v8932, %v10139
    %v10141 = vsel %vm9666, %v10140, %v10136
    %v10142 = vlaneseq
    %v10143 = vshrl.u32 %v10142, 7
    %v10144 = vsub.s32 %v9558, %v10143
    %v10145 = vrot.slane %v8935, %v10144
    %v10146 = vlaneseq
    %v10147 = vshrl.u32 %v10146, 7
    %v10148 = vsub.s32 %v9563, %v10147
    %v10149 = vrot.slane %v8938, %v10148
    %v10150 = vsel %vm9568, %v10149, %v10145
    %v10151 = vlaneseq
    %v10152 = vshrl.u32 %v10151, 7
    %v10153 = vsub.s32 %v9570, %v10152
    %v10154 = vrot.slane %v8941, %v10153
    %v10155 = vsel %vm9575, %v10154, %v10150
    %v10156 = vlaneseq
    %v10157 = vshrl.u32 %v10156, 7
    %v10158 = vsub.s32 %v9577, %v10157
    %v10159 = vrot.slane %v8944, %v10158
    %v10160 = vsel %vm9582, %v10159, %v10155
    %v10161 = vlaneseq
    %v10162 = vshrl.u32 %v10161, 7
    %v10163 = vsub.s32 %v9584, %v10162
    %v10164 = vrot.slane %v8947, %v10163
    %v10165 = vsel %vm9589, %v10164, %v10160
    %v10166 = vlaneseq
    %v10167 = vshrl.u32 %v10166, 7
    %v10168 = vsub.s32 %v9591, %v10167
    %v10169 = vrot.slane %v8950, %v10168
    %v10170 = vsel %vm9596, %v10169, %v10165
    %v10171 = vlaneseq
    %v10172 = vshrl.u32 %v10171, 7
    %v10173 = vsub.s32 %v9598, %v10172
    %v10174 = vrot.slane %v8953, %v10173
    %v10175 = vsel %vm9603, %v10174, %v10170
    %v10176 = vlaneseq
    %v10177 = vshrl.u32 %v10176, 7
    %v10178 = vsub.s32 %v9605, %v10177
    %v10179 = vrot.slane %v8956, %v10178
    %v10180 = vsel %vm9610, %v10179, %v10175
    %v10181 = vlaneseq
    %v10182 = vshrl.u32 %v10181, 7
    %v10183 = vsub.s32 %v9612, %v10182
    %v10184 = vrot.slane %v8959, %v10183
    %v10185 = vsel %vm9617, %v10184, %v10180
    %v10186 = vlaneseq
    %v10187 = vshrl.u32 %v10186, 7
    %v10188 = vsub.s32 %v9619, %v10187
    %v10189 = vrot.slane %v8962, %v10188
    %v10190 = vsel %vm9624, %v10189, %v10185
    %v10191 = vlaneseq
    %v10192 = vshrl.u32 %v10191, 7
    %v10193 = vsub.s32 %v9626, %v10192
    %v10194 = vrot.slane %v8965, %v10193
    %v10195 = vsel %vm9631, %v10194, %v10190
    %v10196 = vlaneseq
    %v10197 = vshrl.u32 %v10196, 7
    %v10198 = vsub.s32 %v9633, %v10197
    %v10199 = vrot.slane %v8968, %v10198
    %v10200 = vsel %vm9638, %v10199, %v10195
    %v10201 = vlaneseq
    %v10202 = vshrl.u32 %v10201, 7
    %v10203 = vsub.s32 %v9640, %v10202
    %v10204 = vrot.slane %v8971, %v10203
    %v10205 = vsel %vm9645, %v10204, %v10200
    %v10206 = vlaneseq
    %v10207 = vshrl.u32 %v10206, 7
    %v10208 = vsub.s32 %v9647, %v10207
    %v10209 = vrot.slane %v8974, %v10208
    %v10210 = vsel %vm9652, %v10209, %v10205
    %v10211 = vlaneseq
    %v10212 = vshrl.u32 %v10211, 7
    %v10213 = vsub.s32 %v9654, %v10212
    %v10214 = vrot.slane %v8977, %v10213
    %v10215 = vsel %vm9659, %v10214, %v10210
    %v10216 = vlaneseq
    %v10217 = vshrl.u32 %v10216, 7
    %v10218 = vsub.s32 %v9661, %v10217
    %v10219 = vrot.slane %v8980, %v10218
    %v10220 = vsel %vm9666, %v10219, %v10215
    %v10221 = vlaneseq
    %v10222 = vshrl.u32 %v10221, 7
    %v10223 = vsub.s32 %v9558, %v10222
    %v10224 = vrot.slane %v8983, %v10223
    %v10225 = vlaneseq
    %v10226 = vshrl.u32 %v10225, 7
    %v10227 = vsub.s32 %v9563, %v10226
    %v10228 = vrot.slane %v8986, %v10227
    %v10229 = vsel %vm9568, %v10228, %v10224
    %v10230 = vlaneseq
    %v10231 = vshrl.u32 %v10230, 7
    %v10232 = vsub.s32 %v9570, %v10231
    %v10233 = vrot.slane %v8989, %v10232
    %v10234 = vsel %vm9575, %v10233, %v10229
    %v10235 = vlaneseq
    %v10236 = vshrl.u32 %v10235, 7
    %v10237 = vsub.s32 %v9577, %v10236
    %v10238 = vrot.slane %v8992, %v10237
    %v10239 = vsel %vm9582, %v10238, %v10234
    %v10240 = vlaneseq
    %v10241 = vshrl.u32 %v10240, 7
    %v10242 = vsub.s32 %v9584, %v10241
    %v10243 = vrot.slane %v8995, %v10242
    %v10244 = vsel %vm9589, %v10243, %v10239
    %v10245 = vlaneseq
    %v10246 = vshrl.u32 %v10245, 7
    %v10247 = vsub.s32 %v9591, %v10246
    %v10248 = vrot.slane %v8998, %v10247
    %v10249 = vsel %vm9596, %v10248, %v10244
    %v10250 = vlaneseq
    %v10251 = vshrl.u32 %v10250, 7
    %v10252 = vsub.s32 %v9598, %v10251
    %v10253 = vrot.slane %v9001, %v10252
    %v10254 = vsel %vm9603, %v10253, %v10249
    %v10255 = vlaneseq
    %v10256 = vshrl.u32 %v10255, 7
    %v10257 = vsub.s32 %v9605, %v10256
    %v10258 = vrot.slane %v9004, %v10257
    %v10259 = vsel %vm9610, %v10258, %v10254
    %v10260 = vlaneseq
    %v10261 = vshrl.u32 %v10260, 7
    %v10262 = vsub.s32 %v9612, %v10261
    %v10263 = vrot.slane %v9007, %v10262
    %v10264 = vsel %vm9617, %v10263, %v10259
    %v10265 = vlaneseq
    %v10266 = vshrl.u32 %v10265, 7
    %v10267 = vsub.s32 %v9619, %v10266
    %v10268 = vrot.slane %v9010, %v10267
    %v10269 = vsel %vm9624, %v10268, %v10264
    %v10270 = vlaneseq
    %v10271 = vshrl.u32 %v10270, 7
    %v10272 = vsub.s32 %v9626, %v10271
    %v10273 = vrot.slane %v9013, %v10272
    %v10274 = vsel %vm9631, %v10273, %v10269
    %v10275 = vlaneseq
    %v10276 = vshrl.u32 %v10275, 7
    %v10277 = vsub.s32 %v9633, %v10276
    %v10278 = vrot.slane %v9016, %v10277
    %v10279 = vsel %vm9638, %v10278, %v10274
    %v10280 = vlaneseq
    %v10281 = vshrl.u32 %v10280, 7
    %v10282 = vsub.s32 %v9640, %v10281
    %v10283 = vrot.slane %v9019, %v10282
    %v10284 = vsel %vm9645, %v10283, %v10279
    %v10285 = vlaneseq
    %v10286 = vshrl.u32 %v10285, 7
    %v10287 = vsub.s32 %v9647, %v10286
    %v10288 = vrot.slane %v9022, %v10287
    %v10289 = vsel %vm9652, %v10288, %v10284
    %v10290 = vlaneseq
    %v10291 = vshrl.u32 %v10290, 7
    %v10292 = vsub.s32 %v9654, %v10291
    %v10293 = vrot.slane %v9025, %v10292
    %v10294 = vsel %vm9659, %v10293, %v10289
    %v10295 = vlaneseq
    %v10296 = vshrl.u32 %v10295, 7
    %v10297 = vsub.s32 %v9661, %v10296
    %v10298 = vrot.slane %v9028, %v10297
    %v10299 = vsel %vm9666, %v10298, %v10294
    %v10300 = vlaneseq
    %v10301 = vshrl.u32 %v10300, 7
    %v10302 = vsub.s32 %v9558, %v10301
    %v10303 = vrot.slane %v9031, %v10302
    %v10304 = vlaneseq
    %v10305 = vshrl.u32 %v10304, 7
    %v10306 = vsub.s32 %v9563, %v10305
    %v10307 = vrot.slane %v9034, %v10306
    %v10308 = vsel %vm9568, %v10307, %v10303
    %v10309 = vlaneseq
    %v10310 = vshrl.u32 %v10309, 7
    %v10311 = vsub.s32 %v9570, %v10310
    %v10312 = vrot.slane %v9037, %v10311
    %v10313 = vsel %vm9575, %v10312, %v10308
    %v10314 = vlaneseq
    %v10315 = vshrl.u32 %v10314, 7
    %v10316 = vsub.s32 %v9577, %v10315
    %v10317 = vrot.slane %v9040, %v10316
    %v10318 = vsel %vm9582, %v10317, %v10313
    %v10319 = vlaneseq
    %v10320 = vshrl.u32 %v10319, 7
    %v10321 = vsub.s32 %v9584, %v10320
    %v10322 = vrot.slane %v9043, %v10321
    %v10323 = vsel %vm9589, %v10322, %v10318
    %v10324 = vlaneseq
    %v10325 = vshrl.u32 %v10324, 7
    %v10326 = vsub.s32 %v9591, %v10325
    %v10327 = vrot.slane %v9046, %v10326
    %v10328 = vsel %vm9596, %v10327, %v10323
    %v10329 = vlaneseq
    %v10330 = vshrl.u32 %v10329, 7
    %v10331 = vsub.s32 %v9598, %v10330
    %v10332 = vrot.slane %v9049, %v10331
    %v10333 = vsel %vm9603, %v10332, %v10328
    %v10334 = vlaneseq
    %v10335 = vshrl.u32 %v10334, 7
    %v10336 = vsub.s32 %v9605, %v10335
    %v10337 = vrot.slane %v9052, %v10336
    %v10338 = vsel %vm9610, %v10337, %v10333
    %v10339 = vlaneseq
    %v10340 = vshrl.u32 %v10339, 7
    %v10341 = vsub.s32 %v9612, %v10340
    %v10342 = vrot.slane %v9055, %v10341
    %v10343 = vsel %vm9617, %v10342, %v10338
    %v10344 = vlaneseq
    %v10345 = vshrl.u32 %v10344, 7
    %v10346 = vsub.s32 %v9619, %v10345
    %v10347 = vrot.slane %v9058, %v10346
    %v10348 = vsel %vm9624, %v10347, %v10343
    %v10349 = vlaneseq
    %v10350 = vshrl.u32 %v10349, 7
    %v10351 = vsub.s32 %v9626, %v10350
    %v10352 = vrot.slane %v9061, %v10351
    %v10353 = vsel %vm9631, %v10352, %v10348
    %v10354 = vlaneseq
    %v10355 = vshrl.u32 %v10354, 7
    %v10356 = vsub.s32 %v9633, %v10355
    %v10357 = vrot.slane %v9064, %v10356
    %v10358 = vsel %vm9638, %v10357, %v10353
    %v10359 = vlaneseq
    %v10360 = vshrl.u32 %v10359, 7
    %v10361 = vsub.s32 %v9640, %v10360
    %v10362 = vrot.slane %v9067, %v10361
    %v10363 = vsel %vm9645, %v10362, %v10358
    %v10364 = vlaneseq
    %v10365 = vshrl.u32 %v10364, 7
    %v10366 = vsub.s32 %v9647, %v10365
    %v10367 = vrot.slane %v9070, %v10366
    %v10368 = vsel %vm9652, %v10367, %v10363
    %v10369 = vlaneseq
    %v10370 = vshrl.u32 %v10369, 7
    %v10371 = vsub.s32 %v9654, %v10370
    %v10372 = vrot.slane %v9073, %v10371
    %v10373 = vsel %vm9659, %v10372, %v10368
    %v10374 = vlaneseq
    %v10375 = vshrl.u32 %v10374, 7
    %v10376 = vsub.s32 %v9661, %v10375
    %v10377 = vrot.slane %v9076, %v10376
    %v10378 = vsel %vm9666, %v10377, %v10373
    %v10379 = vlaneseq
    %v10380 = vshrl.u32 %v10379, 7
    %v10381 = vsub.s32 %v9558, %v10380
    %v10382 = vrot.slane %v9079, %v10381
    %v10383 = vlaneseq
    %v10384 = vshrl.u32 %v10383, 7
    %v10385 = vsub.s32 %v9563, %v10384
    %v10386 = vrot.slane %v9082, %v10385
    %v10387 = vsel %vm9568, %v10386, %v10382
    %v10388 = vlaneseq
    %v10389 = vshrl.u32 %v10388, 7
    %v10390 = vsub.s32 %v9570, %v10389
    %v10391 = vrot.slane %v9085, %v10390
    %v10392 = vsel %vm9575, %v10391, %v10387
    %v10393 = vlaneseq
    %v10394 = vshrl.u32 %v10393, 7
    %v10395 = vsub.s32 %v9577, %v10394
    %v10396 = vrot.slane %v9088, %v10395
    %v10397 = vsel %vm9582, %v10396, %v10392
    %v10398 = vlaneseq
    %v10399 = vshrl.u32 %v10398, 7
    %v10400 = vsub.s32 %v9584, %v10399
    %v10401 = vrot.slane %v9091, %v10400
    %v10402 = vsel %vm9589, %v10401, %v10397
    %v10403 = vlaneseq
    %v10404 = vshrl.u32 %v10403, 7
    %v10405 = vsub.s32 %v9591, %v10404
    %v10406 = vrot.slane %v9094, %v10405
    %v10407 = vsel %vm9596, %v10406, %v10402
    %v10408 = vlaneseq
    %v10409 = vshrl.u32 %v10408, 7
    %v10410 = vsub.s32 %v9598, %v10409
    %v10411 = vrot.slane %v9097, %v10410
    %v10412 = vsel %vm9603, %v10411, %v10407
    %v10413 = vlaneseq
    %v10414 = vshrl.u32 %v10413, 7
    %v10415 = vsub.s32 %v9605, %v10414
    %v10416 = vrot.slane %v9100, %v10415
    %v10417 = vsel %vm9610, %v10416, %v10412
    %v10418 = vlaneseq
    %v10419 = vshrl.u32 %v10418, 7
    %v10420 = vsub.s32 %v9612, %v10419
    %v10421 = vrot.slane %v9103, %v10420
    %v10422 = vsel %vm9617, %v10421, %v10417
    %v10423 = vlaneseq
    %v10424 = vshrl.u32 %v10423, 7
    %v10425 = vsub.s32 %v9619, %v10424
    %v10426 = vrot.slane %v9106, %v10425
    %v10427 = vsel %vm9624, %v10426, %v10422
    %v10428 = vlaneseq
    %v10429 = vshrl.u32 %v10428, 7
    %v10430 = vsub.s32 %v9626, %v10429
    %v10431 = vrot.slane %v9109, %v10430
    %v10432 = vsel %vm9631, %v10431, %v10427
    %v10433 = vlaneseq
    %v10434 = vshrl.u32 %v10433, 7
    %v10435 = vsub.s32 %v9633, %v10434
    %v10436 = vrot.slane %v9112, %v10435
    %v10437 = vsel %vm9638, %v10436, %v10432
    %v10438 = vlaneseq
    %v10439 = vshrl.u32 %v10438, 7
    %v10440 = vsub.s32 %v9640, %v10439
    %v10441 = vrot.slane %v9115, %v10440
    %v10442 = vsel %vm9645, %v10441, %v10437
    %v10443 = vlaneseq
    %v10444 = vshrl.u32 %v10443, 7
    %v10445 = vsub.s32 %v9647, %v10444
    %v10446 = vrot.slane %v9118, %v10445
    %v10447 = vsel %vm9652, %v10446, %v10442
    %v10448 = vlaneseq
    %v10449 = vshrl.u32 %v10448, 7
    %v10450 = vsub.s32 %v9654, %v10449
    %v10451 = vrot.slane %v9121, %v10450
    %v10452 = vsel %vm9659, %v10451, %v10447
    %v10453 = vlaneseq
    %v10454 = vshrl.u32 %v10453, 7
    %v10455 = vsub.s32 %v9661, %v10454
    %v10456 = vrot.slane %v9124, %v10455
    %v10457 = vsel %vm9666, %v10456, %v10452
    %v10458 = vlaneseq
    %v10459 = vshrl.u32 %v10458, 7
    %v10460 = vsub.s32 %v9558, %v10459
    %v10461 = vrot.slane %v9127, %v10460
    %v10462 = vlaneseq
    %v10463 = vshrl.u32 %v10462, 7
    %v10464 = vsub.s32 %v9563, %v10463
    %v10465 = vrot.slane %v9130, %v10464
    %v10466 = vsel %vm9568, %v10465, %v10461
    %v10467 = vlaneseq
    %v10468 = vshrl.u32 %v10467, 7
    %v10469 = vsub.s32 %v9570, %v10468
    %v10470 = vrot.slane %v9133, %v10469
    %v10471 = vsel %vm9575, %v10470, %v10466
    %v10472 = vlaneseq
    %v10473 = vshrl.u32 %v10472, 7
    %v10474 = vsub.s32 %v9577, %v10473
    %v10475 = vrot.slane %v9136, %v10474
    %v10476 = vsel %vm9582, %v10475, %v10471
    %v10477 = vlaneseq
    %v10478 = vshrl.u32 %v10477, 7
    %v10479 = vsub.s32 %v9584, %v10478
    %v10480 = vrot.slane %v9139, %v10479
    %v10481 = vsel %vm9589, %v10480, %v10476
    %v10482 = vlaneseq
    %v10483 = vshrl.u32 %v10482, 7
    %v10484 = vsub.s32 %v9591, %v10483
    %v10485 = vrot.slane %v9142, %v10484
    %v10486 = vsel %vm9596, %v10485, %v10481
    %v10487 = vlaneseq
    %v10488 = vshrl.u32 %v10487, 7
    %v10489 = vsub.s32 %v9598, %v10488
    %v10490 = vrot.slane %v9145, %v10489
    %v10491 = vsel %vm9603, %v10490, %v10486
    %v10492 = vlaneseq
    %v10493 = vshrl.u32 %v10492, 7
    %v10494 = vsub.s32 %v9605, %v10493
    %v10495 = vrot.slane %v9148, %v10494
    %v10496 = vsel %vm9610, %v10495, %v10491
    %v10497 = vlaneseq
    %v10498 = vshrl.u32 %v10497, 7
    %v10499 = vsub.s32 %v9612, %v10498
    %v10500 = vrot.slane %v9151, %v10499
    %v10501 = vsel %vm9617, %v10500, %v10496
    %v10502 = vlaneseq
    %v10503 = vshrl.u32 %v10502, 7
    %v10504 = vsub.s32 %v9619, %v10503
    %v10505 = vrot.slane %v9154, %v10504
    %v10506 = vsel %vm9624, %v10505, %v10501
    %v10507 = vlaneseq
    %v10508 = vshrl.u32 %v10507, 7
    %v10509 = vsub.s32 %v9626, %v10508
    %v10510 = vrot.slane %v9157, %v10509
    %v10511 = vsel %vm9631, %v10510, %v10506
    %v10512 = vlaneseq
    %v10513 = vshrl.u32 %v10512, 7
    %v10514 = vsub.s32 %v9633, %v10513
    %v10515 = vrot.slane %v9160, %v10514
    %v10516 = vsel %vm9638, %v10515, %v10511
    %v10517 = vlaneseq
    %v10518 = vshrl.u32 %v10517, 7
    %v10519 = vsub.s32 %v9640, %v10518
    %v10520 = vrot.slane %v9163, %v10519
    %v10521 = vsel %vm9645, %v10520, %v10516
    %v10522 = vlaneseq
    %v10523 = vshrl.u32 %v10522, 7
    %v10524 = vsub.s32 %v9647, %v10523
    %v10525 = vrot.slane %v9166, %v10524
    %v10526 = vsel %vm9652, %v10525, %v10521
    %v10527 = vlaneseq
    %v10528 = vshrl.u32 %v10527, 7
    %v10529 = vsub.s32 %v9654, %v10528
    %v10530 = vrot.slane %v9169, %v10529
    %v10531 = vsel %vm9659, %v10530, %v10526
    %v10532 = vlaneseq
    %v10533 = vshrl.u32 %v10532, 7
    %v10534 = vsub.s32 %v9661, %v10533
    %v10535 = vrot.slane %v9172, %v10534
    %v10536 = vsel %vm9666, %v10535, %v10531
    %v10537 = vlaneseq
    %v10538 = vshrl.u32 %v10537, 7
    %v10539 = vsub.s32 %v9558, %v10538
    %v10540 = vrot.slane %v9175, %v10539
    %v10541 = vlaneseq
    %v10542 = vshrl.u32 %v10541, 7
    %v10543 = vsub.s32 %v9563, %v10542
    %v10544 = vrot.slane %v9178, %v10543
    %v10545 = vsel %vm9568, %v10544, %v10540
    %v10546 = vlaneseq
    %v10547 = vshrl.u32 %v10546, 7
    %v10548 = vsub.s32 %v9570, %v10547
    %v10549 = vrot.slane %v9181, %v10548
    %v10550 = vsel %vm9575, %v10549, %v10545
    %v10551 = vlaneseq
    %v10552 = vshrl.u32 %v10551, 7
    %v10553 = vsub.s32 %v9577, %v10552
    %v10554 = vrot.slane %v9184, %v10553
    %v10555 = vsel %vm9582, %v10554, %v10550
    %v10556 = vlaneseq
    %v10557 = vshrl.u32 %v10556, 7
    %v10558 = vsub.s32 %v9584, %v10557
    %v10559 = vrot.slane %v9187, %v10558
    %v10560 = vsel %vm9589, %v10559, %v10555
    %v10561 = vlaneseq
    %v10562 = vshrl.u32 %v10561, 7
    %v10563 = vsub.s32 %v9591, %v10562
    %v10564 = vrot.slane %v9190, %v10563
    %v10565 = vsel %vm9596, %v10564, %v10560
    %v10566 = vlaneseq
    %v10567 = vshrl.u32 %v10566, 7
    %v10568 = vsub.s32 %v9598, %v10567
    %v10569 = vrot.slane %v9193, %v10568
    %v10570 = vsel %vm9603, %v10569, %v10565
    %v10571 = vlaneseq
    %v10572 = vshrl.u32 %v10571, 7
    %v10573 = vsub.s32 %v9605, %v10572
    %v10574 = vrot.slane %v9196, %v10573
    %v10575 = vsel %vm9610, %v10574, %v10570
    %v10576 = vlaneseq
    %v10577 = vshrl.u32 %v10576, 7
    %v10578 = vsub.s32 %v9612, %v10577
    %v10579 = vrot.slane %v9199, %v10578
    %v10580 = vsel %vm9617, %v10579, %v10575
    %v10581 = vlaneseq
    %v10582 = vshrl.u32 %v10581, 7
    %v10583 = vsub.s32 %v9619, %v10582
    %v10584 = vrot.slane %v9202, %v10583
    %v10585 = vsel %vm9624, %v10584, %v10580
    %v10586 = vlaneseq
    %v10587 = vshrl.u32 %v10586, 7
    %v10588 = vsub.s32 %v9626, %v10587
    %v10589 = vrot.slane %v9205, %v10588
    %v10590 = vsel %vm9631, %v10589, %v10585
    %v10591 = vlaneseq
    %v10592 = vshrl.u32 %v10591, 7
    %v10593 = vsub.s32 %v9633, %v10592
    %v10594 = vrot.slane %v9208, %v10593
    %v10595 = vsel %vm9638, %v10594, %v10590
    %v10596 = vlaneseq
    %v10597 = vshrl.u32 %v10596, 7
    %v10598 = vsub.s32 %v9640, %v10597
    %v10599 = vrot.slane %v9211, %v10598
    %v10600 = vsel %vm9645, %v10599, %v10595
    %v10601 = vlaneseq
    %v10602 = vshrl.u32 %v10601, 7
    %v10603 = vsub.s32 %v9647, %v10602
    %v10604 = vrot.slane %v9214, %v10603
    %v10605 = vsel %vm9652, %v10604, %v10600
    %v10606 = vlaneseq
    %v10607 = vshrl.u32 %v10606, 7
    %v10608 = vsub.s32 %v9654, %v10607
    %v10609 = vrot.slane %v9217, %v10608
    %v10610 = vsel %vm9659, %v10609, %v10605
    %v10611 = vlaneseq
    %v10612 = vshrl.u32 %v10611, 7
    %v10613 = vsub.s32 %v9661, %v10612
    %v10614 = vrot.slane %v9220, %v10613
    %v10615 = vsel %vm9666, %v10614, %v10610
    %v10616 = vlaneseq
    %v10617 = vshrl.u32 %v10616, 7
    %v10618 = vsub.s32 %v9558, %v10617
    %v10619 = vrot.slane %v9223, %v10618
    %v10620 = vlaneseq
    %v10621 = vshrl.u32 %v10620, 7
    %v10622 = vsub.s32 %v9563, %v10621
    %v10623 = vrot.slane %v9226, %v10622
    %v10624 = vsel %vm9568, %v10623, %v10619
    %v10625 = vlaneseq
    %v10626 = vshrl.u32 %v10625, 7
    %v10627 = vsub.s32 %v9570, %v10626
    %v10628 = vrot.slane %v9229, %v10627
    %v10629 = vsel %vm9575, %v10628, %v10624
    %v10630 = vlaneseq
    %v10631 = vshrl.u32 %v10630, 7
    %v10632 = vsub.s32 %v9577, %v10631
    %v10633 = vrot.slane %v9232, %v10632
    %v10634 = vsel %vm9582, %v10633, %v10629
    %v10635 = vlaneseq
    %v10636 = vshrl.u32 %v10635, 7
    %v10637 = vsub.s32 %v9584, %v10636
    %v10638 = vrot.slane %v9235, %v10637
    %v10639 = vsel %vm9589, %v10638, %v10634
    %v10640 = vlaneseq
    %v10641 = vshrl.u32 %v10640, 7
    %v10642 = vsub.s32 %v9591, %v10641
    %v10643 = vrot.slane %v9238, %v10642
    %v10644 = vsel %vm9596, %v10643, %v10639
    %v10645 = vlaneseq
    %v10646 = vshrl.u32 %v10645, 7
    %v10647 = vsub.s32 %v9598, %v10646
    %v10648 = vrot.slane %v9241, %v10647
    %v10649 = vsel %vm9603, %v10648, %v10644
    %v10650 = vlaneseq
    %v10651 = vshrl.u32 %v10650, 7
    %v10652 = vsub.s32 %v9605, %v10651
    %v10653 = vrot.slane %v9244, %v10652
    %v10654 = vsel %vm9610, %v10653, %v10649
    %v10655 = vlaneseq
    %v10656 = vshrl.u32 %v10655, 7
    %v10657 = vsub.s32 %v9612, %v10656
    %v10658 = vrot.slane %v9247, %v10657
    %v10659 = vsel %vm9617, %v10658, %v10654
    %v10660 = vlaneseq
    %v10661 = vshrl.u32 %v10660, 7
    %v10662 = vsub.s32 %v9619, %v10661
    %v10663 = vrot.slane %v9250, %v10662
    %v10664 = vsel %vm9624, %v10663, %v10659
    %v10665 = vlaneseq
    %v10666 = vshrl.u32 %v10665, 7
    %v10667 = vsub.s32 %v9626, %v10666
    %v10668 = vrot.slane %v9253, %v10667
    %v10669 = vsel %vm9631, %v10668, %v10664
    %v10670 = vlaneseq
    %v10671 = vshrl.u32 %v10670, 7
    %v10672 = vsub.s32 %v9633, %v10671
    %v10673 = vrot.slane %v9256, %v10672
    %v10674 = vsel %vm9638, %v10673, %v10669
    %v10675 = vlaneseq
    %v10676 = vshrl.u32 %v10675, 7
    %v10677 = vsub.s32 %v9640, %v10676
    %v10678 = vrot.slane %v9259, %v10677
    %v10679 = vsel %vm9645, %v10678, %v10674
    %v10680 = vlaneseq
    %v10681 = vshrl.u32 %v10680, 7
    %v10682 = vsub.s32 %v9647, %v10681
    %v10683 = vrot.slane %v9262, %v10682
    %v10684 = vsel %vm9652, %v10683, %v10679
    %v10685 = vlaneseq
    %v10686 = vshrl.u32 %v10685, 7
    %v10687 = vsub.s32 %v9654, %v10686
    %v10688 = vrot.slane %v9265, %v10687
    %v10689 = vsel %vm9659, %v10688, %v10684
    %v10690 = vlaneseq
    %v10691 = vshrl.u32 %v10690, 7
    %v10692 = vsub.s32 %v9661, %v10691
    %v10693 = vrot.slane %v9268, %v10692
    %v10694 = vsel %vm9666, %v10693, %v10689
    %v10695 = vlaneseq
    %v10696 = vshrl.u32 %v10695, 7
    %v10697 = vsub.s32 %v9558, %v10696
    %v10698 = vrot.slane %v9271, %v10697
    %v10699 = vlaneseq
    %v10700 = vshrl.u32 %v10699, 7
    %v10701 = vsub.s32 %v9563, %v10700
    %v10702 = vrot.slane %v9274, %v10701
    %v10703 = vsel %vm9568, %v10702, %v10698
    %v10704 = vlaneseq
    %v10705 = vshrl.u32 %v10704, 7
    %v10706 = vsub.s32 %v9570, %v10705
    %v10707 = vrot.slane %v9277, %v10706
    %v10708 = vsel %vm9575, %v10707, %v10703
    %v10709 = vlaneseq
    %v10710 = vshrl.u32 %v10709, 7
    %v10711 = vsub.s32 %v9577, %v10710
    %v10712 = vrot.slane %v9280, %v10711
    %v10713 = vsel %vm9582, %v10712, %v10708
    %v10714 = vlaneseq
    %v10715 = vshrl.u32 %v10714, 7
    %v10716 = vsub.s32 %v9584, %v10715
    %v10717 = vrot.slane %v9283, %v10716
    %v10718 = vsel %vm9589, %v10717, %v10713
    %v10719 = vlaneseq
    %v10720 = vshrl.u32 %v10719, 7
    %v10721 = vsub.s32 %v9591, %v10720
    %v10722 = vrot.slane %v9286, %v10721
    %v10723 = vsel %vm9596, %v10722, %v10718
    %v10724 = vlaneseq
    %v10725 = vshrl.u32 %v10724, 7
    %v10726 = vsub.s32 %v9598, %v10725
    %v10727 = vrot.slane %v9289, %v10726
    %v10728 = vsel %vm9603, %v10727, %v10723
    %v10729 = vlaneseq
    %v10730 = vshrl.u32 %v10729, 7
    %v10731 = vsub.s32 %v9605, %v10730
    %v10732 = vrot.slane %v9292, %v10731
    %v10733 = vsel %vm9610, %v10732, %v10728
    %v10734 = vlaneseq
    %v10735 = vshrl.u32 %v10734, 7
    %v10736 = vsub.s32 %v9612, %v10735
    %v10737 = vrot.slane %v9295, %v10736
    %v10738 = vsel %vm9617, %v10737, %v10733
    %v10739 = vlaneseq
    %v10740 = vshrl.u32 %v10739, 7
    %v10741 = vsub.s32 %v9619, %v10740
    %v10742 = vrot.slane %v9298, %v10741
    %v10743 = vsel %vm9624, %v10742, %v10738
    %v10744 = vlaneseq
    %v10745 = vshrl.u32 %v10744, 7
    %v10746 = vsub.s32 %v9626, %v10745
    %v10747 = vrot.slane %v9301, %v10746
    %v10748 = vsel %vm9631, %v10747, %v10743
    %v10749 = vlaneseq
    %v10750 = vshrl.u32 %v10749, 7
    %v10751 = vsub.s32 %v9633, %v10750
    %v10752 = vrot.slane %v9304, %v10751
    %v10753 = vsel %vm9638, %v10752, %v10748
    %v10754 = vlaneseq
    %v10755 = vshrl.u32 %v10754, 7
    %v10756 = vsub.s32 %v9640, %v10755
    %v10757 = vrot.slane %v9307, %v10756
    %v10758 = vsel %vm9645, %v10757, %v10753
    %v10759 = vlaneseq
    %v10760 = vshrl.u32 %v10759, 7
    %v10761 = vsub.s32 %v9647, %v10760
    %v10762 = vrot.slane %v9310, %v10761
    %v10763 = vsel %vm9652, %v10762, %v10758
    %v10764 = vlaneseq
    %v10765 = vshrl.u32 %v10764, 7
    %v10766 = vsub.s32 %v9654, %v10765
    %v10767 = vrot.slane %v9313, %v10766
    %v10768 = vsel %vm9659, %v10767, %v10763
    %v10769 = vlaneseq
    %v10770 = vshrl.u32 %v10769, 7
    %v10771 = vsub.s32 %v9661, %v10770
    %v10772 = vrot.slane %v9316, %v10771
    %v10773 = vsel %vm9666, %v10772, %v10768
    %v10774 = vlaneseq
    %v10775 = vshrl.u32 %v10774, 7
    %v10776 = vsub.s32 %v9558, %v10775
    %v10777 = vrot.slane %v9319, %v10776
    %v10778 = vlaneseq
    %v10779 = vshrl.u32 %v10778, 7
    %v10780 = vsub.s32 %v9563, %v10779
    %v10781 = vrot.slane %v9322, %v10780
    %v10782 = vsel %vm9568, %v10781, %v10777
    %v10783 = vlaneseq
    %v10784 = vshrl.u32 %v10783, 7
    %v10785 = vsub.s32 %v9570, %v10784
    %v10786 = vrot.slane %v9325, %v10785
    %v10787 = vsel %vm9575, %v10786, %v10782
    %v10788 = vlaneseq
    %v10789 = vshrl.u32 %v10788, 7
    %v10790 = vsub.s32 %v9577, %v10789
    %v10791 = vrot.slane %v9328, %v10790
    %v10792 = vsel %vm9582, %v10791, %v10787
    %v10793 = vlaneseq
    %v10794 = vshrl.u32 %v10793, 7
    %v10795 = vsub.s32 %v9584, %v10794
    %v10796 = vrot.slane %v9331, %v10795
    %v10797 = vsel %vm9589, %v10796, %v10792
    %v10798 = vlaneseq
    %v10799 = vshrl.u32 %v10798, 7
    %v10800 = vsub.s32 %v9591, %v10799
    %v10801 = vrot.slane %v9334, %v10800
    %v10802 = vsel %vm9596, %v10801, %v10797
    %v10803 = vlaneseq
    %v10804 = vshrl.u32 %v10803, 7
    %v10805 = vsub.s32 %v9598, %v10804
    %v10806 = vrot.slane %v9337, %v10805
    %v10807 = vsel %vm9603, %v10806, %v10802
    %v10808 = vlaneseq
    %v10809 = vshrl.u32 %v10808, 7
    %v10810 = vsub.s32 %v9605, %v10809
    %v10811 = vrot.slane %v9340, %v10810
    %v10812 = vsel %vm9610, %v10811, %v10807
    %v10813 = vlaneseq
    %v10814 = vshrl.u32 %v10813, 7
    %v10815 = vsub.s32 %v9612, %v10814
    %v10816 = vrot.slane %v9343, %v10815
    %v10817 = vsel %vm9617, %v10816, %v10812
    %v10818 = vlaneseq
    %v10819 = vshrl.u32 %v10818, 7
    %v10820 = vsub.s32 %v9619, %v10819
    %v10821 = vrot.slane %v9346, %v10820
    %v10822 = vsel %vm9624, %v10821, %v10817
    %v10823 = vlaneseq
    %v10824 = vshrl.u32 %v10823, 7
    %v10825 = vsub.s32 %v9626, %v10824
    %v10826 = vrot.slane %v9349, %v10825
    %v10827 = vsel %vm9631, %v10826, %v10822
    %v10828 = vlaneseq
    %v10829 = vshrl.u32 %v10828, 7
    %v10830 = vsub.s32 %v9633, %v10829
    %v10831 = vrot.slane %v9352, %v10830
    %v10832 = vsel %vm9638, %v10831, %v10827
    %v10833 = vlaneseq
    %v10834 = vshrl.u32 %v10833, 7
    %v10835 = vsub.s32 %v9640, %v10834
    %v10836 = vrot.slane %v9355, %v10835
    %v10837 = vsel %vm9645, %v10836, %v10832
    %v10838 = vlaneseq
    %v10839 = vshrl.u32 %v10838, 7
    %v10840 = vsub.s32 %v9647, %v10839
    %v10841 = vrot.slane %v9358, %v10840
    %v10842 = vsel %vm9652, %v10841, %v10837
    %v10843 = vlaneseq
    %v10844 = vshrl.u32 %v10843, 7
    %v10845 = vsub.s32 %v9654, %v10844
    %v10846 = vrot.slane %v9361, %v10845
    %v10847 = vsel %vm9659, %v10846, %v10842
    %v10848 = vlaneseq
    %v10849 = vshrl.u32 %v10848, 7
    %v10850 = vsub.s32 %v9661, %v10849
    %v10851 = vrot.slane %v9364, %v10850
    %v10852 = vsel %vm9666, %v10851, %v10847
    %v10853 = vlaneseq
    %v10854 = vshrl.u32 %v10853, 7
    %v10855 = vsub.s32 %v9558, %v10854
    %v10856 = vrot.slane %v9367, %v10855
    %v10857 = vlaneseq
    %v10858 = vshrl.u32 %v10857, 7
    %v10859 = vsub.s32 %v9563, %v10858
    %v10860 = vrot.slane %v9370, %v10859
    %v10861 = vsel %vm9568, %v10860, %v10856
    %v10862 = vlaneseq
    %v10863 = vshrl.u32 %v10862, 7
    %v10864 = vsub.s32 %v9570, %v10863
    %v10865 = vrot.slane %v9373, %v10864
    %v10866 = vsel %vm9575, %v10865, %v10861
    %v10867 = vlaneseq
    %v10868 = vshrl.u32 %v10867, 7
    %v10869 = vsub.s32 %v9577, %v10868
    %v10870 = vrot.slane %v9376, %v10869
    %v10871 = vsel %vm9582, %v10870, %v10866
    %v10872 = vlaneseq
    %v10873 = vshrl.u32 %v10872, 7
    %v10874 = vsub.s32 %v9584, %v10873
    %v10875 = vrot.slane %v9379, %v10874
    %v10876 = vsel %vm9589, %v10875, %v10871
    %v10877 = vlaneseq
    %v10878 = vshrl.u32 %v10877, 7
    %v10879 = vsub.s32 %v9591, %v10878
    %v10880 = vrot.slane %v9382, %v10879
    %v10881 = vsel %vm9596, %v10880, %v10876
    %v10882 = vlaneseq
    %v10883 = vshrl.u32 %v10882, 7
    %v10884 = vsub.s32 %v9598, %v10883
    %v10885 = vrot.slane %v9385, %v10884
    %v10886 = vsel %vm9603, %v10885, %v10881
    %v10887 = vlaneseq
    %v10888 = vshrl.u32 %v10887, 7
    %v10889 = vsub.s32 %v9605, %v10888
    %v10890 = vrot.slane %v9388, %v10889
    %v10891 = vsel %vm9610, %v10890, %v10886
    %v10892 = vlaneseq
    %v10893 = vshrl.u32 %v10892, 7
    %v10894 = vsub.s32 %v9612, %v10893
    %v10895 = vrot.slane %v9391, %v10894
    %v10896 = vsel %vm9617, %v10895, %v10891
    %v10897 = vlaneseq
    %v10898 = vshrl.u32 %v10897, 7
    %v10899 = vsub.s32 %v9619, %v10898
    %v10900 = vrot.slane %v9394, %v10899
    %v10901 = vsel %vm9624, %v10900, %v10896
    %v10902 = vlaneseq
    %v10903 = vshrl.u32 %v10902, 7
    %v10904 = vsub.s32 %v9626, %v10903
    %v10905 = vrot.slane %v9397, %v10904
    %v10906 = vsel %vm9631, %v10905, %v10901
    %v10907 = vlaneseq
    %v10908 = vshrl.u32 %v10907, 7
    %v10909 = vsub.s32 %v9633, %v10908
    %v10910 = vrot.slane %v9400, %v10909
    %v10911 = vsel %vm9638, %v10910, %v10906
    %v10912 = vlaneseq
    %v10913 = vshrl.u32 %v10912, 7
    %v10914 = vsub.s32 %v9640, %v10913
    %v10915 = vrot.slane %v9403, %v10914
    %v10916 = vsel %vm9645, %v10915, %v10911
    %v10917 = vlaneseq
    %v10918 = vshrl.u32 %v10917, 7
    %v10919 = vsub.s32 %v9647, %v10918
    %v10920 = vrot.slane %v9406, %v10919
    %v10921 = vsel %vm9652, %v10920, %v10916
    %v10922 = vlaneseq
    %v10923 = vshrl.u32 %v10922, 7
    %v10924 = vsub.s32 %v9654, %v10923
    %v10925 = vrot.slane %v9409, %v10924
    %v10926 = vsel %vm9659, %v10925, %v10921
    %v10927 = vlaneseq
    %v10928 = vshrl.u32 %v10927, 7
    %v10929 = vsub.s32 %v9661, %v10928
    %v10930 = vrot.slane %v9412, %v10929
    %v10931 = vsel %vm9666, %v10930, %v10926
    %v10932 = vlaneseq
    %v10933 = vshrl.u32 %v10932, 7
    %v10934 = vsub.s32 %v9558, %v10933
    %v10935 = vrot.slane %v9415, %v10934
    %v10936 = vlaneseq
    %v10937 = vshrl.u32 %v10936, 7
    %v10938 = vsub.s32 %v9563, %v10937
    %v10939 = vrot.slane %v9418, %v10938
    %v10940 = vsel %vm9568, %v10939, %v10935
    %v10941 = vlaneseq
    %v10942 = vshrl.u32 %v10941, 7
    %v10943 = vsub.s32 %v9570, %v10942
    %v10944 = vrot.slane %v9421, %v10943
    %v10945 = vsel %vm9575, %v10944, %v10940
    %v10946 = vlaneseq
    %v10947 = vshrl.u32 %v10946, 7
    %v10948 = vsub.s32 %v9577, %v10947
    %v10949 = vrot.slane %v9424, %v10948
    %v10950 = vsel %vm9582, %v10949, %v10945
    %v10951 = vlaneseq
    %v10952 = vshrl.u32 %v10951, 7
    %v10953 = vsub.s32 %v9584, %v10952
    %v10954 = vrot.slane %v9427, %v10953
    %v10955 = vsel %vm9589, %v10954, %v10950
    %v10956 = vlaneseq
    %v10957 = vshrl.u32 %v10956, 7
    %v10958 = vsub.s32 %v9591, %v10957
    %v10959 = vrot.slane %v9430, %v10958
    %v10960 = vsel %vm9596, %v10959, %v10955
    %v10961 = vlaneseq
    %v10962 = vshrl.u32 %v10961, 7
    %v10963 = vsub.s32 %v9598, %v10962
    %v10964 = vrot.slane %v9433, %v10963
    %v10965 = vsel %vm9603, %v10964, %v10960
    %v10966 = vlaneseq
    %v10967 = vshrl.u32 %v10966, 7
    %v10968 = vsub.s32 %v9605, %v10967
    %v10969 = vrot.slane %v9436, %v10968
    %v10970 = vsel %vm9610, %v10969, %v10965
    %v10971 = vlaneseq
    %v10972 = vshrl.u32 %v10971, 7
    %v10973 = vsub.s32 %v9612, %v10972
    %v10974 = vrot.slane %v9439, %v10973
    %v10975 = vsel %vm9617, %v10974, %v10970
    %v10976 = vlaneseq
    %v10977 = vshrl.u32 %v10976, 7
    %v10978 = vsub.s32 %v9619, %v10977
    %v10979 = vrot.slane %v9442, %v10978
    %v10980 = vsel %vm9624, %v10979, %v10975
    %v10981 = vlaneseq
    %v10982 = vshrl.u32 %v10981, 7
    %v10983 = vsub.s32 %v9626, %v10982
    %v10984 = vrot.slane %v9445, %v10983
    %v10985 = vsel %vm9631, %v10984, %v10980
    %v10986 = vlaneseq
    %v10987 = vshrl.u32 %v10986, 7
    %v10988 = vsub.s32 %v9633, %v10987
    %v10989 = vrot.slane %v9448, %v10988
    %v10990 = vsel %vm9638, %v10989, %v10985
    %v10991 = vlaneseq
    %v10992 = vshrl.u32 %v10991, 7
    %v10993 = vsub.s32 %v9640, %v10992
    %v10994 = vrot.slane %v9451, %v10993
    %v10995 = vsel %vm9645, %v10994, %v10990
    %v10996 = vlaneseq
    %v10997 = vshrl.u32 %v10996, 7
    %v10998 = vsub.s32 %v9647, %v10997
    %v10999 = vrot.slane %v9454, %v10998
    %v11000 = vsel %vm9652, %v10999, %v10995
    %v11001 = vlaneseq
    %v11002 = vshrl.u32 %v11001, 7
    %v11003 = vsub.s32 %v9654, %v11002
    %v11004 = vrot.slane %v9457, %v11003
    %v11005 = vsel %vm9659, %v11004, %v11000
    %v11006 = vlaneseq
    %v11007 = vshrl.u32 %v11006, 7
    %v11008 = vsub.s32 %v9661, %v11007
    %v11009 = vrot.slane %v9460, %v11008
    %v11010 = vsel %vm9666, %v11009, %v11005
    %v11011 = vlaneseq
    %v11012 = vshrl.u32 %v11011, 7
    %v11013 = vsub.s32 %v9558, %v11012
    %v11014 = vrot.slane %v9463, %v11013
    %v11015 = vlaneseq
    %v11016 = vshrl.u32 %v11015, 7
    %v11017 = vsub.s32 %v9563, %v11016
    %v11018 = vrot.slane %v9466, %v11017
    %v11019 = vsel %vm9568, %v11018, %v11014
    %v11020 = vlaneseq
    %v11021 = vshrl.u32 %v11020, 7
    %v11022 = vsub.s32 %v9570, %v11021
    %v11023 = vrot.slane %v9469, %v11022
    %v11024 = vsel %vm9575, %v11023, %v11019
    %v11025 = vlaneseq
    %v11026 = vshrl.u32 %v11025, 7
    %v11027 = vsub.s32 %v9577, %v11026
    %v11028 = vrot.slane %v9472, %v11027
    %v11029 = vsel %vm9582, %v11028, %v11024
    %v11030 = vlaneseq
    %v11031 = vshrl.u32 %v11030, 7
    %v11032 = vsub.s32 %v9584, %v11031
    %v11033 = vrot.slane %v9475, %v11032
    %v11034 = vsel %vm9589, %v11033, %v11029
    %v11035 = vlaneseq
    %v11036 = vshrl.u32 %v11035, 7
    %v11037 = vsub.s32 %v9591, %v11036
    %v11038 = vrot.slane %v9478, %v11037
    %v11039 = vsel %vm9596, %v11038, %v11034
    %v11040 = vlaneseq
    %v11041 = vshrl.u32 %v11040, 7
    %v11042 = vsub.s32 %v9598, %v11041
    %v11043 = vrot.slane %v9481, %v11042
    %v11044 = vsel %vm9603, %v11043, %v11039
    %v11045 = vlaneseq
    %v11046 = vshrl.u32 %v11045, 7
    %v11047 = vsub.s32 %v9605, %v11046
    %v11048 = vrot.slane %v9484, %v11047
    %v11049 = vsel %vm9610, %v11048, %v11044
    %v11050 = vlaneseq
    %v11051 = vshrl.u32 %v11050, 7
    %v11052 = vsub.s32 %v9612, %v11051
    %v11053 = vrot.slane %v9487, %v11052
    %v11054 = vsel %vm9617, %v11053, %v11049
    %v11055 = vlaneseq
    %v11056 = vshrl.u32 %v11055, 7
    %v11057 = vsub.s32 %v9619, %v11056
    %v11058 = vrot.slane %v9490, %v11057
    %v11059 = vsel %vm9624, %v11058, %v11054
    %v11060 = vlaneseq
    %v11061 = vshrl.u32 %v11060, 7
    %v11062 = vsub.s32 %v9626, %v11061
    %v11063 = vrot.slane %v9493, %v11062
    %v11064 = vsel %vm9631, %v11063, %v11059
    %v11065 = vlaneseq
    %v11066 = vshrl.u32 %v11065, 7
    %v11067 = vsub.s32 %v9633, %v11066
    %v11068 = vrot.slane %v9496, %v11067
    %v11069 = vsel %vm9638, %v11068, %v11064
    %v11070 = vlaneseq
    %v11071 = vshrl.u32 %v11070, 7
    %v11072 = vsub.s32 %v9640, %v11071
    %v11073 = vrot.slane %v9499, %v11072
    %v11074 = vsel %vm9645, %v11073, %v11069
    %v11075 = vlaneseq
    %v11076 = vshrl.u32 %v11075, 7
    %v11077 = vsub.s32 %v9647, %v11076
    %v11078 = vrot.slane %v9502, %v11077
    %v11079 = vsel %vm9652, %v11078, %v11074
    %v11080 = vlaneseq
    %v11081 = vshrl.u32 %v11080, 7
    %v11082 = vsub.s32 %v9654, %v11081
    %v11083 = vrot.slane %v9505, %v11082
    %v11084 = vsel %vm9659, %v11083, %v11079
    %v11085 = vlaneseq
    %v11086 = vshrl.u32 %v11085, 7
    %v11087 = vsub.s32 %v9661, %v11086
    %v11088 = vrot.slane %v9508, %v11087
    %v11089 = vsel %vm9666, %v11088, %v11084
    %v11090 = vlaneseq
    %v11091 = vshrl.u32 %v11090, 7
    %v11092 = vsub.s32 %v9558, %v11091
    %v11093 = vrot.slane %v9511, %v11092
    %v11094 = vlaneseq
    %v11095 = vshrl.u32 %v11094, 7
    %v11096 = vsub.s32 %v9563, %v11095
    %v11097 = vrot.slane %v9514, %v11096
    %v11098 = vsel %vm9568, %v11097, %v11093
    %v11099 = vlaneseq
    %v11100 = vshrl.u32 %v11099, 7
    %v11101 = vsub.s32 %v9570, %v11100
    %v11102 = vrot.slane %v9517, %v11101
    %v11103 = vsel %vm9575, %v11102, %v11098
    %v11104 = vlaneseq
    %v11105 = vshrl.u32 %v11104, 7
    %v11106 = vsub.s32 %v9577, %v11105
    %v11107 = vrot.slane %v9520, %v11106
    %v11108 = vsel %vm9582, %v11107, %v11103
    %v11109 = vlaneseq
    %v11110 = vshrl.u32 %v11109, 7
    %v11111 = vsub.s32 %v9584, %v11110
    %v11112 = vrot.slane %v9523, %v11111
    %v11113 = vsel %vm9589, %v11112, %v11108
    %v11114 = vlaneseq
    %v11115 = vshrl.u32 %v11114, 7
    %v11116 = vsub.s32 %v9591, %v11115
    %v11117 = vrot.slane %v9526, %v11116
    %v11118 = vsel %vm9596, %v11117, %v11113
    %v11119 = vlaneseq
    %v11120 = vshrl.u32 %v11119, 7
    %v11121 = vsub.s32 %v9598, %v11120
    %v11122 = vrot.slane %v9529, %v11121
    %v11123 = vsel %vm9603, %v11122, %v11118
    %v11124 = vlaneseq
    %v11125 = vshrl.u32 %v11124, 7
    %v11126 = vsub.s32 %v9605, %v11125
    %v11127 = vrot.slane %v9532, %v11126
    %v11128 = vsel %vm9610, %v11127, %v11123
    %v11129 = vlaneseq
    %v11130 = vshrl.u32 %v11129, 7
    %v11131 = vsub.s32 %v9612, %v11130
    %v11132 = vrot.slane %v9535, %v11131
    %v11133 = vsel %vm9617, %v11132, %v11128
    %v11134 = vlaneseq
    %v11135 = vshrl.u32 %v11134, 7
    %v11136 = vsub.s32 %v9619, %v11135
    %v11137 = vrot.slane %v9538, %v11136
    %v11138 = vsel %vm9624, %v11137, %v11133
    %v11139 = vlaneseq
    %v11140 = vshrl.u32 %v11139, 7
    %v11141 = vsub.s32 %v9626, %v11140
    %v11142 = vrot.slane %v9541, %v11141
    %v11143 = vsel %vm9631, %v11142, %v11138
    %v11144 = vlaneseq
    %v11145 = vshrl.u32 %v11144, 7
    %v11146 = vsub.s32 %v9633, %v11145
    %v11147 = vrot.slane %v9544, %v11146
    %v11148 = vsel %vm9638, %v11147, %v11143
    %v11149 = vlaneseq
    %v11150 = vshrl.u32 %v11149, 7
    %v11151 = vsub.s32 %v9640, %v11150
    %v11152 = vrot.slane %v9547, %v11151
    %v11153 = vsel %vm9645, %v11152, %v11148
    %v11154 = vlaneseq
    %v11155 = vshrl.u32 %v11154, 7
    %v11156 = vsub.s32 %v9647, %v11155
    %v11157 = vrot.slane %v9550, %v11156
    %v11158 = vsel %vm9652, %v11157, %v11153
    %v11159 = vlaneseq
    %v11160 = vshrl.u32 %v11159, 7
    %v11161 = vsub.s32 %v9654, %v11160
    %v11162 = vrot.slane %v9553, %v11161
    %v11163 = vsel %vm9659, %v11162, %v11158
    %v11164 = vlaneseq
    %v11165 = vshrl.u32 %v11164, 7
    %v11166 = vsub.s32 %v9661, %v11165
    %v11167 = vrot.slane %v9556, %v11166
    %v11168 = vsel %vm9666, %v11167, %v11163
    %vm11169 = vcmask 1041409
    %v11170 = vsel %vm11169, %v10457, %v9667
    %v11171 = vsel %vm11169, %v10536, %v9746
    %v11172 = vsel %vm11169, %v10615, %v9825
    %v11173 = vsel %vm11169, %v10694, %v9904
    %v11174 = vsel %vm11169, %v10773, %v9983
    %v11175 = vsel %vm11169, %v10852, %v10062
    %v11176 = vsel %vm11169, %v10931, %v10141
    %v11177 = vsel %vm11169, %v11010, %v10220
    %v11178 = vsel %vm11169, %v11089, %v10299
    %v11179 = vsel %vm11169, %v11168, %v10378
    %v11180 = vpack.c.b16 %v11170, %v11170
    %v11181 = vpack.c.b16 %v11171, %v11171
    %v11182 = vpack.c.b16 %v11172, %v11172
    %v11183 = vpack.c.b16 %v11173, %v11173
    %v11184 = vpack.c.b16 %v11174, %v11174
    %v11185 = vpack.c.b16 %v11175, %v11175
    %v11186 = vpack.c.b16 %v11176, %v11176
    %v11187 = vpack.c.b16 %v11177, %v11177
    %v11188 = vpack.c.b16 %v11178, %v11178
    %v11189 = vpack.c.b16 %v11179, %v11179
    %v11360 = vunpack.c.l.b16 %v7945
    %v11361 = vunpack.c.h.b16 %v7945
    %v11362 = vunpack.c.l.b16 %v7946
    %v11363 = vunpack.c.h.b16 %v7946
    %v11364 = vunpack.c.l.b16 %v7947
    %v11365 = vunpack.c.h.b16 %v7947
    %v11366 = vunpack.c.l.b16 %v7948
    %v11367 = vunpack.c.h.b16 %v7948
    %v11368 = vunpack.c.l.b16 %v7949
    %v11369 = vunpack.c.h.b16 %v7949
    %v11370 = vunpack.c.l.b16 %v7950
    %v11371 = vunpack.c.h.b16 %v7950
    %v11372 = vunpack.c.l.b16 %v7951
    %v11373 = vunpack.c.h.b16 %v7951
    %v11374 = vunpack.c.l.b16 %v7952
    %v11375 = vunpack.c.h.b16 %v7952
    %v11376 = vunpack.c.l.b16 %v7953
    %v11377 = vunpack.c.h.b16 %v7953
    %v11378 = vunpack.c.l.b16 %v7954
    %v11379 = vunpack.c.h.b16 %v7954
    %v11380 = vunpack.c.l.b16 %v7955
    %v11381 = vunpack.c.h.b16 %v7955
    %v11382 = vunpack.c.l.b16 %v7956
    %v11383 = vunpack.c.h.b16 %v7956
    %v11384 = vunpack.c.l.b16 %v7957
    %v11385 = vunpack.c.h.b16 %v7957
    %v11386 = vunpack.c.l.b16 %v7958
    %v11387 = vunpack.c.h.b16 %v7958
    %v11388 = vunpack.c.l.b16 %v7959
    %v11389 = vunpack.c.h.b16 %v7959
    %v11390 = vunpack.c.l.b16 %v7960
    %v11391 = vunpack.c.h.b16 %v7960
    %v11392 = vunpack.c.l.b16 %v7961
    %v11393 = vunpack.c.h.b16 %v7961
    %v11394 = vunpack.c.l.b16 %v7962
    %v11395 = vunpack.c.h.b16 %v7962
    %v11396 = vunpack.c.l.b16 %v7963
    %v11397 = vunpack.c.h.b16 %v7963
    %v11398 = vunpack.c.l.b16 %v7964
    %v11399 = vunpack.c.h.b16 %v7964
    %v11400 = vunpack.c.l.b16 %v7965
    %v11401 = vunpack.c.h.b16 %v7965
    %v11402 = vunpack.c.l.b16 %v7966
    %v11403 = vunpack.c.h.b16 %v7966
    %v11404 = vunpack.c.l.b16 %v7967
    %v11405 = vunpack.c.h.b16 %v7967
    %v11406 = vunpack.c.l.b16 %v7968
    %v11407 = vunpack.c.h.b16 %v7968
    %v11408 = vunpack.c.l.b16 %v7969
    %v11409 = vunpack.c.h.b16 %v7969
    %v11410 = vunpack.c.l.b16 %v7970
    %v11411 = vunpack.c.h.b16 %v7970
    %v11412 = vunpack.c.l.b16 %v7971
    %v11413 = vunpack.c.h.b16 %v7971
    %v11414 = vunpack.c.l.b16 %v7972
    %v11415 = vunpack.c.h.b16 %v7972
    %v11416 = vunpack.c.l.b16 %v7973
    %v11417 = vunpack.c.h.b16 %v7973
    %v11418 = vunpack.c.l.b16 %v7974
    %v11419 = vunpack.c.h.b16 %v7974
    %v11420 = vunpack.c.l.b16 %v7975
    %v11421 = vunpack.c.h.b16 %v7975
    %v11422 = vunpack.c.l.b16 %v7976
    %v11423 = vunpack.c.h.b16 %v7976
    %v11424 = vunpack.c.l.b16 %v7977
    %v11425 = vunpack.c.h.b16 %v7977
    %v11426 = vunpack.c.l.b16 %v7978
    %v11427 = vunpack.c.h.b16 %v7978
    %v11428 = vunpack.c.l.b16 %v7979
    %v11429 = vunpack.c.h.b16 %v7979
    %v11430 = vunpack.c.l.b16 %v7980
    %v11431 = vunpack.c.h.b16 %v7980
    %v11432 = vunpack.c.l.b16 %v7981
    %v11433 = vunpack.c.h.b16 %v7981
    %v11434 = vunpack.c.l.b16 %v7982
    %v11435 = vunpack.c.h.b16 %v7982
    %v11436 = vunpack.c.l.b16 %v7983
    %v11437 = vunpack.c.h.b16 %v7983
    %v11438 = vunpack.c.l.b16 %v7984
    %v11439 = vunpack.c.h.b16 %v7984
    %v11440 = vunpack.c.l.b16 %v7985
    %v11441 = vunpack.c.h.b16 %v7985
    %v11442 = vunpack.c.l.b16 %v7986
    %v11443 = vunpack.c.h.b16 %v7986
    %v11444 = vunpack.c.l.b16 %v7987
    %v11445 = vunpack.c.h.b16 %v7987
    %v11446 = vunpack.c.l.b16 %v7988
    %v11447 = vunpack.c.h.b16 %v7988
    %v11448 = vunpack.c.l.b16 %v7989
    %v11449 = vunpack.c.h.b16 %v7989
    %v11450 = vunpack.c.l.b16 %v7990
    %v11451 = vunpack.c.h.b16 %v7990
    %v11452 = vunpack.c.l.b16 %v7991
    %v11453 = vunpack.c.h.b16 %v7991
    %v11454 = vunpack.c.l.b16 %v7992
    %v11455 = vunpack.c.h.b16 %v7992
    %v11456 = vunpack.c.l.b16 %v7993
    %v11457 = vunpack.c.h.b16 %v7993
    %v11458 = vunpack.c.l.b16 %v7994
    %v11459 = vunpack.c.h.b16 %v7994
    %v11460 = vunpack.c.l.b16 %v7995
    %v11461 = vunpack.c.h.b16 %v7995
    %v11462 = vunpack.c.l.b16 %v7996
    %v11463 = vunpack.c.h.b16 %v7996
    %v11464 = vunpack.c.l.b16 %v7997
    %v11465 = vunpack.c.h.b16 %v7997
    %v11466 = vunpack.c.l.b16 %v7998
    %v11467 = vunpack.c.h.b16 %v7998
    %v11468 = vunpack.c.l.b16 %v7999
    %v11469 = vunpack.c.h.b16 %v7999
    %v11470 = vunpack.c.l.b16 %v8000
    %v11471 = vunpack.c.h.b16 %v8000
    %v11472 = vunpack.c.l.b16 %v8001
    %v11473 = vunpack.c.h.b16 %v8001
    %v11474 = vunpack.c.l.b16 %v8002
    %v11475 = vunpack.c.h.b16 %v8002
    %v11476 = vunpack.c.l.b16 %v8003
    %v11477 = vunpack.c.h.b16 %v8003
    %v11478 = vunpack.c.l.b16 %v8004
    %v11479 = vunpack.c.h.b16 %v8004
    %v11480 = vunpack.c.l.b16 %v8005
    %v11481 = vunpack.c.h.b16 %v8005
    %v11482 = vunpack.c.l.b16 %v8006
    %v11483 = vunpack.c.h.b16 %v8006
    %v11484 = vunpack.c.l.b16 %v8007
    %v11485 = vunpack.c.h.b16 %v8007
    %v11486 = vunpack.c.l.b16 %v8008
    %v11487 = vunpack.c.h.b16 %v8008
    %v11488 = vunpack.c.l.b16 %v8009
    %v11489 = vunpack.c.h.b16 %v8009
    %v11490 = vunpack.c.l.b16 %v8010
    %v11491 = vunpack.c.h.b16 %v8010
    %v11492 = vunpack.c.l.b16 %v8011
    %v11493 = vunpack.c.h.b16 %v8011
    %v11494 = vunpack.c.l.b16 %v8012
    %v11495 = vunpack.c.h.b16 %v8012
    %v11496 = vunpack.c.l.b16 %v8013
    %v11497 = vunpack.c.h.b16 %v8013
    %v11498 = vunpack.c.l.b16 %v8014
    %v11499 = vunpack.c.h.b16 %v8014
    %v11500 = vunpack.c.l.b16 %v8015
    %v11501 = vunpack.c.h.b16 %v8015
    %v11502 = vunpack.c.l.b16 %v8016
    %v11503 = vunpack.c.h.b16 %v8016
    %v11504 = vunpack.c.l.b16 %v8017
    %v11505 = vunpack.c.h.b16 %v8017
    %v11506 = vunpack.c.l.b16 %v8018
    %v11507 = vunpack.c.h.b16 %v8018
    %v11508 = vunpack.c.l.b16 %v8019
    %v11509 = vunpack.c.h.b16 %v8019
    %v11510 = vunpack.c.l.b16 %v8020
    %v11511 = vunpack.c.h.b16 %v8020
    %v11512 = vunpack.c.l.b16 %v8021
    %v11513 = vunpack.c.h.b16 %v8021
    %v11514 = vunpack.c.l.b16 %v8022
    %v11515 = vunpack.c.h.b16 %v8022
    %v11516 = vunpack.c.l.b16 %v8023
    %v11517 = vunpack.c.h.b16 %v8023
    %v11518 = vunpack.c.l.b16 %v8024
    %v11519 = vunpack.c.h.b16 %v8024
    %v11520 = vunpack.c.l.b16 %v8025
    %v11521 = vunpack.c.h.b16 %v8025
    %v11522 = vunpack.c.l.b16 %v8026
    %v11523 = vunpack.c.h.b16 %v8026
    %v11524 = vunpack.c.l.b16 %v8027
    %v11525 = vunpack.c.h.b16 %v8027
    %v11526 = vunpack.c.l.b16 %v8028
    %v11527 = vunpack.c.h.b16 %v8028
    %v11528 = vunpack.c.l.b16 %v8029
    %v11529 = vunpack.c.h.b16 %v8029
    %v11530 = vunpack.c.l.b16 %v8030
    %v11531 = vunpack.c.h.b16 %v8030
    %v11532 = vunpack.c.l.b16 %v8031
    %v11533 = vunpack.c.h.b16 %v8031
    %v11534 = vunpack.c.l.b16 %v8032
    %v11535 = vunpack.c.h.b16 %v8032
    %v11536 = vunpack.c.l.b16 %v8033
    %v11537 = vunpack.c.h.b16 %v8033
    %v11538 = vunpack.c.l.b16 %v8034
    %v11539 = vunpack.c.h.b16 %v8034
    %v11540 = vunpack.c.l.b16 %v8035
    %v11541 = vunpack.c.h.b16 %v8035
    %v11542 = vunpack.c.l.b16 %v8036
    %v11543 = vunpack.c.h.b16 %v8036
    %v11544 = vunpack.c.l.b16 %v8037
    %v11545 = vunpack.c.h.b16 %v8037
    %v11546 = vunpack.c.l.b16 %v8038
    %v11547 = vunpack.c.h.b16 %v8038
    %v11548 = vunpack.c.l.b16 %v8039
    %v11549 = vunpack.c.h.b16 %v8039
    %v11550 = vunpack.c.l.b16 %v8040
    %v11551 = vunpack.c.h.b16 %v8040
    %v11552 = vunpack.c.l.b16 %v8041
    %v11553 = vunpack.c.h.b16 %v8041
    %v11554 = vunpack.c.l.b16 %v8042
    %v11555 = vunpack.c.h.b16 %v8042
    %v11556 = vunpack.c.l.b16 %v8043
    %v11557 = vunpack.c.h.b16 %v8043
    %v11558 = vunpack.c.l.b16 %v8044
    %v11559 = vunpack.c.h.b16 %v8044
    %v11560 = vunpack.c.l.b16 %v8045
    %v11561 = vunpack.c.h.b16 %v8045
    %v11562 = vunpack.c.l.b16 %v8046
    %v11563 = vunpack.c.h.b16 %v8046
    %v11564 = vunpack.c.l.b16 %v8047
    %v11565 = vunpack.c.h.b16 %v8047
    %v11566 = vunpack.c.l.b16 %v8048
    %v11567 = vunpack.c.h.b16 %v8048
    %v11568 = vunpack.c.l.b16 %v8049
    %v11569 = vunpack.c.h.b16 %v8049
    %v11570 = vunpack.c.l.b16 %v8050
    %v11571 = vunpack.c.h.b16 %v8050
    %v11572 = vunpack.c.l.b16 %v8051
    %v11573 = vunpack.c.h.b16 %v8051
    %v11574 = vunpack.c.l.b16 %v8052
    %v11575 = vunpack.c.h.b16 %v8052
    %v11576 = vunpack.c.l.b16 %v8053
    %v11577 = vunpack.c.h.b16 %v8053
    %v11578 = vunpack.c.l.b16 %v8054
    %v11579 = vunpack.c.h.b16 %v8054
    %v11580 = vunpack.c.l.b16 %v8055
    %v11581 = vunpack.c.h.b16 %v8055
    %v11582 = vunpack.c.l.b16 %v8056
    %v11583 = vunpack.c.h.b16 %v8056
    %v11584 = vunpack.c.l.b16 %v8057
    %v11585 = vunpack.c.h.b16 %v8057
    %v11586 = vunpack.c.l.b16 %v8058
    %v11587 = vunpack.c.h.b16 %v8058
    %v11588 = vunpack.c.l.b16 %v8059
    %v11589 = vunpack.c.h.b16 %v8059
    %v11590 = vunpack.c.l.b16 %v8060
    %v11591 = vunpack.c.h.b16 %v8060
    %v11592 = vunpack.c.l.b16 %v8061
    %v11593 = vunpack.c.h.b16 %v8061
    %v11594 = vunpack.c.l.b16 %v8062
    %v11595 = vunpack.c.h.b16 %v8062
    %v11596 = vunpack.c.l.b16 %v8063
    %v11597 = vunpack.c.h.b16 %v8063
    %v11598 = vunpack.c.l.b16 %v8064
    %v11599 = vunpack.c.h.b16 %v8064
    %v11600 = vunpack.c.l.b16 %v8065
    %v11601 = vunpack.c.h.b16 %v8065
    %v11602 = vunpack.c.l.b16 %v8066
    %v11603 = vunpack.c.h.b16 %v8066
    %v11604 = vunpack.c.l.b16 %v8067
    %v11605 = vunpack.c.h.b16 %v8067
    %v11606 = vunpack.c.l.b16 %v8068
    %v11607 = vunpack.c.h.b16 %v8068
    %v11608 = vunpack.c.l.b16 %v8069
    %v11609 = vunpack.c.h.b16 %v8069
    %v11610 = vunpack.c.l.b16 %v8070
    %v11611 = vunpack.c.h.b16 %v8070
    %v11612 = vunpack.c.l.b16 %v8071
    %v11613 = vunpack.c.h.b16 %v8071
    %v11614 = vunpack.c.l.b16 %v8072
    %v11615 = vunpack.c.h.b16 %v8072
    %v11616 = vunpack.c.l.b16 %v8073
    %v11617 = vunpack.c.h.b16 %v8073
    %v11618 = vunpack.c.l.b16 %v8074
    %v11619 = vunpack.c.h.b16 %v8074
    %v11620 = vunpack.c.l.b16 %v8075
    %v11621 = vunpack.c.h.b16 %v8075
    %v11622 = vunpack.c.l.b16 %v8076
    %v11623 = vunpack.c.h.b16 %v8076
    %v11624 = vunpack.c.l.b16 %v8077
    %v11625 = vunpack.c.h.b16 %v8077
    %v11626 = vunpack.c.l.b16 %v8078
    %v11627 = vunpack.c.h.b16 %v8078
    %v11628 = vunpack.c.l.b16 %v8079
    %v11629 = vunpack.c.h.b16 %v8079
    %v11630 = vunpack.c.l.b16 %v8080
    %v11631 = vunpack.c.h.b16 %v8080
    %v11632 = vunpack.c.l.b16 %v8081
    %v11633 = vunpack.c.h.b16 %v8081
    %v11634 = vunpack.c.l.b16 %v8082
    %v11635 = vunpack.c.h.b16 %v8082
    %v11636 = vunpack.c.l.b16 %v8083
    %v11637 = vunpack.c.h.b16 %v8083
    %v11638 = vunpack.c.l.b16 %v8084
    %v11639 = vunpack.c.h.b16 %v8084
    %v11640 = vunpack.c.l.b16 %v8085
    %v11641 = vunpack.c.h.b16 %v8085
    %v11642 = vunpack.c.l.b16 %v8086
    %v11643 = vunpack.c.h.b16 %v8086
    %v11644 = vunpack.c.l.b16 %v8087
    %v11645 = vunpack.c.h.b16 %v8087
    %v11646 = vunpack.c.l.b16 %v8088
    %v11647 = vunpack.c.h.b16 %v8088
    %v11648 = vunpack.c.l.b16 %v8089
    %v11649 = vunpack.c.h.b16 %v8089
    %v11650 = vunpack.c.l.b16 %v8090
    %v11651 = vunpack.c.h.b16 %v8090
    %v11652 = vunpack.c.l.b16 %v8091
    %v11653 = vunpack.c.h.b16 %v8091
    %v11654 = vunpack.c.l.b16 %v8092
    %v11655 = vunpack.c.h.b16 %v8092
    %v11656 = vunpack.c.l.b16 %v8093
    %v11657 = vunpack.c.h.b16 %v8093
    %v11658 = vunpack.c.l.b16 %v8094
    %v11659 = vunpack.c.h.b16 %v8094
    %v11660 = vunpack.c.l.b16 %v8095
    %v11661 = vunpack.c.h.b16 %v8095
    %v11662 = vunpack.c.l.b16 %v8096
    %v11663 = vunpack.c.h.b16 %v8096
    %v11664 = vunpack.c.l.b16 %v8097
    %v11665 = vunpack.c.h.b16 %v8097
    %v11666 = vunpack.c.l.b16 %v8098
    %v11667 = vunpack.c.h.b16 %v8098
    %v11668 = vunpack.c.l.b16 %v8099
    %v11669 = vunpack.c.h.b16 %v8099
    %v11670 = vunpack.c.l.b16 %v8100
    %v11671 = vunpack.c.h.b16 %v8100
    %v11672 = vunpack.c.l.b16 %v8101
    %v11673 = vunpack.c.h.b16 %v8101
    %v11674 = vunpack.c.l.b16 %v8102
    %v11675 = vunpack.c.h.b16 %v8102
    %v11676 = vunpack.c.l.b16 %v8103
    %v11677 = vunpack.c.h.b16 %v8103
    %v11678 = vunpack.c.l.b16 %v8104
    %v11679 = vunpack.c.h.b16 %v8104
    %v11680 = vpack.c.b16 %v11362, %v11360
    %v11681 = vpack.c.b16 %v11363, %v11361
    %v11682 = vpack.c.b16 %v11366, %v11364
    %v11683 = vpack.c.b16 %v11367, %v11365
    %v11684 = vpack.c.b16 %v11370, %v11368
    %v11685 = vpack.c.b16 %v11371, %v11369
    %v11686 = vpack.c.b16 %v11374, %v11372
    %v11687 = vpack.c.b16 %v11375, %v11373
    %v11688 = vpack.c.b16 %v11378, %v11376
    %v11689 = vpack.c.b16 %v11379, %v11377
    %v11690 = vpack.c.b16 %v11382, %v11380
    %v11691 = vpack.c.b16 %v11383, %v11381
    %v11692 = vpack.c.b16 %v11386, %v11384
    %v11693 = vpack.c.b16 %v11387, %v11385
    %v11694 = vpack.c.b16 %v11390, %v11388
    %v11695 = vpack.c.b16 %v11391, %v11389
    %v11696 = vpack.c.b16 %v11394, %v11392
    %v11697 = vpack.c.b16 %v11395, %v11393
    %v11698 = vpack.c.b16 %v11398, %v11396
    %v11699 = vpack.c.b16 %v11399, %v11397
    %v11700 = vpack.c.b16 %v11402, %v11400
    %v11701 = vpack.c.b16 %v11403, %v11401
    %v11702 = vpack.c.b16 %v11406, %v11404
    %v11703 = vpack.c.b16 %v11407, %v11405
    %v11704 = vpack.c.b16 %v11410, %v11408
    %v11705 = vpack.c.b16 %v11411, %v11409
    %v11706 = vpack.c.b16 %v11414, %v11412
    %v11707 = vpack.c.b16 %v11415, %v11413
    %v11708 = vpack.c.b16 %v11418, %v11416
    %v11709 = vpack.c.b16 %v11419, %v11417
    %v11710 = vpack.c.b16 %v11422, %v11420
    %v11711 = vpack.c.b16 %v11423, %v11421
    %v11712 = vpack.c.b16 %v11426, %v11424
    %v11713 = vpack.c.b16 %v11427, %v11425
    %v11714 = vpack.c.b16 %v11430, %v11428
    %v11715 = vpack.c.b16 %v11431, %v11429
    %v11716 = vpack.c.b16 %v11434, %v11432
    %v11717 = vpack.c.b16 %v11435, %v11433
    %v11718 = vpack.c.b16 %v11438, %v11436
    %v11719 = vpack.c.b16 %v11439, %v11437
    %v11720 = vpack.c.b16 %v11442, %v11440
    %v11721 = vpack.c.b16 %v11443, %v11441
    %v11722 = vpack.c.b16 %v11446, %v11444
    %v11723 = vpack.c.b16 %v11447, %v11445
    %v11724 = vpack.c.b16 %v11450, %v11448
    %v11725 = vpack.c.b16 %v11451, %v11449
    %v11726 = vpack.c.b16 %v11454, %v11452
    %v11727 = vpack.c.b16 %v11455, %v11453
    %v11728 = vpack.c.b16 %v11458, %v11456
    %v11729 = vpack.c.b16 %v11459, %v11457
    %v11730 = vpack.c.b16 %v11462, %v11460
    %v11731 = vpack.c.b16 %v11463, %v11461
    %v11732 = vpack.c.b16 %v11466, %v11464
    %v11733 = vpack.c.b16 %v11467, %v11465
    %v11734 = vpack.c.b16 %v11470, %v11468
    %v11735 = vpack.c.b16 %v11471, %v11469
    %v11736 = vpack.c.b16 %v11474, %v11472
    %v11737 = vpack.c.b16 %v11475, %v11473
    %v11738 = vpack.c.b16 %v11478, %v11476
    %v11739 = vpack.c.b16 %v11479, %v11477
    %v11740 = vpack.c.b16 %v11482, %v11480
    %v11741 = vpack.c.b16 %v11483, %v11481
    %v11742 = vpack.c.b16 %v11486, %v11484
    %v11743 = vpack.c.b16 %v11487, %v11485
    %v11744 = vpack.c.b16 %v11490, %v11488
    %v11745 = vpack.c.b16 %v11491, %v11489
    %v11746 = vpack.c.b16 %v11494, %v11492
    %v11747 = vpack.c.b16 %v11495, %v11493
    %v11748 = vpack.c.b16 %v11498, %v11496
    %v11749 = vpack.c.b16 %v11499, %v11497
    %v11750 = vpack.c.b16 %v11502, %v11500
    %v11751 = vpack.c.b16 %v11503, %v11501
    %v11752 = vpack.c.b16 %v11506, %v11504
    %v11753 = vpack.c.b16 %v11507, %v11505
    %v11754 = vpack.c.b16 %v11510, %v11508
    %v11755 = vpack.c.b16 %v11511, %v11509
    %v11756 = vpack.c.b16 %v11514, %v11512
    %v11757 = vpack.c.b16 %v11515, %v11513
    %v11758 = vpack.c.b16 %v11518, %v11516
    %v11759 = vpack.c.b16 %v11519, %v11517
    %v11760 = vpack.c.b16 %v11522, %v11520
    %v11761 = vpack.c.b16 %v11523, %v11521
    %v11762 = vpack.c.b16 %v11526, %v11524
    %v11763 = vpack.c.b16 %v11527, %v11525
    %v11764 = vpack.c.b16 %v11530, %v11528
    %v11765 = vpack.c.b16 %v11531, %v11529
    %v11766 = vpack.c.b16 %v11534, %v11532
    %v11767 = vpack.c.b16 %v11535, %v11533
    %v11768 = vpack.c.b16 %v11538, %v11536
    %v11769 = vpack.c.b16 %v11539, %v11537
    %v11770 = vpack.c.b16 %v11542, %v11540
    %v11771 = vpack.c.b16 %v11543, %v11541
    %v11772 = vpack.c.b16 %v11546, %v11544
    %v11773 = vpack.c.b16 %v11547, %v11545
    %v11774 = vpack.c.b16 %v11550, %v11548
    %v11775 = vpack.c.b16 %v11551, %v11549
    %v11776 = vpack.c.b16 %v11554, %v11552
    %v11777 = vpack.c.b16 %v11555, %v11553
    %v11778 = vpack.c.b16 %v11558, %v11556
    %v11779 = vpack.c.b16 %v11559, %v11557
    %v11780 = vpack.c.b16 %v11562, %v11560
    %v11781 = vpack.c.b16 %v11563, %v11561
    %v11782 = vpack.c.b16 %v11566, %v11564
    %v11783 = vpack.c.b16 %v11567, %v11565
    %v11784 = vpack.c.b16 %v11570, %v11568
    %v11785 = vpack.c.b16 %v11571, %v11569
    %v11786 = vpack.c.b16 %v11574, %v11572
    %v11787 = vpack.c.b16 %v11575, %v11573
    %v11788 = vpack.c.b16 %v11578, %v11576
    %v11789 = vpack.c.b16 %v11579, %v11577
    %v11790 = vpack.c.b16 %v11582, %v11580
    %v11791 = vpack.c.b16 %v11583, %v11581
    %v11792 = vpack.c.b16 %v11586, %v11584
    %v11793 = vpack.c.b16 %v11587, %v11585
    %v11794 = vpack.c.b16 %v11590, %v11588
    %v11795 = vpack.c.b16 %v11591, %v11589
    %v11796 = vpack.c.b16 %v11594, %v11592
    %v11797 = vpack.c.b16 %v11595, %v11593
    %v11798 = vpack.c.b16 %v11598, %v11596
    %v11799 = vpack.c.b16 %v11599, %v11597
    %v11800 = vpack.c.b16 %v11602, %v11600
    %v11801 = vpack.c.b16 %v11603, %v11601
    %v11802 = vpack.c.b16 %v11606, %v11604
    %v11803 = vpack.c.b16 %v11607, %v11605
    %v11804 = vpack.c.b16 %v11610, %v11608
    %v11805 = vpack.c.b16 %v11611, %v11609
    %v11806 = vpack.c.b16 %v11614, %v11612
    %v11807 = vpack.c.b16 %v11615, %v11613
    %v11808 = vpack.c.b16 %v11618, %v11616
    %v11809 = vpack.c.b16 %v11619, %v11617
    %v11810 = vpack.c.b16 %v11622, %v11620
    %v11811 = vpack.c.b16 %v11623, %v11621
    %v11812 = vpack.c.b16 %v11626, %v11624
    %v11813 = vpack.c.b16 %v11627, %v11625
    %v11814 = vpack.c.b16 %v11630, %v11628
    %v11815 = vpack.c.b16 %v11631, %v11629
    %v11816 = vpack.c.b16 %v11634, %v11632
    %v11817 = vpack.c.b16 %v11635, %v11633
    %v11818 = vpack.c.b16 %v11638, %v11636
    %v11819 = vpack.c.b16 %v11639, %v11637
    %v11820 = vpack.c.b16 %v11642, %v11640
    %v11821 = vpack.c.b16 %v11643, %v11641
    %v11822 = vpack.c.b16 %v11646, %v11644
    %v11823 = vpack.c.b16 %v11647, %v11645
    %v11824 = vpack.c.b16 %v11650, %v11648
    %v11825 = vpack.c.b16 %v11651, %v11649
    %v11826 = vpack.c.b16 %v11654, %v11652
    %v11827 = vpack.c.b16 %v11655, %v11653
    %v11828 = vpack.c.b16 %v11658, %v11656
    %v11829 = vpack.c.b16 %v11659, %v11657
    %v11830 = vpack.c.b16 %v11662, %v11660
    %v11831 = vpack.c.b16 %v11663, %v11661
    %v11832 = vpack.c.b16 %v11666, %v11664
    %v11833 = vpack.c.b16 %v11667, %v11665
    %v11834 = vpack.c.b16 %v11670, %v11668
    %v11835 = vpack.c.b16 %v11671, %v11669
    %v11836 = vpack.c.b16 %v11674, %v11672
    %v11837 = vpack.c.b16 %v11675, %v11673
    %v11838 = vpack.c.b16 %v11678, %v11676
    %v11839 = vpack.c.b16 %v11679, %v11677
    %12000 = vmatprep.subr.bf16.mxu0 %v11681
    %12001 = vmatpush1.bf16.msra.mxu0 %v11680
    %12002 = vmatprep.subr.bf16.mxu0 %v11683
    %12003 = vmatpush1.bf16.msra.mxu0 %v11682
    %12004 = vmatprep.subr.bf16.mxu0 %v11685
    %12005 = vmatpush1.bf16.msra.mxu0 %v11684
    %12006 = vmatprep.subr.bf16.mxu0 %v11687
    %12007 = vmatpush1.bf16.msra.mxu0 %v11686
    %12008 = vmatprep.subr.bf16.mxu0 %v11689
    %12009 = vmatpush1.bf16.msra.mxu0 %v11688
    %12010 = vmatprep.subr.bf16.mxu0 %v11691
    %12011 = vmatpush1.bf16.msra.mxu0 %v11690
    %12012 = vmatprep.subr.bf16.mxu0 %v11693
    %12013 = vmatpush1.bf16.msra.mxu0 %v11692
    %12014 = vmatprep.subr.bf16.mxu0 %v11695
    %12015 = vmatpush1.bf16.msra.mxu0 %v11694
    %12016 = vmatprep.subr.bf16.mxu0 %v11697
    %12017 = vmatpush1.bf16.msra.mxu0 %v11696
    %12018 = vmatprep.subr.bf16.mxu0 %v11699
    %12019 = vmatpush1.bf16.msra.mxu0 %v11698
    %12020 = vmatprep.subr.bf16.mxu0 %v11701
    %12021 = vmatpush1.bf16.msra.mxu0 %v11700
    %12022 = vmatprep.subr.bf16.mxu0 %v11703
    %12023 = vmatpush1.bf16.msra.mxu0 %v11702
    %12024 = vmatprep.subr.bf16.mxu0 %v11705
    %12025 = vmatpush1.bf16.msra.mxu0 %v11704
    %12026 = vmatprep.subr.bf16.mxu0 %v11707
    %12027 = vmatpush1.bf16.msra.mxu0 %v11706
    %12028 = vmatprep.subr.bf16.mxu0 %v11709
    %12029 = vmatpush1.bf16.msra.mxu0 %v11708
    %12030 = vmatprep.subr.bf16.mxu0 %v11711
    %12031 = vmatpush1.bf16.msra.mxu0 %v11710
    %12032 = vmatprep.mubr.bf16.mxu0 %v11181
    %12033 = vmatmul.mubr.bf16.gmra.mrb[0].mxu0 %v11180
    %v12034 = vpop.f32.mrb[0].mxu0
    %v12035 = vadd.f32 %v8110, %v12034
    %v12036 = vpop.f32.mrb[0].mxu0
    %v12037 = vadd.f32 %v8114, %v12036
    %v12038 = vpop.f32.mrb[0].mxu0
    %v12039 = vpop.f32.mrb[0].mxu0
    %12040 = vdwg.mxu0
    %12041 = vmatprep.subr.bf16.mxu0 %v11713
    %12042 = vmatpush1.bf16.msra.mxu0 %v11712
    %12043 = vmatprep.subr.bf16.mxu0 %v11715
    %12044 = vmatpush1.bf16.msra.mxu0 %v11714
    %12045 = vmatprep.subr.bf16.mxu0 %v11717
    %12046 = vmatpush1.bf16.msra.mxu0 %v11716
    %12047 = vmatprep.subr.bf16.mxu0 %v11719
    %12048 = vmatpush1.bf16.msra.mxu0 %v11718
    %12049 = vmatprep.subr.bf16.mxu0 %v11721
    %12050 = vmatpush1.bf16.msra.mxu0 %v11720
    %12051 = vmatprep.subr.bf16.mxu0 %v11723
    %12052 = vmatpush1.bf16.msra.mxu0 %v11722
    %12053 = vmatprep.subr.bf16.mxu0 %v11725
    %12054 = vmatpush1.bf16.msra.mxu0 %v11724
    %12055 = vmatprep.subr.bf16.mxu0 %v11727
    %12056 = vmatpush1.bf16.msra.mxu0 %v11726
    %12057 = vmatprep.subr.bf16.mxu0 %v11729
    %12058 = vmatpush1.bf16.msra.mxu0 %v11728
    %12059 = vmatprep.subr.bf16.mxu0 %v11731
    %12060 = vmatpush1.bf16.msra.mxu0 %v11730
    %12061 = vmatprep.subr.bf16.mxu0 %v11733
    %12062 = vmatpush1.bf16.msra.mxu0 %v11732
    %12063 = vmatprep.subr.bf16.mxu0 %v11735
    %12064 = vmatpush1.bf16.msra.mxu0 %v11734
    %12065 = vmatprep.subr.bf16.mxu0 %v11737
    %12066 = vmatpush1.bf16.msra.mxu0 %v11736
    %12067 = vmatprep.subr.bf16.mxu0 %v11739
    %12068 = vmatpush1.bf16.msra.mxu0 %v11738
    %12069 = vmatprep.subr.bf16.mxu0 %v11741
    %12070 = vmatpush1.bf16.msra.mxu0 %v11740
    %12071 = vmatprep.subr.bf16.mxu0 %v11743
    %12072 = vmatpush1.bf16.msra.mxu0 %v11742
    %12073 = vmatprep.mubr.bf16.mxu0 %v11183
    %12074 = vmatmul.mubr.bf16.gmra.mrb[0].mxu0 %v11182
    %v12075 = vpop.f32.mrb[0].mxu0
    %v12076 = vadd.f32 %v12035, %v12075
    %v12077 = vpop.f32.mrb[0].mxu0
    %v12078 = vadd.f32 %v12037, %v12077
    %v12079 = vpop.f32.mrb[0].mxu0
    %v12080 = vpop.f32.mrb[0].mxu0
    %12081 = vdwg.mxu0
    %12082 = vmatprep.subr.bf16.mxu0 %v11745
    %12083 = vmatpush1.bf16.msra.mxu0 %v11744
    %12084 = vmatprep.subr.bf16.mxu0 %v11747
    %12085 = vmatpush1.bf16.msra.mxu0 %v11746
    %12086 = vmatprep.subr.bf16.mxu0 %v11749
    %12087 = vmatpush1.bf16.msra.mxu0 %v11748
    %12088 = vmatprep.subr.bf16.mxu0 %v11751
    %12089 = vmatpush1.bf16.msra.mxu0 %v11750
    %12090 = vmatprep.subr.bf16.mxu0 %v11753
    %12091 = vmatpush1.bf16.msra.mxu0 %v11752
    %12092 = vmatprep.subr.bf16.mxu0 %v11755
    %12093 = vmatpush1.bf16.msra.mxu0 %v11754
    %12094 = vmatprep.subr.bf16.mxu0 %v11757
    %12095 = vmatpush1.bf16.msra.mxu0 %v11756
    %12096 = vmatprep.subr.bf16.mxu0 %v11759
    %12097 = vmatpush1.bf16.msra.mxu0 %v11758
    %12098 = vmatprep.subr.bf16.mxu0 %v11761
    %12099 = vmatpush1.bf16.msra.mxu0 %v11760
    %12100 = vmatprep.subr.bf16.mxu0 %v11763
    %12101 = vmatpush1.bf16.msra.mxu0 %v11762
    %12102 = vmatprep.subr.bf16.mxu0 %v11765
    %12103 = vmatpush1.bf16.msra.mxu0 %v11764
    %12104 = vmatprep.subr.bf16.mxu0 %v11767
    %12105 = vmatpush1.bf16.msra.mxu0 %v11766
    %12106 = vmatprep.subr.bf16.mxu0 %v11769
    %12107 = vmatpush1.bf16.msra.mxu0 %v11768
    %12108 = vmatprep.subr.bf16.mxu0 %v11771
    %12109 = vmatpush1.bf16.msra.mxu0 %v11770
    %12110 = vmatprep.subr.bf16.mxu0 %v11773
    %12111 = vmatpush1.bf16.msra.mxu0 %v11772
    %12112 = vmatprep.subr.bf16.mxu0 %v11775
    %12113 = vmatpush1.bf16.msra.mxu0 %v11774
    %12114 = vmatprep.mubr.bf16.mxu0 %v11185
    %12115 = vmatmul.mubr.bf16.gmra.mrb[0].mxu0 %v11184
    %v12116 = vpop.f32.mrb[0].mxu0
    %v12117 = vadd.f32 %v12076, %v12116
    %v12118 = vpop.f32.mrb[0].mxu0
    %v12119 = vadd.f32 %v12078, %v12118
    %v12120 = vpop.f32.mrb[0].mxu0
    %v12121 = vpop.f32.mrb[0].mxu0
    %12122 = vdwg.mxu0
    %12123 = vmatprep.subr.bf16.mxu0 %v11777
    %12124 = vmatpush1.bf16.msra.mxu0 %v11776
    %12125 = vmatprep.subr.bf16.mxu0 %v11779
    %12126 = vmatpush1.bf16.msra.mxu0 %v11778
    %12127 = vmatprep.subr.bf16.mxu0 %v11781
    %12128 = vmatpush1.bf16.msra.mxu0 %v11780
    %12129 = vmatprep.subr.bf16.mxu0 %v11783
    %12130 = vmatpush1.bf16.msra.mxu0 %v11782
    %12131 = vmatprep.subr.bf16.mxu0 %v11785
    %12132 = vmatpush1.bf16.msra.mxu0 %v11784
    %12133 = vmatprep.subr.bf16.mxu0 %v11787
    %12134 = vmatpush1.bf16.msra.mxu0 %v11786
    %12135 = vmatprep.subr.bf16.mxu0 %v11789
    %12136 = vmatpush1.bf16.msra.mxu0 %v11788
    %12137 = vmatprep.subr.bf16.mxu0 %v11791
    %12138 = vmatpush1.bf16.msra.mxu0 %v11790
    %12139 = vmatprep.subr.bf16.mxu0 %v11793
    %12140 = vmatpush1.bf16.msra.mxu0 %v11792
    %12141 = vmatprep.subr.bf16.mxu0 %v11795
    %12142 = vmatpush1.bf16.msra.mxu0 %v11794
    %12143 = vmatprep.subr.bf16.mxu0 %v11797
    %12144 = vmatpush1.bf16.msra.mxu0 %v11796
    %12145 = vmatprep.subr.bf16.mxu0 %v11799
    %12146 = vmatpush1.bf16.msra.mxu0 %v11798
    %12147 = vmatprep.subr.bf16.mxu0 %v11801
    %12148 = vmatpush1.bf16.msra.mxu0 %v11800
    %12149 = vmatprep.subr.bf16.mxu0 %v11803
    %12150 = vmatpush1.bf16.msra.mxu0 %v11802
    %12151 = vmatprep.subr.bf16.mxu0 %v11805
    %12152 = vmatpush1.bf16.msra.mxu0 %v11804
    %12153 = vmatprep.subr.bf16.mxu0 %v11807
    %12154 = vmatpush1.bf16.msra.mxu0 %v11806
    %12155 = vmatprep.mubr.bf16.mxu0 %v11187
    %12156 = vmatmul.mubr.bf16.gmra.mrb[0].mxu0 %v11186
    %v12157 = vpop.f32.mrb[0].mxu0
    %v12158 = vadd.f32 %v12117, %v12157
    %v12159 = vpop.f32.mrb[0].mxu0
    %v12160 = vadd.f32 %v12119, %v12159
    %v12161 = vpop.f32.mrb[0].mxu0
    %v12162 = vpop.f32.mrb[0].mxu0
    %12163 = vdwg.mxu0
    %12164 = vmatprep.subr.bf16.mxu0 %v11809
    %12165 = vmatpush1.bf16.msra.mxu0 %v11808
    %12166 = vmatprep.subr.bf16.mxu0 %v11811
    %12167 = vmatpush1.bf16.msra.mxu0 %v11810
    %12168 = vmatprep.subr.bf16.mxu0 %v11813
    %12169 = vmatpush1.bf16.msra.mxu0 %v11812
    %12170 = vmatprep.subr.bf16.mxu0 %v11815
    %12171 = vmatpush1.bf16.msra.mxu0 %v11814
    %12172 = vmatprep.subr.bf16.mxu0 %v11817
    %12173 = vmatpush1.bf16.msra.mxu0 %v11816
    %12174 = vmatprep.subr.bf16.mxu0 %v11819
    %12175 = vmatpush1.bf16.msra.mxu0 %v11818
    %12176 = vmatprep.subr.bf16.mxu0 %v11821
    %12177 = vmatpush1.bf16.msra.mxu0 %v11820
    %12178 = vmatprep.subr.bf16.mxu0 %v11823
    %12179 = vmatpush1.bf16.msra.mxu0 %v11822
    %12180 = vmatprep.subr.bf16.mxu0 %v11825
    %12181 = vmatpush1.bf16.msra.mxu0 %v11824
    %12182 = vmatprep.subr.bf16.mxu0 %v11827
    %12183 = vmatpush1.bf16.msra.mxu0 %v11826
    %12184 = vmatprep.subr.bf16.mxu0 %v11829
    %12185 = vmatpush1.bf16.msra.mxu0 %v11828
    %12186 = vmatprep.subr.bf16.mxu0 %v11831
    %12187 = vmatpush1.bf16.msra.mxu0 %v11830
    %12188 = vmatprep.subr.bf16.mxu0 %v11833
    %12189 = vmatpush1.bf16.msra.mxu0 %v11832
    %12190 = vmatprep.subr.bf16.mxu0 %v11835
    %12191 = vmatpush1.bf16.msra.mxu0 %v11834
    %12192 = vmatprep.subr.bf16.mxu0 %v11837
    %12193 = vmatpush1.bf16.msra.mxu0 %v11836
    %12194 = vmatprep.subr.bf16.mxu0 %v11839
    %12195 = vmatpush1.bf16.msra.mxu0 %v11838
    %12196 = vmatprep.mubr.bf16.mxu0 %v11189
    %12197 = vmatmul.mubr.bf16.gmra.mrb[0].mxu0 %v11188
    %v12198 = vpop.f32.mrb[0].mxu0
    %v12199 = vadd.f32 %v12158, %v12198
    %v12200 = vpop.f32.mrb[0].mxu0
    %v12201 = vadd.f32 %v12160, %v12200
    %v12202 = vpop.f32.mrb[0].mxu0
    %v12203 = vpop.f32.mrb[0].mxu0
    %12204 = vdwg.mxu0
    %v12207 = vcombine.low %v12199, %v12201
    %v12209 = vunpack.c.l.s4 1983009808
    %v12210 = vunpack.c.0.s8 %v12209
    %v12211 = vlaneseq
    %v12212 = vshrl.u32 %v12211, 7
    %v12213 = vsub.s32 %v12210, %v12212
    %v12214 = vrot.slane %v12207, %v12213
    %12216 = vst [vmem:[#allocation5] sm:$0xf] %v12214
    // Predicated region
    $region34: #{cnn_forward.1} parent=1 // pred_check
      _
    $region35: #{cnn_forward.1} parent=1 // pred_check_branch
      %12218 = sbr.rel (0) target = $region37
    $region36: #{cnn_forward.1} parent=1 // pred_region
      %s12220 = ssub.s32 64, 64
      %12221 = vsyncadd [#allocation4], %s12220
      %s12223 = sshll.u32 [#allocation5], 4
      %s12224 = int_to_ptr.vmem [resolvable:$true] %s12223
      %12226 = dma.vmem_to_hbm [thread:$0]  %s12224, 64, %s7, [#allocation4]
    $region37: #{cnn_forward.1} parent=1 // pred_fallthru
      _
    // Predicated region
    $region38: #{cnn_forward.1} parent=1 // pred_check
      _
    $region39: #{cnn_forward.1} parent=1 // pred_check_branch
      %12228 = sbr.rel (0) target = $region41
    $region40: #{cnn_forward.1} parent=1 // pred_region
      %12229 = dma.done [#allocation4], 64
    $region41: #{cnn_forward.1} parent=1 // pred_fallthru
      _
    %12230 = vsyncpa [#allocation3], 1
    %12231 = vsyncpa [#allocation4], 1

</llo_original>
